<compile_context>
chip_gen: v7x
topology: tpu7x:2x2x1
jax: 0.10.0
libtpu: 0.0.40
codegen_flags: <defaults>
</compile_context>

<pallas_src>
import functools

import jax
import jax.numpy as jnp
from jax.experimental import pallas as pl
from jax.experimental.pallas import tpu as pltpu

C = 64  # in/out channels fixed by the module


def _down4_kernel(xp_ref, w1_ref, b1_ref, w2_ref, b2_ref, o_ref, p1_ref, *, H, W):
    # xp_ref: (1, H+2, W+2, C) bf16   input, zero-padded by 1 (for the 3x3 conv)
    # w1_ref: (3, 3*C, C)      bf16   w1[dy, dx*C + cin, cout]
    # b1_ref: (1, C)           f32
    # w2_ref: (5, 5*C, C)      bf16   w2[dy, dx*C + cin, cout]
    # b2_ref: (1, C)           f32
    # o_ref : (1, H//2, (W//2)*C) f32 lane-dense output
    # p1_ref: (H+4, W+4, C)    bf16   VMEM scratch: conv1 output zero-padded by 2
    xp = xp_ref[0]  # (H+2, W+2, C)

    # Zero the scratch (only the 2-pixel halo actually needs to stay zero; the interior
    # is fully overwritten below).  ~50 KB of VMEM stores per image -> negligible, and
    # doing it every grid step keeps the kernel correct when the batch axis is sharded
    # across TensorCores (each core has its own scratch).
    p1_ref[...] = jnp.zeros_like(p1_ref)

    # ---------------- stage 1: 3x3 conv + bias + ReLU ----------------
    # Stack the kw=3 horizontal shifts along the lane dim once; loop only over dy
    # (a leading-dim slice, no relayout).  K = 3*C = 192 per matmul.
    band1 = jnp.concatenate([xp[:, dx:dx + W, :] for dx in range(3)], axis=-1)
    acc1 = jnp.dot(band1[0:H].reshape(H * W, 3 * C), w1_ref[0],
                   preferred_element_type=jnp.float32)
    for dy in range(1, 3):
        acc1 += jnp.dot(band1[dy:dy + H].reshape(H * W, 3 * C), w1_ref[dy],
                        preferred_element_type=jnp.float32)
    y1 = jnp.maximum(acc1 + b1_ref[...], 0.0)            # (H*W, C) f32
    # Dropout2d -> identity (eval mode)

    # Conv1 activation stays in VMEM: write it into the zero-padded scratch
    # (2-pixel halo of zeros supplies the 5x5 conv's padding).
    p1_ref[2:H + 2, 2:W + 2, :] = y1.astype(jnp.bfloat16).reshape(H, W, C)

    # ------------- stage 2: 5x5 conv + bias + ReLU + 2x2 max-pool -------------
    # Read shifted bands straight off the scratch ref (static slices).
    # K = 5*C = 320 per matmul, 5 matmuls total.
    band2 = jnp.concatenate([p1_ref[:, dx:dx + W, :] for dx in range(5)], axis=-1)
    acc2 = jnp.dot(band2[0:H].reshape(H * W, 5 * C), w2_ref[0],
                   preferred_element_type=jnp.float32)
    for dy in range(1, 5):
        acc2 += jnp.dot(band2[dy:dy + H].reshape(H * W, 5 * C), w2_ref[dy],
                        preferred_element_type=jnp.float32)
    y2 = jnp.maximum(acc2 + b2_ref[...], 0.0)            # (H*W, C) f32
    # Dropout2d -> identity (eval mode)

    # 2x2 max pool, stride 2 (H, W even).
    pooled = jnp.max(y2.reshape(H // 2, 2, W // 2, 2, C), axis=(1, 3))  # (H/2, W/2, C)

    # Lane-dense store: last dim (W//2)*C is a multiple of 128 for W % 4 == 0.
    o_ref[0] = pooled.reshape(H // 2, (W // 2) * C)


def down4_forward(x_nchw, w1, b1, w2, b2):
    """x_nchw: (N, 64, H, W) float32. Returns (N, 64, H//2, W//2) float32 (NCHW)."""
    N, Cin, H, W = x_nchw.shape
    assert Cin == C and H % 2 == 0 and W % 2 == 0
    # Whole-image block per grid step; fine for the sizes this module is used at.
    # TODO(synk): row-tile (with a 3-row input halo) for large H, W so the working
    #             set stays within v7x's 64 MiB VMEM.
    assert (H + 4) * (W + 4) * C * 4 <= 8 * 1024 * 1024, "image too large for whole-image tile"
    Ho, Wo = H // 2, W // 2

    # NHWC bf16 activations (MXU-native); zero-pad by 1 for the 3x3 conv.
    # transpose + convert + pad fuse into one XLA op producing the kernel input.
    x = jnp.transpose(x_nchw, (0, 2, 3, 1)).astype(jnp.bfloat16)
    xp = jnp.pad(x, ((0, 0), (1, 1), (1, 1), (0, 0)))            # (N, H+2, W+2, C)

    # PyTorch weights (Cout, Cin, kh, kw) -> (kh, kw*Cin, Cout), bf16.
    w1k = jnp.transpose(w1, (2, 3, 1, 0)).reshape(3, 3 * C, C).astype(jnp.bfloat16)
    w2k = jnp.transpose(w2, (2, 3, 1, 0)).reshape(5, 5 * C, C).astype(jnp.bfloat16)
    b1k = b1.reshape(1, C).astype(jnp.float32)
    b2k = b2.reshape(1, C).astype(jnp.float32)

    out = pl.pallas_call(
        functools.partial(_down4_kernel, H=H, W=W),
        out_shape=jax.ShapeDtypeStruct((N, Ho, Wo * C), jnp.float32),
        grid_spec=pltpu.PrefetchScalarGridSpec(
            num_scalar_prefetch=0,
            grid=(N,),
            in_specs=[
                pl.BlockSpec((1, H + 2, W + 2, C), lambda n: (n, 0, 0, 0)),
                # weights / biases: same block every step -> Pallas keeps them resident
                pl.BlockSpec((3, 3 * C, C), lambda n: (0, 0, 0)),
                pl.BlockSpec((1, C), lambda n: (0, 0)),
                pl.BlockSpec((5, 5 * C, C), lambda n: (0, 0, 0)),
                pl.BlockSpec((1, C), lambda n: (0, 0)),
            ],
            out_specs=pl.BlockSpec((1, Ho, Wo * C), lambda n: (n, 0, 0)),
            scratch_shapes=[pltpu.VMEM((H + 4, W + 4, C), jnp.bfloat16)],
        ),
        compiler_params=pltpu.CompilerParams(
            dimension_semantics=("parallel",)),
    )(xp, w1k, b1k, w2k, b2k)

    out = out.reshape(N, Ho, Wo, C)
    return jnp.transpose(out, (0, 3, 1, 2))                      # back to NCHW


# ----------------------- pure-JAX f32 reference for sanity check -----------------------
def _reference(x_nchw, w1, b1, w2, b2):
    dn = jax.lax.conv_dimension_numbers(x_nchw.shape, w1.shape,
                                        ("NCHW", "OIHW", "NCHW"))
    y = jax.lax.conv_general_dilated(x_nchw, w1, (1, 1), ((1, 1), (1, 1)),
                                     dimension_numbers=dn)
    y = jnp.maximum(y + b1.reshape(1, C, 1, 1), 0.0)
    y = jax.lax.conv_general_dilated(y, w2, (1, 1), ((2, 2), (2, 2)),
                                     dimension_numbers=dn)
    y = jnp.maximum(y + b2.reshape(1, C, 1, 1), 0.0)
    N, Cc, H, W = y.shape
    y = y.reshape(N, Cc, H // 2, 2, W // 2, 2)
    return jnp.max(y, axis=(3, 5))


if __name__ == "__main__":
    key = jax.random.PRNGKey(0)
    k_x, k_w1, k_b1, k_w2, k_b2 = jax.random.split(key, 5)

    N, H, W = 2, 16, 16
    x = jax.random.normal(k_x, (N, C, H, W), jnp.float32)

    # deterministic parameter init (PyTorch shapes: Conv2d weight (Cout, Cin, kh, kw))
    w1 = jax.random.normal(k_w1, (C, C, 3, 3), jnp.float32) * 0.05
    b1 = jax.random.normal(k_b1, (C,), jnp.float32) * 0.05
    w2 = jax.random.normal(k_w2, (C, C, 5, 5), jnp.float32) * 0.05
    b2 = jax.random.normal(k_b2, (C,), jnp.float32) * 0.05

    out = jax.block_until_ready(down4_forward(x, w1, b1, w2, b2))
    ref = jax.block_until_ready(_reference(x, w1, b1, w2, b2))

    assert out.shape == (N, C, H // 2, W // 2), out.shape
    # bf16 MXU inputs (f32 accumulation) -> relaxed inference tolerance vs. f32 reference.
    assert jnp.allclose(out, ref, atol=5e-2, rtol=5e-2), \
        float(jnp.max(jnp.abs(out - ref)))
    print("KERNEL_OK")
</pallas_src>

<mosaic_0001>
module attributes {stable_mosaic.version = 11 : i64} {
  func.func @_down4_kernel(%arg0: i32, %arg1: memref<1x18x18x64xbf16, #tpu.memory_space<vmem>>, %arg2: memref<3x192x64xbf16, #tpu.memory_space<vmem>>, %arg3: memref<1x64xf32, #tpu.memory_space<vmem>>, %arg4: memref<5x320x64xbf16, #tpu.memory_space<vmem>>, %arg5: memref<1x64xf32, #tpu.memory_space<vmem>>, %arg6: memref<1x8x512xf32, #tpu.memory_space<vmem>>, %arg7: memref<20x20x64xbf16, #tpu.memory_space<vmem>>) attributes {dimension_semantics = [#tpu.dimension_semantics<parallel>], iteration_bounds = array<i64: 2>, scalar_prefetch = 0 : i64, scratch_operands = 1 : i64, tpu.core_type = #tpu.core_type<tc>, window_params = [{transform_indices = @transform_0, window_bounds = array<i64: 1, 18, 18, 64>}, {pipeline_mode = #tpu.pipeline_mode<synchronous>, transform_indices = @transform_1, window_bounds = array<i64: 3, 192, 64>}, {pipeline_mode = #tpu.pipeline_mode<synchronous>, transform_indices = @transform_2, window_bounds = array<i64: 1, 64>}, {pipeline_mode = #tpu.pipeline_mode<synchronous>, transform_indices = @transform_3, window_bounds = array<i64: 5, 320, 64>}, {pipeline_mode = #tpu.pipeline_mode<synchronous>, transform_indices = @transform_4, window_bounds = array<i64: 1, 64>}, {transform_indices = @transform_5, window_bounds = array<i64: 1, 8, 512>}]} {
    %c0 = arith.constant 0 : index
    %c0_0 = arith.constant 0 : index
    %c0_1 = arith.constant 0 : index
    %c0_2 = arith.constant 0 : index
    %0 = vector.load %arg1[%c0, %c0_0, %c0_1, %c0_2] : memref<1x18x18x64xbf16, #tpu.memory_space<vmem>>, vector<1x18x18x64xbf16>
    %1 = vector.shape_cast %0 : vector<1x18x18x64xbf16> to vector<18x18x64xbf16>
    %cst = arith.constant 0.000000e+00 : bf16
    %2 = vector.broadcast %cst : bf16 to vector<20x20x64xbf16>
    %c0_3 = arith.constant 0 : index
    %c0_4 = arith.constant 0 : index
    %c0_5 = arith.constant 0 : index
    %3 = vector.load %arg7[%c0_3, %c0_4, %c0_5] : memref<20x20x64xbf16, #tpu.memory_space<vmem>>, vector<20x20x64xbf16>
    tpu.vector_store %arg7[%c0_3, %c0_4, %c0_5], %2 {strides = array<i32>} : memref<20x20x64xbf16, #tpu.memory_space<vmem>>, vector<20x20x64xbf16>,
    %4 = vector.extract_strided_slice %1 {offsets = [0, 0, 0], sizes = [18, 16, 64], strides = [1, 1, 1]} : vector<18x18x64xbf16> to vector<18x16x64xbf16>
    %5 = vector.extract_strided_slice %1 {offsets = [0, 1, 0], sizes = [18, 16, 64], strides = [1, 1, 1]} : vector<18x18x64xbf16> to vector<18x16x64xbf16>
    %6 = vector.extract_strided_slice %1 {offsets = [0, 2, 0], sizes = [18, 16, 64], strides = [1, 1, 1]} : vector<18x18x64xbf16> to vector<18x16x64xbf16>
    %7 = tpu.concatenate %4, %5, %6 in 2 : vector<18x16x64xbf16>, vector<18x16x64xbf16>, vector<18x16x64xbf16> -> vector<18x16x192xbf16>
    %8 = vector.extract_strided_slice %7 {offsets = [0, 0, 0], sizes = [16, 16, 192], strides = [1, 1, 1]} : vector<18x16x192xbf16> to vector<16x16x192xbf16>
    %9 = vector.shape_cast %8 : vector<16x16x192xbf16> to vector<256x192xbf16>
    %c0_6 = arith.constant 0 : index
    %c0_7 = arith.constant 0 : index
    %c0_8 = arith.constant 0 : index
    %10 = vector.load %arg2[%c0_6, %c0_7, %c0_8] : memref<3x192x64xbf16, #tpu.memory_space<vmem>>, vector<1x192x64xbf16>
    %11 = vector.shape_cast %10 : vector<1x192x64xbf16> to vector<192x64xbf16>
    %cst_9 = arith.constant dense<0.000000e+00> : vector<256x64xf32>
    %12 = tpu.matmul %9, %11, %cst_9 {dimension_numbers = #tpu.dot_dimension_numbers<[1], [0], [0], [1], [0, 0, 1, 1], [], []>} : vector<256x192xbf16>, vector<192x64xbf16>, vector<256x64xf32> -> vector<256x64xf32>
    %13 = vector.extract_strided_slice %7 {offsets = [1, 0, 0], sizes = [16, 16, 192], strides = [1, 1, 1]} : vector<18x16x192xbf16> to vector<16x16x192xbf16>
    %14 = vector.shape_cast %13 : vector<16x16x192xbf16> to vector<256x192xbf16>
    %c1 = arith.constant 1 : index
    %c0_10 = arith.constant 0 : index
    %c0_11 = arith.constant 0 : index
    %15 = vector.load %arg2[%c1, %c0_10, %c0_11] : memref<3x192x64xbf16, #tpu.memory_space<vmem>>, vector<1x192x64xbf16>
    %16 = vector.shape_cast %15 : vector<1x192x64xbf16> to vector<192x64xbf16>
    %cst_12 = arith.constant dense<0.000000e+00> : vector<256x64xf32>
    %17 = tpu.matmul %14, %16, %cst_12 {dimension_numbers = #tpu.dot_dimension_numbers<[1], [0], [0], [1], [0, 0, 1, 1], [], []>} : vector<256x192xbf16>, vector<192x64xbf16>, vector<256x64xf32> -> vector<256x64xf32>
    %18 = arith.addf %12, %17 : vector<256x64xf32>
    %19 = vector.extract_strided_slice %7 {offsets = [2, 0, 0], sizes = [16, 16, 192], strides = [1, 1, 1]} : vector<18x16x192xbf16> to vector<16x16x192xbf16>
    %20 = vector.shape_cast %19 : vector<16x16x192xbf16> to vector<256x192xbf16>
    %c2 = arith.constant 2 : index
    %c0_13 = arith.constant 0 : index
    %c0_14 = arith.constant 0 : index
    %21 = vector.load %arg2[%c2, %c0_13, %c0_14] : memref<3x192x64xbf16, #tpu.memory_space<vmem>>, vector<1x192x64xbf16>
    %22 = vector.shape_cast %21 : vector<1x192x64xbf16> to vector<192x64xbf16>
    %cst_15 = arith.constant dense<0.000000e+00> : vector<256x64xf32>
    %23 = tpu.matmul %20, %22, %cst_15 {dimension_numbers = #tpu.dot_dimension_numbers<[1], [0], [0], [1], [0, 0, 1, 1], [], []>} : vector<256x192xbf16>, vector<192x64xbf16>, vector<256x64xf32> -> vector<256x64xf32>
    %24 = arith.addf %18, %23 : vector<256x64xf32>
    %c0_16 = arith.constant 0 : index
    %c0_17 = arith.constant 0 : index
    %25 = vector.load %arg3[%c0_16, %c0_17] : memref<1x64xf32, #tpu.memory_space<vmem>>, vector<1x64xf32>
    %26 = vector.broadcast %25 : vector<1x64xf32> to vector<256x64xf32>
    %27 = arith.addf %24, %26 : vector<256x64xf32>
    %cst_18 = arith.constant 0.000000e+00 : f32
    %28 = vector.broadcast %cst_18 : f32 to vector<256x64xf32>
    %29 = arith.maximumf %27, %28 : vector<256x64xf32>
    %30 = arith.truncf %29 : vector<256x64xf32> to vector<256x64xbf16>
    %31 = vector.shape_cast %30 : vector<256x64xbf16> to vector<16x16x64xbf16>
    %c2_19 = arith.constant 2 : index
    %c2_20 = arith.constant 2 : index
    %c0_21 = arith.constant 0 : index
    %32 = vector.load %arg7[%c2_19, %c2_20, %c0_21] : memref<20x20x64xbf16, #tpu.memory_space<vmem>>, vector<16x16x64xbf16>
    tpu.vector_store %arg7[%c2_19, %c2_20, %c0_21], %31 {strides = array<i32>} : memref<20x20x64xbf16, #tpu.memory_space<vmem>>, vector<16x16x64xbf16>,
    %c0_22 = arith.constant 0 : index
    %c0_23 = arith.constant 0 : index
    %c0_24 = arith.constant 0 : index
    %33 = vector.load %arg7[%c0_22, %c0_23, %c0_24] : memref<20x20x64xbf16, #tpu.memory_space<vmem>>, vector<20x16x64xbf16>
    %c0_25 = arith.constant 0 : index
    %c1_26 = arith.constant 1 : index
    %c0_27 = arith.constant 0 : index
    %34 = vector.load %arg7[%c0_25, %c1_26, %c0_27] : memref<20x20x64xbf16, #tpu.memory_space<vmem>>, vector<20x16x64xbf16>
    %c0_28 = arith.constant 0 : index
    %c2_29 = arith.constant 2 : index
    %c0_30 = arith.constant 0 : index
    %35 = vector.load %arg7[%c0_28, %c2_29, %c0_30] : memref<20x20x64xbf16, #tpu.memory_space<vmem>>, vector<20x16x64xbf16>
    %c0_31 = arith.constant 0 : index
    %c3 = arith.constant 3 : index
    %c0_32 = arith.constant 0 : index
    %36 = vector.load %arg7[%c0_31, %c3, %c0_32] : memref<20x20x64xbf16, #tpu.memory_space<vmem>>, vector<20x16x64xbf16>
    %c0_33 = arith.constant 0 : index
    %c4 = arith.constant 4 : index
    %c0_34 = arith.constant 0 : index
    %37 = vector.load %arg7[%c0_33, %c4, %c0_34] : memref<20x20x64xbf16, #tpu.memory_space<vmem>>, vector<20x16x64xbf16>
    %38 = tpu.concatenate %33, %34, %35, %36, %37 in 2 : vector<20x16x64xbf16>, vector<20x16x64xbf16>, vector<20x16x64xbf16>, vector<20x16x64xbf16>, vector<20x16x64xbf16> -> vector<20x16x320xbf16>
    %39 = vector.extract_strided_slice %38 {offsets = [0, 0, 0], sizes = [16, 16, 320], strides = [1, 1, 1]} : vector<20x16x320xbf16> to vector<16x16x320xbf16>
    %40 = vector.shape_cast %39 : vector<16x16x320xbf16> to vector<256x320xbf16>
    %c0_35 = arith.constant 0 : index
    %c0_36 = arith.constant 0 : index
    %c0_37 = arith.constant 0 : index
    %41 = vector.load %arg4[%c0_35, %c0_36, %c0_37] : memref<5x320x64xbf16, #tpu.memory_space<vmem>>, vector<1x320x64xbf16>
    %42 = vector.shape_cast %41 : vector<1x320x64xbf16> to vector<320x64xbf16>
    %cst_38 = arith.constant dense<0.000000e+00> : vector<256x64xf32>
    %43 = tpu.matmul %40, %42, %cst_38 {dimension_numbers = #tpu.dot_dimension_numbers<[1], [0], [0], [1], [0, 0, 1, 1], [], []>} : vector<256x320xbf16>, vector<320x64xbf16>, vector<256x64xf32> -> vector<256x64xf32>
    %44 = vector.extract_strided_slice %38 {offsets = [1, 0, 0], sizes = [16, 16, 320], strides = [1, 1, 1]} : vector<20x16x320xbf16> to vector<16x16x320xbf16>
    %45 = vector.shape_cast %44 : vector<16x16x320xbf16> to vector<256x320xbf16>
    %c1_39 = arith.constant 1 : index
    %c0_40 = arith.constant 0 : index
    %c0_41 = arith.constant 0 : index
    %46 = vector.load %arg4[%c1_39, %c0_40, %c0_41] : memref<5x320x64xbf16, #tpu.memory_space<vmem>>, vector<1x320x64xbf16>
    %47 = vector.shape_cast %46 : vector<1x320x64xbf16> to vector<320x64xbf16>
    %cst_42 = arith.constant dense<0.000000e+00> : vector<256x64xf32>
    %48 = tpu.matmul %45, %47, %cst_42 {dimension_numbers = #tpu.dot_dimension_numbers<[1], [0], [0], [1], [0, 0, 1, 1], [], []>} : vector<256x320xbf16>, vector<320x64xbf16>, vector<256x64xf32> -> vector<256x64xf32>
    %49 = arith.addf %43, %48 : vector<256x64xf32>
    %50 = vector.extract_strided_slice %38 {offsets = [2, 0, 0], sizes = [16, 16, 320], strides = [1, 1, 1]} : vector<20x16x320xbf16> to vector<16x16x320xbf16>
    %51 = vector.shape_cast %50 : vector<16x16x320xbf16> to vector<256x320xbf16>
    %c2_43 = arith.constant 2 : index
    %c0_44 = arith.constant 0 : index
    %c0_45 = arith.constant 0 : index
    %52 = vector.load %arg4[%c2_43, %c0_44, %c0_45] : memref<5x320x64xbf16, #tpu.memory_space<vmem>>, vector<1x320x64xbf16>
    %53 = vector.shape_cast %52 : vector<1x320x64xbf16> to vector<320x64xbf16>
    %cst_46 = arith.constant dense<0.000000e+00> : vector<256x64xf32>
    %54 = tpu.matmul %51, %53, %cst_46 {dimension_numbers = #tpu.dot_dimension_numbers<[1], [0], [0], [1], [0, 0, 1, 1], [], []>} : vector<256x320xbf16>, vector<320x64xbf16>, vector<256x64xf32> -> vector<256x64xf32>
    %55 = arith.addf %49, %54 : vector<256x64xf32>
    %56 = vector.extract_strided_slice %38 {offsets = [3, 0, 0], sizes = [16, 16, 320], strides = [1, 1, 1]} : vector<20x16x320xbf16> to vector<16x16x320xbf16>
    %57 = vector.shape_cast %56 : vector<16x16x320xbf16> to vector<256x320xbf16>
    %c3_47 = arith.constant 3 : index
    %c0_48 = arith.constant 0 : index
    %c0_49 = arith.constant 0 : index
    %58 = vector.load %arg4[%c3_47, %c0_48, %c0_49] : memref<5x320x64xbf16, #tpu.memory_space<vmem>>, vector<1x320x64xbf16>
    %59 = vector.shape_cast %58 : vector<1x320x64xbf16> to vector<320x64xbf16>
    %cst_50 = arith.constant dense<0.000000e+00> : vector<256x64xf32>
    %60 = tpu.matmul %57, %59, %cst_50 {dimension_numbers = #tpu.dot_dimension_numbers<[1], [0], [0], [1], [0, 0, 1, 1], [], []>} : vector<256x320xbf16>, vector<320x64xbf16>, vector<256x64xf32> -> vector<256x64xf32>
    %61 = arith.addf %55, %60 : vector<256x64xf32>
    %62 = vector.extract_strided_slice %38 {offsets = [4, 0, 0], sizes = [16, 16, 320], strides = [1, 1, 1]} : vector<20x16x320xbf16> to vector<16x16x320xbf16>
    %63 = vector.shape_cast %62 : vector<16x16x320xbf16> to vector<256x320xbf16>
    %c4_51 = arith.constant 4 : index
    %c0_52 = arith.constant 0 : index
    %c0_53 = arith.constant 0 : index
    %64 = vector.load %arg4[%c4_51, %c0_52, %c0_53] : memref<5x320x64xbf16, #tpu.memory_space<vmem>>, vector<1x320x64xbf16>
    %65 = vector.shape_cast %64 : vector<1x320x64xbf16> to vector<320x64xbf16>
    %cst_54 = arith.constant dense<0.000000e+00> : vector<256x64xf32>
    %66 = tpu.matmul %63, %65, %cst_54 {dimension_numbers = #tpu.dot_dimension_numbers<[1], [0], [0], [1], [0, 0, 1, 1], [], []>} : vector<256x320xbf16>, vector<320x64xbf16>, vector<256x64xf32> -> vector<256x64xf32>
    %67 = arith.addf %61, %66 : vector<256x64xf32>
    %c0_55 = arith.constant 0 : index
    %c0_56 = arith.constant 0 : index
    %68 = vector.load %arg5[%c0_55, %c0_56] : memref<1x64xf32, #tpu.memory_space<vmem>>, vector<1x64xf32>
    %69 = vector.broadcast %68 : vector<1x64xf32> to vector<256x64xf32>
    %70 = arith.addf %67, %69 : vector<256x64xf32>
    %cst_57 = arith.constant 0.000000e+00 : f32
    %71 = vector.broadcast %cst_57 : f32 to vector<256x64xf32>
    %72 = arith.maximumf %70, %71 : vector<256x64xf32>
    %73 = vector.shape_cast %72 : vector<256x64xf32> to vector<8x2x8x2x64xf32>
    %cst_58 = arith.constant dense<0xFF800000> : vector<8x8x64xf32>
    %74 = vector.multi_reduction <maximumf>, %73, %cst_58 [1, 3] : vector<8x2x8x2x64xf32> to vector<8x8x64xf32>
    %75 = vector.shape_cast %74 : vector<8x8x64xf32> to vector<8x512xf32>
    %c0_59 = arith.constant 0 : index
    %c0_60 = arith.constant 0 : index
    %c0_61 = arith.constant 0 : index
    %76 = vector.load %arg6[%c0_59, %c0_60, %c0_61] : memref<1x8x512xf32, #tpu.memory_space<vmem>>, vector<1x8x512xf32>
    %77 = vector.shape_cast %76 : vector<1x8x512xf32> to vector<8x512xf32>
    %78 = vector.shape_cast %75 : vector<8x512xf32> to vector<1x8x512xf32>
    tpu.vector_store %arg6[%c0_59, %c0_60, %c0_61], %78 {strides = array<i32>} : memref<1x8x512xf32, #tpu.memory_space<vmem>>, vector<1x8x512xf32>,
    return
  }
  func.func @transform_0(%arg0: i32) -> (i32, i32, i32, i32) {
    %c0_i32 = arith.constant 0 : i32
    %c0_i32_0 = arith.constant 0 : i32
    %c0_i32_1 = arith.constant 0 : i32
    %c0_i32_2 = arith.constant 0 : i32
    return %arg0, %c0_i32, %c0_i32_0, %c0_i32_1 : i32, i32, i32, i32
  }
  func.func @transform_1(%arg0: i32) -> (i32, i32, i32) {
    %c0_i32 = arith.constant 0 : i32
    %c0_i32_0 = arith.constant 0 : i32
    %c0_i32_1 = arith.constant 0 : i32
    %c0_i32_2 = arith.constant 0 : i32
    return %c0_i32, %c0_i32_0, %c0_i32_1 : i32, i32, i32
  }
  func.func @transform_2(%arg0: i32) -> (i32, i32) {
    %c0_i32 = arith.constant 0 : i32
    %c0_i32_0 = arith.constant 0 : i32
    %c0_i32_1 = arith.constant 0 : i32
    return %c0_i32, %c0_i32_0 : i32, i32
  }
  func.func @transform_3(%arg0: i32) -> (i32, i32, i32) {
    %c0_i32 = arith.constant 0 : i32
    %c0_i32_0 = arith.constant 0 : i32
    %c0_i32_1 = arith.constant 0 : i32
    %c0_i32_2 = arith.constant 0 : i32
    return %c0_i32, %c0_i32_0, %c0_i32_1 : i32, i32, i32
  }
  func.func @transform_4(%arg0: i32) -> (i32, i32) {
    %c0_i32 = arith.constant 0 : i32
    %c0_i32_0 = arith.constant 0 : i32
    %c0_i32_1 = arith.constant 0 : i32
    return %c0_i32, %c0_i32_0 : i32, i32
  }
  func.func @transform_5(%arg0: i32) -> (i32, i32, i32) {
    %c0_i32 = arith.constant 0 : i32
    %c0_i32_0 = arith.constant 0 : i32
    %c0_i32_1 = arith.constant 0 : i32
    return %arg0, %c0_i32, %c0_i32_0 : i32, i32, i32
  }
}

</mosaic_0001>

<llo_original>
// kernel: tpu_custom_call.1
$region0: #{tpu_custom_call.1}
  #allocation0 [shape = 'u32[]', space=smem, size = 0x4, offset = 0x4, fixed_abs, tag = 'smem constant byte address 0x4 - core index']
  #allocation1 [shape = 'u32[144,128]{1,0:T(1,128)}', space=vmem, size = 0x12000, scoped, tag = 'internal scratch']
  #allocation2 [shape = 'bf16[20,20,64]{2,1,0:T(8,128)(2,1)}', space=vmem, size = 0x1e000, scoped, tag = 'scratch operand']
  %s0 = inlined_call_operand.vmem [shape: bf16[2,18,18,64], index: 0, kind: input, shape index: {}]
  %s1 = inlined_call_operand.vmem [shape: bf16[3,192,64], index: 1, kind: input, shape index: {}]
  %s2 = inlined_call_operand.vmem [shape: f32[1,64], index: 2, kind: input, shape index: {}]
  %s3 = inlined_call_operand.vmem [shape: bf16[5,320,64], index: 3, kind: input, shape index: {}]
  %s4 = inlined_call_operand.vmem [shape: f32[1,64], index: 4, kind: input, shape index: {}]
  %s5 = inlined_call_operand.hbm [shape: f32[2,8,512], index: 5, kind: output, shape index: {}]
  %s6 = sld [smem:[#allocation0]]
  $region53: #{tpu_custom_call.1} parent=0
    _
  %s8 = ssub.s32 1, %s6
  %s9 = scalar_select 0, %s8, %s6
  $region1: #{tpu_custom_call.1} parent=0
    #allocation3 [shape = 'u8[32768]{0}', space=vmem, size = 0x8000, scoped, tag = 'output window, operand 0']
    #allocation4 [shape = 's32[2]{0}', space=sflag, size = 0x8, scoped, tag = 'scoped memory for tpu_custom_call.1']
    %10 = vsyncpa [#allocation4], 0
    %s11 = scalar_lea.sflag [#allocation4], 1
    %12 = vsyncpa %s11, 0
    loop: start=0, step=1, limit=4
    $region2: #{tpu_custom_call.1} parent=1 // loop_pre_header
      _
    $region3: #{tpu_custom_call.1} parent=1 // loop_header
      %s14 = sphi 0, %s18
      %p15 = scmp.ge.s32.totalorder %s14, 4
      %s24 = sphi 0, %s26
      %s27 = sphi 0, %s24
      %s28 = sphi 0, %s27
      %s44 = sphi 0, %s28
      %s48 = sphi 0, %s48
      %s50 = sphi 0, %s48
      %s51 = sphi 0, %s50
      %s65 = sphi 0, %s51
      %s69 = sphi 0, %s69
      %s71 = sphi 0, %s69
      %s72 = sphi 0, %s71
      %s86 = sphi 0, %s72
      %s90 = sphi 0, %s90
      %s92 = sphi 0, %s90
      %s93 = sphi 0, %s92
      %s107 = sphi 0, %s93
      %s111 = sphi 0, %s111
      %s113 = sphi 0, %s111
      %s114 = sphi 0, %s113
      %s128 = sphi 0, %s114
      %s134 = sphi 0, %s136
      %s137 = sphi 0, %s134
      %s138 = sphi 0, %s137
      %s154 = sphi 0, %s138
    $region4: #{tpu_custom_call.1} parent=1 // loop_header_branch
      %17 = sbr.rel (%p15) target = $region8
    $region5: #{tpu_custom_call.1} parent=1 // loop_body
      %s19 = ssub.s32 %s14, 1
      %s20 = ssub.s32 %s14, 2
      %s21 = sadd.s32 %s14, 1
      %s22 = ssub.s32 %s14, %s21
      %p23 = scmp.eq.s32.totalorder %s22, 0
      %s25 = sadd.s32 %s24, 1
      %s26 = scalar_select %p23, %s24, %s25
      %p29 = pneg %p23
      %p30 = scmp.eq.s32.totalorder %s14, 1
      %p31 = por %p29, %p30
      %p32 = scmp.ne.s32.totalorder %s24, %s27
      %p33 = scmp.eq.s32.totalorder %s14, 0
      %p34 = por %p32, %p33
      %p35 = scmp.ne.s32.totalorder %s24, %s27
      %p36 = scmp.eq.s32.totalorder %s19, 1
      %p37 = por %p35, %p36
      %p38 = scmp.ne.s32.totalorder %s27, %s28
      %p39 = scmp.eq.s32.totalorder %s19, 0
      %p40 = por %p38, %p39
      %p41 = scmp.ne.s32.totalorder %s27, %s28
      %p42 = scmp.eq.s32.totalorder %s20, 1
      %p43 = por %p41, %p42
      %p45 = scmp.ne.s32.totalorder %s28, %s44
      %p46 = scmp.eq.s32.totalorder %s20, 0
      %p47 = por %p45, %p46
      %s49 = sadd.s32 %s48, 1
      %p52 = scmp.eq.s32.totalorder %s14, 1
      %p53 = scmp.ne.s32.totalorder %s48, %s50
      %p54 = scmp.eq.s32.totalorder %s14, 0
      %p55 = por %p53, %p54
      %p56 = scmp.ne.s32.totalorder %s48, %s50
      %p57 = scmp.eq.s32.totalorder %s19, 1
      %p58 = por %p56, %p57
      %p59 = scmp.ne.s32.totalorder %s50, %s51
      %p60 = scmp.eq.s32.totalorder %s19, 0
      %p61 = por %p59, %p60
      %p62 = scmp.ne.s32.totalorder %s50, %s51
      %p63 = scmp.eq.s32.totalorder %s20, 1
      %p64 = por %p62, %p63
      %p66 = scmp.ne.s32.totalorder %s51, %s65
      %p67 = scmp.eq.s32.totalorder %s20, 0
      %p68 = por %p66, %p67
      %s70 = sadd.s32 %s69, 1
      %p73 = scmp.eq.s32.totalorder %s14, 1
      %p74 = scmp.ne.s32.totalorder %s69, %s71
      %p75 = scmp.eq.s32.totalorder %s14, 0
      %p76 = por %p74, %p75
      %p77 = scmp.ne.s32.totalorder %s69, %s71
      %p78 = scmp.eq.s32.totalorder %s19, 1
      %p79 = por %p77, %p78
      %p80 = scmp.ne.s32.totalorder %s71, %s72
      %p81 = scmp.eq.s32.totalorder %s19, 0
      %p82 = por %p80, %p81
      %p83 = scmp.ne.s32.totalorder %s71, %s72
      %p84 = scmp.eq.s32.totalorder %s20, 1
      %p85 = por %p83, %p84
      %p87 = scmp.ne.s32.totalorder %s72, %s86
      %p88 = scmp.eq.s32.totalorder %s20, 0
      %p89 = por %p87, %p88
      %s91 = sadd.s32 %s90, 1
      %p94 = scmp.eq.s32.totalorder %s14, 1
      %p95 = scmp.ne.s32.totalorder %s90, %s92
      %p96 = scmp.eq.s32.totalorder %s14, 0
      %p97 = por %p95, %p96
      %p98 = scmp.ne.s32.totalorder %s90, %s92
      %p99 = scmp.eq.s32.totalorder %s19, 1
      %p100 = por %p98, %p99
      %p101 = scmp.ne.s32.totalorder %s92, %s93
      %p102 = scmp.eq.s32.totalorder %s19, 0
      %p103 = por %p101, %p102
      %p104 = scmp.ne.s32.totalorder %s92, %s93
      %p105 = scmp.eq.s32.totalorder %s20, 1
      %p106 = por %p104, %p105
      %p108 = scmp.ne.s32.totalorder %s93, %s107
      %p109 = scmp.eq.s32.totalorder %s20, 0
      %p110 = por %p108, %p109
      %s112 = sadd.s32 %s111, 1
      %p115 = scmp.eq.s32.totalorder %s14, 1
      %p116 = scmp.ne.s32.totalorder %s111, %s113
      %p117 = scmp.eq.s32.totalorder %s14, 0
      %p118 = por %p116, %p117
      %p119 = scmp.ne.s32.totalorder %s111, %s113
      %p120 = scmp.eq.s32.totalorder %s19, 1
      %p121 = por %p119, %p120
      %p122 = scmp.ne.s32.totalorder %s113, %s114
      %p123 = scmp.eq.s32.totalorder %s19, 0
      %p124 = por %p122, %p123
      %p125 = scmp.ne.s32.totalorder %s113, %s114
      %p126 = scmp.eq.s32.totalorder %s20, 1
      %p127 = por %p125, %p126
      %p129 = scmp.ne.s32.totalorder %s114, %s128
      %p130 = scmp.eq.s32.totalorder %s20, 0
      %p131 = por %p129, %p130
      %s132 = ssub.s32 %s14, %s21
      %p133 = scmp.eq.s32.totalorder %s132, 0
      %s135 = sadd.s32 %s134, 1
      %s136 = scalar_select %p133, %s134, %s135
      %p139 = pneg %p133
      %p140 = scmp.eq.s32.totalorder %s14, 1
      %p141 = por %p139, %p140
      %p142 = scmp.ne.s32.totalorder %s134, %s137
      %p143 = scmp.eq.s32.totalorder %s14, 0
      %p144 = por %p142, %p143
      %p145 = scmp.ne.s32.totalorder %s134, %s137
      %p146 = scmp.eq.s32.totalorder %s19, 1
      %p147 = por %p145, %p146
      %p148 = scmp.ne.s32.totalorder %s137, %s138
      %p149 = scmp.eq.s32.totalorder %s19, 0
      %p150 = por %p148, %p149
      %p151 = scmp.ne.s32.totalorder %s137, %s138
      %p152 = scmp.eq.s32.totalorder %s20, 1
      %p153 = por %p151, %p152
      %p155 = scmp.ne.s32.totalorder %s138, %s154
      %p156 = scmp.eq.s32.totalorder %s20, 0
      %p157 = por %p155, %p156
      %p158 = scmp.le.s32.totalorder 1, %s14
      %p159 = scmp.lt.s32.totalorder %s14, 3
      %p160 = pnand %p158, %p159
      %p161 = pneg %p160
      // Predicated region
      $region9: #{tpu_custom_call.1} parent=5 // pred_check
        _
      $region10: #{tpu_custom_call.1} parent=5 // pred_check_branch
        %163 = sbr.rel (%p160) target = $region12
      $region11: #{tpu_custom_call.1} parent=5 // pred_region
        %s164 = ssub.s32 %s14, 1
        // Predicated region
        $region13: #{tpu_custom_call.1} parent=11 // pred_check
          %p165 = pneg %p61
        $region14: #{tpu_custom_call.1} parent=11 // pred_check_branch
          %167 = sbr.rel (%p165) target = $region16
        $region15: #{tpu_custom_call.1} parent=11 // pred_region
          _
        $region16: #{tpu_custom_call.1} parent=11 // pred_fallthru
          _
        // Predicated region
        $region17: #{tpu_custom_call.1} parent=11 // pred_check
          %p168 = pneg %p82
        $region18: #{tpu_custom_call.1} parent=11 // pred_check_branch
          %170 = sbr.rel (%p168) target = $region20
        $region19: #{tpu_custom_call.1} parent=11 // pred_region
          _
        $region20: #{tpu_custom_call.1} parent=11 // pred_fallthru
          _
        // Predicated region
        $region21: #{tpu_custom_call.1} parent=11 // pred_check
          %p171 = pneg %p103
        $region22: #{tpu_custom_call.1} parent=11 // pred_check_branch
          %173 = sbr.rel (%p171) target = $region24
        $region23: #{tpu_custom_call.1} parent=11 // pred_region
          _
        $region24: #{tpu_custom_call.1} parent=11 // pred_fallthru
          _
        // Predicated region
        $region25: #{tpu_custom_call.1} parent=11 // pred_check
          %p174 = pneg %p124
        $region26: #{tpu_custom_call.1} parent=11 // pred_check_branch
          %176 = sbr.rel (%p174) target = $region28
        $region27: #{tpu_custom_call.1} parent=11 // pred_region
          _
        $region28: #{tpu_custom_call.1} parent=11 // pred_fallthru
          _
      $region12: #{tpu_custom_call.1} parent=5 // pred_fallthru
        _
      %p177 = scmp.lt.s32.totalorder %s14, 2
      // Predicated region
      $region29: #{tpu_custom_call.1} parent=5 // pred_check
        %p178 = pneg %p177
      $region30: #{tpu_custom_call.1} parent=5 // pred_check_branch
        %180 = sbr.rel (%p178) target = $region32
      $region31: #{tpu_custom_call.1} parent=5 // pred_region
        // Predicated region
        $region33: #{tpu_custom_call.1} parent=31 // pred_check
          %p181 = pneg %p34
        $region34: #{tpu_custom_call.1} parent=31 // pred_check_branch
          %183 = sbr.rel (%p181) target = $region36
        $region35: #{tpu_custom_call.1} parent=31 // pred_region
          %p184 = scmp.lt.s32.totalorder %s14, 1
          %s185 = scalar_select %p184, %s14, 1
          %s186 = smul.addr %s185, 54
          %s187 = smul.addr %s186, 4
          %s188 = scalar_lea.vmem %s0, %s187
        $region36: #{tpu_custom_call.1} parent=31 // pred_fallthru
          _
      $region32: #{tpu_custom_call.1} parent=5 // pred_fallthru
        _
      %p189 = scmp.le.s32.totalorder 1, %s14
      %p190 = scmp.lt.s32.totalorder %s14, 3
      %p191 = pnand %p189, %p190
      %p192 = pneg %p191
      // Predicated region
      $region37: #{tpu_custom_call.1} parent=5 // pred_check
        _
      $region38: #{tpu_custom_call.1} parent=5 // pred_check_branch
        %194 = sbr.rel (%p191) target = $region40
      $region39: #{tpu_custom_call.1} parent=5 // pred_region
        %s195 = ssub.s32 %s14, 1
        %p196 = scmp.lt.s32.totalorder %s19, 1
        %s197 = scalar_select %p196, %s19, 1
        %s198 = smul.addr %s197, 54
        %s199 = smul.addr %s198, 4
        %s200 = scalar_lea.vmem %s0, %s199
        %p201 = pneg %p40
        %p202 = pneg %p37
        %p203 = pneg %p61
        %p204 = pneg %p58
        %p205 = pneg %p82
        %p206 = pneg %p79
        %p207 = pneg %p103
        %p208 = pneg %p100
        %p209 = pneg %p124
        %p210 = pneg %p121
        %p211 = pneg %p150
        %p212 = pneg %p147
        %s213 = sand.u32 %s137, 1
        %s214 = scalar_lea.sflag [#allocation4], %s213
        %s215 = sand.u32 %s137, 1
        %s216 = smul.addr %s215, 32
        %s217 = scalar_lea.vmem [#allocation3], %s216
        %p218 = scmp.lt.s32.totalorder %s19, 1
        %s219 = scalar_select %p218, %s19, 1
        %s220 = smul.addr %s219, 54
        %s221 = smul.addr %s220, 4
        %s222 = scalar_lea.vmem %s0, %s221
        %v224 = vld [vmem:[%s222] sm:$0xf]
        %v225 = vld [vmem:[%s222 + $0x4] sm:$0xf]
        %v226 = vld [vmem:[%s222 + $0x8] sm:$0x1]
        %v227 = vld [vmem:[%s222 + $0xc] sm:$0xf]
        %v228 = vld [vmem:[%s222 + $0x10] sm:$0xf]
        %v229 = vld [vmem:[%s222 + $0x14] sm:$0x1]
        %v230 = vld [vmem:[%s222 + $0x18] sm:$0xf]
        %v231 = vld [vmem:[%s222 + $0x1c] sm:$0xf]
        %v232 = vld [vmem:[%s222 + $0x20] sm:$0x1]
        %v233 = vld [vmem:[%s222 + $0x24] sm:$0xf]
        %v234 = vld [vmem:[%s222 + $0x28] sm:$0xf]
        %v235 = vld [vmem:[%s222 + $0x2c] sm:$0x1]
        %v236 = vld [vmem:[%s222 + $0x30] sm:$0xf]
        %v237 = vld [vmem:[%s222 + $0x34] sm:$0xf]
        %v238 = vld [vmem:[%s222 + $0x38] sm:$0x1]
        %v239 = vld [vmem:[%s222 + $0x3c] sm:$0xf]
        %v240 = vld [vmem:[%s222 + $0x40] sm:$0xf]
        %v241 = vld [vmem:[%s222 + $0x44] sm:$0x1]
        %v242 = vld [vmem:[%s222 + $0x48] sm:$0xf]
        %v243 = vld [vmem:[%s222 + $0x4c] sm:$0xf]
        %v244 = vld [vmem:[%s222 + $0x50] sm:$0x1]
        %v245 = vld [vmem:[%s222 + $0x54] sm:$0xf]
        %v246 = vld [vmem:[%s222 + $0x58] sm:$0xf]
        %v247 = vld [vmem:[%s222 + $0x5c] sm:$0x1]
        %v248 = vld [vmem:[%s222 + $0x60] sm:$0xf]
        %v249 = vld [vmem:[%s222 + $0x64] sm:$0xf]
        %v250 = vld [vmem:[%s222 + $0x68] sm:$0x1]
        %v251 = vld [vmem:[%s222 + $0x6c] sm:$0xf]
        %v252 = vld [vmem:[%s222 + $0x70] sm:$0xf]
        %v253 = vld [vmem:[%s222 + $0x74] sm:$0x1]
        %v254 = vld [vmem:[%s222 + $0x78] sm:$0xf]
        %v255 = vld [vmem:[%s222 + $0x7c] sm:$0xf]
        %v256 = vld [vmem:[%s222 + $0x80] sm:$0x1]
        %v257 = vld [vmem:[%s222 + $0x84] sm:$0xf]
        %v258 = vld [vmem:[%s222 + $0x88] sm:$0xf]
        %v259 = vld [vmem:[%s222 + $0x8c] sm:$0x1]
        %v260 = vld [vmem:[%s222 + $0x90] sm:$0xf]
        %v261 = vld [vmem:[%s222 + $0x94] sm:$0xf]
        %v262 = vld [vmem:[%s222 + $0x98] sm:$0x1]
        %v263 = vld [vmem:[%s222 + $0x9c] sm:$0xf]
        %v264 = vld [vmem:[%s222 + $0xa0] sm:$0xf]
        %v265 = vld [vmem:[%s222 + $0xa4] sm:$0x1]
        %v266 = vld [vmem:[%s222 + $0xa8] sm:$0xf]
        %v267 = vld [vmem:[%s222 + $0xac] sm:$0xf]
        %v268 = vld [vmem:[%s222 + $0xb0] sm:$0x1]
        %v269 = vld [vmem:[%s222 + $0xb4] sm:$0xf]
        %v270 = vld [vmem:[%s222 + $0xb8] sm:$0xf]
        %v271 = vld [vmem:[%s222 + $0xbc] sm:$0x1]
        %v272 = vld [vmem:[%s222 + $0xc0] sm:$0xf]
        %v273 = vld [vmem:[%s222 + $0xc4] sm:$0xf]
        %v274 = vld [vmem:[%s222 + $0xc8] sm:$0x1]
        %v275 = vld [vmem:[%s222 + $0xcc] sm:$0xf]
        %v276 = vld [vmem:[%s222 + $0xd0] sm:$0xf]
        %v277 = vld [vmem:[%s222 + $0xd4] sm:$0x1]
        %vm278 = vcmask 519168
        %279 = vst.msk [vmem:[#allocation2] sm:$0xf] %vm278, 0
        %280 = vst.msk [vmem:[#allocation2 + $0x4] sm:$0xf] %vm278, 0
        %vm281 = vcmask 517120
        %282 = vst.msk [vmem:[#allocation2 + $0x8] sm:$0x3] %vm281, 0
        %283 = vst.msk [vmem:[#allocation2 + $0xc] sm:$0xf] %vm278, 0
        %284 = vst.msk [vmem:[#allocation2 + $0x10] sm:$0xf] %vm278, 0
        %285 = vst.msk [vmem:[#allocation2 + $0x14] sm:$0x3] %vm281, 0
        %286 = vst.msk [vmem:[#allocation2 + $0x18] sm:$0xf] %vm278, 0
        %287 = vst.msk [vmem:[#allocation2 + $0x1c] sm:$0xf] %vm278, 0
        %288 = vst.msk [vmem:[#allocation2 + $0x20] sm:$0x3] %vm281, 0
        %289 = vst.msk [vmem:[#allocation2 + $0x24] sm:$0xf] %vm278, 0
        %290 = vst.msk [vmem:[#allocation2 + $0x28] sm:$0xf] %vm278, 0
        %291 = vst.msk [vmem:[#allocation2 + $0x2c] sm:$0x3] %vm281, 0
        %292 = vst.msk [vmem:[#allocation2 + $0x30] sm:$0xf] %vm278, 0
        %293 = vst.msk [vmem:[#allocation2 + $0x34] sm:$0xf] %vm278, 0
        %294 = vst.msk [vmem:[#allocation2 + $0x38] sm:$0x3] %vm281, 0
        %295 = vst.msk [vmem:[#allocation2 + $0x3c] sm:$0xf] %vm278, 0
        %296 = vst.msk [vmem:[#allocation2 + $0x40] sm:$0xf] %vm278, 0
        %297 = vst.msk [vmem:[#allocation2 + $0x44] sm:$0x3] %vm281, 0
        %298 = vst.msk [vmem:[#allocation2 + $0x48] sm:$0xf] %vm278, 0
        %299 = vst.msk [vmem:[#allocation2 + $0x4c] sm:$0xf] %vm278, 0
        %300 = vst.msk [vmem:[#allocation2 + $0x50] sm:$0x3] %vm281, 0
        %301 = vst.msk [vmem:[#allocation2 + $0x54] sm:$0xf] %vm278, 0
        %302 = vst.msk [vmem:[#allocation2 + $0x58] sm:$0xf] %vm278, 0
        %303 = vst.msk [vmem:[#allocation2 + $0x5c] sm:$0x3] %vm281, 0
        %304 = vst.msk [vmem:[#allocation2 + $0x60] sm:$0xf] %vm278, 0
        %305 = vst.msk [vmem:[#allocation2 + $0x64] sm:$0xf] %vm278, 0
        %306 = vst.msk [vmem:[#allocation2 + $0x68] sm:$0x3] %vm281, 0
        %307 = vst.msk [vmem:[#allocation2 + $0x6c] sm:$0xf] %vm278, 0
        %308 = vst.msk [vmem:[#allocation2 + $0x70] sm:$0xf] %vm278, 0
        %309 = vst.msk [vmem:[#allocation2 + $0x74] sm:$0x3] %vm281, 0
        %310 = vst.msk [vmem:[#allocation2 + $0x78] sm:$0xf] %vm278, 0
        %311 = vst.msk [vmem:[#allocation2 + $0x7c] sm:$0xf] %vm278, 0
        %312 = vst.msk [vmem:[#allocation2 + $0x80] sm:$0x3] %vm281, 0
        %313 = vst.msk [vmem:[#allocation2 + $0x84] sm:$0xf] %vm278, 0
        %314 = vst.msk [vmem:[#allocation2 + $0x88] sm:$0xf] %vm278, 0
        %315 = vst.msk [vmem:[#allocation2 + $0x8c] sm:$0x3] %vm281, 0
        %316 = vst.msk [vmem:[#allocation2 + $0x90] sm:$0xf] %vm278, 0
        %317 = vst.msk [vmem:[#allocation2 + $0x94] sm:$0xf] %vm278, 0
        %318 = vst.msk [vmem:[#allocation2 + $0x98] sm:$0x3] %vm281, 0
        %319 = vst.msk [vmem:[#allocation2 + $0x9c] sm:$0xf] %vm278, 0
        %320 = vst.msk [vmem:[#allocation2 + $0xa0] sm:$0xf] %vm278, 0
        %321 = vst.msk [vmem:[#allocation2 + $0xa4] sm:$0x3] %vm281, 0
        %322 = vst.msk [vmem:[#allocation2 + $0xa8] sm:$0xf] %vm278, 0
        %323 = vst.msk [vmem:[#allocation2 + $0xac] sm:$0xf] %vm278, 0
        %324 = vst.msk [vmem:[#allocation2 + $0xb0] sm:$0x3] %vm281, 0
        %325 = vst.msk [vmem:[#allocation2 + $0xb4] sm:$0xf] %vm278, 0
        %326 = vst.msk [vmem:[#allocation2 + $0xb8] sm:$0xf] %vm278, 0
        %327 = vst.msk [vmem:[#allocation2 + $0xbc] sm:$0x3] %vm281, 0
        %328 = vst.msk [vmem:[#allocation2 + $0xc0] sm:$0xf] %vm278, 0
        %329 = vst.msk [vmem:[#allocation2 + $0xc4] sm:$0xf] %vm278, 0
        %330 = vst.msk [vmem:[#allocation2 + $0xc8] sm:$0x3] %vm281, 0
        %331 = vst.msk [vmem:[#allocation2 + $0xcc] sm:$0xf] %vm278, 0
        %332 = vst.msk [vmem:[#allocation2 + $0xd0] sm:$0xf] %vm278, 0
        %333 = vst.msk [vmem:[#allocation2 + $0xd4] sm:$0x3] %vm281, 0
        %334 = vst.msk [vmem:[#allocation2 + $0xd8] sm:$0xf] %vm278, 0
        %335 = vst.msk [vmem:[#allocation2 + $0xdc] sm:$0xf] %vm278, 0
        %336 = vst.msk [vmem:[#allocation2 + $0xe0] sm:$0x3] %vm281, 0
        %337 = vst.msk [vmem:[#allocation2 + $0xe4] sm:$0xf] %vm278, 0
        %338 = vst.msk [vmem:[#allocation2 + $0xe8] sm:$0xf] %vm278, 0
        %339 = vst.msk [vmem:[#allocation2 + $0xec] sm:$0x3] %vm281, 0
        %v376 = vunpack.c.l.b16 %v224
        %v377 = vunpack.c.l.b16 %v225
        %v378 = vunpack.c.l.b16 %v227
        %v379 = vunpack.c.l.b16 %v228
        %v380 = vunpack.c.l.b16 %v230
        %v381 = vunpack.c.l.b16 %v231
        %v382 = vunpack.c.l.b16 %v233
        %v383 = vunpack.c.l.b16 %v234
        %v384 = vunpack.c.l.b16 %v236
        %v385 = vunpack.c.l.b16 %v237
        %v386 = vunpack.c.l.b16 %v239
        %v387 = vunpack.c.l.b16 %v240
        %v388 = vunpack.c.l.b16 %v242
        %v389 = vunpack.c.l.b16 %v243
        %v390 = vunpack.c.l.b16 %v245
        %v391 = vunpack.c.l.b16 %v246
        %v392 = vunpack.c.l.b16 %v248
        %v393 = vunpack.c.l.b16 %v249
        %v394 = vunpack.c.l.b16 %v251
        %v395 = vunpack.c.l.b16 %v252
        %v396 = vunpack.c.l.b16 %v254
        %v397 = vunpack.c.l.b16 %v255
        %v398 = vunpack.c.l.b16 %v257
        %v399 = vunpack.c.l.b16 %v258
        %v400 = vunpack.c.l.b16 %v260
        %v401 = vunpack.c.l.b16 %v261
        %v402 = vunpack.c.l.b16 %v263
        %v403 = vunpack.c.l.b16 %v264
        %v404 = vunpack.c.l.b16 %v266
        %v405 = vunpack.c.l.b16 %v267
        %v406 = vunpack.c.l.b16 %v269
        %v407 = vunpack.c.l.b16 %v270
        %v408 = vunpack.c.l.b16 %v272
        %v409 = vunpack.c.l.b16 %v273
        %v410 = vunpack.c.l.b16 %v275
        %v411 = vunpack.c.l.b16 %v276
        %v412 = vpack.c.b16 %v377, %v376
        %v413 = vpack.c.b16 %v379, %v378
        %v414 = vpack.c.b16 %v381, %v380
        %v415 = vpack.c.b16 %v383, %v382
        %v416 = vpack.c.b16 %v385, %v384
        %v417 = vpack.c.b16 %v387, %v386
        %v418 = vpack.c.b16 %v389, %v388
        %v419 = vpack.c.b16 %v391, %v390
        %v420 = vpack.c.b16 %v393, %v392
        %v421 = vpack.c.b16 %v395, %v394
        %v422 = vpack.c.b16 %v397, %v396
        %v423 = vpack.c.b16 %v399, %v398
        %v424 = vpack.c.b16 %v401, %v400
        %v425 = vpack.c.b16 %v403, %v402
        %v426 = vpack.c.b16 %v405, %v404
        %v427 = vpack.c.b16 %v407, %v406
        %v428 = vpack.c.b16 %v409, %v408
        %v429 = vpack.c.b16 %v411, %v410
        %v448 = vunpack.c.l.b16 %v226
        %v449 = vunpack.c.l.b16 %v229
        %v450 = vunpack.c.l.b16 %v232
        %v451 = vunpack.c.l.b16 %v235
        %v452 = vunpack.c.l.b16 %v238
        %v453 = vunpack.c.l.b16 %v241
        %v454 = vunpack.c.l.b16 %v244
        %v455 = vunpack.c.l.b16 %v247
        %v456 = vunpack.c.l.b16 %v250
        %v457 = vunpack.c.l.b16 %v253
        %v458 = vunpack.c.l.b16 %v256
        %v459 = vunpack.c.l.b16 %v259
        %v460 = vunpack.c.l.b16 %v262
        %v461 = vunpack.c.l.b16 %v265
        %v462 = vunpack.c.l.b16 %v268
        %v463 = vunpack.c.l.b16 %v271
        %v464 = vunpack.c.l.b16 %v274
        %v465 = vunpack.c.l.b16 %v277
        %v466 = vpack.c.b16 %v448, %v448
        %v467 = vpack.c.b16 %v449, %v449
        %v468 = vpack.c.b16 %v450, %v450
        %v469 = vpack.c.b16 %v451, %v451
        %v470 = vpack.c.b16 %v452, %v452
        %v471 = vpack.c.b16 %v453, %v453
        %v472 = vpack.c.b16 %v454, %v454
        %v473 = vpack.c.b16 %v455, %v455
        %v474 = vpack.c.b16 %v456, %v456
        %v475 = vpack.c.b16 %v457, %v457
        %v476 = vpack.c.b16 %v458, %v458
        %v477 = vpack.c.b16 %v459, %v459
        %v478 = vpack.c.b16 %v460, %v460
        %v479 = vpack.c.b16 %v461, %v461
        %v480 = vpack.c.b16 %v462, %v462
        %v481 = vpack.c.b16 %v463, %v463
        %v482 = vpack.c.b16 %v464, %v464
        %v483 = vpack.c.b16 %v465, %v465
        %vm484 = vsmask.f32 7424
        %v486 = vshrl.u32 %v412, 16
        %v488 = vshll.u32 %v412, 16
        %v490 = vrot.slane %v488, 1
        %v491 = vor.u32 %v486, %v490
        %v493 = vshll.u32 %v466, 16
        %v495 = vrot.slane %v493, 1
        %v496 = vsel %vm484, %v491, %v495
        %v498 = vshrl.u32 %v413, 16
        %v500 = vshll.u32 %v413, 16
        %v502 = vrot.slane %v500, 1
        %v503 = vor.u32 %v498, %v502
        %v505 = vshll.u32 %v467, 16
        %v507 = vrot.slane %v505, 1
        %v508 = vsel %vm484, %v503, %v507
        %v510 = vshrl.u32 %v414, 16
        %v512 = vshll.u32 %v414, 16
        %v514 = vrot.slane %v512, 1
        %v515 = vor.u32 %v510, %v514
        %v517 = vshll.u32 %v468, 16
        %v519 = vrot.slane %v517, 1
        %v520 = vsel %vm484, %v515, %v519
        %v522 = vshrl.u32 %v415, 16
        %v524 = vshll.u32 %v415, 16
        %v526 = vrot.slane %v524, 1
        %v527 = vor.u32 %v522, %v526
        %v529 = vshll.u32 %v469, 16
        %v531 = vrot.slane %v529, 1
        %v532 = vsel %vm484, %v527, %v531
        %v534 = vshrl.u32 %v416, 16
        %v536 = vshll.u32 %v416, 16
        %v538 = vrot.slane %v536, 1
        %v539 = vor.u32 %v534, %v538
        %v541 = vshll.u32 %v470, 16
        %v543 = vrot.slane %v541, 1
        %v544 = vsel %vm484, %v539, %v543
        %v546 = vshrl.u32 %v417, 16
        %v548 = vshll.u32 %v417, 16
        %v550 = vrot.slane %v548, 1
        %v551 = vor.u32 %v546, %v550
        %v553 = vshll.u32 %v471, 16
        %v555 = vrot.slane %v553, 1
        %v556 = vsel %vm484, %v551, %v555
        %v558 = vshrl.u32 %v418, 16
        %v560 = vshll.u32 %v418, 16
        %v562 = vrot.slane %v560, 1
        %v563 = vor.u32 %v558, %v562
        %v565 = vshll.u32 %v472, 16
        %v567 = vrot.slane %v565, 1
        %v568 = vsel %vm484, %v563, %v567
        %v570 = vshrl.u32 %v419, 16
        %v572 = vshll.u32 %v419, 16
        %v574 = vrot.slane %v572, 1
        %v575 = vor.u32 %v570, %v574
        %v577 = vshll.u32 %v473, 16
        %v579 = vrot.slane %v577, 1
        %v580 = vsel %vm484, %v575, %v579
        %v582 = vshrl.u32 %v420, 16
        %v584 = vshll.u32 %v420, 16
        %v586 = vrot.slane %v584, 1
        %v587 = vor.u32 %v582, %v586
        %v589 = vshll.u32 %v474, 16
        %v591 = vrot.slane %v589, 1
        %v592 = vsel %vm484, %v587, %v591
        %v594 = vshrl.u32 %v421, 16
        %v596 = vshll.u32 %v421, 16
        %v598 = vrot.slane %v596, 1
        %v599 = vor.u32 %v594, %v598
        %v601 = vshll.u32 %v475, 16
        %v603 = vrot.slane %v601, 1
        %v604 = vsel %vm484, %v599, %v603
        %v606 = vshrl.u32 %v422, 16
        %v608 = vshll.u32 %v422, 16
        %v610 = vrot.slane %v608, 1
        %v611 = vor.u32 %v606, %v610
        %v613 = vshll.u32 %v476, 16
        %v615 = vrot.slane %v613, 1
        %v616 = vsel %vm484, %v611, %v615
        %v618 = vshrl.u32 %v423, 16
        %v620 = vshll.u32 %v423, 16
        %v622 = vrot.slane %v620, 1
        %v623 = vor.u32 %v618, %v622
        %v625 = vshll.u32 %v477, 16
        %v627 = vrot.slane %v625, 1
        %v628 = vsel %vm484, %v623, %v627
        %v630 = vshrl.u32 %v424, 16
        %v632 = vshll.u32 %v424, 16
        %v634 = vrot.slane %v632, 1
        %v635 = vor.u32 %v630, %v634
        %v637 = vshll.u32 %v478, 16
        %v639 = vrot.slane %v637, 1
        %v640 = vsel %vm484, %v635, %v639
        %v642 = vshrl.u32 %v425, 16
        %v644 = vshll.u32 %v425, 16
        %v646 = vrot.slane %v644, 1
        %v647 = vor.u32 %v642, %v646
        %v649 = vshll.u32 %v479, 16
        %v651 = vrot.slane %v649, 1
        %v652 = vsel %vm484, %v647, %v651
        %v654 = vshrl.u32 %v426, 16
        %v656 = vshll.u32 %v426, 16
        %v658 = vrot.slane %v656, 1
        %v659 = vor.u32 %v654, %v658
        %v661 = vshll.u32 %v480, 16
        %v663 = vrot.slane %v661, 1
        %v664 = vsel %vm484, %v659, %v663
        %v666 = vshrl.u32 %v427, 16
        %v668 = vshll.u32 %v427, 16
        %v670 = vrot.slane %v668, 1
        %v671 = vor.u32 %v666, %v670
        %v673 = vshll.u32 %v481, 16
        %v675 = vrot.slane %v673, 1
        %v676 = vsel %vm484, %v671, %v675
        %v678 = vshrl.u32 %v428, 16
        %v680 = vshll.u32 %v428, 16
        %v682 = vrot.slane %v680, 1
        %v683 = vor.u32 %v678, %v682
        %v685 = vshll.u32 %v482, 16
        %v687 = vrot.slane %v685, 1
        %v688 = vsel %vm484, %v683, %v687
        %v690 = vshrl.u32 %v429, 16
        %v692 = vshll.u32 %v429, 16
        %v694 = vrot.slane %v692, 1
        %v695 = vor.u32 %v690, %v694
        %v697 = vshll.u32 %v483, 16
        %v699 = vrot.slane %v697, 1
        %v700 = vsel %vm484, %v695, %v699
        %701 = vrot.lane.b32.xlu0 %v496, 64
        %v702 = vpop.permute.xlu0 %701
        %703 = vrot.lane.b32.xlu0 %v508, 64
        %v704 = vpop.permute.xlu0 %703
        %705 = vrot.lane.b32.xlu0 %v520, 64
        %v706 = vpop.permute.xlu0 %705
        %707 = vrot.lane.b32.xlu0 %v532, 64
        %v708 = vpop.permute.xlu0 %707
        %709 = vrot.lane.b32.xlu0 %v544, 64
        %v710 = vpop.permute.xlu0 %709
        %711 = vrot.lane.b32.xlu0 %v556, 64
        %v712 = vpop.permute.xlu0 %711
        %713 = vrot.lane.b32.xlu0 %v568, 64
        %v714 = vpop.permute.xlu0 %713
        %715 = vrot.lane.b32.xlu0 %v580, 64
        %v716 = vpop.permute.xlu0 %715
        %717 = vrot.lane.b32.xlu0 %v592, 64
        %v718 = vpop.permute.xlu0 %717
        %719 = vrot.lane.b32.xlu0 %v604, 64
        %v720 = vpop.permute.xlu0 %719
        %721 = vrot.lane.b32.xlu0 %v616, 64
        %v722 = vpop.permute.xlu0 %721
        %723 = vrot.lane.b32.xlu0 %v628, 64
        %v724 = vpop.permute.xlu0 %723
        %725 = vrot.lane.b32.xlu0 %v640, 64
        %v726 = vpop.permute.xlu0 %725
        %727 = vrot.lane.b32.xlu0 %v652, 64
        %v728 = vpop.permute.xlu0 %727
        %729 = vrot.lane.b32.xlu0 %v664, 64
        %v730 = vpop.permute.xlu0 %729
        %731 = vrot.lane.b32.xlu0 %v676, 64
        %v732 = vpop.permute.xlu0 %731
        %733 = vrot.lane.b32.xlu0 %v688, 64
        %v734 = vpop.permute.xlu0 %733
        %735 = vrot.lane.b32.xlu0 %v700, 64
        %v736 = vpop.permute.xlu0 %735
        %vm737 = vcmask 1046528
        %v738 = vrot.slane %v412, 1
        %v739 = vrot.slane %v466, 1
        %v740 = vsel %vm737, %v738, %v739
        %v741 = vrot.slane %v413, 1
        %v742 = vrot.slane %v467, 1
        %v743 = vsel %vm737, %v741, %v742
        %v744 = vrot.slane %v414, 1
        %v745 = vrot.slane %v468, 1
        %v746 = vsel %vm737, %v744, %v745
        %v747 = vrot.slane %v415, 1
        %v748 = vrot.slane %v469, 1
        %v749 = vsel %vm737, %v747, %v748
        %v750 = vrot.slane %v416, 1
        %v751 = vrot.slane %v470, 1
        %v752 = vsel %vm737, %v750, %v751
        %v753 = vrot.slane %v417, 1
        %v754 = vrot.slane %v471, 1
        %v755 = vsel %vm737, %v753, %v754
        %v756 = vrot.slane %v418, 1
        %v757 = vrot.slane %v472, 1
        %v758 = vsel %vm737, %v756, %v757
        %v759 = vrot.slane %v419, 1
        %v760 = vrot.slane %v473, 1
        %v761 = vsel %vm737, %v759, %v760
        %v762 = vrot.slane %v420, 1
        %v763 = vrot.slane %v474, 1
        %v764 = vsel %vm737, %v762, %v763
        %v765 = vrot.slane %v421, 1
        %v766 = vrot.slane %v475, 1
        %v767 = vsel %vm737, %v765, %v766
        %v768 = vrot.slane %v422, 1
        %v769 = vrot.slane %v476, 1
        %v770 = vsel %vm737, %v768, %v769
        %v771 = vrot.slane %v423, 1
        %v772 = vrot.slane %v477, 1
        %v773 = vsel %vm737, %v771, %v772
        %v774 = vrot.slane %v424, 1
        %v775 = vrot.slane %v478, 1
        %v776 = vsel %vm737, %v774, %v775
        %v777 = vrot.slane %v425, 1
        %v778 = vrot.slane %v479, 1
        %v779 = vsel %vm737, %v777, %v778
        %v780 = vrot.slane %v426, 1
        %v781 = vrot.slane %v480, 1
        %v782 = vsel %vm737, %v780, %v781
        %v783 = vrot.slane %v427, 1
        %v784 = vrot.slane %v481, 1
        %v785 = vsel %vm737, %v783, %v784
        %v786 = vrot.slane %v428, 1
        %v787 = vrot.slane %v482, 1
        %v788 = vsel %vm737, %v786, %v787
        %v789 = vrot.slane %v429, 1
        %v790 = vrot.slane %v483, 1
        %v791 = vsel %vm737, %v789, %v790
        %vm792 = vcmask 523264
        %v794 = vsel %vm792, %v412, %v702
        %v797 = vsel %vm792, %v413, %v704
        %v800 = vsel %vm792, %v414, %v706
        %v803 = vsel %vm792, %v415, %v708
        %v806 = vsel %vm792, %v416, %v710
        %v809 = vsel %vm792, %v417, %v712
        %v812 = vsel %vm792, %v418, %v714
        %v815 = vsel %vm792, %v419, %v716
        %v818 = vsel %vm792, %v420, %v718
        %v821 = vsel %vm792, %v421, %v720
        %v824 = vsel %vm792, %v422, %v722
        %v827 = vsel %vm792, %v423, %v724
        %v830 = vsel %vm792, %v424, %v726
        %v833 = vsel %vm792, %v425, %v728
        %v836 = vsel %vm792, %v426, %v730
        %v839 = vsel %vm792, %v427, %v732
        %v842 = vsel %vm792, %v428, %v734
        %v845 = vsel %vm792, %v429, %v736
        %v847 = vld [vmem:[%s1] sm:$0xf]
        %v848 = vld [vmem:[%s1 + $0x4] sm:$0xf]
        %v849 = vld [vmem:[%s1 + $0x8] sm:$0xf]
        %v850 = vld [vmem:[%s1 + $0xc] sm:$0xf]
        %v851 = vld [vmem:[%s1 + $0x10] sm:$0xf]
        %v852 = vld [vmem:[%s1 + $0x14] sm:$0xf]
        %v853 = vld [vmem:[%s1 + $0x18] sm:$0xf]
        %v854 = vld [vmem:[%s1 + $0x1c] sm:$0xf]
        %v855 = vld [vmem:[%s1 + $0x20] sm:$0xf]
        %v856 = vld [vmem:[%s1 + $0x24] sm:$0xf]
        %v857 = vld [vmem:[%s1 + $0x28] sm:$0xf]
        %v858 = vld [vmem:[%s1 + $0x2c] sm:$0xf]
        %v859 = vld [vmem:[%s1 + $0x30] sm:$0xf]
        %v860 = vld [vmem:[%s1 + $0x34] sm:$0xf]
        %v861 = vld [vmem:[%s1 + $0x38] sm:$0xf]
        %v862 = vld [vmem:[%s1 + $0x3c] sm:$0xf]
        %v863 = vld [vmem:[%s1 + $0x40] sm:$0xf]
        %v864 = vld [vmem:[%s1 + $0x44] sm:$0xf]
        %v865 = vld [vmem:[%s1 + $0x48] sm:$0xf]
        %v866 = vld [vmem:[%s1 + $0x4c] sm:$0xf]
        %v867 = vld [vmem:[%s1 + $0x50] sm:$0xf]
        %v868 = vld [vmem:[%s1 + $0x54] sm:$0xf]
        %v869 = vld [vmem:[%s1 + $0x58] sm:$0xf]
        %v870 = vld [vmem:[%s1 + $0x5c] sm:$0xf]
        %s871 = scalar_lea.vmem %s1, 96
        %v872 = vld [vmem:[%s871] sm:$0xf]
        %v873 = vld [vmem:[%s871 + $0x4] sm:$0xf]
        %v874 = vld [vmem:[%s871 + $0x8] sm:$0xf]
        %v875 = vld [vmem:[%s871 + $0xc] sm:$0xf]
        %v876 = vld [vmem:[%s871 + $0x10] sm:$0xf]
        %v877 = vld [vmem:[%s871 + $0x14] sm:$0xf]
        %v878 = vld [vmem:[%s871 + $0x18] sm:$0xf]
        %v879 = vld [vmem:[%s871 + $0x1c] sm:$0xf]
        %v880 = vld [vmem:[%s871 + $0x20] sm:$0xf]
        %v881 = vld [vmem:[%s871 + $0x24] sm:$0xf]
        %v882 = vld [vmem:[%s871 + $0x28] sm:$0xf]
        %v883 = vld [vmem:[%s871 + $0x2c] sm:$0xf]
        %v884 = vld [vmem:[%s871 + $0x30] sm:$0xf]
        %v885 = vld [vmem:[%s871 + $0x34] sm:$0xf]
        %v886 = vld [vmem:[%s871 + $0x38] sm:$0xf]
        %v887 = vld [vmem:[%s871 + $0x3c] sm:$0xf]
        %v888 = vld [vmem:[%s871 + $0x40] sm:$0xf]
        %v889 = vld [vmem:[%s871 + $0x44] sm:$0xf]
        %v890 = vld [vmem:[%s871 + $0x48] sm:$0xf]
        %v891 = vld [vmem:[%s871 + $0x4c] sm:$0xf]
        %v892 = vld [vmem:[%s871 + $0x50] sm:$0xf]
        %v893 = vld [vmem:[%s871 + $0x54] sm:$0xf]
        %v894 = vld [vmem:[%s871 + $0x58] sm:$0xf]
        %v895 = vld [vmem:[%s871 + $0x5c] sm:$0xf]
        %v920 = vunpack.c.l.b16 %v872
        %v921 = vunpack.c.l.b16 %v873
        %v922 = vunpack.c.l.b16 %v874
        %v923 = vunpack.c.l.b16 %v875
        %v924 = vunpack.c.l.b16 %v876
        %v925 = vunpack.c.l.b16 %v877
        %v926 = vunpack.c.l.b16 %v878
        %v927 = vunpack.c.l.b16 %v879
        %v928 = vunpack.c.l.b16 %v880
        %v929 = vunpack.c.l.b16 %v881
        %v930 = vunpack.c.l.b16 %v882
        %v931 = vunpack.c.l.b16 %v883
        %v932 = vunpack.c.l.b16 %v884
        %v933 = vunpack.c.l.b16 %v885
        %v934 = vunpack.c.l.b16 %v886
        %v935 = vunpack.c.l.b16 %v887
        %v936 = vunpack.c.l.b16 %v888
        %v937 = vunpack.c.l.b16 %v889
        %v938 = vunpack.c.l.b16 %v890
        %v939 = vunpack.c.l.b16 %v891
        %v940 = vunpack.c.l.b16 %v892
        %v941 = vunpack.c.l.b16 %v893
        %v942 = vunpack.c.l.b16 %v894
        %v943 = vunpack.c.l.b16 %v895
        %v944 = vpack.c.b16 %v921, %v920
        %v945 = vpack.c.b16 %v923, %v922
        %v946 = vpack.c.b16 %v925, %v924
        %v947 = vpack.c.b16 %v927, %v926
        %v948 = vpack.c.b16 %v929, %v928
        %v949 = vpack.c.b16 %v931, %v930
        %v950 = vpack.c.b16 %v933, %v932
        %v951 = vpack.c.b16 %v935, %v934
        %v952 = vpack.c.b16 %v937, %v936
        %v953 = vpack.c.b16 %v939, %v938
        %v954 = vpack.c.b16 %v941, %v940
        %v955 = vpack.c.b16 %v943, %v942
        %v969 = vsel %vm792, %v743, 0
        %v972 = vsel %vm792, %v746, 0
        %v975 = vsel %vm792, %v749, 0
        %v978 = vsel %vm792, %v752, 0
        %v981 = vsel %vm792, %v755, 0
        %v984 = vsel %vm792, %v758, 0
        %v987 = vsel %vm792, %v761, 0
        %v990 = vsel %vm792, %v764, 0
        %v993 = vsel %vm792, %v767, 0
        %v996 = vsel %vm792, %v770, 0
        %v999 = vsel %vm792, %v773, 0
        %v1002 = vsel %vm792, %v776, 0
        %v1005 = vsel %vm792, %v779, 0
        %v1008 = vsel %vm792, %v782, 0
        %v1011 = vsel %vm792, %v785, 0
        %v1014 = vsel %vm792, %v788, 0
        %1016 = vmatprep.subr.bf16.mxu0 0
        %1017 = vmatpush1.bf16.msra.mxu0 %v944
        %1018 = vmatprep.subr.bf16.mxu0 0
        %1019 = vmatpush1.bf16.msra.mxu0 %v945
        %1020 = vmatprep.subr.bf16.mxu0 0
        %1021 = vmatpush1.bf16.msra.mxu0 %v946
        %1022 = vmatprep.subr.bf16.mxu0 0
        %1023 = vmatpush1.bf16.msra.mxu0 %v947
        %1024 = vmatprep.subr.bf16.mxu0 0
        %1025 = vmatpush1.bf16.msra.mxu0 %v948
        %1026 = vmatprep.subr.bf16.mxu0 0
        %1027 = vmatpush1.bf16.msra.mxu0 %v949
        %1028 = vmatprep.subr.bf16.mxu0 0
        %1029 = vmatpush1.bf16.msra.mxu0 %v950
        %1030 = vmatprep.subr.bf16.mxu0 0
        %1031 = vmatpush1.bf16.msra.mxu0 %v951
        %1032 = vmatprep.subr.bf16.mxu0 0
        %1033 = vmatpush1.bf16.msra.mxu0 %v952
        %1034 = vmatprep.subr.bf16.mxu0 0
        %1035 = vmatpush1.bf16.msra.mxu0 %v953
        %1036 = vmatprep.subr.bf16.mxu0 0
        %1037 = vmatpush1.bf16.msra.mxu0 %v954
        %1038 = vmatprep.subr.bf16.mxu0 0
        %1039 = vmatpush1.bf16.msra.mxu0 %v955
        %1040 = vmatprep.subr.bf16.mxu0 0
        %1041 = vmatpush1.bf16.msra.mxu0 0
        %1042 = vmatprep.subr.bf16.mxu0 0
        %1043 = vmatpush1.bf16.msra.mxu0 0
        %1044 = vmatprep.subr.bf16.mxu0 0
        %1045 = vmatpush1.bf16.msra.mxu0 0
        %1046 = vmatprep.subr.bf16.mxu0 0
        %1047 = vmatpush1.bf16.msra.mxu0 0
        %1048 = vmatprep.mubr.bf16.mxu0 %v969
        %1049 = vmatmul.mubr.bf16.gmra.mrb[0].mxu0 %v797
        %v1050 = vpop.f32.mrb[0].mxu0
        %v1051 = vadd.f32 0.0, %v1050
        %v1052 = vpop.f32.mrb[0].mxu0
        %v1053 = vpop.f32.mrb[0].mxu0
        %v1054 = vadd.f32 0.0, %v1053
        %v1055 = vpop.f32.mrb[0].mxu0
        %1056 = vmatprep.mubr.bf16.mxu0 %v972
        %1057 = vmatmul.mubr.bf16.gmra.mrb[0].mxu0 %v800
        %v1058 = vpop.f32.mrb[0].mxu0
        %v1059 = vadd.f32 0.0, %v1058
        %v1060 = vpop.f32.mrb[0].mxu0
        %v1061 = vpop.f32.mrb[0].mxu0
        %v1062 = vadd.f32 0.0, %v1061
        %v1063 = vpop.f32.mrb[0].mxu0
        %1064 = vmatprep.mubr.bf16.mxu0 %v975
        %1065 = vmatmul.mubr.bf16.gmra.mrb[0].mxu0 %v803
        %v1066 = vpop.f32.mrb[0].mxu0
        %v1067 = vadd.f32 0.0, %v1066
        %v1068 = vpop.f32.mrb[0].mxu0
        %v1069 = vpop.f32.mrb[0].mxu0
        %v1070 = vadd.f32 0.0, %v1069
        %v1071 = vpop.f32.mrb[0].mxu0
        %1072 = vmatprep.mubr.bf16.mxu0 %v978
        %1073 = vmatmul.mubr.bf16.gmra.mrb[0].mxu0 %v806
        %v1074 = vpop.f32.mrb[0].mxu0
        %v1075 = vadd.f32 0.0, %v1074
        %v1076 = vpop.f32.mrb[0].mxu0
        %v1077 = vpop.f32.mrb[0].mxu0
        %v1078 = vadd.f32 0.0, %v1077
        %v1079 = vpop.f32.mrb[0].mxu0
        %1080 = vmatprep.mubr.bf16.mxu0 %v981
        %1081 = vmatmul.mubr.bf16.gmra.mrb[0].mxu0 %v809
        %v1082 = vpop.f32.mrb[0].mxu0
        %v1083 = vadd.f32 0.0, %v1082
        %v1084 = vpop.f32.mrb[0].mxu0
        %v1085 = vpop.f32.mrb[0].mxu0
        %v1086 = vadd.f32 0.0, %v1085
        %v1087 = vpop.f32.mrb[0].mxu0
        %1088 = vmatprep.mubr.bf16.mxu0 %v984
        %1089 = vmatmul.mubr.bf16.gmra.mrb[0].mxu0 %v812
        %v1090 = vpop.f32.mrb[0].mxu0
        %v1091 = vadd.f32 0.0, %v1090
        %v1092 = vpop.f32.mrb[0].mxu0
        %v1093 = vpop.f32.mrb[0].mxu0
        %v1094 = vadd.f32 0.0, %v1093
        %v1095 = vpop.f32.mrb[0].mxu0
        %1096 = vmatprep.mubr.bf16.mxu0 %v987
        %1097 = vmatmul.mubr.bf16.gmra.mrb[0].mxu0 %v815
        %v1098 = vpop.f32.mrb[0].mxu0
        %v1099 = vadd.f32 0.0, %v1098
        %v1100 = vpop.f32.mrb[0].mxu0
        %v1101 = vpop.f32.mrb[0].mxu0
        %v1102 = vadd.f32 0.0, %v1101
        %v1103 = vpop.f32.mrb[0].mxu0
        %1104 = vmatprep.mubr.bf16.mxu0 %v990
        %1105 = vmatmul.mubr.bf16.gmra.mrb[0].mxu0 %v818
        %v1106 = vpop.f32.mrb[0].mxu0
        %v1107 = vadd.f32 0.0, %v1106
        %v1108 = vpop.f32.mrb[0].mxu0
        %v1109 = vpop.f32.mrb[0].mxu0
        %v1110 = vadd.f32 0.0, %v1109
        %v1111 = vpop.f32.mrb[0].mxu0
        %1112 = vmatprep.mubr.bf16.mxu0 %v993
        %1113 = vmatmul.mubr.bf16.gmra.mrb[0].mxu0 %v821
        %v1114 = vpop.f32.mrb[0].mxu0
        %v1115 = vadd.f32 0.0, %v1114
        %v1116 = vpop.f32.mrb[0].mxu0
        %v1117 = vpop.f32.mrb[0].mxu0
        %v1118 = vadd.f32 0.0, %v1117
        %v1119 = vpop.f32.mrb[0].mxu0
        %1120 = vmatprep.mubr.bf16.mxu0 %v996
        %1121 = vmatmul.mubr.bf16.gmra.mrb[0].mxu0 %v824
        %v1122 = vpop.f32.mrb[0].mxu0
        %v1123 = vadd.f32 0.0, %v1122
        %v1124 = vpop.f32.mrb[0].mxu0
        %v1125 = vpop.f32.mrb[0].mxu0
        %v1126 = vadd.f32 0.0, %v1125
        %v1127 = vpop.f32.mrb[0].mxu0
        %1128 = vmatprep.mubr.bf16.mxu0 %v999
        %1129 = vmatmul.mubr.bf16.gmra.mrb[0].mxu0 %v827
        %v1130 = vpop.f32.mrb[0].mxu0
        %v1131 = vadd.f32 0.0, %v1130
        %v1132 = vpop.f32.mrb[0].mxu0
        %v1133 = vpop.f32.mrb[0].mxu0
        %v1134 = vadd.f32 0.0, %v1133
        %v1135 = vpop.f32.mrb[0].mxu0
        %1136 = vmatprep.mubr.bf16.mxu0 %v1002
        %1137 = vmatmul.mubr.bf16.gmra.mrb[0].mxu0 %v830
        %v1138 = vpop.f32.mrb[0].mxu0
        %v1139 = vadd.f32 0.0, %v1138
        %v1140 = vpop.f32.mrb[0].mxu0
        %v1141 = vpop.f32.mrb[0].mxu0
        %v1142 = vadd.f32 0.0, %v1141
        %v1143 = vpop.f32.mrb[0].mxu0
        %1144 = vmatprep.mubr.bf16.mxu0 %v1005
        %1145 = vmatmul.mubr.bf16.gmra.mrb[0].mxu0 %v833
        %v1146 = vpop.f32.mrb[0].mxu0
        %v1147 = vadd.f32 0.0, %v1146
        %v1148 = vpop.f32.mrb[0].mxu0
        %v1149 = vpop.f32.mrb[0].mxu0
        %v1150 = vadd.f32 0.0, %v1149
        %v1151 = vpop.f32.mrb[0].mxu0
        %1152 = vmatprep.mubr.bf16.mxu0 %v1008
        %1153 = vmatmul.mubr.bf16.gmra.mrb[0].mxu0 %v836
        %v1154 = vpop.f32.mrb[0].mxu0
        %v1155 = vadd.f32 0.0, %v1154
        %v1156 = vpop.f32.mrb[0].mxu0
        %v1157 = vpop.f32.mrb[0].mxu0
        %v1158 = vadd.f32 0.0, %v1157
        %v1159 = vpop.f32.mrb[0].mxu0
        %1160 = vmatprep.mubr.bf16.mxu0 %v1011
        %1161 = vmatmul.mubr.bf16.gmra.mrb[0].mxu0 %v839
        %v1162 = vpop.f32.mrb[0].mxu0
        %v1163 = vadd.f32 0.0, %v1162
        %v1164 = vpop.f32.mrb[0].mxu0
        %v1165 = vpop.f32.mrb[0].mxu0
        %v1166 = vadd.f32 0.0, %v1165
        %v1167 = vpop.f32.mrb[0].mxu0
        %1168 = vmatprep.mubr.bf16.mxu0 %v1014
        %1169 = vmatmul.mubr.bf16.gmra.mrb[0].mxu0 %v842
        %v1170 = vpop.f32.mrb[0].mxu0
        %v1171 = vadd.f32 0.0, %v1170
        %v1172 = vpop.f32.mrb[0].mxu0
        %v1173 = vpop.f32.mrb[0].mxu0
        %v1174 = vadd.f32 0.0, %v1173
        %v1175 = vpop.f32.mrb[0].mxu0
        %1176 = vdwg.mxu0
        %v1201 = vunpack.c.l.b16 %v847
        %v1202 = vunpack.c.l.b16 %v848
        %v1203 = vunpack.c.l.b16 %v849
        %v1204 = vunpack.c.l.b16 %v850
        %v1205 = vunpack.c.l.b16 %v851
        %v1206 = vunpack.c.l.b16 %v852
        %v1207 = vunpack.c.l.b16 %v853
        %v1208 = vunpack.c.l.b16 %v854
        %v1209 = vunpack.c.l.b16 %v855
        %v1210 = vunpack.c.l.b16 %v856
        %v1211 = vunpack.c.l.b16 %v857
        %v1212 = vunpack.c.l.b16 %v858
        %v1213 = vunpack.c.l.b16 %v859
        %v1214 = vunpack.c.l.b16 %v860
        %v1215 = vunpack.c.l.b16 %v861
        %v1216 = vunpack.c.l.b16 %v862
        %v1217 = vunpack.c.l.b16 %v863
        %v1218 = vunpack.c.l.b16 %v864
        %v1219 = vunpack.c.l.b16 %v865
        %v1220 = vunpack.c.l.b16 %v866
        %v1221 = vunpack.c.l.b16 %v867
        %v1222 = vunpack.c.l.b16 %v868
        %v1223 = vunpack.c.l.b16 %v869
        %v1224 = vunpack.c.l.b16 %v870
        %v1225 = vpack.c.b16 %v1202, %v1201
        %v1226 = vpack.c.b16 %v1204, %v1203
        %v1227 = vpack.c.b16 %v1206, %v1205
        %v1228 = vpack.c.b16 %v1208, %v1207
        %v1229 = vpack.c.b16 %v1210, %v1209
        %v1230 = vpack.c.b16 %v1212, %v1211
        %v1231 = vpack.c.b16 %v1214, %v1213
        %v1232 = vpack.c.b16 %v1216, %v1215
        %v1233 = vpack.c.b16 %v1218, %v1217
        %v1234 = vpack.c.b16 %v1220, %v1219
        %v1235 = vpack.c.b16 %v1222, %v1221
        %v1236 = vpack.c.b16 %v1224, %v1223
        %v1250 = vsel %vm792, %v740, 0
        %1252 = vmatprep.subr.bf16.mxu0 0
        %1253 = vmatpush1.bf16.msra.mxu0 %v1225
        %1254 = vmatprep.subr.bf16.mxu0 0
        %1255 = vmatpush1.bf16.msra.mxu0 %v1226
        %1256 = vmatprep.subr.bf16.mxu0 0
        %1257 = vmatpush1.bf16.msra.mxu0 %v1227
        %1258 = vmatprep.subr.bf16.mxu0 0
        %1259 = vmatpush1.bf16.msra.mxu0 %v1228
        %1260 = vmatprep.subr.bf16.mxu0 0
        %1261 = vmatpush1.bf16.msra.mxu0 %v1229
        %1262 = vmatprep.subr.bf16.mxu0 0
        %1263 = vmatpush1.bf16.msra.mxu0 %v1230
        %1264 = vmatprep.subr.bf16.mxu0 0
        %1265 = vmatpush1.bf16.msra.mxu0 %v1231
        %1266 = vmatprep.subr.bf16.mxu0 0
        %1267 = vmatpush1.bf16.msra.mxu0 %v1232
        %1268 = vmatprep.subr.bf16.mxu0 0
        %1269 = vmatpush1.bf16.msra.mxu0 %v1233
        %1270 = vmatprep.subr.bf16.mxu0 0
        %1271 = vmatpush1.bf16.msra.mxu0 %v1234
        %1272 = vmatprep.subr.bf16.mxu0 0
        %1273 = vmatpush1.bf16.msra.mxu0 %v1235
        %1274 = vmatprep.subr.bf16.mxu0 0
        %1275 = vmatpush1.bf16.msra.mxu0 %v1236
        %1276 = vmatprep.subr.bf16.mxu0 0
        %1277 = vmatpush1.bf16.msra.mxu0 0
        %1278 = vmatprep.subr.bf16.mxu0 0
        %1279 = vmatpush1.bf16.msra.mxu0 0
        %1280 = vmatprep.subr.bf16.mxu0 0
        %1281 = vmatpush1.bf16.msra.mxu0 0
        %1282 = vmatprep.subr.bf16.mxu0 0
        %1283 = vmatpush1.bf16.msra.mxu0 0
        %1284 = vmatprep.mubr.bf16.mxu0 %v1250
        %1285 = vmatmul.mubr.bf16.gmra.mrb[0].mxu0 %v794
        %v1286 = vpop.f32.mrb[0].mxu0
        %v1287 = vadd.f32 %v1051, %v1286
        %v1288 = vpop.f32.mrb[0].mxu0
        %v1289 = vpop.f32.mrb[0].mxu0
        %v1290 = vadd.f32 %v1054, %v1289
        %v1291 = vpop.f32.mrb[0].mxu0
        %1292 = vmatprep.mubr.bf16.mxu0 %v969
        %1293 = vmatmul.mubr.bf16.gmra.mrb[0].mxu0 %v797
        %v1294 = vpop.f32.mrb[0].mxu0
        %v1295 = vadd.f32 %v1059, %v1294
        %v1296 = vpop.f32.mrb[0].mxu0
        %v1297 = vpop.f32.mrb[0].mxu0
        %v1298 = vadd.f32 %v1062, %v1297
        %v1299 = vpop.f32.mrb[0].mxu0
        %1300 = vmatprep.mubr.bf16.mxu0 %v972
        %1301 = vmatmul.mubr.bf16.gmra.mrb[0].mxu0 %v800
        %v1302 = vpop.f32.mrb[0].mxu0
        %v1303 = vadd.f32 %v1067, %v1302
        %v1304 = vpop.f32.mrb[0].mxu0
        %v1305 = vpop.f32.mrb[0].mxu0
        %v1306 = vadd.f32 %v1070, %v1305
        %v1307 = vpop.f32.mrb[0].mxu0
        %1308 = vmatprep.mubr.bf16.mxu0 %v975
        %1309 = vmatmul.mubr.bf16.gmra.mrb[0].mxu0 %v803
        %v1310 = vpop.f32.mrb[0].mxu0
        %v1311 = vadd.f32 %v1075, %v1310
        %v1312 = vpop.f32.mrb[0].mxu0
        %v1313 = vpop.f32.mrb[0].mxu0
        %v1314 = vadd.f32 %v1078, %v1313
        %v1315 = vpop.f32.mrb[0].mxu0
        %1316 = vmatprep.mubr.bf16.mxu0 %v978
        %1317 = vmatmul.mubr.bf16.gmra.mrb[0].mxu0 %v806
        %v1318 = vpop.f32.mrb[0].mxu0
        %v1319 = vadd.f32 %v1083, %v1318
        %v1320 = vpop.f32.mrb[0].mxu0
        %v1321 = vpop.f32.mrb[0].mxu0
        %v1322 = vadd.f32 %v1086, %v1321
        %v1323 = vpop.f32.mrb[0].mxu0
        %1324 = vmatprep.mubr.bf16.mxu0 %v981
        %1325 = vmatmul.mubr.bf16.gmra.mrb[0].mxu0 %v809
        %v1326 = vpop.f32.mrb[0].mxu0
        %v1327 = vadd.f32 %v1091, %v1326
        %v1328 = vpop.f32.mrb[0].mxu0
        %v1329 = vpop.f32.mrb[0].mxu0
        %v1330 = vadd.f32 %v1094, %v1329
        %v1331 = vpop.f32.mrb[0].mxu0
        %1332 = vmatprep.mubr.bf16.mxu0 %v984
        %1333 = vmatmul.mubr.bf16.gmra.mrb[0].mxu0 %v812
        %v1334 = vpop.f32.mrb[0].mxu0
        %v1335 = vadd.f32 %v1099, %v1334
        %v1336 = vpop.f32.mrb[0].mxu0
        %v1337 = vpop.f32.mrb[0].mxu0
        %v1338 = vadd.f32 %v1102, %v1337
        %v1339 = vpop.f32.mrb[0].mxu0
        %1340 = vmatprep.mubr.bf16.mxu0 %v987
        %1341 = vmatmul.mubr.bf16.gmra.mrb[0].mxu0 %v815
        %v1342 = vpop.f32.mrb[0].mxu0
        %v1343 = vadd.f32 %v1107, %v1342
        %v1344 = vpop.f32.mrb[0].mxu0
        %v1345 = vpop.f32.mrb[0].mxu0
        %v1346 = vadd.f32 %v1110, %v1345
        %v1347 = vpop.f32.mrb[0].mxu0
        %1348 = vmatprep.mubr.bf16.mxu0 %v990
        %1349 = vmatmul.mubr.bf16.gmra.mrb[0].mxu0 %v818
        %v1350 = vpop.f32.mrb[0].mxu0
        %v1351 = vadd.f32 %v1115, %v1350
        %v1352 = vpop.f32.mrb[0].mxu0
        %v1353 = vpop.f32.mrb[0].mxu0
        %v1354 = vadd.f32 %v1118, %v1353
        %v1355 = vpop.f32.mrb[0].mxu0
        %1356 = vmatprep.mubr.bf16.mxu0 %v993
        %1357 = vmatmul.mubr.bf16.gmra.mrb[0].mxu0 %v821
        %v1358 = vpop.f32.mrb[0].mxu0
        %v1359 = vadd.f32 %v1123, %v1358
        %v1360 = vpop.f32.mrb[0].mxu0
        %v1361 = vpop.f32.mrb[0].mxu0
        %v1362 = vadd.f32 %v1126, %v1361
        %v1363 = vpop.f32.mrb[0].mxu0
        %1364 = vmatprep.mubr.bf16.mxu0 %v996
        %1365 = vmatmul.mubr.bf16.gmra.mrb[0].mxu0 %v824
        %v1366 = vpop.f32.mrb[0].mxu0
        %v1367 = vadd.f32 %v1131, %v1366
        %v1368 = vpop.f32.mrb[0].mxu0
        %v1369 = vpop.f32.mrb[0].mxu0
        %v1370 = vadd.f32 %v1134, %v1369
        %v1371 = vpop.f32.mrb[0].mxu0
        %1372 = vmatprep.mubr.bf16.mxu0 %v999
        %1373 = vmatmul.mubr.bf16.gmra.mrb[0].mxu0 %v827
        %v1374 = vpop.f32.mrb[0].mxu0
        %v1375 = vadd.f32 %v1139, %v1374
        %v1376 = vpop.f32.mrb[0].mxu0
        %v1377 = vpop.f32.mrb[0].mxu0
        %v1378 = vadd.f32 %v1142, %v1377
        %v1379 = vpop.f32.mrb[0].mxu0
        %1380 = vmatprep.mubr.bf16.mxu0 %v1002
        %1381 = vmatmul.mubr.bf16.gmra.mrb[0].mxu0 %v830
        %v1382 = vpop.f32.mrb[0].mxu0
        %v1383 = vadd.f32 %v1147, %v1382
        %v1384 = vpop.f32.mrb[0].mxu0
        %v1385 = vpop.f32.mrb[0].mxu0
        %v1386 = vadd.f32 %v1150, %v1385
        %v1387 = vpop.f32.mrb[0].mxu0
        %1388 = vmatprep.mubr.bf16.mxu0 %v1005
        %1389 = vmatmul.mubr.bf16.gmra.mrb[0].mxu0 %v833
        %v1390 = vpop.f32.mrb[0].mxu0
        %v1391 = vadd.f32 %v1155, %v1390
        %v1392 = vpop.f32.mrb[0].mxu0
        %v1393 = vpop.f32.mrb[0].mxu0
        %v1394 = vadd.f32 %v1158, %v1393
        %v1395 = vpop.f32.mrb[0].mxu0
        %1396 = vmatprep.mubr.bf16.mxu0 %v1008
        %1397 = vmatmul.mubr.bf16.gmra.mrb[0].mxu0 %v836
        %v1398 = vpop.f32.mrb[0].mxu0
        %v1399 = vadd.f32 %v1163, %v1398
        %v1400 = vpop.f32.mrb[0].mxu0
        %v1401 = vpop.f32.mrb[0].mxu0
        %v1402 = vadd.f32 %v1166, %v1401
        %v1403 = vpop.f32.mrb[0].mxu0
        %1404 = vmatprep.mubr.bf16.mxu0 %v1011
        %1405 = vmatmul.mubr.bf16.gmra.mrb[0].mxu0 %v839
        %v1406 = vpop.f32.mrb[0].mxu0
        %v1407 = vadd.f32 %v1171, %v1406
        %v1408 = vpop.f32.mrb[0].mxu0
        %v1409 = vpop.f32.mrb[0].mxu0
        %v1410 = vadd.f32 %v1174, %v1409
        %v1411 = vpop.f32.mrb[0].mxu0
        %1412 = vdwg.mxu0
        %s1413 = scalar_lea.vmem %s1, 192
        %v1414 = vld [vmem:[%s1413] sm:$0xf]
        %v1415 = vld [vmem:[%s1413 + $0x4] sm:$0xf]
        %v1416 = vld [vmem:[%s1413 + $0x8] sm:$0xf]
        %v1417 = vld [vmem:[%s1413 + $0xc] sm:$0xf]
        %v1418 = vld [vmem:[%s1413 + $0x10] sm:$0xf]
        %v1419 = vld [vmem:[%s1413 + $0x14] sm:$0xf]
        %v1420 = vld [vmem:[%s1413 + $0x18] sm:$0xf]
        %v1421 = vld [vmem:[%s1413 + $0x1c] sm:$0xf]
        %v1422 = vld [vmem:[%s1413 + $0x20] sm:$0xf]
        %v1423 = vld [vmem:[%s1413 + $0x24] sm:$0xf]
        %v1424 = vld [vmem:[%s1413 + $0x28] sm:$0xf]
        %v1425 = vld [vmem:[%s1413 + $0x2c] sm:$0xf]
        %v1426 = vld [vmem:[%s1413 + $0x30] sm:$0xf]
        %v1427 = vld [vmem:[%s1413 + $0x34] sm:$0xf]
        %v1428 = vld [vmem:[%s1413 + $0x38] sm:$0xf]
        %v1429 = vld [vmem:[%s1413 + $0x3c] sm:$0xf]
        %v1430 = vld [vmem:[%s1413 + $0x40] sm:$0xf]
        %v1431 = vld [vmem:[%s1413 + $0x44] sm:$0xf]
        %v1432 = vld [vmem:[%s1413 + $0x48] sm:$0xf]
        %v1433 = vld [vmem:[%s1413 + $0x4c] sm:$0xf]
        %v1434 = vld [vmem:[%s1413 + $0x50] sm:$0xf]
        %v1435 = vld [vmem:[%s1413 + $0x54] sm:$0xf]
        %v1436 = vld [vmem:[%s1413 + $0x58] sm:$0xf]
        %v1437 = vld [vmem:[%s1413 + $0x5c] sm:$0xf]
        %v1462 = vunpack.c.l.b16 %v1414
        %v1463 = vunpack.c.l.b16 %v1415
        %v1464 = vunpack.c.l.b16 %v1416
        %v1465 = vunpack.c.l.b16 %v1417
        %v1466 = vunpack.c.l.b16 %v1418
        %v1467 = vunpack.c.l.b16 %v1419
        %v1468 = vunpack.c.l.b16 %v1420
        %v1469 = vunpack.c.l.b16 %v1421
        %v1470 = vunpack.c.l.b16 %v1422
        %v1471 = vunpack.c.l.b16 %v1423
        %v1472 = vunpack.c.l.b16 %v1424
        %v1473 = vunpack.c.l.b16 %v1425
        %v1474 = vunpack.c.l.b16 %v1426
        %v1475 = vunpack.c.l.b16 %v1427
        %v1476 = vunpack.c.l.b16 %v1428
        %v1477 = vunpack.c.l.b16 %v1429
        %v1478 = vunpack.c.l.b16 %v1430
        %v1479 = vunpack.c.l.b16 %v1431
        %v1480 = vunpack.c.l.b16 %v1432
        %v1481 = vunpack.c.l.b16 %v1433
        %v1482 = vunpack.c.l.b16 %v1434
        %v1483 = vunpack.c.l.b16 %v1435
        %v1484 = vunpack.c.l.b16 %v1436
        %v1485 = vunpack.c.l.b16 %v1437
        %v1486 = vpack.c.b16 %v1463, %v1462
        %v1487 = vpack.c.b16 %v1465, %v1464
        %v1488 = vpack.c.b16 %v1467, %v1466
        %v1489 = vpack.c.b16 %v1469, %v1468
        %v1490 = vpack.c.b16 %v1471, %v1470
        %v1491 = vpack.c.b16 %v1473, %v1472
        %v1492 = vpack.c.b16 %v1475, %v1474
        %v1493 = vpack.c.b16 %v1477, %v1476
        %v1494 = vpack.c.b16 %v1479, %v1478
        %v1495 = vpack.c.b16 %v1481, %v1480
        %v1496 = vpack.c.b16 %v1483, %v1482
        %v1497 = vpack.c.b16 %v1485, %v1484
        %v1511 = vsel %vm792, %v791, 0
        %1513 = vmatprep.subr.bf16.mxu0 0
        %1514 = vmatpush1.bf16.msra.mxu0 %v1486
        %1515 = vmatprep.subr.bf16.mxu0 0
        %1516 = vmatpush1.bf16.msra.mxu0 %v1487
        %1517 = vmatprep.subr.bf16.mxu0 0
        %1518 = vmatpush1.bf16.msra.mxu0 %v1488
        %1519 = vmatprep.subr.bf16.mxu0 0
        %1520 = vmatpush1.bf16.msra.mxu0 %v1489
        %1521 = vmatprep.subr.bf16.mxu0 0
        %1522 = vmatpush1.bf16.msra.mxu0 %v1490
        %1523 = vmatprep.subr.bf16.mxu0 0
        %1524 = vmatpush1.bf16.msra.mxu0 %v1491
        %1525 = vmatprep.subr.bf16.mxu0 0
        %1526 = vmatpush1.bf16.msra.mxu0 %v1492
        %1527 = vmatprep.subr.bf16.mxu0 0
        %1528 = vmatpush1.bf16.msra.mxu0 %v1493
        %1529 = vmatprep.subr.bf16.mxu0 0
        %1530 = vmatpush1.bf16.msra.mxu0 %v1494
        %1531 = vmatprep.subr.bf16.mxu0 0
        %1532 = vmatpush1.bf16.msra.mxu0 %v1495
        %1533 = vmatprep.subr.bf16.mxu0 0
        %1534 = vmatpush1.bf16.msra.mxu0 %v1496
        %1535 = vmatprep.subr.bf16.mxu0 0
        %1536 = vmatpush1.bf16.msra.mxu0 %v1497
        %1537 = vmatprep.subr.bf16.mxu0 0
        %1538 = vmatpush1.bf16.msra.mxu0 0
        %1539 = vmatprep.subr.bf16.mxu0 0
        %1540 = vmatpush1.bf16.msra.mxu0 0
        %1541 = vmatprep.subr.bf16.mxu0 0
        %1542 = vmatpush1.bf16.msra.mxu0 0
        %1543 = vmatprep.subr.bf16.mxu0 0
        %1544 = vmatpush1.bf16.msra.mxu0 0
        %1545 = vmatprep.mubr.bf16.mxu0 %v972
        %1546 = vmatmul.mubr.bf16.gmra.mrb[0].mxu0 %v800
        %v1547 = vpop.f32.mrb[0].mxu0
        %v1548 = vadd.f32 0.0, %v1547
        %v1549 = vpop.f32.mrb[0].mxu0
        %v1550 = vpop.f32.mrb[0].mxu0
        %v1551 = vadd.f32 0.0, %v1550
        %v1552 = vpop.f32.mrb[0].mxu0
        %1553 = vmatprep.mubr.bf16.mxu0 %v975
        %1554 = vmatmul.mubr.bf16.gmra.mrb[0].mxu0 %v803
        %v1555 = vpop.f32.mrb[0].mxu0
        %v1556 = vadd.f32 0.0, %v1555
        %v1557 = vpop.f32.mrb[0].mxu0
        %v1558 = vpop.f32.mrb[0].mxu0
        %v1559 = vadd.f32 0.0, %v1558
        %v1560 = vpop.f32.mrb[0].mxu0
        %1561 = vmatprep.mubr.bf16.mxu0 %v978
        %1562 = vmatmul.mubr.bf16.gmra.mrb[0].mxu0 %v806
        %v1563 = vpop.f32.mrb[0].mxu0
        %v1564 = vadd.f32 0.0, %v1563
        %v1565 = vpop.f32.mrb[0].mxu0
        %v1566 = vpop.f32.mrb[0].mxu0
        %v1567 = vadd.f32 0.0, %v1566
        %v1568 = vpop.f32.mrb[0].mxu0
        %1569 = vmatprep.mubr.bf16.mxu0 %v981
        %1570 = vmatmul.mubr.bf16.gmra.mrb[0].mxu0 %v809
        %v1571 = vpop.f32.mrb[0].mxu0
        %v1572 = vadd.f32 0.0, %v1571
        %v1573 = vpop.f32.mrb[0].mxu0
        %v1574 = vpop.f32.mrb[0].mxu0
        %v1575 = vadd.f32 0.0, %v1574
        %v1576 = vpop.f32.mrb[0].mxu0
        %1577 = vmatprep.mubr.bf16.mxu0 %v984
        %1578 = vmatmul.mubr.bf16.gmra.mrb[0].mxu0 %v812
        %v1579 = vpop.f32.mrb[0].mxu0
        %v1580 = vadd.f32 0.0, %v1579
        %v1581 = vpop.f32.mrb[0].mxu0
        %v1582 = vpop.f32.mrb[0].mxu0
        %v1583 = vadd.f32 0.0, %v1582
        %v1584 = vpop.f32.mrb[0].mxu0
        %1585 = vmatprep.mubr.bf16.mxu0 %v987
        %1586 = vmatmul.mubr.bf16.gmra.mrb[0].mxu0 %v815
        %v1587 = vpop.f32.mrb[0].mxu0
        %v1588 = vadd.f32 0.0, %v1587
        %v1589 = vpop.f32.mrb[0].mxu0
        %v1590 = vpop.f32.mrb[0].mxu0
        %v1591 = vadd.f32 0.0, %v1590
        %v1592 = vpop.f32.mrb[0].mxu0
        %1593 = vmatprep.mubr.bf16.mxu0 %v990
        %1594 = vmatmul.mubr.bf16.gmra.mrb[0].mxu0 %v818
        %v1595 = vpop.f32.mrb[0].mxu0
        %v1596 = vadd.f32 0.0, %v1595
        %v1597 = vpop.f32.mrb[0].mxu0
        %v1598 = vpop.f32.mrb[0].mxu0
        %v1599 = vadd.f32 0.0, %v1598
        %v1600 = vpop.f32.mrb[0].mxu0
        %1601 = vmatprep.mubr.bf16.mxu0 %v993
        %1602 = vmatmul.mubr.bf16.gmra.mrb[0].mxu0 %v821
        %v1603 = vpop.f32.mrb[0].mxu0
        %v1604 = vadd.f32 0.0, %v1603
        %v1605 = vpop.f32.mrb[0].mxu0
        %v1606 = vpop.f32.mrb[0].mxu0
        %v1607 = vadd.f32 0.0, %v1606
        %v1608 = vpop.f32.mrb[0].mxu0
        %1609 = vmatprep.mubr.bf16.mxu0 %v996
        %1610 = vmatmul.mubr.bf16.gmra.mrb[0].mxu0 %v824
        %v1611 = vpop.f32.mrb[0].mxu0
        %v1612 = vadd.f32 0.0, %v1611
        %v1613 = vpop.f32.mrb[0].mxu0
        %v1614 = vpop.f32.mrb[0].mxu0
        %v1615 = vadd.f32 0.0, %v1614
        %v1616 = vpop.f32.mrb[0].mxu0
        %1617 = vmatprep.mubr.bf16.mxu0 %v999
        %1618 = vmatmul.mubr.bf16.gmra.mrb[0].mxu0 %v827
        %v1619 = vpop.f32.mrb[0].mxu0
        %v1620 = vadd.f32 0.0, %v1619
        %v1621 = vpop.f32.mrb[0].mxu0
        %v1622 = vpop.f32.mrb[0].mxu0
        %v1623 = vadd.f32 0.0, %v1622
        %v1624 = vpop.f32.mrb[0].mxu0
        %1625 = vmatprep.mubr.bf16.mxu0 %v1002
        %1626 = vmatmul.mubr.bf16.gmra.mrb[0].mxu0 %v830
        %v1627 = vpop.f32.mrb[0].mxu0
        %v1628 = vadd.f32 0.0, %v1627
        %v1629 = vpop.f32.mrb[0].mxu0
        %v1630 = vpop.f32.mrb[0].mxu0
        %v1631 = vadd.f32 0.0, %v1630
        %v1632 = vpop.f32.mrb[0].mxu0
        %1633 = vmatprep.mubr.bf16.mxu0 %v1005
        %1634 = vmatmul.mubr.bf16.gmra.mrb[0].mxu0 %v833
        %v1635 = vpop.f32.mrb[0].mxu0
        %v1636 = vadd.f32 0.0, %v1635
        %v1637 = vpop.f32.mrb[0].mxu0
        %v1638 = vpop.f32.mrb[0].mxu0
        %v1639 = vadd.f32 0.0, %v1638
        %v1640 = vpop.f32.mrb[0].mxu0
        %1641 = vmatprep.mubr.bf16.mxu0 %v1008
        %1642 = vmatmul.mubr.bf16.gmra.mrb[0].mxu0 %v836
        %v1643 = vpop.f32.mrb[0].mxu0
        %v1644 = vadd.f32 0.0, %v1643
        %v1645 = vpop.f32.mrb[0].mxu0
        %v1646 = vpop.f32.mrb[0].mxu0
        %v1647 = vadd.f32 0.0, %v1646
        %v1648 = vpop.f32.mrb[0].mxu0
        %1649 = vmatprep.mubr.bf16.mxu0 %v1011
        %1650 = vmatmul.mubr.bf16.gmra.mrb[0].mxu0 %v839
        %v1651 = vpop.f32.mrb[0].mxu0
        %v1652 = vadd.f32 0.0, %v1651
        %v1653 = vpop.f32.mrb[0].mxu0
        %v1654 = vpop.f32.mrb[0].mxu0
        %v1655 = vadd.f32 0.0, %v1654
        %v1656 = vpop.f32.mrb[0].mxu0
        %1657 = vmatprep.mubr.bf16.mxu0 %v1014
        %1658 = vmatmul.mubr.bf16.gmra.mrb[0].mxu0 %v842
        %v1659 = vpop.f32.mrb[0].mxu0
        %v1660 = vadd.f32 0.0, %v1659
        %v1661 = vpop.f32.mrb[0].mxu0
        %v1662 = vpop.f32.mrb[0].mxu0
        %v1663 = vadd.f32 0.0, %v1662
        %v1664 = vpop.f32.mrb[0].mxu0
        %1665 = vmatprep.mubr.bf16.mxu0 %v1511
        %1666 = vmatmul.mubr.bf16.gmra.mrb[0].mxu0 %v845
        %v1667 = vpop.f32.mrb[0].mxu0
        %v1668 = vadd.f32 0.0, %v1667
        %v1669 = vpop.f32.mrb[0].mxu0
        %v1670 = vpop.f32.mrb[0].mxu0
        %v1671 = vadd.f32 0.0, %v1670
        %v1672 = vpop.f32.mrb[0].mxu0
        %1673 = vdwg.mxu0
        %v1674 = vadd.f32 %v1287, %v1548
        %v1675 = vadd.f32 %v1290, %v1551
        %v1676 = vadd.f32 %v1295, %v1556
        %v1677 = vadd.f32 %v1298, %v1559
        %v1678 = vadd.f32 %v1303, %v1564
        %v1679 = vadd.f32 %v1306, %v1567
        %v1680 = vadd.f32 %v1311, %v1572
        %v1681 = vadd.f32 %v1314, %v1575
        %v1682 = vadd.f32 %v1319, %v1580
        %v1683 = vadd.f32 %v1322, %v1583
        %v1684 = vadd.f32 %v1327, %v1588
        %v1685 = vadd.f32 %v1330, %v1591
        %v1686 = vadd.f32 %v1335, %v1596
        %v1687 = vadd.f32 %v1338, %v1599
        %v1688 = vadd.f32 %v1343, %v1604
        %v1689 = vadd.f32 %v1346, %v1607
        %v1690 = vadd.f32 %v1351, %v1612
        %v1691 = vadd.f32 %v1354, %v1615
        %v1692 = vadd.f32 %v1359, %v1620
        %v1693 = vadd.f32 %v1362, %v1623
        %v1694 = vadd.f32 %v1367, %v1628
        %v1695 = vadd.f32 %v1370, %v1631
        %v1696 = vadd.f32 %v1375, %v1636
        %v1697 = vadd.f32 %v1378, %v1639
        %v1698 = vadd.f32 %v1383, %v1644
        %v1699 = vadd.f32 %v1386, %v1647
        %v1700 = vadd.f32 %v1391, %v1652
        %v1701 = vadd.f32 %v1394, %v1655
        %v1702 = vadd.f32 %v1399, %v1660
        %v1703 = vadd.f32 %v1402, %v1663
        %v1704 = vadd.f32 %v1407, %v1668
        %v1705 = vadd.f32 %v1410, %v1671
        %v1706 = vld [vmem:[%s2] sm:$0x1]
        %v1708 = vlaneseq
        %v1709 = vshrl.u32 %v1708, 7
        %v1710 = vsub.s32 0, %v1709
        %v1711 = vrot.slane %v1706, %v1710
        %v1713 = vadd.f32 %v1674, %v1711
        %v1714 = vadd.f32 %v1675, %v1711
        %v1715 = vadd.f32 %v1676, %v1711
        %v1716 = vadd.f32 %v1677, %v1711
        %v1717 = vadd.f32 %v1678, %v1711
        %v1718 = vadd.f32 %v1679, %v1711
        %v1719 = vadd.f32 %v1680, %v1711
        %v1720 = vadd.f32 %v1681, %v1711
        %v1721 = vadd.f32 %v1682, %v1711
        %v1722 = vadd.f32 %v1683, %v1711
        %v1723 = vadd.f32 %v1684, %v1711
        %v1724 = vadd.f32 %v1685, %v1711
        %v1725 = vadd.f32 %v1686, %v1711
        %v1726 = vadd.f32 %v1687, %v1711
        %v1727 = vadd.f32 %v1688, %v1711
        %v1728 = vadd.f32 %v1689, %v1711
        %v1729 = vadd.f32 %v1690, %v1711
        %v1730 = vadd.f32 %v1691, %v1711
        %v1731 = vadd.f32 %v1692, %v1711
        %v1732 = vadd.f32 %v1693, %v1711
        %v1733 = vadd.f32 %v1694, %v1711
        %v1734 = vadd.f32 %v1695, %v1711
        %v1735 = vadd.f32 %v1696, %v1711
        %v1736 = vadd.f32 %v1697, %v1711
        %v1737 = vadd.f32 %v1698, %v1711
        %v1738 = vadd.f32 %v1699, %v1711
        %v1739 = vadd.f32 %v1700, %v1711
        %v1740 = vadd.f32 %v1701, %v1711
        %v1741 = vadd.f32 %v1702, %v1711
        %v1742 = vadd.f32 %v1703, %v1711
        %v1743 = vadd.f32 %v1704, %v1711
        %v1744 = vadd.f32 %v1705, %v1711
        %v1745 = vmax.f32 %v1713, 0.0
        %v1746 = vmax.f32 %v1714, 0.0
        %v1747 = vmax.f32 %v1715, 0.0
        %v1748 = vmax.f32 %v1716, 0.0
        %v1749 = vmax.f32 %v1717, 0.0
        %v1750 = vmax.f32 %v1718, 0.0
        %v1751 = vmax.f32 %v1719, 0.0
        %v1752 = vmax.f32 %v1720, 0.0
        %v1753 = vmax.f32 %v1721, 0.0
        %v1754 = vmax.f32 %v1722, 0.0
        %v1755 = vmax.f32 %v1723, 0.0
        %v1756 = vmax.f32 %v1724, 0.0
        %v1757 = vmax.f32 %v1725, 0.0
        %v1758 = vmax.f32 %v1726, 0.0
        %v1759 = vmax.f32 %v1727, 0.0
        %v1760 = vmax.f32 %v1728, 0.0
        %v1761 = vmax.f32 %v1729, 0.0
        %v1762 = vmax.f32 %v1730, 0.0
        %v1763 = vmax.f32 %v1731, 0.0
        %v1764 = vmax.f32 %v1732, 0.0
        %v1765 = vmax.f32 %v1733, 0.0
        %v1766 = vmax.f32 %v1734, 0.0
        %v1767 = vmax.f32 %v1735, 0.0
        %v1768 = vmax.f32 %v1736, 0.0
        %v1769 = vmax.f32 %v1737, 0.0
        %v1770 = vmax.f32 %v1738, 0.0
        %v1771 = vmax.f32 %v1739, 0.0
        %v1772 = vmax.f32 %v1740, 0.0
        %v1773 = vmax.f32 %v1741, 0.0
        %v1774 = vmax.f32 %v1742, 0.0
        %v1775 = vmax.f32 %v1743, 0.0
        %v1776 = vmax.f32 %v1744, 0.0
        %v1777 = vpack.c.bf16 %v1746, %v1745
        %v1778 = vpack.c.bf16 %v1748, %v1747
        %v1779 = vpack.c.bf16 %v1750, %v1749
        %v1780 = vpack.c.bf16 %v1752, %v1751
        %v1781 = vpack.c.bf16 %v1754, %v1753
        %v1782 = vpack.c.bf16 %v1756, %v1755
        %v1783 = vpack.c.bf16 %v1758, %v1757
        %v1784 = vpack.c.bf16 %v1760, %v1759
        %v1785 = vpack.c.bf16 %v1762, %v1761
        %v1786 = vpack.c.bf16 %v1764, %v1763
        %v1787 = vpack.c.bf16 %v1766, %v1765
        %v1788 = vpack.c.bf16 %v1768, %v1767
        %v1789 = vpack.c.bf16 %v1770, %v1769
        %v1790 = vpack.c.bf16 %v1772, %v1771
        %v1791 = vpack.c.bf16 %v1774, %v1773
        %v1792 = vpack.c.bf16 %v1776, %v1775
        %v1809 = vunpack.c.l.b16 %v1777
        %v1810 = vunpack.c.h.b16 %v1777
        %v1811 = vunpack.c.l.b16 %v1778
        %v1812 = vunpack.c.h.b16 %v1778
        %v1813 = vunpack.c.l.b16 %v1779
        %v1814 = vunpack.c.h.b16 %v1779
        %v1815 = vunpack.c.l.b16 %v1780
        %v1816 = vunpack.c.h.b16 %v1780
        %v1817 = vunpack.c.l.b16 %v1781
        %v1818 = vunpack.c.h.b16 %v1781
        %v1819 = vunpack.c.l.b16 %v1782
        %v1820 = vunpack.c.h.b16 %v1782
        %v1821 = vunpack.c.l.b16 %v1783
        %v1822 = vunpack.c.h.b16 %v1783
        %v1823 = vunpack.c.l.b16 %v1784
        %v1824 = vunpack.c.h.b16 %v1784
        %v1825 = vunpack.c.l.b16 %v1785
        %v1826 = vunpack.c.h.b16 %v1785
        %v1827 = vunpack.c.l.b16 %v1786
        %v1828 = vunpack.c.h.b16 %v1786
        %v1829 = vunpack.c.l.b16 %v1787
        %v1830 = vunpack.c.h.b16 %v1787
        %v1831 = vunpack.c.l.b16 %v1788
        %v1832 = vunpack.c.h.b16 %v1788
        %v1833 = vunpack.c.l.b16 %v1789
        %v1834 = vunpack.c.h.b16 %v1789
        %v1835 = vunpack.c.l.b16 %v1790
        %v1836 = vunpack.c.h.b16 %v1790
        %v1837 = vunpack.c.l.b16 %v1791
        %v1838 = vunpack.c.h.b16 %v1791
        %v1839 = vunpack.c.l.b16 %v1792
        %v1840 = vunpack.c.h.b16 %v1792
        %v1841 = vpack.c.b16 %v1809, %v1809
        %v1842 = vpack.c.b16 %v1810, %v1810
        %v1843 = vpack.c.b16 %v1811, %v1811
        %v1844 = vpack.c.b16 %v1812, %v1812
        %v1845 = vpack.c.b16 %v1813, %v1813
        %v1846 = vpack.c.b16 %v1814, %v1814
        %v1847 = vpack.c.b16 %v1815, %v1815
        %v1848 = vpack.c.b16 %v1816, %v1816
        %v1849 = vpack.c.b16 %v1817, %v1817
        %v1850 = vpack.c.b16 %v1818, %v1818
        %v1851 = vpack.c.b16 %v1819, %v1819
        %v1852 = vpack.c.b16 %v1820, %v1820
        %v1853 = vpack.c.b16 %v1821, %v1821
        %v1854 = vpack.c.b16 %v1822, %v1822
        %v1855 = vpack.c.b16 %v1823, %v1823
        %v1856 = vpack.c.b16 %v1824, %v1824
        %v1857 = vpack.c.b16 %v1825, %v1825
        %v1858 = vpack.c.b16 %v1826, %v1826
        %v1859 = vpack.c.b16 %v1827, %v1827
        %v1860 = vpack.c.b16 %v1828, %v1828
        %v1861 = vpack.c.b16 %v1829, %v1829
        %v1862 = vpack.c.b16 %v1830, %v1830
        %v1863 = vpack.c.b16 %v1831, %v1831
        %v1864 = vpack.c.b16 %v1832, %v1832
        %v1865 = vpack.c.b16 %v1833, %v1833
        %v1866 = vpack.c.b16 %v1834, %v1834
        %v1867 = vpack.c.b16 %v1835, %v1835
        %v1868 = vpack.c.b16 %v1836, %v1836
        %v1869 = vpack.c.b16 %v1837, %v1837
        %v1870 = vpack.c.b16 %v1838, %v1838
        %v1871 = vpack.c.b16 %v1839, %v1839
        %v1872 = vpack.c.b16 %v1840, %v1840
        %vm1873 = vcmask 1040384
        %vm1874 = vcmask 1044484
        %vm1875 = vmor %vm1873, %vm1874
        %v1876 = vrot.slane %v1841, 7
        %v1877 = vrot.slane %v1876, 4
        %v1878 = vrot.slane %v1842, 7
        %v1879 = vsel %vm1875, %v1877, %v1878
        %v1880 = vrot.slane %v1878, 4
        %v1881 = vrot.slane %v1843, 7
        %v1882 = vrot.slane %v1881, 4
        %v1883 = vrot.slane %v1844, 7
        %v1884 = vsel %vm1875, %v1882, %v1883
        %v1885 = vrot.slane %v1883, 4
        %v1886 = vrot.slane %v1845, 7
        %v1887 = vrot.slane %v1886, 4
        %v1888 = vrot.slane %v1846, 7
        %v1889 = vsel %vm1875, %v1887, %v1888
        %v1890 = vrot.slane %v1888, 4
        %v1891 = vrot.slane %v1847, 7
        %v1892 = vrot.slane %v1891, 4
        %v1893 = vrot.slane %v1848, 7
        %v1894 = vsel %vm1875, %v1892, %v1893
        %v1895 = vrot.slane %v1893, 4
        %v1896 = vrot.slane %v1849, 7
        %v1897 = vrot.slane %v1896, 4
        %v1898 = vrot.slane %v1850, 7
        %v1899 = vsel %vm1875, %v1897, %v1898
        %v1900 = vrot.slane %v1898, 4
        %v1901 = vrot.slane %v1851, 7
        %v1902 = vrot.slane %v1901, 4
        %v1903 = vrot.slane %v1852, 7
        %v1904 = vsel %vm1875, %v1902, %v1903
        %v1905 = vrot.slane %v1903, 4
        %v1906 = vrot.slane %v1853, 7
        %v1907 = vrot.slane %v1906, 4
        %v1908 = vrot.slane %v1854, 7
        %v1909 = vsel %vm1875, %v1907, %v1908
        %v1910 = vrot.slane %v1908, 4
        %v1911 = vrot.slane %v1855, 7
        %v1912 = vrot.slane %v1911, 4
        %v1913 = vrot.slane %v1856, 7
        %v1914 = vsel %vm1875, %v1912, %v1913
        %v1915 = vrot.slane %v1913, 4
        %v1916 = vrot.slane %v1857, 7
        %v1917 = vrot.slane %v1916, 4
        %v1918 = vrot.slane %v1858, 7
        %v1919 = vsel %vm1875, %v1917, %v1918
        %v1920 = vrot.slane %v1918, 4
        %v1921 = vrot.slane %v1859, 7
        %v1922 = vrot.slane %v1921, 4
        %v1923 = vrot.slane %v1860, 7
        %v1924 = vsel %vm1875, %v1922, %v1923
        %v1925 = vrot.slane %v1923, 4
        %v1926 = vrot.slane %v1861, 7
        %v1927 = vrot.slane %v1926, 4
        %v1928 = vrot.slane %v1862, 7
        %v1929 = vsel %vm1875, %v1927, %v1928
        %v1930 = vrot.slane %v1928, 4
        %v1931 = vrot.slane %v1863, 7
        %v1932 = vrot.slane %v1931, 4
        %v1933 = vrot.slane %v1864, 7
        %v1934 = vsel %vm1875, %v1932, %v1933
        %v1935 = vrot.slane %v1933, 4
        %v1936 = vrot.slane %v1865, 7
        %v1937 = vrot.slane %v1936, 4
        %v1938 = vrot.slane %v1866, 7
        %v1939 = vsel %vm1875, %v1937, %v1938
        %v1940 = vrot.slane %v1938, 4
        %v1941 = vrot.slane %v1867, 7
        %v1942 = vrot.slane %v1941, 4
        %v1943 = vrot.slane %v1868, 7
        %v1944 = vsel %vm1875, %v1942, %v1943
        %v1945 = vrot.slane %v1943, 4
        %v1946 = vrot.slane %v1869, 7
        %v1947 = vrot.slane %v1946, 4
        %v1948 = vrot.slane %v1870, 7
        %v1949 = vsel %vm1875, %v1947, %v1948
        %v1950 = vrot.slane %v1948, 4
        %v1951 = vrot.slane %v1871, 7
        %v1952 = vrot.slane %v1951, 4
        %v1953 = vrot.slane %v1872, 7
        %v1954 = vsel %vm1875, %v1952, %v1953
        %v1955 = vrot.slane %v1953, 4
        %s2004 = scalar_lea.vmem [#allocation2], 24
        %vm2005 = vcmask 519169
        %2006 = vst.msk [vmem:[%s2004] sm:$0xe] %vm2005, %v1876
        %2007 = vst.msk [vmem:[%s2004 + $0x4] sm:$0xf] %vm278, %v1879
        %vm2008 = vcmask 516096
        %2009 = vst.msk [vmem:[%s2004 + $0x8] sm:$0x1] %vm2008, %v1880
        %2010 = vst.msk [vmem:[%s2004 + $0xc] sm:$0xe] %vm2005, %v1881
        %2011 = vst.msk [vmem:[%s2004 + $0x10] sm:$0xf] %vm278, %v1884
        %2012 = vst.msk [vmem:[%s2004 + $0x14] sm:$0x1] %vm2008, %v1885
        %2013 = vst.msk [vmem:[%s2004 + $0x18] sm:$0xe] %vm2005, %v1886
        %2014 = vst.msk [vmem:[%s2004 + $0x1c] sm:$0xf] %vm278, %v1889
        %2015 = vst.msk [vmem:[%s2004 + $0x20] sm:$0x1] %vm2008, %v1890
        %2016 = vst.msk [vmem:[%s2004 + $0x24] sm:$0xe] %vm2005, %v1891
        %2017 = vst.msk [vmem:[%s2004 + $0x28] sm:$0xf] %vm278, %v1894
        %2018 = vst.msk [vmem:[%s2004 + $0x2c] sm:$0x1] %vm2008, %v1895
        %2019 = vst.msk [vmem:[%s2004 + $0x30] sm:$0xe] %vm2005, %v1896
        %2020 = vst.msk [vmem:[%s2004 + $0x34] sm:$0xf] %vm278, %v1899
        %2021 = vst.msk [vmem:[%s2004 + $0x38] sm:$0x1] %vm2008, %v1900
        %2022 = vst.msk [vmem:[%s2004 + $0x3c] sm:$0xe] %vm2005, %v1901
        %2023 = vst.msk [vmem:[%s2004 + $0x40] sm:$0xf] %vm278, %v1904
        %2024 = vst.msk [vmem:[%s2004 + $0x44] sm:$0x1] %vm2008, %v1905
        %2025 = vst.msk [vmem:[%s2004 + $0x48] sm:$0xe] %vm2005, %v1906
        %2026 = vst.msk [vmem:[%s2004 + $0x4c] sm:$0xf] %vm278, %v1909
        %2027 = vst.msk [vmem:[%s2004 + $0x50] sm:$0x1] %vm2008, %v1910
        %2028 = vst.msk [vmem:[%s2004 + $0x54] sm:$0xe] %vm2005, %v1911
        %2029 = vst.msk [vmem:[%s2004 + $0x58] sm:$0xf] %vm278, %v1914
        %2030 = vst.msk [vmem:[%s2004 + $0x5c] sm:$0x1] %vm2008, %v1915
        %2031 = vst.msk [vmem:[%s2004 + $0x60] sm:$0xe] %vm2005, %v1916
        %2032 = vst.msk [vmem:[%s2004 + $0x64] sm:$0xf] %vm278, %v1919
        %2033 = vst.msk [vmem:[%s2004 + $0x68] sm:$0x1] %vm2008, %v1920
        %2034 = vst.msk [vmem:[%s2004 + $0x6c] sm:$0xe] %vm2005, %v1921
        %2035 = vst.msk [vmem:[%s2004 + $0x70] sm:$0xf] %vm278, %v1924
        %2036 = vst.msk [vmem:[%s2004 + $0x74] sm:$0x1] %vm2008, %v1925
        %2037 = vst.msk [vmem:[%s2004 + $0x78] sm:$0xe] %vm2005, %v1926
        %2038 = vst.msk [vmem:[%s2004 + $0x7c] sm:$0xf] %vm278, %v1929
        %2039 = vst.msk [vmem:[%s2004 + $0x80] sm:$0x1] %vm2008, %v1930
        %2040 = vst.msk [vmem:[%s2004 + $0x84] sm:$0xe] %vm2005, %v1931
        %2041 = vst.msk [vmem:[%s2004 + $0x88] sm:$0xf] %vm278, %v1934
        %2042 = vst.msk [vmem:[%s2004 + $0x8c] sm:$0x1] %vm2008, %v1935
        %2043 = vst.msk [vmem:[%s2004 + $0x90] sm:$0xe] %vm2005, %v1936
        %2044 = vst.msk [vmem:[%s2004 + $0x94] sm:$0xf] %vm278, %v1939
        %2045 = vst.msk [vmem:[%s2004 + $0x98] sm:$0x1] %vm2008, %v1940
        %2046 = vst.msk [vmem:[%s2004 + $0x9c] sm:$0xe] %vm2005, %v1941
        %2047 = vst.msk [vmem:[%s2004 + $0xa0] sm:$0xf] %vm278, %v1944
        %2048 = vst.msk [vmem:[%s2004 + $0xa4] sm:$0x1] %vm2008, %v1945
        %2049 = vst.msk [vmem:[%s2004 + $0xa8] sm:$0xe] %vm2005, %v1946
        %2050 = vst.msk [vmem:[%s2004 + $0xac] sm:$0xf] %vm278, %v1949
        %2051 = vst.msk [vmem:[%s2004 + $0xb0] sm:$0x1] %vm2008, %v1950
        %2052 = vst.msk [vmem:[%s2004 + $0xb4] sm:$0xe] %vm2005, %v1951
        %2053 = vst.msk [vmem:[%s2004 + $0xb8] sm:$0xf] %vm278, %v1954
        %2054 = vst.msk [vmem:[%s2004 + $0xbc] sm:$0x1] %vm2008, %v1955
        %v2055 = vld [vmem:[#allocation2] sm:$0xf]
        %v2056 = vld [vmem:[#allocation2 + $0x4] sm:$0xf]
        %v2057 = vld [vmem:[#allocation2 + $0xc] sm:$0xf]
        %v2058 = vld [vmem:[#allocation2 + $0x10] sm:$0xf]
        %v2059 = vld [vmem:[#allocation2 + $0x18] sm:$0xf]
        %v2060 = vld [vmem:[#allocation2 + $0x1c] sm:$0xf]
        %v2061 = vld [vmem:[#allocation2 + $0x24] sm:$0xf]
        %v2062 = vld [vmem:[#allocation2 + $0x28] sm:$0xf]
        %v2063 = vld [vmem:[#allocation2 + $0x30] sm:$0xf]
        %v2064 = vld [vmem:[#allocation2 + $0x34] sm:$0xf]
        %v2065 = vld [vmem:[#allocation2 + $0x3c] sm:$0xf]
        %v2066 = vld [vmem:[#allocation2 + $0x40] sm:$0xf]
        %v2067 = vld [vmem:[#allocation2 + $0x48] sm:$0xf]
        %v2068 = vld [vmem:[#allocation2 + $0x4c] sm:$0xf]
        %v2069 = vld [vmem:[#allocation2 + $0x54] sm:$0xf]
        %v2070 = vld [vmem:[#allocation2 + $0x58] sm:$0xf]
        %v2071 = vld [vmem:[#allocation2 + $0x60] sm:$0xf]
        %v2072 = vld [vmem:[#allocation2 + $0x64] sm:$0xf]
        %v2073 = vld [vmem:[#allocation2 + $0x6c] sm:$0xf]
        %v2074 = vld [vmem:[#allocation2 + $0x70] sm:$0xf]
        %v2075 = vld [vmem:[#allocation2 + $0x78] sm:$0xf]
        %v2076 = vld [vmem:[#allocation2 + $0x7c] sm:$0xf]
        %v2077 = vld [vmem:[#allocation2 + $0x84] sm:$0xf]
        %v2078 = vld [vmem:[#allocation2 + $0x88] sm:$0xf]
        %v2079 = vld [vmem:[#allocation2 + $0x90] sm:$0xf]
        %v2080 = vld [vmem:[#allocation2 + $0x94] sm:$0xf]
        %v2081 = vld [vmem:[#allocation2 + $0x9c] sm:$0xf]
        %v2082 = vld [vmem:[#allocation2 + $0xa0] sm:$0xf]
        %v2083 = vld [vmem:[#allocation2 + $0xa8] sm:$0xf]
        %v2084 = vld [vmem:[#allocation2 + $0xac] sm:$0xf]
        %v2085 = vld [vmem:[#allocation2 + $0xb4] sm:$0xf]
        %v2086 = vld [vmem:[#allocation2 + $0xb8] sm:$0xf]
        %v2087 = vld [vmem:[#allocation2 + $0xc0] sm:$0xf]
        %v2088 = vld [vmem:[#allocation2 + $0xc4] sm:$0xf]
        %v2089 = vld [vmem:[#allocation2 + $0xcc] sm:$0xf]
        %v2090 = vld [vmem:[#allocation2 + $0xd0] sm:$0xf]
        %v2091 = vld [vmem:[#allocation2 + $0xd8] sm:$0xf]
        %v2092 = vld [vmem:[#allocation2 + $0xdc] sm:$0xf]
        %v2093 = vld [vmem:[#allocation2 + $0xe4] sm:$0xf]
        %v2094 = vld [vmem:[#allocation2 + $0xe8] sm:$0xf]
        %v2095 = vld [vmem:[#allocation2 + $0x8] sm:$0x1]
        %v2096 = vld [vmem:[#allocation2 + $0x14] sm:$0x1]
        %v2097 = vld [vmem:[#allocation2 + $0x20] sm:$0x1]
        %v2098 = vld [vmem:[#allocation2 + $0x2c] sm:$0x1]
        %v2099 = vld [vmem:[#allocation2 + $0x38] sm:$0x1]
        %v2100 = vld [vmem:[#allocation2 + $0x44] sm:$0x1]
        %v2101 = vld [vmem:[#allocation2 + $0x50] sm:$0x1]
        %v2102 = vld [vmem:[#allocation2 + $0x5c] sm:$0x1]
        %v2103 = vld [vmem:[#allocation2 + $0x68] sm:$0x1]
        %v2104 = vld [vmem:[#allocation2 + $0x74] sm:$0x1]
        %v2105 = vld [vmem:[#allocation2 + $0x80] sm:$0x1]
        %v2106 = vld [vmem:[#allocation2 + $0x8c] sm:$0x1]
        %v2107 = vld [vmem:[#allocation2 + $0x98] sm:$0x1]
        %v2108 = vld [vmem:[#allocation2 + $0xa4] sm:$0x1]
        %v2109 = vld [vmem:[#allocation2 + $0xb0] sm:$0x1]
        %v2110 = vld [vmem:[#allocation2 + $0xbc] sm:$0x1]
        %v2111 = vld [vmem:[#allocation2 + $0xc8] sm:$0x1]
        %v2112 = vld [vmem:[#allocation2 + $0xd4] sm:$0x1]
        %v2113 = vld [vmem:[#allocation2 + $0xe0] sm:$0x1]
        %v2114 = vld [vmem:[#allocation2 + $0xec] sm:$0x1]
        %v2115 = vld [vmem:[#allocation2] sm:$0xe]
        %v2116 = vld [vmem:[#allocation2 + $0xc] sm:$0xe]
        %v2117 = vld [vmem:[#allocation2 + $0x18] sm:$0xe]
        %v2118 = vld [vmem:[#allocation2 + $0x24] sm:$0xe]
        %v2119 = vld [vmem:[#allocation2 + $0x30] sm:$0xe]
        %v2120 = vld [vmem:[#allocation2 + $0x3c] sm:$0xe]
        %v2121 = vld [vmem:[#allocation2 + $0x48] sm:$0xe]
        %v2122 = vld [vmem:[#allocation2 + $0x54] sm:$0xe]
        %v2123 = vld [vmem:[#allocation2 + $0x60] sm:$0xe]
        %v2124 = vld [vmem:[#allocation2 + $0x6c] sm:$0xe]
        %v2125 = vld [vmem:[#allocation2 + $0x78] sm:$0xe]
        %v2126 = vld [vmem:[#allocation2 + $0x84] sm:$0xe]
        %v2127 = vld [vmem:[#allocation2 + $0x90] sm:$0xe]
        %v2128 = vld [vmem:[#allocation2 + $0x9c] sm:$0xe]
        %v2129 = vld [vmem:[#allocation2 + $0xa8] sm:$0xe]
        %v2130 = vld [vmem:[#allocation2 + $0xb4] sm:$0xe]
        %v2131 = vld [vmem:[#allocation2 + $0xc0] sm:$0xe]
        %v2132 = vld [vmem:[#allocation2 + $0xcc] sm:$0xe]
        %v2133 = vld [vmem:[#allocation2 + $0xd8] sm:$0xe]
        %v2134 = vld [vmem:[#allocation2 + $0xe4] sm:$0xe]
        %v2135 = vld [vmem:[#allocation2 + $0x8] sm:$0x3]
        %v2136 = vld [vmem:[#allocation2 + $0x14] sm:$0x3]
        %v2137 = vld [vmem:[#allocation2 + $0x20] sm:$0x3]
        %v2138 = vld [vmem:[#allocation2 + $0x2c] sm:$0x3]
        %v2139 = vld [vmem:[#allocation2 + $0x38] sm:$0x3]
        %v2140 = vld [vmem:[#allocation2 + $0x44] sm:$0x3]
        %v2141 = vld [vmem:[#allocation2 + $0x50] sm:$0x3]
        %v2142 = vld [vmem:[#allocation2 + $0x5c] sm:$0x3]
        %v2143 = vld [vmem:[#allocation2 + $0x68] sm:$0x3]
        %v2144 = vld [vmem:[#allocation2 + $0x74] sm:$0x3]
        %v2145 = vld [vmem:[#allocation2 + $0x80] sm:$0x3]
        %v2146 = vld [vmem:[#allocation2 + $0x8c] sm:$0x3]
        %v2147 = vld [vmem:[#allocation2 + $0x98] sm:$0x3]
        %v2148 = vld [vmem:[#allocation2 + $0xa4] sm:$0x3]
        %v2149 = vld [vmem:[#allocation2 + $0xb0] sm:$0x3]
        %v2150 = vld [vmem:[#allocation2 + $0xbc] sm:$0x3]
        %v2151 = vld [vmem:[#allocation2 + $0xc8] sm:$0x3]
        %v2152 = vld [vmem:[#allocation2 + $0xd4] sm:$0x3]
        %v2153 = vld [vmem:[#allocation2 + $0xe0] sm:$0x3]
        %v2154 = vld [vmem:[#allocation2 + $0xec] sm:$0x3]
        %v2155 = vld [vmem:[#allocation2] sm:$0xc]
        %v2156 = vld [vmem:[#allocation2 + $0xc] sm:$0xc]
        %v2157 = vld [vmem:[#allocation2 + $0x18] sm:$0xc]
        %v2158 = vld [vmem:[#allocation2 + $0x24] sm:$0xc]
        %v2159 = vld [vmem:[#allocation2 + $0x30] sm:$0xc]
        %v2160 = vld [vmem:[#allocation2 + $0x3c] sm:$0xc]
        %v2161 = vld [vmem:[#allocation2 + $0x48] sm:$0xc]
        %v2162 = vld [vmem:[#allocation2 + $0x54] sm:$0xc]
        %v2163 = vld [vmem:[#allocation2 + $0x60] sm:$0xc]
        %v2164 = vld [vmem:[#allocation2 + $0x6c] sm:$0xc]
        %v2165 = vld [vmem:[#allocation2 + $0x78] sm:$0xc]
        %v2166 = vld [vmem:[#allocation2 + $0x84] sm:$0xc]
        %v2167 = vld [vmem:[#allocation2 + $0x90] sm:$0xc]
        %v2168 = vld [vmem:[#allocation2 + $0x9c] sm:$0xc]
        %v2169 = vld [vmem:[#allocation2 + $0xa8] sm:$0xc]
        %v2170 = vld [vmem:[#allocation2 + $0xb4] sm:$0xc]
        %v2171 = vld [vmem:[#allocation2 + $0xc0] sm:$0xc]
        %v2172 = vld [vmem:[#allocation2 + $0xcc] sm:$0xc]
        %v2173 = vld [vmem:[#allocation2 + $0xd8] sm:$0xc]
        %v2174 = vld [vmem:[#allocation2 + $0xe4] sm:$0xc]
        %v2215 = vunpack.c.l.b16 %v2055
        %v2216 = vunpack.c.l.b16 %v2056
        %v2217 = vunpack.c.l.b16 %v2057
        %v2218 = vunpack.c.l.b16 %v2058
        %v2219 = vunpack.c.l.b16 %v2059
        %v2220 = vunpack.c.l.b16 %v2060
        %v2221 = vunpack.c.l.b16 %v2061
        %v2222 = vunpack.c.l.b16 %v2062
        %v2223 = vunpack.c.l.b16 %v2063
        %v2224 = vunpack.c.l.b16 %v2064
        %v2225 = vunpack.c.l.b16 %v2065
        %v2226 = vunpack.c.l.b16 %v2066
        %v2227 = vunpack.c.l.b16 %v2067
        %v2228 = vunpack.c.l.b16 %v2068
        %v2229 = vunpack.c.l.b16 %v2069
        %v2230 = vunpack.c.l.b16 %v2070
        %v2231 = vunpack.c.l.b16 %v2071
        %v2232 = vunpack.c.l.b16 %v2072
        %v2233 = vunpack.c.l.b16 %v2073
        %v2234 = vunpack.c.l.b16 %v2074
        %v2235 = vunpack.c.l.b16 %v2075
        %v2236 = vunpack.c.l.b16 %v2076
        %v2237 = vunpack.c.l.b16 %v2077
        %v2238 = vunpack.c.l.b16 %v2078
        %v2239 = vunpack.c.l.b16 %v2079
        %v2240 = vunpack.c.l.b16 %v2080
        %v2241 = vunpack.c.l.b16 %v2081
        %v2242 = vunpack.c.l.b16 %v2082
        %v2243 = vunpack.c.l.b16 %v2083
        %v2244 = vunpack.c.l.b16 %v2084
        %v2245 = vunpack.c.l.b16 %v2085
        %v2246 = vunpack.c.l.b16 %v2086
        %v2247 = vunpack.c.l.b16 %v2087
        %v2248 = vunpack.c.l.b16 %v2088
        %v2249 = vunpack.c.l.b16 %v2089
        %v2250 = vunpack.c.l.b16 %v2090
        %v2251 = vunpack.c.l.b16 %v2091
        %v2252 = vunpack.c.l.b16 %v2092
        %v2253 = vunpack.c.l.b16 %v2093
        %v2254 = vunpack.c.l.b16 %v2094
        %v2255 = vpack.c.b16 %v2216, %v2215
        %v2256 = vpack.c.b16 %v2218, %v2217
        %v2257 = vpack.c.b16 %v2220, %v2219
        %v2258 = vpack.c.b16 %v2222, %v2221
        %v2259 = vpack.c.b16 %v2224, %v2223
        %v2260 = vpack.c.b16 %v2226, %v2225
        %v2261 = vpack.c.b16 %v2228, %v2227
        %v2262 = vpack.c.b16 %v2230, %v2229
        %v2263 = vpack.c.b16 %v2232, %v2231
        %v2264 = vpack.c.b16 %v2234, %v2233
        %v2265 = vpack.c.b16 %v2236, %v2235
        %v2266 = vpack.c.b16 %v2238, %v2237
        %v2267 = vpack.c.b16 %v2240, %v2239
        %v2268 = vpack.c.b16 %v2242, %v2241
        %v2269 = vpack.c.b16 %v2244, %v2243
        %v2270 = vpack.c.b16 %v2246, %v2245
        %v2271 = vpack.c.b16 %v2248, %v2247
        %v2272 = vpack.c.b16 %v2250, %v2249
        %v2273 = vpack.c.b16 %v2252, %v2251
        %v2274 = vpack.c.b16 %v2254, %v2253
        %v2295 = vunpack.c.l.b16 %v2095
        %v2296 = vunpack.c.l.b16 %v2096
        %v2297 = vunpack.c.l.b16 %v2097
        %v2298 = vunpack.c.l.b16 %v2098
        %v2299 = vunpack.c.l.b16 %v2099
        %v2300 = vunpack.c.l.b16 %v2100
        %v2301 = vunpack.c.l.b16 %v2101
        %v2302 = vunpack.c.l.b16 %v2102
        %v2303 = vunpack.c.l.b16 %v2103
        %v2304 = vunpack.c.l.b16 %v2104
        %v2305 = vunpack.c.l.b16 %v2105
        %v2306 = vunpack.c.l.b16 %v2106
        %v2307 = vunpack.c.l.b16 %v2107
        %v2308 = vunpack.c.l.b16 %v2108
        %v2309 = vunpack.c.l.b16 %v2109
        %v2310 = vunpack.c.l.b16 %v2110
        %v2311 = vunpack.c.l.b16 %v2111
        %v2312 = vunpack.c.l.b16 %v2112
        %v2313 = vunpack.c.l.b16 %v2113
        %v2314 = vunpack.c.l.b16 %v2114
        %v2315 = vpack.c.b16 %v2295, %v2295
        %v2316 = vpack.c.b16 %v2296, %v2296
        %v2317 = vpack.c.b16 %v2297, %v2297
        %v2318 = vpack.c.b16 %v2298, %v2298
        %v2319 = vpack.c.b16 %v2299, %v2299
        %v2320 = vpack.c.b16 %v2300, %v2300
        %v2321 = vpack.c.b16 %v2301, %v2301
        %v2322 = vpack.c.b16 %v2302, %v2302
        %v2323 = vpack.c.b16 %v2303, %v2303
        %v2324 = vpack.c.b16 %v2304, %v2304
        %v2325 = vpack.c.b16 %v2305, %v2305
        %v2326 = vpack.c.b16 %v2306, %v2306
        %v2327 = vpack.c.b16 %v2307, %v2307
        %v2328 = vpack.c.b16 %v2308, %v2308
        %v2329 = vpack.c.b16 %v2309, %v2309
        %v2330 = vpack.c.b16 %v2310, %v2310
        %v2331 = vpack.c.b16 %v2311, %v2311
        %v2332 = vpack.c.b16 %v2312, %v2312
        %v2333 = vpack.c.b16 %v2313, %v2313
        %v2334 = vpack.c.b16 %v2314, %v2314
        %v2336 = vshrl.u32 %v2255, 16
        %v2338 = vshll.u32 %v2255, 16
        %v2340 = vrot.slane %v2338, 1
        %v2341 = vor.u32 %v2336, %v2340
        %v2343 = vshll.u32 %v2315, 16
        %v2345 = vrot.slane %v2343, 1
        %v2346 = vsel %vm484, %v2341, %v2345
        %v2348 = vshrl.u32 %v2256, 16
        %v2350 = vshll.u32 %v2256, 16
        %v2352 = vrot.slane %v2350, 1
        %v2353 = vor.u32 %v2348, %v2352
        %v2355 = vshll.u32 %v2316, 16
        %v2357 = vrot.slane %v2355, 1
        %v2358 = vsel %vm484, %v2353, %v2357
        %v2360 = vshrl.u32 %v2257, 16
        %v2362 = vshll.u32 %v2257, 16
        %v2364 = vrot.slane %v2362, 1
        %v2365 = vor.u32 %v2360, %v2364
        %v2367 = vshll.u32 %v2317, 16
        %v2369 = vrot.slane %v2367, 1
        %v2370 = vsel %vm484, %v2365, %v2369
        %v2372 = vshrl.u32 %v2258, 16
        %v2374 = vshll.u32 %v2258, 16
        %v2376 = vrot.slane %v2374, 1
        %v2377 = vor.u32 %v2372, %v2376
        %v2379 = vshll.u32 %v2318, 16
        %v2381 = vrot.slane %v2379, 1
        %v2382 = vsel %vm484, %v2377, %v2381
        %v2384 = vshrl.u32 %v2259, 16
        %v2386 = vshll.u32 %v2259, 16
        %v2388 = vrot.slane %v2386, 1
        %v2389 = vor.u32 %v2384, %v2388
        %v2391 = vshll.u32 %v2319, 16
        %v2393 = vrot.slane %v2391, 1
        %v2394 = vsel %vm484, %v2389, %v2393
        %v2396 = vshrl.u32 %v2260, 16
        %v2398 = vshll.u32 %v2260, 16
        %v2400 = vrot.slane %v2398, 1
        %v2401 = vor.u32 %v2396, %v2400
        %v2403 = vshll.u32 %v2320, 16
        %v2405 = vrot.slane %v2403, 1
        %v2406 = vsel %vm484, %v2401, %v2405
        %v2408 = vshrl.u32 %v2261, 16
        %v2410 = vshll.u32 %v2261, 16
        %v2412 = vrot.slane %v2410, 1
        %v2413 = vor.u32 %v2408, %v2412
        %v2415 = vshll.u32 %v2321, 16
        %v2417 = vrot.slane %v2415, 1
        %v2418 = vsel %vm484, %v2413, %v2417
        %v2420 = vshrl.u32 %v2262, 16
        %v2422 = vshll.u32 %v2262, 16
        %v2424 = vrot.slane %v2422, 1
        %v2425 = vor.u32 %v2420, %v2424
        %v2427 = vshll.u32 %v2322, 16
        %v2429 = vrot.slane %v2427, 1
        %v2430 = vsel %vm484, %v2425, %v2429
        %v2432 = vshrl.u32 %v2263, 16
        %v2434 = vshll.u32 %v2263, 16
        %v2436 = vrot.slane %v2434, 1
        %v2437 = vor.u32 %v2432, %v2436
        %v2439 = vshll.u32 %v2323, 16
        %v2441 = vrot.slane %v2439, 1
        %v2442 = vsel %vm484, %v2437, %v2441
        %v2444 = vshrl.u32 %v2264, 16
        %v2446 = vshll.u32 %v2264, 16
        %v2448 = vrot.slane %v2446, 1
        %v2449 = vor.u32 %v2444, %v2448
        %v2451 = vshll.u32 %v2324, 16
        %v2453 = vrot.slane %v2451, 1
        %v2454 = vsel %vm484, %v2449, %v2453
        %v2456 = vshrl.u32 %v2265, 16
        %v2458 = vshll.u32 %v2265, 16
        %v2460 = vrot.slane %v2458, 1
        %v2461 = vor.u32 %v2456, %v2460
        %v2463 = vshll.u32 %v2325, 16
        %v2465 = vrot.slane %v2463, 1
        %v2466 = vsel %vm484, %v2461, %v2465
        %v2468 = vshrl.u32 %v2266, 16
        %v2470 = vshll.u32 %v2266, 16
        %v2472 = vrot.slane %v2470, 1
        %v2473 = vor.u32 %v2468, %v2472
        %v2475 = vshll.u32 %v2326, 16
        %v2477 = vrot.slane %v2475, 1
        %v2478 = vsel %vm484, %v2473, %v2477
        %v2480 = vshrl.u32 %v2267, 16
        %v2482 = vshll.u32 %v2267, 16
        %v2484 = vrot.slane %v2482, 1
        %v2485 = vor.u32 %v2480, %v2484
        %v2487 = vshll.u32 %v2327, 16
        %v2489 = vrot.slane %v2487, 1
        %v2490 = vsel %vm484, %v2485, %v2489
        %v2492 = vshrl.u32 %v2268, 16
        %v2494 = vshll.u32 %v2268, 16
        %v2496 = vrot.slane %v2494, 1
        %v2497 = vor.u32 %v2492, %v2496
        %v2499 = vshll.u32 %v2328, 16
        %v2501 = vrot.slane %v2499, 1
        %v2502 = vsel %vm484, %v2497, %v2501
        %v2504 = vshrl.u32 %v2269, 16
        %v2506 = vshll.u32 %v2269, 16
        %v2508 = vrot.slane %v2506, 1
        %v2509 = vor.u32 %v2504, %v2508
        %v2511 = vshll.u32 %v2329, 16
        %v2513 = vrot.slane %v2511, 1
        %v2514 = vsel %vm484, %v2509, %v2513
        %v2516 = vshrl.u32 %v2270, 16
        %v2518 = vshll.u32 %v2270, 16
        %v2520 = vrot.slane %v2518, 1
        %v2521 = vor.u32 %v2516, %v2520
        %v2523 = vshll.u32 %v2330, 16
        %v2525 = vrot.slane %v2523, 1
        %v2526 = vsel %vm484, %v2521, %v2525
        %v2528 = vshrl.u32 %v2271, 16
        %v2530 = vshll.u32 %v2271, 16
        %v2532 = vrot.slane %v2530, 1
        %v2533 = vor.u32 %v2528, %v2532
        %v2535 = vshll.u32 %v2331, 16
        %v2537 = vrot.slane %v2535, 1
        %v2538 = vsel %vm484, %v2533, %v2537
        %v2540 = vshrl.u32 %v2272, 16
        %v2542 = vshll.u32 %v2272, 16
        %v2544 = vrot.slane %v2542, 1
        %v2545 = vor.u32 %v2540, %v2544
        %v2547 = vshll.u32 %v2332, 16
        %v2549 = vrot.slane %v2547, 1
        %v2550 = vsel %vm484, %v2545, %v2549
        %v2552 = vshrl.u32 %v2273, 16
        %v2554 = vshll.u32 %v2273, 16
        %v2556 = vrot.slane %v2554, 1
        %v2557 = vor.u32 %v2552, %v2556
        %v2559 = vshll.u32 %v2333, 16
        %v2561 = vrot.slane %v2559, 1
        %v2562 = vsel %vm484, %v2557, %v2561
        %v2564 = vshrl.u32 %v2274, 16
        %v2566 = vshll.u32 %v2274, 16
        %v2568 = vrot.slane %v2566, 1
        %v2569 = vor.u32 %v2564, %v2568
        %v2571 = vshll.u32 %v2334, 16
        %v2573 = vrot.slane %v2571, 1
        %v2574 = vsel %vm484, %v2569, %v2573
        %2575 = vrot.lane.b32.xlu0 %v2346, 64
        %v2576 = vpop.permute.xlu0 %2575
        %2577 = vrot.lane.b32.xlu0 %v2358, 64
        %v2578 = vpop.permute.xlu0 %2577
        %2579 = vrot.lane.b32.xlu0 %v2370, 64
        %v2580 = vpop.permute.xlu0 %2579
        %2581 = vrot.lane.b32.xlu0 %v2382, 64
        %v2582 = vpop.permute.xlu0 %2581
        %2583 = vrot.lane.b32.xlu0 %v2394, 64
        %v2584 = vpop.permute.xlu0 %2583
        %2585 = vrot.lane.b32.xlu0 %v2406, 64
        %v2586 = vpop.permute.xlu0 %2585
        %2587 = vrot.lane.b32.xlu0 %v2418, 64
        %v2588 = vpop.permute.xlu0 %2587
        %2589 = vrot.lane.b32.xlu0 %v2430, 64
        %v2590 = vpop.permute.xlu0 %2589
        %2591 = vrot.lane.b32.xlu0 %v2442, 64
        %v2592 = vpop.permute.xlu0 %2591
        %2593 = vrot.lane.b32.xlu0 %v2454, 64
        %v2594 = vpop.permute.xlu0 %2593
        %2595 = vrot.lane.b32.xlu0 %v2466, 64
        %v2596 = vpop.permute.xlu0 %2595
        %2597 = vrot.lane.b32.xlu0 %v2478, 64
        %v2598 = vpop.permute.xlu0 %2597
        %2599 = vrot.lane.b32.xlu0 %v2490, 64
        %v2600 = vpop.permute.xlu0 %2599
        %2601 = vrot.lane.b32.xlu0 %v2502, 64
        %v2602 = vpop.permute.xlu0 %2601
        %2603 = vrot.lane.b32.xlu0 %v2514, 64
        %v2604 = vpop.permute.xlu0 %2603
        %2605 = vrot.lane.b32.xlu0 %v2526, 64
        %v2606 = vpop.permute.xlu0 %2605
        %2607 = vrot.lane.b32.xlu0 %v2538, 64
        %v2608 = vpop.permute.xlu0 %2607
        %2609 = vrot.lane.b32.xlu0 %v2550, 64
        %v2610 = vpop.permute.xlu0 %2609
        %2611 = vrot.lane.b32.xlu0 %v2562, 64
        %v2612 = vpop.permute.xlu0 %2611
        %2613 = vrot.lane.b32.xlu0 %v2574, 64
        %v2614 = vpop.permute.xlu0 %2613
        %v2635 = vunpack.c.l.b16 %v2115
        %v2636 = vunpack.c.l.b16 %v2116
        %v2637 = vunpack.c.l.b16 %v2117
        %v2638 = vunpack.c.l.b16 %v2118
        %v2639 = vunpack.c.l.b16 %v2119
        %v2640 = vunpack.c.l.b16 %v2120
        %v2641 = vunpack.c.l.b16 %v2121
        %v2642 = vunpack.c.l.b16 %v2122
        %v2643 = vunpack.c.l.b16 %v2123
        %v2644 = vunpack.c.l.b16 %v2124
        %v2645 = vunpack.c.l.b16 %v2125
        %v2646 = vunpack.c.l.b16 %v2126
        %v2647 = vunpack.c.l.b16 %v2127
        %v2648 = vunpack.c.l.b16 %v2128
        %v2649 = vunpack.c.l.b16 %v2129
        %v2650 = vunpack.c.l.b16 %v2130
        %v2651 = vunpack.c.l.b16 %v2131
        %v2652 = vunpack.c.l.b16 %v2132
        %v2653 = vunpack.c.l.b16 %v2133
        %v2654 = vunpack.c.l.b16 %v2134
        %v2655 = vpack.c.b16 %v2216, %v2635
        %v2656 = vpack.c.b16 %v2218, %v2636
        %v2657 = vpack.c.b16 %v2220, %v2637
        %v2658 = vpack.c.b16 %v2222, %v2638
        %v2659 = vpack.c.b16 %v2224, %v2639
        %v2660 = vpack.c.b16 %v2226, %v2640
        %v2661 = vpack.c.b16 %v2228, %v2641
        %v2662 = vpack.c.b16 %v2230, %v2642
        %v2663 = vpack.c.b16 %v2232, %v2643
        %v2664 = vpack.c.b16 %v2234, %v2644
        %v2665 = vpack.c.b16 %v2236, %v2645
        %v2666 = vpack.c.b16 %v2238, %v2646
        %v2667 = vpack.c.b16 %v2240, %v2647
        %v2668 = vpack.c.b16 %v2242, %v2648
        %v2669 = vpack.c.b16 %v2244, %v2649
        %v2670 = vpack.c.b16 %v2246, %v2650
        %v2671 = vpack.c.b16 %v2248, %v2651
        %v2672 = vpack.c.b16 %v2250, %v2652
        %v2673 = vpack.c.b16 %v2252, %v2653
        %v2674 = vpack.c.b16 %v2254, %v2654
        %v2675 = vrot.slane %v2655, 1
        %v2676 = vrot.slane %v2315, 1
        %v2677 = vsel %vm737, %v2675, %v2676
        %v2678 = vrot.slane %v2656, 1
        %v2679 = vrot.slane %v2316, 1
        %v2680 = vsel %vm737, %v2678, %v2679
        %v2681 = vrot.slane %v2657, 1
        %v2682 = vrot.slane %v2317, 1
        %v2683 = vsel %vm737, %v2681, %v2682
        %v2684 = vrot.slane %v2658, 1
        %v2685 = vrot.slane %v2318, 1
        %v2686 = vsel %vm737, %v2684, %v2685
        %v2687 = vrot.slane %v2659, 1
        %v2688 = vrot.slane %v2319, 1
        %v2689 = vsel %vm737, %v2687, %v2688
        %v2690 = vrot.slane %v2660, 1
        %v2691 = vrot.slane %v2320, 1
        %v2692 = vsel %vm737, %v2690, %v2691
        %v2693 = vrot.slane %v2661, 1
        %v2694 = vrot.slane %v2321, 1
        %v2695 = vsel %vm737, %v2693, %v2694
        %v2696 = vrot.slane %v2662, 1
        %v2697 = vrot.slane %v2322, 1
        %v2698 = vsel %vm737, %v2696, %v2697
        %v2699 = vrot.slane %v2663, 1
        %v2700 = vrot.slane %v2323, 1
        %v2701 = vsel %vm737, %v2699, %v2700
        %v2702 = vrot.slane %v2664, 1
        %v2703 = vrot.slane %v2324, 1
        %v2704 = vsel %vm737, %v2702, %v2703
        %v2705 = vrot.slane %v2665, 1
        %v2706 = vrot.slane %v2325, 1
        %v2707 = vsel %vm737, %v2705, %v2706
        %v2708 = vrot.slane %v2666, 1
        %v2709 = vrot.slane %v2326, 1
        %v2710 = vsel %vm737, %v2708, %v2709
        %v2711 = vrot.slane %v2667, 1
        %v2712 = vrot.slane %v2327, 1
        %v2713 = vsel %vm737, %v2711, %v2712
        %v2714 = vrot.slane %v2668, 1
        %v2715 = vrot.slane %v2328, 1
        %v2716 = vsel %vm737, %v2714, %v2715
        %v2717 = vrot.slane %v2669, 1
        %v2718 = vrot.slane %v2329, 1
        %v2719 = vsel %vm737, %v2717, %v2718
        %v2720 = vrot.slane %v2670, 1
        %v2721 = vrot.slane %v2330, 1
        %v2722 = vsel %vm737, %v2720, %v2721
        %v2723 = vrot.slane %v2671, 1
        %v2724 = vrot.slane %v2331, 1
        %v2725 = vsel %vm737, %v2723, %v2724
        %v2726 = vrot.slane %v2672, 1
        %v2727 = vrot.slane %v2332, 1
        %v2728 = vsel %vm737, %v2726, %v2727
        %v2729 = vrot.slane %v2673, 1
        %v2730 = vrot.slane %v2333, 1
        %v2731 = vsel %vm737, %v2729, %v2730
        %v2732 = vrot.slane %v2674, 1
        %v2733 = vrot.slane %v2334, 1
        %v2734 = vsel %vm737, %v2732, %v2733
        %v2755 = vunpack.c.l.b16 %v2135
        %v2756 = vunpack.c.l.b16 %v2136
        %v2757 = vunpack.c.l.b16 %v2137
        %v2758 = vunpack.c.l.b16 %v2138
        %v2759 = vunpack.c.l.b16 %v2139
        %v2760 = vunpack.c.l.b16 %v2140
        %v2761 = vunpack.c.l.b16 %v2141
        %v2762 = vunpack.c.l.b16 %v2142
        %v2763 = vunpack.c.l.b16 %v2143
        %v2764 = vunpack.c.l.b16 %v2144
        %v2765 = vunpack.c.l.b16 %v2145
        %v2766 = vunpack.c.l.b16 %v2146
        %v2767 = vunpack.c.l.b16 %v2147
        %v2768 = vunpack.c.l.b16 %v2148
        %v2769 = vunpack.c.l.b16 %v2149
        %v2770 = vunpack.c.l.b16 %v2150
        %v2771 = vunpack.c.l.b16 %v2151
        %v2772 = vunpack.c.l.b16 %v2152
        %v2773 = vunpack.c.l.b16 %v2153
        %v2774 = vunpack.c.l.b16 %v2154
        %v2775 = vpack.c.b16 %v2755, %v2755
        %v2776 = vpack.c.b16 %v2756, %v2756
        %v2777 = vpack.c.b16 %v2757, %v2757
        %v2778 = vpack.c.b16 %v2758, %v2758
        %v2779 = vpack.c.b16 %v2759, %v2759
        %v2780 = vpack.c.b16 %v2760, %v2760
        %v2781 = vpack.c.b16 %v2761, %v2761
        %v2782 = vpack.c.b16 %v2762, %v2762
        %v2783 = vpack.c.b16 %v2763, %v2763
        %v2784 = vpack.c.b16 %v2764, %v2764
        %v2785 = vpack.c.b16 %v2765, %v2765
        %v2786 = vpack.c.b16 %v2766, %v2766
        %v2787 = vpack.c.b16 %v2767, %v2767
        %v2788 = vpack.c.b16 %v2768, %v2768
        %v2789 = vpack.c.b16 %v2769, %v2769
        %v2790 = vpack.c.b16 %v2770, %v2770
        %v2791 = vpack.c.b16 %v2771, %v2771
        %v2792 = vpack.c.b16 %v2772, %v2772
        %v2793 = vpack.c.b16 %v2773, %v2773
        %v2794 = vpack.c.b16 %v2774, %v2774
        %vm2795 = vsmask.f32 6400
        %v2797 = vshrl.u32 %v2655, 16
        %v2799 = vrot.slane %v2797, 1
        %v2800 = vshll.u32 %v2655, 16
        %v2802 = vrot.slane %v2800, 2
        %v2803 = vor.u32 %v2799, %v2802
        %v2805 = vshrl.u32 %v2775, 16
        %v2807 = vrot.slane %v2805, 1
        %v2808 = vshll.u32 %v2775, 16
        %v2810 = vrot.slane %v2808, 2
        %v2811 = vor.u32 %v2807, %v2810
        %v2812 = vsel %vm2795, %v2803, %v2811
        %v2814 = vshrl.u32 %v2656, 16
        %v2816 = vrot.slane %v2814, 1
        %v2817 = vshll.u32 %v2656, 16
        %v2819 = vrot.slane %v2817, 2
        %v2820 = vor.u32 %v2816, %v2819
        %v2822 = vshrl.u32 %v2776, 16
        %v2824 = vrot.slane %v2822, 1
        %v2825 = vshll.u32 %v2776, 16
        %v2827 = vrot.slane %v2825, 2
        %v2828 = vor.u32 %v2824, %v2827
        %v2829 = vsel %vm2795, %v2820, %v2828
        %v2831 = vshrl.u32 %v2657, 16
        %v2833 = vrot.slane %v2831, 1
        %v2834 = vshll.u32 %v2657, 16
        %v2836 = vrot.slane %v2834, 2
        %v2837 = vor.u32 %v2833, %v2836
        %v2839 = vshrl.u32 %v2777, 16
        %v2841 = vrot.slane %v2839, 1
        %v2842 = vshll.u32 %v2777, 16
        %v2844 = vrot.slane %v2842, 2
        %v2845 = vor.u32 %v2841, %v2844
        %v2846 = vsel %vm2795, %v2837, %v2845
        %v2848 = vshrl.u32 %v2658, 16
        %v2850 = vrot.slane %v2848, 1
        %v2851 = vshll.u32 %v2658, 16
        %v2853 = vrot.slane %v2851, 2
        %v2854 = vor.u32 %v2850, %v2853
        %v2856 = vshrl.u32 %v2778, 16
        %v2858 = vrot.slane %v2856, 1
        %v2859 = vshll.u32 %v2778, 16
        %v2861 = vrot.slane %v2859, 2
        %v2862 = vor.u32 %v2858, %v2861
        %v2863 = vsel %vm2795, %v2854, %v2862
        %v2865 = vshrl.u32 %v2659, 16
        %v2867 = vrot.slane %v2865, 1
        %v2868 = vshll.u32 %v2659, 16
        %v2870 = vrot.slane %v2868, 2
        %v2871 = vor.u32 %v2867, %v2870
        %v2873 = vshrl.u32 %v2779, 16
        %v2875 = vrot.slane %v2873, 1
        %v2876 = vshll.u32 %v2779, 16
        %v2878 = vrot.slane %v2876, 2
        %v2879 = vor.u32 %v2875, %v2878
        %v2880 = vsel %vm2795, %v2871, %v2879
        %v2882 = vshrl.u32 %v2660, 16
        %v2884 = vrot.slane %v2882, 1
        %v2885 = vshll.u32 %v2660, 16
        %v2887 = vrot.slane %v2885, 2
        %v2888 = vor.u32 %v2884, %v2887
        %v2890 = vshrl.u32 %v2780, 16
        %v2892 = vrot.slane %v2890, 1
        %v2893 = vshll.u32 %v2780, 16
        %v2895 = vrot.slane %v2893, 2
        %v2896 = vor.u32 %v2892, %v2895
        %v2897 = vsel %vm2795, %v2888, %v2896
        %v2899 = vshrl.u32 %v2661, 16
        %v2901 = vrot.slane %v2899, 1
        %v2902 = vshll.u32 %v2661, 16
        %v2904 = vrot.slane %v2902, 2
        %v2905 = vor.u32 %v2901, %v2904
        %v2907 = vshrl.u32 %v2781, 16
        %v2909 = vrot.slane %v2907, 1
        %v2910 = vshll.u32 %v2781, 16
        %v2912 = vrot.slane %v2910, 2
        %v2913 = vor.u32 %v2909, %v2912
        %v2914 = vsel %vm2795, %v2905, %v2913
        %v2916 = vshrl.u32 %v2662, 16
        %v2918 = vrot.slane %v2916, 1
        %v2919 = vshll.u32 %v2662, 16
        %v2921 = vrot.slane %v2919, 2
        %v2922 = vor.u32 %v2918, %v2921
        %v2924 = vshrl.u32 %v2782, 16
        %v2926 = vrot.slane %v2924, 1
        %v2927 = vshll.u32 %v2782, 16
        %v2929 = vrot.slane %v2927, 2
        %v2930 = vor.u32 %v2926, %v2929
        %v2931 = vsel %vm2795, %v2922, %v2930
        %v2933 = vshrl.u32 %v2663, 16
        %v2935 = vrot.slane %v2933, 1
        %v2936 = vshll.u32 %v2663, 16
        %v2938 = vrot.slane %v2936, 2
        %v2939 = vor.u32 %v2935, %v2938
        %v2941 = vshrl.u32 %v2783, 16
        %v2943 = vrot.slane %v2941, 1
        %v2944 = vshll.u32 %v2783, 16
        %v2946 = vrot.slane %v2944, 2
        %v2947 = vor.u32 %v2943, %v2946
        %v2948 = vsel %vm2795, %v2939, %v2947
        %v2950 = vshrl.u32 %v2664, 16
        %v2952 = vrot.slane %v2950, 1
        %v2953 = vshll.u32 %v2664, 16
        %v2955 = vrot.slane %v2953, 2
        %v2956 = vor.u32 %v2952, %v2955
        %v2958 = vshrl.u32 %v2784, 16
        %v2960 = vrot.slane %v2958, 1
        %v2961 = vshll.u32 %v2784, 16
        %v2963 = vrot.slane %v2961, 2
        %v2964 = vor.u32 %v2960, %v2963
        %v2965 = vsel %vm2795, %v2956, %v2964
        %v2967 = vshrl.u32 %v2665, 16
        %v2969 = vrot.slane %v2967, 1
        %v2970 = vshll.u32 %v2665, 16
        %v2972 = vrot.slane %v2970, 2
        %v2973 = vor.u32 %v2969, %v2972
        %v2975 = vshrl.u32 %v2785, 16
        %v2977 = vrot.slane %v2975, 1
        %v2978 = vshll.u32 %v2785, 16
        %v2980 = vrot.slane %v2978, 2
        %v2981 = vor.u32 %v2977, %v2980
        %v2982 = vsel %vm2795, %v2973, %v2981
        %v2984 = vshrl.u32 %v2666, 16
        %v2986 = vrot.slane %v2984, 1
        %v2987 = vshll.u32 %v2666, 16
        %v2989 = vrot.slane %v2987, 2
        %v2990 = vor.u32 %v2986, %v2989
        %v2992 = vshrl.u32 %v2786, 16
        %v2994 = vrot.slane %v2992, 1
        %v2995 = vshll.u32 %v2786, 16
        %v2997 = vrot.slane %v2995, 2
        %v2998 = vor.u32 %v2994, %v2997
        %v2999 = vsel %vm2795, %v2990, %v2998
        %v3001 = vshrl.u32 %v2667, 16
        %v3003 = vrot.slane %v3001, 1
        %v3004 = vshll.u32 %v2667, 16
        %v3006 = vrot.slane %v3004, 2
        %v3007 = vor.u32 %v3003, %v3006
        %v3009 = vshrl.u32 %v2787, 16
        %v3011 = vrot.slane %v3009, 1
        %v3012 = vshll.u32 %v2787, 16
        %v3014 = vrot.slane %v3012, 2
        %v3015 = vor.u32 %v3011, %v3014
        %v3016 = vsel %vm2795, %v3007, %v3015
        %v3018 = vshrl.u32 %v2668, 16
        %v3020 = vrot.slane %v3018, 1
        %v3021 = vshll.u32 %v2668, 16
        %v3023 = vrot.slane %v3021, 2
        %v3024 = vor.u32 %v3020, %v3023
        %v3026 = vshrl.u32 %v2788, 16
        %v3028 = vrot.slane %v3026, 1
        %v3029 = vshll.u32 %v2788, 16
        %v3031 = vrot.slane %v3029, 2
        %v3032 = vor.u32 %v3028, %v3031
        %v3033 = vsel %vm2795, %v3024, %v3032
        %v3035 = vshrl.u32 %v2669, 16
        %v3037 = vrot.slane %v3035, 1
        %v3038 = vshll.u32 %v2669, 16
        %v3040 = vrot.slane %v3038, 2
        %v3041 = vor.u32 %v3037, %v3040
        %v3043 = vshrl.u32 %v2789, 16
        %v3045 = vrot.slane %v3043, 1
        %v3046 = vshll.u32 %v2789, 16
        %v3048 = vrot.slane %v3046, 2
        %v3049 = vor.u32 %v3045, %v3048
        %v3050 = vsel %vm2795, %v3041, %v3049
        %v3052 = vshrl.u32 %v2670, 16
        %v3054 = vrot.slane %v3052, 1
        %v3055 = vshll.u32 %v2670, 16
        %v3057 = vrot.slane %v3055, 2
        %v3058 = vor.u32 %v3054, %v3057
        %v3060 = vshrl.u32 %v2790, 16
        %v3062 = vrot.slane %v3060, 1
        %v3063 = vshll.u32 %v2790, 16
        %v3065 = vrot.slane %v3063, 2
        %v3066 = vor.u32 %v3062, %v3065
        %v3067 = vsel %vm2795, %v3058, %v3066
        %v3069 = vshrl.u32 %v2671, 16
        %v3071 = vrot.slane %v3069, 1
        %v3072 = vshll.u32 %v2671, 16
        %v3074 = vrot.slane %v3072, 2
        %v3075 = vor.u32 %v3071, %v3074
        %v3077 = vshrl.u32 %v2791, 16
        %v3079 = vrot.slane %v3077, 1
        %v3080 = vshll.u32 %v2791, 16
        %v3082 = vrot.slane %v3080, 2
        %v3083 = vor.u32 %v3079, %v3082
        %v3084 = vsel %vm2795, %v3075, %v3083
        %v3086 = vshrl.u32 %v2672, 16
        %v3088 = vrot.slane %v3086, 1
        %v3089 = vshll.u32 %v2672, 16
        %v3091 = vrot.slane %v3089, 2
        %v3092 = vor.u32 %v3088, %v3091
        %v3094 = vshrl.u32 %v2792, 16
        %v3096 = vrot.slane %v3094, 1
        %v3097 = vshll.u32 %v2792, 16
        %v3099 = vrot.slane %v3097, 2
        %v3100 = vor.u32 %v3096, %v3099
        %v3101 = vsel %vm2795, %v3092, %v3100
        %v3103 = vshrl.u32 %v2673, 16
        %v3105 = vrot.slane %v3103, 1
        %v3106 = vshll.u32 %v2673, 16
        %v3108 = vrot.slane %v3106, 2
        %v3109 = vor.u32 %v3105, %v3108
        %v3111 = vshrl.u32 %v2793, 16
        %v3113 = vrot.slane %v3111, 1
        %v3114 = vshll.u32 %v2793, 16
        %v3116 = vrot.slane %v3114, 2
        %v3117 = vor.u32 %v3113, %v3116
        %v3118 = vsel %vm2795, %v3109, %v3117
        %v3120 = vshrl.u32 %v2674, 16
        %v3122 = vrot.slane %v3120, 1
        %v3123 = vshll.u32 %v2674, 16
        %v3125 = vrot.slane %v3123, 2
        %v3126 = vor.u32 %v3122, %v3125
        %v3128 = vshrl.u32 %v2794, 16
        %v3130 = vrot.slane %v3128, 1
        %v3131 = vshll.u32 %v2794, 16
        %v3133 = vrot.slane %v3131, 2
        %v3134 = vor.u32 %v3130, %v3133
        %v3135 = vsel %vm2795, %v3126, %v3134
        %3136 = vrot.lane.b32.xlu0 %v2812, 64
        %v3137 = vpop.permute.xlu0 %3136
        %3138 = vrot.lane.b32.xlu0 %v2829, 64
        %v3139 = vpop.permute.xlu0 %3138
        %3140 = vrot.lane.b32.xlu0 %v2846, 64
        %v3141 = vpop.permute.xlu0 %3140
        %3142 = vrot.lane.b32.xlu0 %v2863, 64
        %v3143 = vpop.permute.xlu0 %3142
        %3144 = vrot.lane.b32.xlu0 %v2880, 64
        %v3145 = vpop.permute.xlu0 %3144
        %3146 = vrot.lane.b32.xlu0 %v2897, 64
        %v3147 = vpop.permute.xlu0 %3146
        %3148 = vrot.lane.b32.xlu0 %v2914, 64
        %v3149 = vpop.permute.xlu0 %3148
        %3150 = vrot.lane.b32.xlu0 %v2931, 64
        %v3151 = vpop.permute.xlu0 %3150
        %3152 = vrot.lane.b32.xlu0 %v2948, 64
        %v3153 = vpop.permute.xlu0 %3152
        %3154 = vrot.lane.b32.xlu0 %v2965, 64
        %v3155 = vpop.permute.xlu0 %3154
        %3156 = vrot.lane.b32.xlu0 %v2982, 64
        %v3157 = vpop.permute.xlu0 %3156
        %3158 = vrot.lane.b32.xlu0 %v2999, 64
        %v3159 = vpop.permute.xlu0 %3158
        %3160 = vrot.lane.b32.xlu0 %v3016, 64
        %v3161 = vpop.permute.xlu0 %3160
        %3162 = vrot.lane.b32.xlu0 %v3033, 64
        %v3163 = vpop.permute.xlu0 %3162
        %3164 = vrot.lane.b32.xlu0 %v3050, 64
        %v3165 = vpop.permute.xlu0 %3164
        %3166 = vrot.lane.b32.xlu0 %v3067, 64
        %v3167 = vpop.permute.xlu0 %3166
        %3168 = vrot.lane.b32.xlu0 %v3084, 64
        %v3169 = vpop.permute.xlu0 %3168
        %3170 = vrot.lane.b32.xlu0 %v3101, 64
        %v3171 = vpop.permute.xlu0 %3170
        %3172 = vrot.lane.b32.xlu0 %v3118, 64
        %v3173 = vpop.permute.xlu0 %3172
        %3174 = vrot.lane.b32.xlu0 %v3135, 64
        %v3175 = vpop.permute.xlu0 %3174
        %v3196 = vunpack.c.l.b16 %v2155
        %v3197 = vunpack.c.l.b16 %v2156
        %v3198 = vunpack.c.l.b16 %v2157
        %v3199 = vunpack.c.l.b16 %v2158
        %v3200 = vunpack.c.l.b16 %v2159
        %v3201 = vunpack.c.l.b16 %v2160
        %v3202 = vunpack.c.l.b16 %v2161
        %v3203 = vunpack.c.l.b16 %v2162
        %v3204 = vunpack.c.l.b16 %v2163
        %v3205 = vunpack.c.l.b16 %v2164
        %v3206 = vunpack.c.l.b16 %v2165
        %v3207 = vunpack.c.l.b16 %v2166
        %v3208 = vunpack.c.l.b16 %v2167
        %v3209 = vunpack.c.l.b16 %v2168
        %v3210 = vunpack.c.l.b16 %v2169
        %v3211 = vunpack.c.l.b16 %v2170
        %v3212 = vunpack.c.l.b16 %v2171
        %v3213 = vunpack.c.l.b16 %v2172
        %v3214 = vunpack.c.l.b16 %v2173
        %v3215 = vunpack.c.l.b16 %v2174
        %v3216 = vpack.c.b16 %v2216, %v3196
        %v3217 = vpack.c.b16 %v2218, %v3197
        %v3218 = vpack.c.b16 %v2220, %v3198
        %v3219 = vpack.c.b16 %v2222, %v3199
        %v3220 = vpack.c.b16 %v2224, %v3200
        %v3221 = vpack.c.b16 %v2226, %v3201
        %v3222 = vpack.c.b16 %v2228, %v3202
        %v3223 = vpack.c.b16 %v2230, %v3203
        %v3224 = vpack.c.b16 %v2232, %v3204
        %v3225 = vpack.c.b16 %v2234, %v3205
        %v3226 = vpack.c.b16 %v2236, %v3206
        %v3227 = vpack.c.b16 %v2238, %v3207
        %v3228 = vpack.c.b16 %v2240, %v3208
        %v3229 = vpack.c.b16 %v2242, %v3209
        %v3230 = vpack.c.b16 %v2244, %v3210
        %v3231 = vpack.c.b16 %v2246, %v3211
        %v3232 = vpack.c.b16 %v2248, %v3212
        %v3233 = vpack.c.b16 %v2250, %v3213
        %v3234 = vpack.c.b16 %v2252, %v3214
        %v3235 = vpack.c.b16 %v2254, %v3215
        %vm3236 = vcmask 1045504
        %v3237 = vrot.slane %v3216, 2
        %v3238 = vrot.slane %v2775, 2
        %v3239 = vsel %vm3236, %v3237, %v3238
        %v3240 = vrot.slane %v3217, 2
        %v3241 = vrot.slane %v2776, 2
        %v3242 = vsel %vm3236, %v3240, %v3241
        %v3243 = vrot.slane %v3218, 2
        %v3244 = vrot.slane %v2777, 2
        %v3245 = vsel %vm3236, %v3243, %v3244
        %v3246 = vrot.slane %v3219, 2
        %v3247 = vrot.slane %v2778, 2
        %v3248 = vsel %vm3236, %v3246, %v3247
        %v3249 = vrot.slane %v3220, 2
        %v3250 = vrot.slane %v2779, 2
        %v3251 = vsel %vm3236, %v3249, %v3250
        %v3252 = vrot.slane %v3221, 2
        %v3253 = vrot.slane %v2780, 2
        %v3254 = vsel %vm3236, %v3252, %v3253
        %v3255 = vrot.slane %v3222, 2
        %v3256 = vrot.slane %v2781, 2
        %v3257 = vsel %vm3236, %v3255, %v3256
        %v3258 = vrot.slane %v3223, 2
        %v3259 = vrot.slane %v2782, 2
        %v3260 = vsel %vm3236, %v3258, %v3259
        %v3261 = vrot.slane %v3224, 2
        %v3262 = vrot.slane %v2783, 2
        %v3263 = vsel %vm3236, %v3261, %v3262
        %v3264 = vrot.slane %v3225, 2
        %v3265 = vrot.slane %v2784, 2
        %v3266 = vsel %vm3236, %v3264, %v3265
        %v3267 = vrot.slane %v3226, 2
        %v3268 = vrot.slane %v2785, 2
        %v3269 = vsel %vm3236, %v3267, %v3268
        %v3270 = vrot.slane %v3227, 2
        %v3271 = vrot.slane %v2786, 2
        %v3272 = vsel %vm3236, %v3270, %v3271
        %v3273 = vrot.slane %v3228, 2
        %v3274 = vrot.slane %v2787, 2
        %v3275 = vsel %vm3236, %v3273, %v3274
        %v3276 = vrot.slane %v3229, 2
        %v3277 = vrot.slane %v2788, 2
        %v3278 = vsel %vm3236, %v3276, %v3277
        %v3279 = vrot.slane %v3230, 2
        %v3280 = vrot.slane %v2789, 2
        %v3281 = vsel %vm3236, %v3279, %v3280
        %v3282 = vrot.slane %v3231, 2
        %v3283 = vrot.slane %v2790, 2
        %v3284 = vsel %vm3236, %v3282, %v3283
        %v3285 = vrot.slane %v3232, 2
        %v3286 = vrot.slane %v2791, 2
        %v3287 = vsel %vm3236, %v3285, %v3286
        %v3288 = vrot.slane %v3233, 2
        %v3289 = vrot.slane %v2792, 2
        %v3290 = vsel %vm3236, %v3288, %v3289
        %v3291 = vrot.slane %v3234, 2
        %v3292 = vrot.slane %v2793, 2
        %v3293 = vsel %vm3236, %v3291, %v3292
        %v3294 = vrot.slane %v3235, 2
        %v3295 = vrot.slane %v2794, 2
        %v3296 = vsel %vm3236, %v3294, %v3295
        %v3298 = vsel %vm792, %v2255, %v2576
        %v3301 = vsel %vm792, %v2256, %v2578
        %v3304 = vsel %vm792, %v2257, %v2580
        %v3307 = vsel %vm792, %v2258, %v2582
        %v3310 = vsel %vm792, %v2259, %v2584
        %v3313 = vsel %vm792, %v2260, %v2586
        %v3316 = vsel %vm792, %v2261, %v2588
        %v3319 = vsel %vm792, %v2262, %v2590
        %v3322 = vsel %vm792, %v2263, %v2592
        %v3325 = vsel %vm792, %v2264, %v2594
        %v3328 = vsel %vm792, %v2265, %v2596
        %v3331 = vsel %vm792, %v2266, %v2598
        %v3334 = vsel %vm792, %v2267, %v2600
        %v3337 = vsel %vm792, %v2268, %v2602
        %v3340 = vsel %vm792, %v2269, %v2604
        %v3343 = vsel %vm792, %v2270, %v2606
        %v3346 = vsel %vm792, %v2271, %v2608
        %v3349 = vsel %vm792, %v2272, %v2610
        %v3352 = vsel %vm792, %v2273, %v2612
        %v3355 = vsel %vm792, %v2274, %v2614
        %v3359 = vsel %vm792, %v2677, %v3137
        %v3363 = vsel %vm792, %v2680, %v3139
        %v3367 = vsel %vm792, %v2683, %v3141
        %v3371 = vsel %vm792, %v2686, %v3143
        %v3375 = vsel %vm792, %v2689, %v3145
        %v3379 = vsel %vm792, %v2692, %v3147
        %v3383 = vsel %vm792, %v2695, %v3149
        %v3387 = vsel %vm792, %v2698, %v3151
        %v3391 = vsel %vm792, %v2701, %v3153
        %v3395 = vsel %vm792, %v2704, %v3155
        %v3399 = vsel %vm792, %v2707, %v3157
        %v3403 = vsel %vm792, %v2710, %v3159
        %v3407 = vsel %vm792, %v2713, %v3161
        %v3411 = vsel %vm792, %v2716, %v3163
        %v3415 = vsel %vm792, %v2719, %v3165
        %v3419 = vsel %vm792, %v2722, %v3167
        %v3423 = vsel %vm792, %v2725, %v3169
        %v3427 = vsel %vm792, %v2728, %v3171
        %v3431 = vsel %vm792, %v2731, %v3173
        %v3435 = vsel %vm792, %v2734, %v3175
        %v3437 = vld [vmem:[%s3] sm:$0xf]
        %v3438 = vld [vmem:[%s3 + $0x4] sm:$0xf]
        %v3439 = vld [vmem:[%s3 + $0x8] sm:$0xf]
        %v3440 = vld [vmem:[%s3 + $0xc] sm:$0xf]
        %v3441 = vld [vmem:[%s3 + $0x10] sm:$0xf]
        %v3442 = vld [vmem:[%s3 + $0x14] sm:$0xf]
        %v3443 = vld [vmem:[%s3 + $0x18] sm:$0xf]
        %v3444 = vld [vmem:[%s3 + $0x1c] sm:$0xf]
        %v3445 = vld [vmem:[%s3 + $0x20] sm:$0xf]
        %v3446 = vld [vmem:[%s3 + $0x24] sm:$0xf]
        %v3447 = vld [vmem:[%s3 + $0x28] sm:$0xf]
        %v3448 = vld [vmem:[%s3 + $0x2c] sm:$0xf]
        %v3449 = vld [vmem:[%s3 + $0x30] sm:$0xf]
        %v3450 = vld [vmem:[%s3 + $0x34] sm:$0xf]
        %v3451 = vld [vmem:[%s3 + $0x38] sm:$0xf]
        %v3452 = vld [vmem:[%s3 + $0x3c] sm:$0xf]
        %v3453 = vld [vmem:[%s3 + $0x40] sm:$0xf]
        %v3454 = vld [vmem:[%s3 + $0x44] sm:$0xf]
        %v3455 = vld [vmem:[%s3 + $0x48] sm:$0xf]
        %v3456 = vld [vmem:[%s3 + $0x4c] sm:$0xf]
        %v3457 = vld [vmem:[%s3 + $0x50] sm:$0xf]
        %v3458 = vld [vmem:[%s3 + $0x54] sm:$0xf]
        %v3459 = vld [vmem:[%s3 + $0x58] sm:$0xf]
        %v3460 = vld [vmem:[%s3 + $0x5c] sm:$0xf]
        %v3461 = vld [vmem:[%s3 + $0x60] sm:$0xf]
        %v3462 = vld [vmem:[%s3 + $0x64] sm:$0xf]
        %v3463 = vld [vmem:[%s3 + $0x68] sm:$0xf]
        %v3464 = vld [vmem:[%s3 + $0x6c] sm:$0xf]
        %v3465 = vld [vmem:[%s3 + $0x70] sm:$0xf]
        %v3466 = vld [vmem:[%s3 + $0x74] sm:$0xf]
        %v3467 = vld [vmem:[%s3 + $0x78] sm:$0xf]
        %v3468 = vld [vmem:[%s3 + $0x7c] sm:$0xf]
        %v3469 = vld [vmem:[%s3 + $0x80] sm:$0xf]
        %v3470 = vld [vmem:[%s3 + $0x84] sm:$0xf]
        %v3471 = vld [vmem:[%s3 + $0x88] sm:$0xf]
        %v3472 = vld [vmem:[%s3 + $0x8c] sm:$0xf]
        %v3473 = vld [vmem:[%s3 + $0x90] sm:$0xf]
        %v3474 = vld [vmem:[%s3 + $0x94] sm:$0xf]
        %v3475 = vld [vmem:[%s3 + $0x98] sm:$0xf]
        %v3476 = vld [vmem:[%s3 + $0x9c] sm:$0xf]
        %s3477 = scalar_lea.vmem %s3, 160
        %v3478 = vld [vmem:[%s3477] sm:$0xf]
        %v3479 = vld [vmem:[%s3477 + $0x4] sm:$0xf]
        %v3480 = vld [vmem:[%s3477 + $0x8] sm:$0xf]
        %v3481 = vld [vmem:[%s3477 + $0xc] sm:$0xf]
        %v3482 = vld [vmem:[%s3477 + $0x10] sm:$0xf]
        %v3483 = vld [vmem:[%s3477 + $0x14] sm:$0xf]
        %v3484 = vld [vmem:[%s3477 + $0x18] sm:$0xf]
        %v3485 = vld [vmem:[%s3477 + $0x1c] sm:$0xf]
        %v3486 = vld [vmem:[%s3477 + $0x20] sm:$0xf]
        %v3487 = vld [vmem:[%s3477 + $0x24] sm:$0xf]
        %v3488 = vld [vmem:[%s3477 + $0x28] sm:$0xf]
        %v3489 = vld [vmem:[%s3477 + $0x2c] sm:$0xf]
        %v3490 = vld [vmem:[%s3477 + $0x30] sm:$0xf]
        %v3491 = vld [vmem:[%s3477 + $0x34] sm:$0xf]
        %v3492 = vld [vmem:[%s3477 + $0x38] sm:$0xf]
        %v3493 = vld [vmem:[%s3477 + $0x3c] sm:$0xf]
        %v3494 = vld [vmem:[%s3477 + $0x40] sm:$0xf]
        %v3495 = vld [vmem:[%s3477 + $0x44] sm:$0xf]
        %v3496 = vld [vmem:[%s3477 + $0x48] sm:$0xf]
        %v3497 = vld [vmem:[%s3477 + $0x4c] sm:$0xf]
        %v3498 = vld [vmem:[%s3477 + $0x50] sm:$0xf]
        %v3499 = vld [vmem:[%s3477 + $0x54] sm:$0xf]
        %v3500 = vld [vmem:[%s3477 + $0x58] sm:$0xf]
        %v3501 = vld [vmem:[%s3477 + $0x5c] sm:$0xf]
        %v3502 = vld [vmem:[%s3477 + $0x60] sm:$0xf]
        %v3503 = vld [vmem:[%s3477 + $0x64] sm:$0xf]
        %v3504 = vld [vmem:[%s3477 + $0x68] sm:$0xf]
        %v3505 = vld [vmem:[%s3477 + $0x6c] sm:$0xf]
        %v3506 = vld [vmem:[%s3477 + $0x70] sm:$0xf]
        %v3507 = vld [vmem:[%s3477 + $0x74] sm:$0xf]
        %v3508 = vld [vmem:[%s3477 + $0x78] sm:$0xf]
        %v3509 = vld [vmem:[%s3477 + $0x7c] sm:$0xf]
        %v3510 = vld [vmem:[%s3477 + $0x80] sm:$0xf]
        %v3511 = vld [vmem:[%s3477 + $0x84] sm:$0xf]
        %v3512 = vld [vmem:[%s3477 + $0x88] sm:$0xf]
        %v3513 = vld [vmem:[%s3477 + $0x8c] sm:$0xf]
        %v3514 = vld [vmem:[%s3477 + $0x90] sm:$0xf]
        %v3515 = vld [vmem:[%s3477 + $0x94] sm:$0xf]
        %v3516 = vld [vmem:[%s3477 + $0x98] sm:$0xf]
        %v3517 = vld [vmem:[%s3477 + $0x9c] sm:$0xf]
        %v3558 = vunpack.c.l.b16 %v3478
        %v3559 = vunpack.c.l.b16 %v3479
        %v3560 = vunpack.c.l.b16 %v3480
        %v3561 = vunpack.c.l.b16 %v3481
        %v3562 = vunpack.c.l.b16 %v3482
        %v3563 = vunpack.c.l.b16 %v3483
        %v3564 = vunpack.c.l.b16 %v3484
        %v3565 = vunpack.c.l.b16 %v3485
        %v3566 = vunpack.c.l.b16 %v3486
        %v3567 = vunpack.c.l.b16 %v3487
        %v3568 = vunpack.c.l.b16 %v3488
        %v3569 = vunpack.c.l.b16 %v3489
        %v3570 = vunpack.c.l.b16 %v3490
        %v3571 = vunpack.c.l.b16 %v3491
        %v3572 = vunpack.c.l.b16 %v3492
        %v3573 = vunpack.c.l.b16 %v3493
        %v3574 = vunpack.c.l.b16 %v3494
        %v3575 = vunpack.c.l.b16 %v3495
        %v3576 = vunpack.c.l.b16 %v3496
        %v3577 = vunpack.c.l.b16 %v3497
        %v3578 = vunpack.c.l.b16 %v3498
        %v3579 = vunpack.c.l.b16 %v3499
        %v3580 = vunpack.c.l.b16 %v3500
        %v3581 = vunpack.c.l.b16 %v3501
        %v3582 = vunpack.c.l.b16 %v3502
        %v3583 = vunpack.c.l.b16 %v3503
        %v3584 = vunpack.c.l.b16 %v3504
        %v3585 = vunpack.c.l.b16 %v3505
        %v3586 = vunpack.c.l.b16 %v3506
        %v3587 = vunpack.c.l.b16 %v3507
        %v3588 = vunpack.c.l.b16 %v3508
        %v3589 = vunpack.c.l.b16 %v3509
        %v3590 = vunpack.c.l.b16 %v3510
        %v3591 = vunpack.c.l.b16 %v3511
        %v3592 = vunpack.c.l.b16 %v3512
        %v3593 = vunpack.c.l.b16 %v3513
        %v3594 = vunpack.c.l.b16 %v3514
        %v3595 = vunpack.c.l.b16 %v3515
        %v3596 = vunpack.c.l.b16 %v3516
        %v3597 = vunpack.c.l.b16 %v3517
        %v3598 = vpack.c.b16 %v3559, %v3558
        %v3599 = vpack.c.b16 %v3561, %v3560
        %v3600 = vpack.c.b16 %v3563, %v3562
        %v3601 = vpack.c.b16 %v3565, %v3564
        %v3602 = vpack.c.b16 %v3567, %v3566
        %v3603 = vpack.c.b16 %v3569, %v3568
        %v3604 = vpack.c.b16 %v3571, %v3570
        %v3605 = vpack.c.b16 %v3573, %v3572
        %v3606 = vpack.c.b16 %v3575, %v3574
        %v3607 = vpack.c.b16 %v3577, %v3576
        %v3608 = vpack.c.b16 %v3579, %v3578
        %v3609 = vpack.c.b16 %v3581, %v3580
        %v3610 = vpack.c.b16 %v3583, %v3582
        %v3611 = vpack.c.b16 %v3585, %v3584
        %v3612 = vpack.c.b16 %v3587, %v3586
        %v3613 = vpack.c.b16 %v3589, %v3588
        %v3614 = vpack.c.b16 %v3591, %v3590
        %v3615 = vpack.c.b16 %v3593, %v3592
        %v3616 = vpack.c.b16 %v3595, %v3594
        %v3617 = vpack.c.b16 %v3597, %v3596
        %v3639 = vsel %vm792, %v3242, 0
        %v3642 = vsel %vm792, %v3245, 0
        %v3645 = vsel %vm792, %v3248, 0
        %v3648 = vsel %vm792, %v3251, 0
        %v3651 = vsel %vm792, %v3254, 0
        %v3654 = vsel %vm792, %v3257, 0
        %v3657 = vsel %vm792, %v3260, 0
        %v3660 = vsel %vm792, %v3263, 0
        %v3663 = vsel %vm792, %v3266, 0
        %v3666 = vsel %vm792, %v3269, 0
        %v3669 = vsel %vm792, %v3272, 0
        %v3672 = vsel %vm792, %v3275, 0
        %v3675 = vsel %vm792, %v3278, 0
        %v3678 = vsel %vm792, %v3281, 0
        %v3681 = vsel %vm792, %v3284, 0
        %v3684 = vsel %vm792, %v3287, 0
        %3686 = vmatprep.subr.bf16.mxu0 0
        %3687 = vmatpush1.bf16.msra.mxu0 %v3598
        %3688 = vmatprep.subr.bf16.mxu0 0
        %3689 = vmatpush1.bf16.msra.mxu0 %v3599
        %3690 = vmatprep.subr.bf16.mxu0 0
        %3691 = vmatpush1.bf16.msra.mxu0 %v3600
        %3692 = vmatprep.subr.bf16.mxu0 0
        %3693 = vmatpush1.bf16.msra.mxu0 %v3601
        %3694 = vmatprep.subr.bf16.mxu0 0
        %3695 = vmatpush1.bf16.msra.mxu0 %v3602
        %3696 = vmatprep.subr.bf16.mxu0 0
        %3697 = vmatpush1.bf16.msra.mxu0 %v3603
        %3698 = vmatprep.subr.bf16.mxu0 0
        %3699 = vmatpush1.bf16.msra.mxu0 %v3604
        %3700 = vmatprep.subr.bf16.mxu0 0
        %3701 = vmatpush1.bf16.msra.mxu0 %v3605
        %3702 = vmatprep.subr.bf16.mxu0 0
        %3703 = vmatpush1.bf16.msra.mxu0 %v3606
        %3704 = vmatprep.subr.bf16.mxu0 0
        %3705 = vmatpush1.bf16.msra.mxu0 %v3607
        %3706 = vmatprep.subr.bf16.mxu0 0
        %3707 = vmatpush1.bf16.msra.mxu0 %v3608
        %3708 = vmatprep.subr.bf16.mxu0 0
        %3709 = vmatpush1.bf16.msra.mxu0 %v3609
        %3710 = vmatprep.subr.bf16.mxu0 0
        %3711 = vmatpush1.bf16.msra.mxu0 %v3610
        %3712 = vmatprep.subr.bf16.mxu0 0
        %3713 = vmatpush1.bf16.msra.mxu0 %v3611
        %3714 = vmatprep.subr.bf16.mxu0 0
        %3715 = vmatpush1.bf16.msra.mxu0 %v3612
        %3716 = vmatprep.subr.bf16.mxu0 0
        %3717 = vmatpush1.bf16.msra.mxu0 %v3613
        %3718 = vmatprep.mubr.bf16.mxu0 %v3363
        %3719 = vmatmul.mubr.bf16.gmra.mrb[0].mxu0 %v3301
        %v3720 = vpop.f32.mrb[0].mxu0
        %v3721 = vadd.f32 0.0, %v3720
        %v3722 = vpop.f32.mrb[0].mxu0
        %v3723 = vpop.f32.mrb[0].mxu0
        %v3724 = vadd.f32 0.0, %v3723
        %v3725 = vpop.f32.mrb[0].mxu0
        %3726 = vmatprep.mubr.bf16.mxu0 %v3367
        %3727 = vmatmul.mubr.bf16.gmra.mrb[0].mxu0 %v3304
        %v3728 = vpop.f32.mrb[0].mxu0
        %v3729 = vadd.f32 0.0, %v3728
        %v3730 = vpop.f32.mrb[0].mxu0
        %v3731 = vpop.f32.mrb[0].mxu0
        %v3732 = vadd.f32 0.0, %v3731
        %v3733 = vpop.f32.mrb[0].mxu0
        %3734 = vmatprep.mubr.bf16.mxu0 %v3371
        %3735 = vmatmul.mubr.bf16.gmra.mrb[0].mxu0 %v3307
        %v3736 = vpop.f32.mrb[0].mxu0
        %v3737 = vadd.f32 0.0, %v3736
        %v3738 = vpop.f32.mrb[0].mxu0
        %v3739 = vpop.f32.mrb[0].mxu0
        %v3740 = vadd.f32 0.0, %v3739
        %v3741 = vpop.f32.mrb[0].mxu0
        %3742 = vmatprep.mubr.bf16.mxu0 %v3375
        %3743 = vmatmul.mubr.bf16.gmra.mrb[0].mxu0 %v3310
        %v3744 = vpop.f32.mrb[0].mxu0
        %v3745 = vadd.f32 0.0, %v3744
        %v3746 = vpop.f32.mrb[0].mxu0
        %v3747 = vpop.f32.mrb[0].mxu0
        %v3748 = vadd.f32 0.0, %v3747
        %v3749 = vpop.f32.mrb[0].mxu0
        %3750 = vmatprep.mubr.bf16.mxu0 %v3379
        %3751 = vmatmul.mubr.bf16.gmra.mrb[0].mxu0 %v3313
        %v3752 = vpop.f32.mrb[0].mxu0
        %v3753 = vadd.f32 0.0, %v3752
        %v3754 = vpop.f32.mrb[0].mxu0
        %v3755 = vpop.f32.mrb[0].mxu0
        %v3756 = vadd.f32 0.0, %v3755
        %v3757 = vpop.f32.mrb[0].mxu0
        %3758 = vmatprep.mubr.bf16.mxu0 %v3383
        %3759 = vmatmul.mubr.bf16.gmra.mrb[0].mxu0 %v3316
        %v3760 = vpop.f32.mrb[0].mxu0
        %v3761 = vadd.f32 0.0, %v3760
        %v3762 = vpop.f32.mrb[0].mxu0
        %v3763 = vpop.f32.mrb[0].mxu0
        %v3764 = vadd.f32 0.0, %v3763
        %v3765 = vpop.f32.mrb[0].mxu0
        %3766 = vmatprep.mubr.bf16.mxu0 %v3387
        %3767 = vmatmul.mubr.bf16.gmra.mrb[0].mxu0 %v3319
        %v3768 = vpop.f32.mrb[0].mxu0
        %v3769 = vadd.f32 0.0, %v3768
        %v3770 = vpop.f32.mrb[0].mxu0
        %v3771 = vpop.f32.mrb[0].mxu0
        %v3772 = vadd.f32 0.0, %v3771
        %v3773 = vpop.f32.mrb[0].mxu0
        %3774 = vmatprep.mubr.bf16.mxu0 %v3391
        %3775 = vmatmul.mubr.bf16.gmra.mrb[0].mxu0 %v3322
        %v3776 = vpop.f32.mrb[0].mxu0
        %v3777 = vadd.f32 0.0, %v3776
        %v3778 = vpop.f32.mrb[0].mxu0
        %v3779 = vpop.f32.mrb[0].mxu0
        %v3780 = vadd.f32 0.0, %v3779
        %v3781 = vpop.f32.mrb[0].mxu0
        %3782 = vmatprep.mubr.bf16.mxu0 %v3395
        %3783 = vmatmul.mubr.bf16.gmra.mrb[0].mxu0 %v3325
        %v3784 = vpop.f32.mrb[0].mxu0
        %v3785 = vadd.f32 0.0, %v3784
        %v3786 = vpop.f32.mrb[0].mxu0
        %v3787 = vpop.f32.mrb[0].mxu0
        %v3788 = vadd.f32 0.0, %v3787
        %v3789 = vpop.f32.mrb[0].mxu0
        %3790 = vmatprep.mubr.bf16.mxu0 %v3399
        %3791 = vmatmul.mubr.bf16.gmra.mrb[0].mxu0 %v3328
        %v3792 = vpop.f32.mrb[0].mxu0
        %v3793 = vadd.f32 0.0, %v3792
        %v3794 = vpop.f32.mrb[0].mxu0
        %v3795 = vpop.f32.mrb[0].mxu0
        %v3796 = vadd.f32 0.0, %v3795
        %v3797 = vpop.f32.mrb[0].mxu0
        %3798 = vmatprep.mubr.bf16.mxu0 %v3403
        %3799 = vmatmul.mubr.bf16.gmra.mrb[0].mxu0 %v3331
        %v3800 = vpop.f32.mrb[0].mxu0
        %v3801 = vadd.f32 0.0, %v3800
        %v3802 = vpop.f32.mrb[0].mxu0
        %v3803 = vpop.f32.mrb[0].mxu0
        %v3804 = vadd.f32 0.0, %v3803
        %v3805 = vpop.f32.mrb[0].mxu0
        %3806 = vmatprep.mubr.bf16.mxu0 %v3407
        %3807 = vmatmul.mubr.bf16.gmra.mrb[0].mxu0 %v3334
        %v3808 = vpop.f32.mrb[0].mxu0
        %v3809 = vadd.f32 0.0, %v3808
        %v3810 = vpop.f32.mrb[0].mxu0
        %v3811 = vpop.f32.mrb[0].mxu0
        %v3812 = vadd.f32 0.0, %v3811
        %v3813 = vpop.f32.mrb[0].mxu0
        %3814 = vmatprep.mubr.bf16.mxu0 %v3411
        %3815 = vmatmul.mubr.bf16.gmra.mrb[0].mxu0 %v3337
        %v3816 = vpop.f32.mrb[0].mxu0
        %v3817 = vadd.f32 0.0, %v3816
        %v3818 = vpop.f32.mrb[0].mxu0
        %v3819 = vpop.f32.mrb[0].mxu0
        %v3820 = vadd.f32 0.0, %v3819
        %v3821 = vpop.f32.mrb[0].mxu0
        %3822 = vmatprep.mubr.bf16.mxu0 %v3415
        %3823 = vmatmul.mubr.bf16.gmra.mrb[0].mxu0 %v3340
        %v3824 = vpop.f32.mrb[0].mxu0
        %v3825 = vadd.f32 0.0, %v3824
        %v3826 = vpop.f32.mrb[0].mxu0
        %v3827 = vpop.f32.mrb[0].mxu0
        %v3828 = vadd.f32 0.0, %v3827
        %v3829 = vpop.f32.mrb[0].mxu0
        %3830 = vmatprep.mubr.bf16.mxu0 %v3419
        %3831 = vmatmul.mubr.bf16.gmra.mrb[0].mxu0 %v3343
        %v3832 = vpop.f32.mrb[0].mxu0
        %v3833 = vadd.f32 0.0, %v3832
        %v3834 = vpop.f32.mrb[0].mxu0
        %v3835 = vpop.f32.mrb[0].mxu0
        %v3836 = vadd.f32 0.0, %v3835
        %v3837 = vpop.f32.mrb[0].mxu0
        %3838 = vmatprep.mubr.bf16.mxu0 %v3423
        %3839 = vmatmul.mubr.bf16.gmra.mrb[0].mxu0 %v3346
        %v3840 = vpop.f32.mrb[0].mxu0
        %v3841 = vadd.f32 0.0, %v3840
        %v3842 = vpop.f32.mrb[0].mxu0
        %v3843 = vpop.f32.mrb[0].mxu0
        %v3844 = vadd.f32 0.0, %v3843
        %v3845 = vpop.f32.mrb[0].mxu0
        %3846 = vdwg.mxu0
        %3847 = vmatprep.subr.bf16.mxu0 0
        %3848 = vmatpush1.bf16.msra.mxu0 %v3614
        %3849 = vmatprep.subr.bf16.mxu0 0
        %3850 = vmatpush1.bf16.msra.mxu0 %v3615
        %3851 = vmatprep.subr.bf16.mxu0 0
        %3852 = vmatpush1.bf16.msra.mxu0 %v3616
        %3853 = vmatprep.subr.bf16.mxu0 0
        %3854 = vmatpush1.bf16.msra.mxu0 %v3617
        %3855 = vmatprep.subr.bf16.mxu0 0
        %3856 = vmatpush1.bf16.msra.mxu0 0
        %3857 = vmatprep.subr.bf16.mxu0 0
        %3858 = vmatpush1.bf16.msra.mxu0 0
        %3859 = vmatprep.subr.bf16.mxu0 0
        %3860 = vmatpush1.bf16.msra.mxu0 0
        %3861 = vmatprep.subr.bf16.mxu0 0
        %3862 = vmatpush1.bf16.msra.mxu0 0
        %3863 = vmatprep.subr.bf16.mxu0 0
        %3864 = vmatpush1.bf16.msra.mxu0 0
        %3865 = vmatprep.subr.bf16.mxu0 0
        %3866 = vmatpush1.bf16.msra.mxu0 0
        %3867 = vmatprep.subr.bf16.mxu0 0
        %3868 = vmatpush1.bf16.msra.mxu0 0
        %3869 = vmatprep.subr.bf16.mxu0 0
        %3870 = vmatpush1.bf16.msra.mxu0 0
        %3871 = vmatprep.subr.bf16.mxu0 0
        %3872 = vmatpush1.bf16.msra.mxu0 0
        %3873 = vmatprep.subr.bf16.mxu0 0
        %3874 = vmatpush1.bf16.msra.mxu0 0
        %3875 = vmatprep.subr.bf16.mxu0 0
        %3876 = vmatpush1.bf16.msra.mxu0 0
        %3877 = vmatprep.subr.bf16.mxu0 0
        %3878 = vmatpush1.bf16.msra.mxu0 0
        %3879 = vmatprep.mubr.bf16.mxu0 0
        %3880 = vmatmul.mubr.bf16.gmra.mrb[0].mxu0 %v3639
        %v3881 = vpop.f32.mrb[0].mxu0
        %v3882 = vadd.f32 %v3721, %v3881
        %v3883 = vpop.f32.mrb[0].mxu0
        %v3884 = vpop.f32.mrb[0].mxu0
        %v3885 = vadd.f32 %v3724, %v3884
        %v3886 = vpop.f32.mrb[0].mxu0
        %3887 = vmatprep.mubr.bf16.mxu0 0
        %3888 = vmatmul.mubr.bf16.gmra.mrb[0].mxu0 %v3642
        %v3889 = vpop.f32.mrb[0].mxu0
        %v3890 = vadd.f32 %v3729, %v3889
        %v3891 = vpop.f32.mrb[0].mxu0
        %v3892 = vpop.f32.mrb[0].mxu0
        %v3893 = vadd.f32 %v3732, %v3892
        %v3894 = vpop.f32.mrb[0].mxu0
        %3895 = vmatprep.mubr.bf16.mxu0 0
        %3896 = vmatmul.mubr.bf16.gmra.mrb[0].mxu0 %v3645
        %v3897 = vpop.f32.mrb[0].mxu0
        %v3898 = vadd.f32 %v3737, %v3897
        %v3899 = vpop.f32.mrb[0].mxu0
        %v3900 = vpop.f32.mrb[0].mxu0
        %v3901 = vadd.f32 %v3740, %v3900
        %v3902 = vpop.f32.mrb[0].mxu0
        %3903 = vmatprep.mubr.bf16.mxu0 0
        %3904 = vmatmul.mubr.bf16.gmra.mrb[0].mxu0 %v3648
        %v3905 = vpop.f32.mrb[0].mxu0
        %v3906 = vadd.f32 %v3745, %v3905
        %v3907 = vpop.f32.mrb[0].mxu0
        %v3908 = vpop.f32.mrb[0].mxu0
        %v3909 = vadd.f32 %v3748, %v3908
        %v3910 = vpop.f32.mrb[0].mxu0
        %3911 = vmatprep.mubr.bf16.mxu0 0
        %3912 = vmatmul.mubr.bf16.gmra.mrb[0].mxu0 %v3651
        %v3913 = vpop.f32.mrb[0].mxu0
        %v3914 = vadd.f32 %v3753, %v3913
        %v3915 = vpop.f32.mrb[0].mxu0
        %v3916 = vpop.f32.mrb[0].mxu0
        %v3917 = vadd.f32 %v3756, %v3916
        %v3918 = vpop.f32.mrb[0].mxu0
        %3919 = vmatprep.mubr.bf16.mxu0 0
        %3920 = vmatmul.mubr.bf16.gmra.mrb[0].mxu0 %v3654
        %v3921 = vpop.f32.mrb[0].mxu0
        %v3922 = vadd.f32 %v3761, %v3921
        %v3923 = vpop.f32.mrb[0].mxu0
        %v3924 = vpop.f32.mrb[0].mxu0
        %v3925 = vadd.f32 %v3764, %v3924
        %v3926 = vpop.f32.mrb[0].mxu0
        %3927 = vmatprep.mubr.bf16.mxu0 0
        %3928 = vmatmul.mubr.bf16.gmra.mrb[0].mxu0 %v3657
        %v3929 = vpop.f32.mrb[0].mxu0
        %v3930 = vadd.f32 %v3769, %v3929
        %v3931 = vpop.f32.mrb[0].mxu0
        %v3932 = vpop.f32.mrb[0].mxu0
        %v3933 = vadd.f32 %v3772, %v3932
        %v3934 = vpop.f32.mrb[0].mxu0
        %3935 = vmatprep.mubr.bf16.mxu0 0
        %3936 = vmatmul.mubr.bf16.gmra.mrb[0].mxu0 %v3660
        %v3937 = vpop.f32.mrb[0].mxu0
        %v3938 = vadd.f32 %v3777, %v3937
        %v3939 = vpop.f32.mrb[0].mxu0
        %v3940 = vpop.f32.mrb[0].mxu0
        %v3941 = vadd.f32 %v3780, %v3940
        %v3942 = vpop.f32.mrb[0].mxu0
        %3943 = vmatprep.mubr.bf16.mxu0 0
        %3944 = vmatmul.mubr.bf16.gmra.mrb[0].mxu0 %v3663
        %v3945 = vpop.f32.mrb[0].mxu0
        %v3946 = vadd.f32 %v3785, %v3945
        %v3947 = vpop.f32.mrb[0].mxu0
        %v3948 = vpop.f32.mrb[0].mxu0
        %v3949 = vadd.f32 %v3788, %v3948
        %v3950 = vpop.f32.mrb[0].mxu0
        %3951 = vmatprep.mubr.bf16.mxu0 0
        %3952 = vmatmul.mubr.bf16.gmra.mrb[0].mxu0 %v3666
        %v3953 = vpop.f32.mrb[0].mxu0
        %v3954 = vadd.f32 %v3793, %v3953
        %v3955 = vpop.f32.mrb[0].mxu0
        %v3956 = vpop.f32.mrb[0].mxu0
        %v3957 = vadd.f32 %v3796, %v3956
        %v3958 = vpop.f32.mrb[0].mxu0
        %3959 = vmatprep.mubr.bf16.mxu0 0
        %3960 = vmatmul.mubr.bf16.gmra.mrb[0].mxu0 %v3669
        %v3961 = vpop.f32.mrb[0].mxu0
        %v3962 = vadd.f32 %v3801, %v3961
        %v3963 = vpop.f32.mrb[0].mxu0
        %v3964 = vpop.f32.mrb[0].mxu0
        %v3965 = vadd.f32 %v3804, %v3964
        %v3966 = vpop.f32.mrb[0].mxu0
        %3967 = vmatprep.mubr.bf16.mxu0 0
        %3968 = vmatmul.mubr.bf16.gmra.mrb[0].mxu0 %v3672
        %v3969 = vpop.f32.mrb[0].mxu0
        %v3970 = vadd.f32 %v3809, %v3969
        %v3971 = vpop.f32.mrb[0].mxu0
        %v3972 = vpop.f32.mrb[0].mxu0
        %v3973 = vadd.f32 %v3812, %v3972
        %v3974 = vpop.f32.mrb[0].mxu0
        %3975 = vmatprep.mubr.bf16.mxu0 0
        %3976 = vmatmul.mubr.bf16.gmra.mrb[0].mxu0 %v3675
        %v3977 = vpop.f32.mrb[0].mxu0
        %v3978 = vadd.f32 %v3817, %v3977
        %v3979 = vpop.f32.mrb[0].mxu0
        %v3980 = vpop.f32.mrb[0].mxu0
        %v3981 = vadd.f32 %v3820, %v3980
        %v3982 = vpop.f32.mrb[0].mxu0
        %3983 = vmatprep.mubr.bf16.mxu0 0
        %3984 = vmatmul.mubr.bf16.gmra.mrb[0].mxu0 %v3678
        %v3985 = vpop.f32.mrb[0].mxu0
        %v3986 = vadd.f32 %v3825, %v3985
        %v3987 = vpop.f32.mrb[0].mxu0
        %v3988 = vpop.f32.mrb[0].mxu0
        %v3989 = vadd.f32 %v3828, %v3988
        %v3990 = vpop.f32.mrb[0].mxu0
        %3991 = vmatprep.mubr.bf16.mxu0 0
        %3992 = vmatmul.mubr.bf16.gmra.mrb[0].mxu0 %v3681
        %v3993 = vpop.f32.mrb[0].mxu0
        %v3994 = vadd.f32 %v3833, %v3993
        %v3995 = vpop.f32.mrb[0].mxu0
        %v3996 = vpop.f32.mrb[0].mxu0
        %v3997 = vadd.f32 %v3836, %v3996
        %v3998 = vpop.f32.mrb[0].mxu0
        %3999 = vmatprep.mubr.bf16.mxu0 0
        %4000 = vmatmul.mubr.bf16.gmra.mrb[0].mxu0 %v3684
        %v4001 = vpop.f32.mrb[0].mxu0
        %v4002 = vadd.f32 %v3841, %v4001
        %v4003 = vpop.f32.mrb[0].mxu0
        %v4004 = vpop.f32.mrb[0].mxu0
        %v4005 = vadd.f32 %v3844, %v4004
        %v4006 = vpop.f32.mrb[0].mxu0
        %4007 = vdwg.mxu0
        %v4048 = vunpack.c.l.b16 %v3437
        %v4049 = vunpack.c.l.b16 %v3438
        %v4050 = vunpack.c.l.b16 %v3439
        %v4051 = vunpack.c.l.b16 %v3440
        %v4052 = vunpack.c.l.b16 %v3441
        %v4053 = vunpack.c.l.b16 %v3442
        %v4054 = vunpack.c.l.b16 %v3443
        %v4055 = vunpack.c.l.b16 %v3444
        %v4056 = vunpack.c.l.b16 %v3445
        %v4057 = vunpack.c.l.b16 %v3446
        %v4058 = vunpack.c.l.b16 %v3447
        %v4059 = vunpack.c.l.b16 %v3448
        %v4060 = vunpack.c.l.b16 %v3449
        %v4061 = vunpack.c.l.b16 %v3450
        %v4062 = vunpack.c.l.b16 %v3451
        %v4063 = vunpack.c.l.b16 %v3452
        %v4064 = vunpack.c.l.b16 %v3453
        %v4065 = vunpack.c.l.b16 %v3454
        %v4066 = vunpack.c.l.b16 %v3455
        %v4067 = vunpack.c.l.b16 %v3456
        %v4068 = vunpack.c.l.b16 %v3457
        %v4069 = vunpack.c.l.b16 %v3458
        %v4070 = vunpack.c.l.b16 %v3459
        %v4071 = vunpack.c.l.b16 %v3460
        %v4072 = vunpack.c.l.b16 %v3461
        %v4073 = vunpack.c.l.b16 %v3462
        %v4074 = vunpack.c.l.b16 %v3463
        %v4075 = vunpack.c.l.b16 %v3464
        %v4076 = vunpack.c.l.b16 %v3465
        %v4077 = vunpack.c.l.b16 %v3466
        %v4078 = vunpack.c.l.b16 %v3467
        %v4079 = vunpack.c.l.b16 %v3468
        %v4080 = vunpack.c.l.b16 %v3469
        %v4081 = vunpack.c.l.b16 %v3470
        %v4082 = vunpack.c.l.b16 %v3471
        %v4083 = vunpack.c.l.b16 %v3472
        %v4084 = vunpack.c.l.b16 %v3473
        %v4085 = vunpack.c.l.b16 %v3474
        %v4086 = vunpack.c.l.b16 %v3475
        %v4087 = vunpack.c.l.b16 %v3476
        %v4088 = vpack.c.b16 %v4049, %v4048
        %v4089 = vpack.c.b16 %v4051, %v4050
        %v4090 = vpack.c.b16 %v4053, %v4052
        %v4091 = vpack.c.b16 %v4055, %v4054
        %v4092 = vpack.c.b16 %v4057, %v4056
        %v4093 = vpack.c.b16 %v4059, %v4058
        %v4094 = vpack.c.b16 %v4061, %v4060
        %v4095 = vpack.c.b16 %v4063, %v4062
        %v4096 = vpack.c.b16 %v4065, %v4064
        %v4097 = vpack.c.b16 %v4067, %v4066
        %v4098 = vpack.c.b16 %v4069, %v4068
        %v4099 = vpack.c.b16 %v4071, %v4070
        %v4100 = vpack.c.b16 %v4073, %v4072
        %v4101 = vpack.c.b16 %v4075, %v4074
        %v4102 = vpack.c.b16 %v4077, %v4076
        %v4103 = vpack.c.b16 %v4079, %v4078
        %v4104 = vpack.c.b16 %v4081, %v4080
        %v4105 = vpack.c.b16 %v4083, %v4082
        %v4106 = vpack.c.b16 %v4085, %v4084
        %v4107 = vpack.c.b16 %v4087, %v4086
        %v4129 = vsel %vm792, %v3239, 0
        %4131 = vmatprep.subr.bf16.mxu0 0
        %4132 = vmatpush1.bf16.msra.mxu0 %v4088
        %4133 = vmatprep.subr.bf16.mxu0 0
        %4134 = vmatpush1.bf16.msra.mxu0 %v4089
        %4135 = vmatprep.subr.bf16.mxu0 0
        %4136 = vmatpush1.bf16.msra.mxu0 %v4090
        %4137 = vmatprep.subr.bf16.mxu0 0
        %4138 = vmatpush1.bf16.msra.mxu0 %v4091
        %4139 = vmatprep.subr.bf16.mxu0 0
        %4140 = vmatpush1.bf16.msra.mxu0 %v4092
        %4141 = vmatprep.subr.bf16.mxu0 0
        %4142 = vmatpush1.bf16.msra.mxu0 %v4093
        %4143 = vmatprep.subr.bf16.mxu0 0
        %4144 = vmatpush1.bf16.msra.mxu0 %v4094
        %4145 = vmatprep.subr.bf16.mxu0 0
        %4146 = vmatpush1.bf16.msra.mxu0 %v4095
        %4147 = vmatprep.subr.bf16.mxu0 0
        %4148 = vmatpush1.bf16.msra.mxu0 %v4096
        %4149 = vmatprep.subr.bf16.mxu0 0
        %4150 = vmatpush1.bf16.msra.mxu0 %v4097
        %4151 = vmatprep.subr.bf16.mxu0 0
        %4152 = vmatpush1.bf16.msra.mxu0 %v4098
        %4153 = vmatprep.subr.bf16.mxu0 0
        %4154 = vmatpush1.bf16.msra.mxu0 %v4099
        %4155 = vmatprep.subr.bf16.mxu0 0
        %4156 = vmatpush1.bf16.msra.mxu0 %v4100
        %4157 = vmatprep.subr.bf16.mxu0 0
        %4158 = vmatpush1.bf16.msra.mxu0 %v4101
        %4159 = vmatprep.subr.bf16.mxu0 0
        %4160 = vmatpush1.bf16.msra.mxu0 %v4102
        %4161 = vmatprep.subr.bf16.mxu0 0
        %4162 = vmatpush1.bf16.msra.mxu0 %v4103
        %4163 = vmatprep.mubr.bf16.mxu0 %v3359
        %4164 = vmatmul.mubr.bf16.gmra.mrb[0].mxu0 %v3298
        %v4165 = vpop.f32.mrb[0].mxu0
        %v4166 = vadd.f32 %v3882, %v4165
        %v4167 = vpop.f32.mrb[0].mxu0
        %v4168 = vpop.f32.mrb[0].mxu0
        %v4169 = vadd.f32 %v3885, %v4168
        %v4170 = vpop.f32.mrb[0].mxu0
        %4171 = vmatprep.mubr.bf16.mxu0 %v3363
        %4172 = vmatmul.mubr.bf16.gmra.mrb[0].mxu0 %v3301
        %v4173 = vpop.f32.mrb[0].mxu0
        %v4174 = vadd.f32 %v3890, %v4173
        %v4175 = vpop.f32.mrb[0].mxu0
        %v4176 = vpop.f32.mrb[0].mxu0
        %v4177 = vadd.f32 %v3893, %v4176
        %v4178 = vpop.f32.mrb[0].mxu0
        %4179 = vmatprep.mubr.bf16.mxu0 %v3367
        %4180 = vmatmul.mubr.bf16.gmra.mrb[0].mxu0 %v3304
        %v4181 = vpop.f32.mrb[0].mxu0
        %v4182 = vadd.f32 %v3898, %v4181
        %v4183 = vpop.f32.mrb[0].mxu0
        %v4184 = vpop.f32.mrb[0].mxu0
        %v4185 = vadd.f32 %v3901, %v4184
        %v4186 = vpop.f32.mrb[0].mxu0
        %4187 = vmatprep.mubr.bf16.mxu0 %v3371
        %4188 = vmatmul.mubr.bf16.gmra.mrb[0].mxu0 %v3307
        %v4189 = vpop.f32.mrb[0].mxu0
        %v4190 = vadd.f32 %v3906, %v4189
        %v4191 = vpop.f32.mrb[0].mxu0
        %v4192 = vpop.f32.mrb[0].mxu0
        %v4193 = vadd.f32 %v3909, %v4192
        %v4194 = vpop.f32.mrb[0].mxu0
        %4195 = vmatprep.mubr.bf16.mxu0 %v3375
        %4196 = vmatmul.mubr.bf16.gmra.mrb[0].mxu0 %v3310
        %v4197 = vpop.f32.mrb[0].mxu0
        %v4198 = vadd.f32 %v3914, %v4197
        %v4199 = vpop.f32.mrb[0].mxu0
        %v4200 = vpop.f32.mrb[0].mxu0
        %v4201 = vadd.f32 %v3917, %v4200
        %v4202 = vpop.f32.mrb[0].mxu0
        %4203 = vmatprep.mubr.bf16.mxu0 %v3379
        %4204 = vmatmul.mubr.bf16.gmra.mrb[0].mxu0 %v3313
        %v4205 = vpop.f32.mrb[0].mxu0
        %v4206 = vadd.f32 %v3922, %v4205
        %v4207 = vpop.f32.mrb[0].mxu0
        %v4208 = vpop.f32.mrb[0].mxu0
        %v4209 = vadd.f32 %v3925, %v4208
        %v4210 = vpop.f32.mrb[0].mxu0
        %4211 = vmatprep.mubr.bf16.mxu0 %v3383
        %4212 = vmatmul.mubr.bf16.gmra.mrb[0].mxu0 %v3316
        %v4213 = vpop.f32.mrb[0].mxu0
        %v4214 = vadd.f32 %v3930, %v4213
        %v4215 = vpop.f32.mrb[0].mxu0
        %v4216 = vpop.f32.mrb[0].mxu0
        %v4217 = vadd.f32 %v3933, %v4216
        %v4218 = vpop.f32.mrb[0].mxu0
        %4219 = vmatprep.mubr.bf16.mxu0 %v3387
        %4220 = vmatmul.mubr.bf16.gmra.mrb[0].mxu0 %v3319
        %v4221 = vpop.f32.mrb[0].mxu0
        %v4222 = vadd.f32 %v3938, %v4221
        %v4223 = vpop.f32.mrb[0].mxu0
        %v4224 = vpop.f32.mrb[0].mxu0
        %v4225 = vadd.f32 %v3941, %v4224
        %v4226 = vpop.f32.mrb[0].mxu0
        %4227 = vmatprep.mubr.bf16.mxu0 %v3391
        %4228 = vmatmul.mubr.bf16.gmra.mrb[0].mxu0 %v3322
        %v4229 = vpop.f32.mrb[0].mxu0
        %v4230 = vadd.f32 %v3946, %v4229
        %v4231 = vpop.f32.mrb[0].mxu0
        %v4232 = vpop.f32.mrb[0].mxu0
        %v4233 = vadd.f32 %v3949, %v4232
        %v4234 = vpop.f32.mrb[0].mxu0
        %4235 = vmatprep.mubr.bf16.mxu0 %v3395
        %4236 = vmatmul.mubr.bf16.gmra.mrb[0].mxu0 %v3325
        %v4237 = vpop.f32.mrb[0].mxu0
        %v4238 = vadd.f32 %v3954, %v4237
        %v4239 = vpop.f32.mrb[0].mxu0
        %v4240 = vpop.f32.mrb[0].mxu0
        %v4241 = vadd.f32 %v3957, %v4240
        %v4242 = vpop.f32.mrb[0].mxu0
        %4243 = vmatprep.mubr.bf16.mxu0 %v3399
        %4244 = vmatmul.mubr.bf16.gmra.mrb[0].mxu0 %v3328
        %v4245 = vpop.f32.mrb[0].mxu0
        %v4246 = vadd.f32 %v3962, %v4245
        %v4247 = vpop.f32.mrb[0].mxu0
        %v4248 = vpop.f32.mrb[0].mxu0
        %v4249 = vadd.f32 %v3965, %v4248
        %v4250 = vpop.f32.mrb[0].mxu0
        %4251 = vmatprep.mubr.bf16.mxu0 %v3403
        %4252 = vmatmul.mubr.bf16.gmra.mrb[0].mxu0 %v3331
        %v4253 = vpop.f32.mrb[0].mxu0
        %v4254 = vadd.f32 %v3970, %v4253
        %v4255 = vpop.f32.mrb[0].mxu0
        %v4256 = vpop.f32.mrb[0].mxu0
        %v4257 = vadd.f32 %v3973, %v4256
        %v4258 = vpop.f32.mrb[0].mxu0
        %4259 = vmatprep.mubr.bf16.mxu0 %v3407
        %4260 = vmatmul.mubr.bf16.gmra.mrb[0].mxu0 %v3334
        %v4261 = vpop.f32.mrb[0].mxu0
        %v4262 = vadd.f32 %v3978, %v4261
        %v4263 = vpop.f32.mrb[0].mxu0
        %v4264 = vpop.f32.mrb[0].mxu0
        %v4265 = vadd.f32 %v3981, %v4264
        %v4266 = vpop.f32.mrb[0].mxu0
        %4267 = vmatprep.mubr.bf16.mxu0 %v3411
        %4268 = vmatmul.mubr.bf16.gmra.mrb[0].mxu0 %v3337
        %v4269 = vpop.f32.mrb[0].mxu0
        %v4270 = vadd.f32 %v3986, %v4269
        %v4271 = vpop.f32.mrb[0].mxu0
        %v4272 = vpop.f32.mrb[0].mxu0
        %v4273 = vadd.f32 %v3989, %v4272
        %v4274 = vpop.f32.mrb[0].mxu0
        %4275 = vmatprep.mubr.bf16.mxu0 %v3415
        %4276 = vmatmul.mubr.bf16.gmra.mrb[0].mxu0 %v3340
        %v4277 = vpop.f32.mrb[0].mxu0
        %v4278 = vadd.f32 %v3994, %v4277
        %v4279 = vpop.f32.mrb[0].mxu0
        %v4280 = vpop.f32.mrb[0].mxu0
        %v4281 = vadd.f32 %v3997, %v4280
        %v4282 = vpop.f32.mrb[0].mxu0
        %4283 = vmatprep.mubr.bf16.mxu0 %v3419
        %4284 = vmatmul.mubr.bf16.gmra.mrb[0].mxu0 %v3343
        %v4285 = vpop.f32.mrb[0].mxu0
        %v4286 = vadd.f32 %v4002, %v4285
        %v4287 = vpop.f32.mrb[0].mxu0
        %v4288 = vpop.f32.mrb[0].mxu0
        %v4289 = vadd.f32 %v4005, %v4288
        %v4290 = vpop.f32.mrb[0].mxu0
        %4291 = vdwg.mxu0
        %4292 = vmatprep.subr.bf16.mxu0 0
        %4293 = vmatpush1.bf16.msra.mxu0 %v4104
        %4294 = vmatprep.subr.bf16.mxu0 0
        %4295 = vmatpush1.bf16.msra.mxu0 %v4105
        %4296 = vmatprep.subr.bf16.mxu0 0
        %4297 = vmatpush1.bf16.msra.mxu0 %v4106
        %4298 = vmatprep.subr.bf16.mxu0 0
        %4299 = vmatpush1.bf16.msra.mxu0 %v4107
        %4300 = vmatprep.subr.bf16.mxu0 0
        %4301 = vmatpush1.bf16.msra.mxu0 0
        %4302 = vmatprep.subr.bf16.mxu0 0
        %4303 = vmatpush1.bf16.msra.mxu0 0
        %4304 = vmatprep.subr.bf16.mxu0 0
        %4305 = vmatpush1.bf16.msra.mxu0 0
        %4306 = vmatprep.subr.bf16.mxu0 0
        %4307 = vmatpush1.bf16.msra.mxu0 0
        %4308 = vmatprep.subr.bf16.mxu0 0
        %4309 = vmatpush1.bf16.msra.mxu0 0
        %4310 = vmatprep.subr.bf16.mxu0 0
        %4311 = vmatpush1.bf16.msra.mxu0 0
        %4312 = vmatprep.subr.bf16.mxu0 0
        %4313 = vmatpush1.bf16.msra.mxu0 0
        %4314 = vmatprep.subr.bf16.mxu0 0
        %4315 = vmatpush1.bf16.msra.mxu0 0
        %4316 = vmatprep.subr.bf16.mxu0 0
        %4317 = vmatpush1.bf16.msra.mxu0 0
        %4318 = vmatprep.subr.bf16.mxu0 0
        %4319 = vmatpush1.bf16.msra.mxu0 0
        %4320 = vmatprep.subr.bf16.mxu0 0
        %4321 = vmatpush1.bf16.msra.mxu0 0
        %4322 = vmatprep.subr.bf16.mxu0 0
        %4323 = vmatpush1.bf16.msra.mxu0 0
        %4324 = vmatprep.mubr.bf16.mxu0 0
        %4325 = vmatmul.mubr.bf16.gmra.mrb[0].mxu0 %v4129
        %v4326 = vpop.f32.mrb[0].mxu0
        %v4327 = vadd.f32 %v4166, %v4326
        %v4328 = vpop.f32.mrb[0].mxu0
        %v4329 = vpop.f32.mrb[0].mxu0
        %v4330 = vadd.f32 %v4169, %v4329
        %v4331 = vpop.f32.mrb[0].mxu0
        %4332 = vmatprep.mubr.bf16.mxu0 0
        %4333 = vmatmul.mubr.bf16.gmra.mrb[0].mxu0 %v3639
        %v4334 = vpop.f32.mrb[0].mxu0
        %v4335 = vadd.f32 %v4174, %v4334
        %v4336 = vpop.f32.mrb[0].mxu0
        %v4337 = vpop.f32.mrb[0].mxu0
        %v4338 = vadd.f32 %v4177, %v4337
        %v4339 = vpop.f32.mrb[0].mxu0
        %4340 = vmatprep.mubr.bf16.mxu0 0
        %4341 = vmatmul.mubr.bf16.gmra.mrb[0].mxu0 %v3642
        %v4342 = vpop.f32.mrb[0].mxu0
        %v4343 = vadd.f32 %v4182, %v4342
        %v4344 = vpop.f32.mrb[0].mxu0
        %v4345 = vpop.f32.mrb[0].mxu0
        %v4346 = vadd.f32 %v4185, %v4345
        %v4347 = vpop.f32.mrb[0].mxu0
        %4348 = vmatprep.mubr.bf16.mxu0 0
        %4349 = vmatmul.mubr.bf16.gmra.mrb[0].mxu0 %v3645
        %v4350 = vpop.f32.mrb[0].mxu0
        %v4351 = vadd.f32 %v4190, %v4350
        %v4352 = vpop.f32.mrb[0].mxu0
        %v4353 = vpop.f32.mrb[0].mxu0
        %v4354 = vadd.f32 %v4193, %v4353
        %v4355 = vpop.f32.mrb[0].mxu0
        %4356 = vmatprep.mubr.bf16.mxu0 0
        %4357 = vmatmul.mubr.bf16.gmra.mrb[0].mxu0 %v3648
        %v4358 = vpop.f32.mrb[0].mxu0
        %v4359 = vadd.f32 %v4198, %v4358
        %v4360 = vpop.f32.mrb[0].mxu0
        %v4361 = vpop.f32.mrb[0].mxu0
        %v4362 = vadd.f32 %v4201, %v4361
        %v4363 = vpop.f32.mrb[0].mxu0
        %4364 = vmatprep.mubr.bf16.mxu0 0
        %4365 = vmatmul.mubr.bf16.gmra.mrb[0].mxu0 %v3651
        %v4366 = vpop.f32.mrb[0].mxu0
        %v4367 = vadd.f32 %v4206, %v4366
        %v4368 = vpop.f32.mrb[0].mxu0
        %v4369 = vpop.f32.mrb[0].mxu0
        %v4370 = vadd.f32 %v4209, %v4369
        %v4371 = vpop.f32.mrb[0].mxu0
        %4372 = vmatprep.mubr.bf16.mxu0 0
        %4373 = vmatmul.mubr.bf16.gmra.mrb[0].mxu0 %v3654
        %v4374 = vpop.f32.mrb[0].mxu0
        %v4375 = vadd.f32 %v4214, %v4374
        %v4376 = vpop.f32.mrb[0].mxu0
        %v4377 = vpop.f32.mrb[0].mxu0
        %v4378 = vadd.f32 %v4217, %v4377
        %v4379 = vpop.f32.mrb[0].mxu0
        %4380 = vmatprep.mubr.bf16.mxu0 0
        %4381 = vmatmul.mubr.bf16.gmra.mrb[0].mxu0 %v3657
        %v4382 = vpop.f32.mrb[0].mxu0
        %v4383 = vadd.f32 %v4222, %v4382
        %v4384 = vpop.f32.mrb[0].mxu0
        %v4385 = vpop.f32.mrb[0].mxu0
        %v4386 = vadd.f32 %v4225, %v4385
        %v4387 = vpop.f32.mrb[0].mxu0
        %4388 = vmatprep.mubr.bf16.mxu0 0
        %4389 = vmatmul.mubr.bf16.gmra.mrb[0].mxu0 %v3660
        %v4390 = vpop.f32.mrb[0].mxu0
        %v4391 = vadd.f32 %v4230, %v4390
        %v4392 = vpop.f32.mrb[0].mxu0
        %v4393 = vpop.f32.mrb[0].mxu0
        %v4394 = vadd.f32 %v4233, %v4393
        %v4395 = vpop.f32.mrb[0].mxu0
        %4396 = vmatprep.mubr.bf16.mxu0 0
        %4397 = vmatmul.mubr.bf16.gmra.mrb[0].mxu0 %v3663
        %v4398 = vpop.f32.mrb[0].mxu0
        %v4399 = vadd.f32 %v4238, %v4398
        %v4400 = vpop.f32.mrb[0].mxu0
        %v4401 = vpop.f32.mrb[0].mxu0
        %v4402 = vadd.f32 %v4241, %v4401
        %v4403 = vpop.f32.mrb[0].mxu0
        %4404 = vmatprep.mubr.bf16.mxu0 0
        %4405 = vmatmul.mubr.bf16.gmra.mrb[0].mxu0 %v3666
        %v4406 = vpop.f32.mrb[0].mxu0
        %v4407 = vadd.f32 %v4246, %v4406
        %v4408 = vpop.f32.mrb[0].mxu0
        %v4409 = vpop.f32.mrb[0].mxu0
        %v4410 = vadd.f32 %v4249, %v4409
        %v4411 = vpop.f32.mrb[0].mxu0
        %4412 = vmatprep.mubr.bf16.mxu0 0
        %4413 = vmatmul.mubr.bf16.gmra.mrb[0].mxu0 %v3669
        %v4414 = vpop.f32.mrb[0].mxu0
        %v4415 = vadd.f32 %v4254, %v4414
        %v4416 = vpop.f32.mrb[0].mxu0
        %v4417 = vpop.f32.mrb[0].mxu0
        %v4418 = vadd.f32 %v4257, %v4417
        %v4419 = vpop.f32.mrb[0].mxu0
        %4420 = vmatprep.mubr.bf16.mxu0 0
        %4421 = vmatmul.mubr.bf16.gmra.mrb[0].mxu0 %v3672
        %v4422 = vpop.f32.mrb[0].mxu0
        %v4423 = vadd.f32 %v4262, %v4422
        %v4424 = vpop.f32.mrb[0].mxu0
        %v4425 = vpop.f32.mrb[0].mxu0
        %v4426 = vadd.f32 %v4265, %v4425
        %v4427 = vpop.f32.mrb[0].mxu0
        %4428 = vmatprep.mubr.bf16.mxu0 0
        %4429 = vmatmul.mubr.bf16.gmra.mrb[0].mxu0 %v3675
        %v4430 = vpop.f32.mrb[0].mxu0
        %v4431 = vadd.f32 %v4270, %v4430
        %v4432 = vpop.f32.mrb[0].mxu0
        %v4433 = vpop.f32.mrb[0].mxu0
        %v4434 = vadd.f32 %v4273, %v4433
        %v4435 = vpop.f32.mrb[0].mxu0
        %4436 = vmatprep.mubr.bf16.mxu0 0
        %4437 = vmatmul.mubr.bf16.gmra.mrb[0].mxu0 %v3678
        %v4438 = vpop.f32.mrb[0].mxu0
        %v4439 = vadd.f32 %v4278, %v4438
        %v4440 = vpop.f32.mrb[0].mxu0
        %v4441 = vpop.f32.mrb[0].mxu0
        %v4442 = vadd.f32 %v4281, %v4441
        %v4443 = vpop.f32.mrb[0].mxu0
        %4444 = vmatprep.mubr.bf16.mxu0 0
        %4445 = vmatmul.mubr.bf16.gmra.mrb[0].mxu0 %v3681
        %v4446 = vpop.f32.mrb[0].mxu0
        %v4447 = vadd.f32 %v4286, %v4446
        %v4448 = vpop.f32.mrb[0].mxu0
        %v4449 = vpop.f32.mrb[0].mxu0
        %v4450 = vadd.f32 %v4289, %v4449
        %v4451 = vpop.f32.mrb[0].mxu0
        %4452 = vdwg.mxu0
        %s4453 = scalar_lea.vmem %s3, 320
        %v4454 = vld [vmem:[%s4453] sm:$0xf]
        %v4455 = vld [vmem:[%s4453 + $0x4] sm:$0xf]
        %v4456 = vld [vmem:[%s4453 + $0x8] sm:$0xf]
        %v4457 = vld [vmem:[%s4453 + $0xc] sm:$0xf]
        %v4458 = vld [vmem:[%s4453 + $0x10] sm:$0xf]
        %v4459 = vld [vmem:[%s4453 + $0x14] sm:$0xf]
        %v4460 = vld [vmem:[%s4453 + $0x18] sm:$0xf]
        %v4461 = vld [vmem:[%s4453 + $0x1c] sm:$0xf]
        %v4462 = vld [vmem:[%s4453 + $0x20] sm:$0xf]
        %v4463 = vld [vmem:[%s4453 + $0x24] sm:$0xf]
        %v4464 = vld [vmem:[%s4453 + $0x28] sm:$0xf]
        %v4465 = vld [vmem:[%s4453 + $0x2c] sm:$0xf]
        %v4466 = vld [vmem:[%s4453 + $0x30] sm:$0xf]
        %v4467 = vld [vmem:[%s4453 + $0x34] sm:$0xf]
        %v4468 = vld [vmem:[%s4453 + $0x38] sm:$0xf]
        %v4469 = vld [vmem:[%s4453 + $0x3c] sm:$0xf]
        %v4470 = vld [vmem:[%s4453 + $0x40] sm:$0xf]
        %v4471 = vld [vmem:[%s4453 + $0x44] sm:$0xf]
        %v4472 = vld [vmem:[%s4453 + $0x48] sm:$0xf]
        %v4473 = vld [vmem:[%s4453 + $0x4c] sm:$0xf]
        %v4474 = vld [vmem:[%s4453 + $0x50] sm:$0xf]
        %v4475 = vld [vmem:[%s4453 + $0x54] sm:$0xf]
        %v4476 = vld [vmem:[%s4453 + $0x58] sm:$0xf]
        %v4477 = vld [vmem:[%s4453 + $0x5c] sm:$0xf]
        %v4478 = vld [vmem:[%s4453 + $0x60] sm:$0xf]
        %v4479 = vld [vmem:[%s4453 + $0x64] sm:$0xf]
        %v4480 = vld [vmem:[%s4453 + $0x68] sm:$0xf]
        %v4481 = vld [vmem:[%s4453 + $0x6c] sm:$0xf]
        %v4482 = vld [vmem:[%s4453 + $0x70] sm:$0xf]
        %v4483 = vld [vmem:[%s4453 + $0x74] sm:$0xf]
        %v4484 = vld [vmem:[%s4453 + $0x78] sm:$0xf]
        %v4485 = vld [vmem:[%s4453 + $0x7c] sm:$0xf]
        %v4486 = vld [vmem:[%s4453 + $0x80] sm:$0xf]
        %v4487 = vld [vmem:[%s4453 + $0x84] sm:$0xf]
        %v4488 = vld [vmem:[%s4453 + $0x88] sm:$0xf]
        %v4489 = vld [vmem:[%s4453 + $0x8c] sm:$0xf]
        %v4490 = vld [vmem:[%s4453 + $0x90] sm:$0xf]
        %v4491 = vld [vmem:[%s4453 + $0x94] sm:$0xf]
        %v4492 = vld [vmem:[%s4453 + $0x98] sm:$0xf]
        %v4493 = vld [vmem:[%s4453 + $0x9c] sm:$0xf]
        %v4534 = vunpack.c.l.b16 %v4454
        %v4535 = vunpack.c.l.b16 %v4455
        %v4536 = vunpack.c.l.b16 %v4456
        %v4537 = vunpack.c.l.b16 %v4457
        %v4538 = vunpack.c.l.b16 %v4458
        %v4539 = vunpack.c.l.b16 %v4459
        %v4540 = vunpack.c.l.b16 %v4460
        %v4541 = vunpack.c.l.b16 %v4461
        %v4542 = vunpack.c.l.b16 %v4462
        %v4543 = vunpack.c.l.b16 %v4463
        %v4544 = vunpack.c.l.b16 %v4464
        %v4545 = vunpack.c.l.b16 %v4465
        %v4546 = vunpack.c.l.b16 %v4466
        %v4547 = vunpack.c.l.b16 %v4467
        %v4548 = vunpack.c.l.b16 %v4468
        %v4549 = vunpack.c.l.b16 %v4469
        %v4550 = vunpack.c.l.b16 %v4470
        %v4551 = vunpack.c.l.b16 %v4471
        %v4552 = vunpack.c.l.b16 %v4472
        %v4553 = vunpack.c.l.b16 %v4473
        %v4554 = vunpack.c.l.b16 %v4474
        %v4555 = vunpack.c.l.b16 %v4475
        %v4556 = vunpack.c.l.b16 %v4476
        %v4557 = vunpack.c.l.b16 %v4477
        %v4558 = vunpack.c.l.b16 %v4478
        %v4559 = vunpack.c.l.b16 %v4479
        %v4560 = vunpack.c.l.b16 %v4480
        %v4561 = vunpack.c.l.b16 %v4481
        %v4562 = vunpack.c.l.b16 %v4482
        %v4563 = vunpack.c.l.b16 %v4483
        %v4564 = vunpack.c.l.b16 %v4484
        %v4565 = vunpack.c.l.b16 %v4485
        %v4566 = vunpack.c.l.b16 %v4486
        %v4567 = vunpack.c.l.b16 %v4487
        %v4568 = vunpack.c.l.b16 %v4488
        %v4569 = vunpack.c.l.b16 %v4489
        %v4570 = vunpack.c.l.b16 %v4490
        %v4571 = vunpack.c.l.b16 %v4491
        %v4572 = vunpack.c.l.b16 %v4492
        %v4573 = vunpack.c.l.b16 %v4493
        %v4574 = vpack.c.b16 %v4535, %v4534
        %v4575 = vpack.c.b16 %v4537, %v4536
        %v4576 = vpack.c.b16 %v4539, %v4538
        %v4577 = vpack.c.b16 %v4541, %v4540
        %v4578 = vpack.c.b16 %v4543, %v4542
        %v4579 = vpack.c.b16 %v4545, %v4544
        %v4580 = vpack.c.b16 %v4547, %v4546
        %v4581 = vpack.c.b16 %v4549, %v4548
        %v4582 = vpack.c.b16 %v4551, %v4550
        %v4583 = vpack.c.b16 %v4553, %v4552
        %v4584 = vpack.c.b16 %v4555, %v4554
        %v4585 = vpack.c.b16 %v4557, %v4556
        %v4586 = vpack.c.b16 %v4559, %v4558
        %v4587 = vpack.c.b16 %v4561, %v4560
        %v4588 = vpack.c.b16 %v4563, %v4562
        %v4589 = vpack.c.b16 %v4565, %v4564
        %v4590 = vpack.c.b16 %v4567, %v4566
        %v4591 = vpack.c.b16 %v4569, %v4568
        %v4592 = vpack.c.b16 %v4571, %v4570
        %v4593 = vpack.c.b16 %v4573, %v4572
        %v4615 = vsel %vm792, %v3290, 0
        %4617 = vmatprep.subr.bf16.mxu0 0
        %4618 = vmatpush1.bf16.msra.mxu0 %v4574
        %4619 = vmatprep.subr.bf16.mxu0 0
        %4620 = vmatpush1.bf16.msra.mxu0 %v4575
        %4621 = vmatprep.subr.bf16.mxu0 0
        %4622 = vmatpush1.bf16.msra.mxu0 %v4576
        %4623 = vmatprep.subr.bf16.mxu0 0
        %4624 = vmatpush1.bf16.msra.mxu0 %v4577
        %4625 = vmatprep.subr.bf16.mxu0 0
        %4626 = vmatpush1.bf16.msra.mxu0 %v4578
        %4627 = vmatprep.subr.bf16.mxu0 0
        %4628 = vmatpush1.bf16.msra.mxu0 %v4579
        %4629 = vmatprep.subr.bf16.mxu0 0
        %4630 = vmatpush1.bf16.msra.mxu0 %v4580
        %4631 = vmatprep.subr.bf16.mxu0 0
        %4632 = vmatpush1.bf16.msra.mxu0 %v4581
        %4633 = vmatprep.subr.bf16.mxu0 0
        %4634 = vmatpush1.bf16.msra.mxu0 %v4582
        %4635 = vmatprep.subr.bf16.mxu0 0
        %4636 = vmatpush1.bf16.msra.mxu0 %v4583
        %4637 = vmatprep.subr.bf16.mxu0 0
        %4638 = vmatpush1.bf16.msra.mxu0 %v4584
        %4639 = vmatprep.subr.bf16.mxu0 0
        %4640 = vmatpush1.bf16.msra.mxu0 %v4585
        %4641 = vmatprep.subr.bf16.mxu0 0
        %4642 = vmatpush1.bf16.msra.mxu0 %v4586
        %4643 = vmatprep.subr.bf16.mxu0 0
        %4644 = vmatpush1.bf16.msra.mxu0 %v4587
        %4645 = vmatprep.subr.bf16.mxu0 0
        %4646 = vmatpush1.bf16.msra.mxu0 %v4588
        %4647 = vmatprep.subr.bf16.mxu0 0
        %4648 = vmatpush1.bf16.msra.mxu0 %v4589
        %4649 = vmatprep.mubr.bf16.mxu0 %v3367
        %4650 = vmatmul.mubr.bf16.gmra.mrb[0].mxu0 %v3304
        %v4651 = vpop.f32.mrb[0].mxu0
        %v4652 = vadd.f32 0.0, %v4651
        %v4653 = vpop.f32.mrb[0].mxu0
        %v4654 = vpop.f32.mrb[0].mxu0
        %v4655 = vadd.f32 0.0, %v4654
        %v4656 = vpop.f32.mrb[0].mxu0
        %4657 = vmatprep.mubr.bf16.mxu0 %v3371
        %4658 = vmatmul.mubr.bf16.gmra.mrb[0].mxu0 %v3307
        %v4659 = vpop.f32.mrb[0].mxu0
        %v4660 = vadd.f32 0.0, %v4659
        %v4661 = vpop.f32.mrb[0].mxu0
        %v4662 = vpop.f32.mrb[0].mxu0
        %v4663 = vadd.f32 0.0, %v4662
        %v4664 = vpop.f32.mrb[0].mxu0
        %4665 = vmatprep.mubr.bf16.mxu0 %v3375
        %4666 = vmatmul.mubr.bf16.gmra.mrb[0].mxu0 %v3310
        %v4667 = vpop.f32.mrb[0].mxu0
        %v4668 = vadd.f32 0.0, %v4667
        %v4669 = vpop.f32.mrb[0].mxu0
        %v4670 = vpop.f32.mrb[0].mxu0
        %v4671 = vadd.f32 0.0, %v4670
        %v4672 = vpop.f32.mrb[0].mxu0
        %4673 = vmatprep.mubr.bf16.mxu0 %v3379
        %4674 = vmatmul.mubr.bf16.gmra.mrb[0].mxu0 %v3313
        %v4675 = vpop.f32.mrb[0].mxu0
        %v4676 = vadd.f32 0.0, %v4675
        %v4677 = vpop.f32.mrb[0].mxu0
        %v4678 = vpop.f32.mrb[0].mxu0
        %v4679 = vadd.f32 0.0, %v4678
        %v4680 = vpop.f32.mrb[0].mxu0
        %4681 = vmatprep.mubr.bf16.mxu0 %v3383
        %4682 = vmatmul.mubr.bf16.gmra.mrb[0].mxu0 %v3316
        %v4683 = vpop.f32.mrb[0].mxu0
        %v4684 = vadd.f32 0.0, %v4683
        %v4685 = vpop.f32.mrb[0].mxu0
        %v4686 = vpop.f32.mrb[0].mxu0
        %v4687 = vadd.f32 0.0, %v4686
        %v4688 = vpop.f32.mrb[0].mxu0
        %4689 = vmatprep.mubr.bf16.mxu0 %v3387
        %4690 = vmatmul.mubr.bf16.gmra.mrb[0].mxu0 %v3319
        %v4691 = vpop.f32.mrb[0].mxu0
        %v4692 = vadd.f32 0.0, %v4691
        %v4693 = vpop.f32.mrb[0].mxu0
        %v4694 = vpop.f32.mrb[0].mxu0
        %v4695 = vadd.f32 0.0, %v4694
        %v4696 = vpop.f32.mrb[0].mxu0
        %4697 = vmatprep.mubr.bf16.mxu0 %v3391
        %4698 = vmatmul.mubr.bf16.gmra.mrb[0].mxu0 %v3322
        %v4699 = vpop.f32.mrb[0].mxu0
        %v4700 = vadd.f32 0.0, %v4699
        %v4701 = vpop.f32.mrb[0].mxu0
        %v4702 = vpop.f32.mrb[0].mxu0
        %v4703 = vadd.f32 0.0, %v4702
        %v4704 = vpop.f32.mrb[0].mxu0
        %4705 = vmatprep.mubr.bf16.mxu0 %v3395
        %4706 = vmatmul.mubr.bf16.gmra.mrb[0].mxu0 %v3325
        %v4707 = vpop.f32.mrb[0].mxu0
        %v4708 = vadd.f32 0.0, %v4707
        %v4709 = vpop.f32.mrb[0].mxu0
        %v4710 = vpop.f32.mrb[0].mxu0
        %v4711 = vadd.f32 0.0, %v4710
        %v4712 = vpop.f32.mrb[0].mxu0
        %4713 = vmatprep.mubr.bf16.mxu0 %v3399
        %4714 = vmatmul.mubr.bf16.gmra.mrb[0].mxu0 %v3328
        %v4715 = vpop.f32.mrb[0].mxu0
        %v4716 = vadd.f32 0.0, %v4715
        %v4717 = vpop.f32.mrb[0].mxu0
        %v4718 = vpop.f32.mrb[0].mxu0
        %v4719 = vadd.f32 0.0, %v4718
        %v4720 = vpop.f32.mrb[0].mxu0
        %4721 = vmatprep.mubr.bf16.mxu0 %v3403
        %4722 = vmatmul.mubr.bf16.gmra.mrb[0].mxu0 %v3331
        %v4723 = vpop.f32.mrb[0].mxu0
        %v4724 = vadd.f32 0.0, %v4723
        %v4725 = vpop.f32.mrb[0].mxu0
        %v4726 = vpop.f32.mrb[0].mxu0
        %v4727 = vadd.f32 0.0, %v4726
        %v4728 = vpop.f32.mrb[0].mxu0
        %4729 = vmatprep.mubr.bf16.mxu0 %v3407
        %4730 = vmatmul.mubr.bf16.gmra.mrb[0].mxu0 %v3334
        %v4731 = vpop.f32.mrb[0].mxu0
        %v4732 = vadd.f32 0.0, %v4731
        %v4733 = vpop.f32.mrb[0].mxu0
        %v4734 = vpop.f32.mrb[0].mxu0
        %v4735 = vadd.f32 0.0, %v4734
        %v4736 = vpop.f32.mrb[0].mxu0
        %4737 = vmatprep.mubr.bf16.mxu0 %v3411
        %4738 = vmatmul.mubr.bf16.gmra.mrb[0].mxu0 %v3337
        %v4739 = vpop.f32.mrb[0].mxu0
        %v4740 = vadd.f32 0.0, %v4739
        %v4741 = vpop.f32.mrb[0].mxu0
        %v4742 = vpop.f32.mrb[0].mxu0
        %v4743 = vadd.f32 0.0, %v4742
        %v4744 = vpop.f32.mrb[0].mxu0
        %4745 = vmatprep.mubr.bf16.mxu0 %v3415
        %4746 = vmatmul.mubr.bf16.gmra.mrb[0].mxu0 %v3340
        %v4747 = vpop.f32.mrb[0].mxu0
        %v4748 = vadd.f32 0.0, %v4747
        %v4749 = vpop.f32.mrb[0].mxu0
        %v4750 = vpop.f32.mrb[0].mxu0
        %v4751 = vadd.f32 0.0, %v4750
        %v4752 = vpop.f32.mrb[0].mxu0
        %4753 = vmatprep.mubr.bf16.mxu0 %v3419
        %4754 = vmatmul.mubr.bf16.gmra.mrb[0].mxu0 %v3343
        %v4755 = vpop.f32.mrb[0].mxu0
        %v4756 = vadd.f32 0.0, %v4755
        %v4757 = vpop.f32.mrb[0].mxu0
        %v4758 = vpop.f32.mrb[0].mxu0
        %v4759 = vadd.f32 0.0, %v4758
        %v4760 = vpop.f32.mrb[0].mxu0
        %4761 = vmatprep.mubr.bf16.mxu0 %v3423
        %4762 = vmatmul.mubr.bf16.gmra.mrb[0].mxu0 %v3346
        %v4763 = vpop.f32.mrb[0].mxu0
        %v4764 = vadd.f32 0.0, %v4763
        %v4765 = vpop.f32.mrb[0].mxu0
        %v4766 = vpop.f32.mrb[0].mxu0
        %v4767 = vadd.f32 0.0, %v4766
        %v4768 = vpop.f32.mrb[0].mxu0
        %4769 = vmatprep.mubr.bf16.mxu0 %v3427
        %4770 = vmatmul.mubr.bf16.gmra.mrb[0].mxu0 %v3349
        %v4771 = vpop.f32.mrb[0].mxu0
        %v4772 = vadd.f32 0.0, %v4771
        %v4773 = vpop.f32.mrb[0].mxu0
        %v4774 = vpop.f32.mrb[0].mxu0
        %v4775 = vadd.f32 0.0, %v4774
        %v4776 = vpop.f32.mrb[0].mxu0
        %4777 = vdwg.mxu0
        %4778 = vmatprep.subr.bf16.mxu0 0
        %4779 = vmatpush1.bf16.msra.mxu0 %v4590
        %4780 = vmatprep.subr.bf16.mxu0 0
        %4781 = vmatpush1.bf16.msra.mxu0 %v4591
        %4782 = vmatprep.subr.bf16.mxu0 0
        %4783 = vmatpush1.bf16.msra.mxu0 %v4592
        %4784 = vmatprep.subr.bf16.mxu0 0
        %4785 = vmatpush1.bf16.msra.mxu0 %v4593
        %4786 = vmatprep.subr.bf16.mxu0 0
        %4787 = vmatpush1.bf16.msra.mxu0 0
        %4788 = vmatprep.subr.bf16.mxu0 0
        %4789 = vmatpush1.bf16.msra.mxu0 0
        %4790 = vmatprep.subr.bf16.mxu0 0
        %4791 = vmatpush1.bf16.msra.mxu0 0
        %4792 = vmatprep.subr.bf16.mxu0 0
        %4793 = vmatpush1.bf16.msra.mxu0 0
        %4794 = vmatprep.subr.bf16.mxu0 0
        %4795 = vmatpush1.bf16.msra.mxu0 0
        %4796 = vmatprep.subr.bf16.mxu0 0
        %4797 = vmatpush1.bf16.msra.mxu0 0
        %4798 = vmatprep.subr.bf16.mxu0 0
        %4799 = vmatpush1.bf16.msra.mxu0 0
        %4800 = vmatprep.subr.bf16.mxu0 0
        %4801 = vmatpush1.bf16.msra.mxu0 0
        %4802 = vmatprep.subr.bf16.mxu0 0
        %4803 = vmatpush1.bf16.msra.mxu0 0
        %4804 = vmatprep.subr.bf16.mxu0 0
        %4805 = vmatpush1.bf16.msra.mxu0 0
        %4806 = vmatprep.subr.bf16.mxu0 0
        %4807 = vmatpush1.bf16.msra.mxu0 0
        %4808 = vmatprep.subr.bf16.mxu0 0
        %4809 = vmatpush1.bf16.msra.mxu0 0
        %4810 = vmatprep.mubr.bf16.mxu0 0
        %4811 = vmatmul.mubr.bf16.gmra.mrb[0].mxu0 %v3642
        %v4812 = vpop.f32.mrb[0].mxu0
        %v4813 = vadd.f32 %v4652, %v4812
        %v4814 = vpop.f32.mrb[0].mxu0
        %v4815 = vpop.f32.mrb[0].mxu0
        %v4816 = vadd.f32 %v4655, %v4815
        %v4817 = vpop.f32.mrb[0].mxu0
        %4818 = vmatprep.mubr.bf16.mxu0 0
        %4819 = vmatmul.mubr.bf16.gmra.mrb[0].mxu0 %v3645
        %v4820 = vpop.f32.mrb[0].mxu0
        %v4821 = vadd.f32 %v4660, %v4820
        %v4822 = vpop.f32.mrb[0].mxu0
        %v4823 = vpop.f32.mrb[0].mxu0
        %v4824 = vadd.f32 %v4663, %v4823
        %v4825 = vpop.f32.mrb[0].mxu0
        %4826 = vmatprep.mubr.bf16.mxu0 0
        %4827 = vmatmul.mubr.bf16.gmra.mrb[0].mxu0 %v3648
        %v4828 = vpop.f32.mrb[0].mxu0
        %v4829 = vadd.f32 %v4668, %v4828
        %v4830 = vpop.f32.mrb[0].mxu0
        %v4831 = vpop.f32.mrb[0].mxu0
        %v4832 = vadd.f32 %v4671, %v4831
        %v4833 = vpop.f32.mrb[0].mxu0
        %4834 = vmatprep.mubr.bf16.mxu0 0
        %4835 = vmatmul.mubr.bf16.gmra.mrb[0].mxu0 %v3651
        %v4836 = vpop.f32.mrb[0].mxu0
        %v4837 = vadd.f32 %v4676, %v4836
        %v4838 = vpop.f32.mrb[0].mxu0
        %v4839 = vpop.f32.mrb[0].mxu0
        %v4840 = vadd.f32 %v4679, %v4839
        %v4841 = vpop.f32.mrb[0].mxu0
        %4842 = vmatprep.mubr.bf16.mxu0 0
        %4843 = vmatmul.mubr.bf16.gmra.mrb[0].mxu0 %v3654
        %v4844 = vpop.f32.mrb[0].mxu0
        %v4845 = vadd.f32 %v4684, %v4844
        %v4846 = vpop.f32.mrb[0].mxu0
        %v4847 = vpop.f32.mrb[0].mxu0
        %v4848 = vadd.f32 %v4687, %v4847
        %v4849 = vpop.f32.mrb[0].mxu0
        %4850 = vmatprep.mubr.bf16.mxu0 0
        %4851 = vmatmul.mubr.bf16.gmra.mrb[0].mxu0 %v3657
        %v4852 = vpop.f32.mrb[0].mxu0
        %v4853 = vadd.f32 %v4692, %v4852
        %v4854 = vpop.f32.mrb[0].mxu0
        %v4855 = vpop.f32.mrb[0].mxu0
        %v4856 = vadd.f32 %v4695, %v4855
        %v4857 = vpop.f32.mrb[0].mxu0
        %4858 = vmatprep.mubr.bf16.mxu0 0
        %4859 = vmatmul.mubr.bf16.gmra.mrb[0].mxu0 %v3660
        %v4860 = vpop.f32.mrb[0].mxu0
        %v4861 = vadd.f32 %v4700, %v4860
        %v4862 = vpop.f32.mrb[0].mxu0
        %v4863 = vpop.f32.mrb[0].mxu0
        %v4864 = vadd.f32 %v4703, %v4863
        %v4865 = vpop.f32.mrb[0].mxu0
        %4866 = vmatprep.mubr.bf16.mxu0 0
        %4867 = vmatmul.mubr.bf16.gmra.mrb[0].mxu0 %v3663
        %v4868 = vpop.f32.mrb[0].mxu0
        %v4869 = vadd.f32 %v4708, %v4868
        %v4870 = vpop.f32.mrb[0].mxu0
        %v4871 = vpop.f32.mrb[0].mxu0
        %v4872 = vadd.f32 %v4711, %v4871
        %v4873 = vpop.f32.mrb[0].mxu0
        %4874 = vmatprep.mubr.bf16.mxu0 0
        %4875 = vmatmul.mubr.bf16.gmra.mrb[0].mxu0 %v3666
        %v4876 = vpop.f32.mrb[0].mxu0
        %v4877 = vadd.f32 %v4716, %v4876
        %v4878 = vpop.f32.mrb[0].mxu0
        %v4879 = vpop.f32.mrb[0].mxu0
        %v4880 = vadd.f32 %v4719, %v4879
        %v4881 = vpop.f32.mrb[0].mxu0
        %4882 = vmatprep.mubr.bf16.mxu0 0
        %4883 = vmatmul.mubr.bf16.gmra.mrb[0].mxu0 %v3669
        %v4884 = vpop.f32.mrb[0].mxu0
        %v4885 = vadd.f32 %v4724, %v4884
        %v4886 = vpop.f32.mrb[0].mxu0
        %v4887 = vpop.f32.mrb[0].mxu0
        %v4888 = vadd.f32 %v4727, %v4887
        %v4889 = vpop.f32.mrb[0].mxu0
        %4890 = vmatprep.mubr.bf16.mxu0 0
        %4891 = vmatmul.mubr.bf16.gmra.mrb[0].mxu0 %v3672
        %v4892 = vpop.f32.mrb[0].mxu0
        %v4893 = vadd.f32 %v4732, %v4892
        %v4894 = vpop.f32.mrb[0].mxu0
        %v4895 = vpop.f32.mrb[0].mxu0
        %v4896 = vadd.f32 %v4735, %v4895
        %v4897 = vpop.f32.mrb[0].mxu0
        %4898 = vmatprep.mubr.bf16.mxu0 0
        %4899 = vmatmul.mubr.bf16.gmra.mrb[0].mxu0 %v3675
        %v4900 = vpop.f32.mrb[0].mxu0
        %v4901 = vadd.f32 %v4740, %v4900
        %v4902 = vpop.f32.mrb[0].mxu0
        %v4903 = vpop.f32.mrb[0].mxu0
        %v4904 = vadd.f32 %v4743, %v4903
        %v4905 = vpop.f32.mrb[0].mxu0
        %4906 = vmatprep.mubr.bf16.mxu0 0
        %4907 = vmatmul.mubr.bf16.gmra.mrb[0].mxu0 %v3678
        %v4908 = vpop.f32.mrb[0].mxu0
        %v4909 = vadd.f32 %v4748, %v4908
        %v4910 = vpop.f32.mrb[0].mxu0
        %v4911 = vpop.f32.mrb[0].mxu0
        %v4912 = vadd.f32 %v4751, %v4911
        %v4913 = vpop.f32.mrb[0].mxu0
        %4914 = vmatprep.mubr.bf16.mxu0 0
        %4915 = vmatmul.mubr.bf16.gmra.mrb[0].mxu0 %v3681
        %v4916 = vpop.f32.mrb[0].mxu0
        %v4917 = vadd.f32 %v4756, %v4916
        %v4918 = vpop.f32.mrb[0].mxu0
        %v4919 = vpop.f32.mrb[0].mxu0
        %v4920 = vadd.f32 %v4759, %v4919
        %v4921 = vpop.f32.mrb[0].mxu0
        %4922 = vmatprep.mubr.bf16.mxu0 0
        %4923 = vmatmul.mubr.bf16.gmra.mrb[0].mxu0 %v3684
        %v4924 = vpop.f32.mrb[0].mxu0
        %v4925 = vadd.f32 %v4764, %v4924
        %v4926 = vpop.f32.mrb[0].mxu0
        %v4927 = vpop.f32.mrb[0].mxu0
        %v4928 = vadd.f32 %v4767, %v4927
        %v4929 = vpop.f32.mrb[0].mxu0
        %4930 = vmatprep.mubr.bf16.mxu0 0
        %4931 = vmatmul.mubr.bf16.gmra.mrb[0].mxu0 %v4615
        %v4932 = vpop.f32.mrb[0].mxu0
        %v4933 = vadd.f32 %v4772, %v4932
        %v4934 = vpop.f32.mrb[0].mxu0
        %v4935 = vpop.f32.mrb[0].mxu0
        %v4936 = vadd.f32 %v4775, %v4935
        %v4937 = vpop.f32.mrb[0].mxu0
        %4938 = vdwg.mxu0
        %v4939 = vadd.f32 %v4327, %v4813
        %v4940 = vadd.f32 %v4330, %v4816
        %v4941 = vadd.f32 %v4335, %v4821
        %v4942 = vadd.f32 %v4338, %v4824
        %v4943 = vadd.f32 %v4343, %v4829
        %v4944 = vadd.f32 %v4346, %v4832
        %v4945 = vadd.f32 %v4351, %v4837
        %v4946 = vadd.f32 %v4354, %v4840
        %v4947 = vadd.f32 %v4359, %v4845
        %v4948 = vadd.f32 %v4362, %v4848
        %v4949 = vadd.f32 %v4367, %v4853
        %v4950 = vadd.f32 %v4370, %v4856
        %v4951 = vadd.f32 %v4375, %v4861
        %v4952 = vadd.f32 %v4378, %v4864
        %v4953 = vadd.f32 %v4383, %v4869
        %v4954 = vadd.f32 %v4386, %v4872
        %v4955 = vadd.f32 %v4391, %v4877
        %v4956 = vadd.f32 %v4394, %v4880
        %v4957 = vadd.f32 %v4399, %v4885
        %v4958 = vadd.f32 %v4402, %v4888
        %v4959 = vadd.f32 %v4407, %v4893
        %v4960 = vadd.f32 %v4410, %v4896
        %v4961 = vadd.f32 %v4415, %v4901
        %v4962 = vadd.f32 %v4418, %v4904
        %v4963 = vadd.f32 %v4423, %v4909
        %v4964 = vadd.f32 %v4426, %v4912
        %v4965 = vadd.f32 %v4431, %v4917
        %v4966 = vadd.f32 %v4434, %v4920
        %v4967 = vadd.f32 %v4439, %v4925
        %v4968 = vadd.f32 %v4442, %v4928
        %v4969 = vadd.f32 %v4447, %v4933
        %v4970 = vadd.f32 %v4450, %v4936
        %s4971 = scalar_lea.vmem %s3, 480
        %v4972 = vld [vmem:[%s4971] sm:$0xf]
        %v4973 = vld [vmem:[%s4971 + $0x4] sm:$0xf]
        %v4974 = vld [vmem:[%s4971 + $0x8] sm:$0xf]
        %v4975 = vld [vmem:[%s4971 + $0xc] sm:$0xf]
        %v4976 = vld [vmem:[%s4971 + $0x10] sm:$0xf]
        %v4977 = vld [vmem:[%s4971 + $0x14] sm:$0xf]
        %v4978 = vld [vmem:[%s4971 + $0x18] sm:$0xf]
        %v4979 = vld [vmem:[%s4971 + $0x1c] sm:$0xf]
        %v4980 = vld [vmem:[%s4971 + $0x20] sm:$0xf]
        %v4981 = vld [vmem:[%s4971 + $0x24] sm:$0xf]
        %v4982 = vld [vmem:[%s4971 + $0x28] sm:$0xf]
        %v4983 = vld [vmem:[%s4971 + $0x2c] sm:$0xf]
        %v4984 = vld [vmem:[%s4971 + $0x30] sm:$0xf]
        %v4985 = vld [vmem:[%s4971 + $0x34] sm:$0xf]
        %v4986 = vld [vmem:[%s4971 + $0x38] sm:$0xf]
        %v4987 = vld [vmem:[%s4971 + $0x3c] sm:$0xf]
        %v4988 = vld [vmem:[%s4971 + $0x40] sm:$0xf]
        %v4989 = vld [vmem:[%s4971 + $0x44] sm:$0xf]
        %v4990 = vld [vmem:[%s4971 + $0x48] sm:$0xf]
        %v4991 = vld [vmem:[%s4971 + $0x4c] sm:$0xf]
        %v4992 = vld [vmem:[%s4971 + $0x50] sm:$0xf]
        %v4993 = vld [vmem:[%s4971 + $0x54] sm:$0xf]
        %v4994 = vld [vmem:[%s4971 + $0x58] sm:$0xf]
        %v4995 = vld [vmem:[%s4971 + $0x5c] sm:$0xf]
        %v4996 = vld [vmem:[%s4971 + $0x60] sm:$0xf]
        %v4997 = vld [vmem:[%s4971 + $0x64] sm:$0xf]
        %v4998 = vld [vmem:[%s4971 + $0x68] sm:$0xf]
        %v4999 = vld [vmem:[%s4971 + $0x6c] sm:$0xf]
        %v5000 = vld [vmem:[%s4971 + $0x70] sm:$0xf]
        %v5001 = vld [vmem:[%s4971 + $0x74] sm:$0xf]
        %v5002 = vld [vmem:[%s4971 + $0x78] sm:$0xf]
        %v5003 = vld [vmem:[%s4971 + $0x7c] sm:$0xf]
        %v5004 = vld [vmem:[%s4971 + $0x80] sm:$0xf]
        %v5005 = vld [vmem:[%s4971 + $0x84] sm:$0xf]
        %v5006 = vld [vmem:[%s4971 + $0x88] sm:$0xf]
        %v5007 = vld [vmem:[%s4971 + $0x8c] sm:$0xf]
        %v5008 = vld [vmem:[%s4971 + $0x90] sm:$0xf]
        %v5009 = vld [vmem:[%s4971 + $0x94] sm:$0xf]
        %v5010 = vld [vmem:[%s4971 + $0x98] sm:$0xf]
        %v5011 = vld [vmem:[%s4971 + $0x9c] sm:$0xf]
        %v5052 = vunpack.c.l.b16 %v4972
        %v5053 = vunpack.c.l.b16 %v4973
        %v5054 = vunpack.c.l.b16 %v4974
        %v5055 = vunpack.c.l.b16 %v4975
        %v5056 = vunpack.c.l.b16 %v4976
        %v5057 = vunpack.c.l.b16 %v4977
        %v5058 = vunpack.c.l.b16 %v4978
        %v5059 = vunpack.c.l.b16 %v4979
        %v5060 = vunpack.c.l.b16 %v4980
        %v5061 = vunpack.c.l.b16 %v4981
        %v5062 = vunpack.c.l.b16 %v4982
        %v5063 = vunpack.c.l.b16 %v4983
        %v5064 = vunpack.c.l.b16 %v4984
        %v5065 = vunpack.c.l.b16 %v4985
        %v5066 = vunpack.c.l.b16 %v4986
        %v5067 = vunpack.c.l.b16 %v4987
        %v5068 = vunpack.c.l.b16 %v4988
        %v5069 = vunpack.c.l.b16 %v4989
        %v5070 = vunpack.c.l.b16 %v4990
        %v5071 = vunpack.c.l.b16 %v4991
        %v5072 = vunpack.c.l.b16 %v4992
        %v5073 = vunpack.c.l.b16 %v4993
        %v5074 = vunpack.c.l.b16 %v4994
        %v5075 = vunpack.c.l.b16 %v4995
        %v5076 = vunpack.c.l.b16 %v4996
        %v5077 = vunpack.c.l.b16 %v4997
        %v5078 = vunpack.c.l.b16 %v4998
        %v5079 = vunpack.c.l.b16 %v4999
        %v5080 = vunpack.c.l.b16 %v5000
        %v5081 = vunpack.c.l.b16 %v5001
        %v5082 = vunpack.c.l.b16 %v5002
        %v5083 = vunpack.c.l.b16 %v5003
        %v5084 = vunpack.c.l.b16 %v5004
        %v5085 = vunpack.c.l.b16 %v5005
        %v5086 = vunpack.c.l.b16 %v5006
        %v5087 = vunpack.c.l.b16 %v5007
        %v5088 = vunpack.c.l.b16 %v5008
        %v5089 = vunpack.c.l.b16 %v5009
        %v5090 = vunpack.c.l.b16 %v5010
        %v5091 = vunpack.c.l.b16 %v5011
        %v5092 = vpack.c.b16 %v5053, %v5052
        %v5093 = vpack.c.b16 %v5055, %v5054
        %v5094 = vpack.c.b16 %v5057, %v5056
        %v5095 = vpack.c.b16 %v5059, %v5058
        %v5096 = vpack.c.b16 %v5061, %v5060
        %v5097 = vpack.c.b16 %v5063, %v5062
        %v5098 = vpack.c.b16 %v5065, %v5064
        %v5099 = vpack.c.b16 %v5067, %v5066
        %v5100 = vpack.c.b16 %v5069, %v5068
        %v5101 = vpack.c.b16 %v5071, %v5070
        %v5102 = vpack.c.b16 %v5073, %v5072
        %v5103 = vpack.c.b16 %v5075, %v5074
        %v5104 = vpack.c.b16 %v5077, %v5076
        %v5105 = vpack.c.b16 %v5079, %v5078
        %v5106 = vpack.c.b16 %v5081, %v5080
        %v5107 = vpack.c.b16 %v5083, %v5082
        %v5108 = vpack.c.b16 %v5085, %v5084
        %v5109 = vpack.c.b16 %v5087, %v5086
        %v5110 = vpack.c.b16 %v5089, %v5088
        %v5111 = vpack.c.b16 %v5091, %v5090
        %v5133 = vsel %vm792, %v3293, 0
        %5135 = vmatprep.subr.bf16.mxu0 0
        %5136 = vmatpush1.bf16.msra.mxu0 %v5092
        %5137 = vmatprep.subr.bf16.mxu0 0
        %5138 = vmatpush1.bf16.msra.mxu0 %v5093
        %5139 = vmatprep.subr.bf16.mxu0 0
        %5140 = vmatpush1.bf16.msra.mxu0 %v5094
        %5141 = vmatprep.subr.bf16.mxu0 0
        %5142 = vmatpush1.bf16.msra.mxu0 %v5095
        %5143 = vmatprep.subr.bf16.mxu0 0
        %5144 = vmatpush1.bf16.msra.mxu0 %v5096
        %5145 = vmatprep.subr.bf16.mxu0 0
        %5146 = vmatpush1.bf16.msra.mxu0 %v5097
        %5147 = vmatprep.subr.bf16.mxu0 0
        %5148 = vmatpush1.bf16.msra.mxu0 %v5098
        %5149 = vmatprep.subr.bf16.mxu0 0
        %5150 = vmatpush1.bf16.msra.mxu0 %v5099
        %5151 = vmatprep.subr.bf16.mxu0 0
        %5152 = vmatpush1.bf16.msra.mxu0 %v5100
        %5153 = vmatprep.subr.bf16.mxu0 0
        %5154 = vmatpush1.bf16.msra.mxu0 %v5101
        %5155 = vmatprep.subr.bf16.mxu0 0
        %5156 = vmatpush1.bf16.msra.mxu0 %v5102
        %5157 = vmatprep.subr.bf16.mxu0 0
        %5158 = vmatpush1.bf16.msra.mxu0 %v5103
        %5159 = vmatprep.subr.bf16.mxu0 0
        %5160 = vmatpush1.bf16.msra.mxu0 %v5104
        %5161 = vmatprep.subr.bf16.mxu0 0
        %5162 = vmatpush1.bf16.msra.mxu0 %v5105
        %5163 = vmatprep.subr.bf16.mxu0 0
        %5164 = vmatpush1.bf16.msra.mxu0 %v5106
        %5165 = vmatprep.subr.bf16.mxu0 0
        %5166 = vmatpush1.bf16.msra.mxu0 %v5107
        %5167 = vmatprep.mubr.bf16.mxu0 %v3371
        %5168 = vmatmul.mubr.bf16.gmra.mrb[0].mxu0 %v3307
        %v5169 = vpop.f32.mrb[0].mxu0
        %v5170 = vadd.f32 0.0, %v5169
        %v5171 = vpop.f32.mrb[0].mxu0
        %v5172 = vpop.f32.mrb[0].mxu0
        %v5173 = vadd.f32 0.0, %v5172
        %v5174 = vpop.f32.mrb[0].mxu0
        %5175 = vmatprep.mubr.bf16.mxu0 %v3375
        %5176 = vmatmul.mubr.bf16.gmra.mrb[0].mxu0 %v3310
        %v5177 = vpop.f32.mrb[0].mxu0
        %v5178 = vadd.f32 0.0, %v5177
        %v5179 = vpop.f32.mrb[0].mxu0
        %v5180 = vpop.f32.mrb[0].mxu0
        %v5181 = vadd.f32 0.0, %v5180
        %v5182 = vpop.f32.mrb[0].mxu0
        %5183 = vmatprep.mubr.bf16.mxu0 %v3379
        %5184 = vmatmul.mubr.bf16.gmra.mrb[0].mxu0 %v3313
        %v5185 = vpop.f32.mrb[0].mxu0
        %v5186 = vadd.f32 0.0, %v5185
        %v5187 = vpop.f32.mrb[0].mxu0
        %v5188 = vpop.f32.mrb[0].mxu0
        %v5189 = vadd.f32 0.0, %v5188
        %v5190 = vpop.f32.mrb[0].mxu0
        %5191 = vmatprep.mubr.bf16.mxu0 %v3383
        %5192 = vmatmul.mubr.bf16.gmra.mrb[0].mxu0 %v3316
        %v5193 = vpop.f32.mrb[0].mxu0
        %v5194 = vadd.f32 0.0, %v5193
        %v5195 = vpop.f32.mrb[0].mxu0
        %v5196 = vpop.f32.mrb[0].mxu0
        %v5197 = vadd.f32 0.0, %v5196
        %v5198 = vpop.f32.mrb[0].mxu0
        %5199 = vmatprep.mubr.bf16.mxu0 %v3387
        %5200 = vmatmul.mubr.bf16.gmra.mrb[0].mxu0 %v3319
        %v5201 = vpop.f32.mrb[0].mxu0
        %v5202 = vadd.f32 0.0, %v5201
        %v5203 = vpop.f32.mrb[0].mxu0
        %v5204 = vpop.f32.mrb[0].mxu0
        %v5205 = vadd.f32 0.0, %v5204
        %v5206 = vpop.f32.mrb[0].mxu0
        %5207 = vmatprep.mubr.bf16.mxu0 %v3391
        %5208 = vmatmul.mubr.bf16.gmra.mrb[0].mxu0 %v3322
        %v5209 = vpop.f32.mrb[0].mxu0
        %v5210 = vadd.f32 0.0, %v5209
        %v5211 = vpop.f32.mrb[0].mxu0
        %v5212 = vpop.f32.mrb[0].mxu0
        %v5213 = vadd.f32 0.0, %v5212
        %v5214 = vpop.f32.mrb[0].mxu0
        %5215 = vmatprep.mubr.bf16.mxu0 %v3395
        %5216 = vmatmul.mubr.bf16.gmra.mrb[0].mxu0 %v3325
        %v5217 = vpop.f32.mrb[0].mxu0
        %v5218 = vadd.f32 0.0, %v5217
        %v5219 = vpop.f32.mrb[0].mxu0
        %v5220 = vpop.f32.mrb[0].mxu0
        %v5221 = vadd.f32 0.0, %v5220
        %v5222 = vpop.f32.mrb[0].mxu0
        %5223 = vmatprep.mubr.bf16.mxu0 %v3399
        %5224 = vmatmul.mubr.bf16.gmra.mrb[0].mxu0 %v3328
        %v5225 = vpop.f32.mrb[0].mxu0
        %v5226 = vadd.f32 0.0, %v5225
        %v5227 = vpop.f32.mrb[0].mxu0
        %v5228 = vpop.f32.mrb[0].mxu0
        %v5229 = vadd.f32 0.0, %v5228
        %v5230 = vpop.f32.mrb[0].mxu0
        %5231 = vmatprep.mubr.bf16.mxu0 %v3403
        %5232 = vmatmul.mubr.bf16.gmra.mrb[0].mxu0 %v3331
        %v5233 = vpop.f32.mrb[0].mxu0
        %v5234 = vadd.f32 0.0, %v5233
        %v5235 = vpop.f32.mrb[0].mxu0
        %v5236 = vpop.f32.mrb[0].mxu0
        %v5237 = vadd.f32 0.0, %v5236
        %v5238 = vpop.f32.mrb[0].mxu0
        %5239 = vmatprep.mubr.bf16.mxu0 %v3407
        %5240 = vmatmul.mubr.bf16.gmra.mrb[0].mxu0 %v3334
        %v5241 = vpop.f32.mrb[0].mxu0
        %v5242 = vadd.f32 0.0, %v5241
        %v5243 = vpop.f32.mrb[0].mxu0
        %v5244 = vpop.f32.mrb[0].mxu0
        %v5245 = vadd.f32 0.0, %v5244
        %v5246 = vpop.f32.mrb[0].mxu0
        %5247 = vmatprep.mubr.bf16.mxu0 %v3411
        %5248 = vmatmul.mubr.bf16.gmra.mrb[0].mxu0 %v3337
        %v5249 = vpop.f32.mrb[0].mxu0
        %v5250 = vadd.f32 0.0, %v5249
        %v5251 = vpop.f32.mrb[0].mxu0
        %v5252 = vpop.f32.mrb[0].mxu0
        %v5253 = vadd.f32 0.0, %v5252
        %v5254 = vpop.f32.mrb[0].mxu0
        %5255 = vmatprep.mubr.bf16.mxu0 %v3415
        %5256 = vmatmul.mubr.bf16.gmra.mrb[0].mxu0 %v3340
        %v5257 = vpop.f32.mrb[0].mxu0
        %v5258 = vadd.f32 0.0, %v5257
        %v5259 = vpop.f32.mrb[0].mxu0
        %v5260 = vpop.f32.mrb[0].mxu0
        %v5261 = vadd.f32 0.0, %v5260
        %v5262 = vpop.f32.mrb[0].mxu0
        %5263 = vmatprep.mubr.bf16.mxu0 %v3419
        %5264 = vmatmul.mubr.bf16.gmra.mrb[0].mxu0 %v3343
        %v5265 = vpop.f32.mrb[0].mxu0
        %v5266 = vadd.f32 0.0, %v5265
        %v5267 = vpop.f32.mrb[0].mxu0
        %v5268 = vpop.f32.mrb[0].mxu0
        %v5269 = vadd.f32 0.0, %v5268
        %v5270 = vpop.f32.mrb[0].mxu0
        %5271 = vmatprep.mubr.bf16.mxu0 %v3423
        %5272 = vmatmul.mubr.bf16.gmra.mrb[0].mxu0 %v3346
        %v5273 = vpop.f32.mrb[0].mxu0
        %v5274 = vadd.f32 0.0, %v5273
        %v5275 = vpop.f32.mrb[0].mxu0
        %v5276 = vpop.f32.mrb[0].mxu0
        %v5277 = vadd.f32 0.0, %v5276
        %v5278 = vpop.f32.mrb[0].mxu0
        %5279 = vmatprep.mubr.bf16.mxu0 %v3427
        %5280 = vmatmul.mubr.bf16.gmra.mrb[0].mxu0 %v3349
        %v5281 = vpop.f32.mrb[0].mxu0
        %v5282 = vadd.f32 0.0, %v5281
        %v5283 = vpop.f32.mrb[0].mxu0
        %v5284 = vpop.f32.mrb[0].mxu0
        %v5285 = vadd.f32 0.0, %v5284
        %v5286 = vpop.f32.mrb[0].mxu0
        %5287 = vmatprep.mubr.bf16.mxu0 %v3431
        %5288 = vmatmul.mubr.bf16.gmra.mrb[0].mxu0 %v3352
        %v5289 = vpop.f32.mrb[0].mxu0
        %v5290 = vadd.f32 0.0, %v5289
        %v5291 = vpop.f32.mrb[0].mxu0
        %v5292 = vpop.f32.mrb[0].mxu0
        %v5293 = vadd.f32 0.0, %v5292
        %v5294 = vpop.f32.mrb[0].mxu0
        %5295 = vdwg.mxu0
        %5296 = vmatprep.subr.bf16.mxu0 0
        %5297 = vmatpush1.bf16.msra.mxu0 %v5108
        %5298 = vmatprep.subr.bf16.mxu0 0
        %5299 = vmatpush1.bf16.msra.mxu0 %v5109
        %5300 = vmatprep.subr.bf16.mxu0 0
        %5301 = vmatpush1.bf16.msra.mxu0 %v5110
        %5302 = vmatprep.subr.bf16.mxu0 0
        %5303 = vmatpush1.bf16.msra.mxu0 %v5111
        %5304 = vmatprep.subr.bf16.mxu0 0
        %5305 = vmatpush1.bf16.msra.mxu0 0
        %5306 = vmatprep.subr.bf16.mxu0 0
        %5307 = vmatpush1.bf16.msra.mxu0 0
        %5308 = vmatprep.subr.bf16.mxu0 0
        %5309 = vmatpush1.bf16.msra.mxu0 0
        %5310 = vmatprep.subr.bf16.mxu0 0
        %5311 = vmatpush1.bf16.msra.mxu0 0
        %5312 = vmatprep.subr.bf16.mxu0 0
        %5313 = vmatpush1.bf16.msra.mxu0 0
        %5314 = vmatprep.subr.bf16.mxu0 0
        %5315 = vmatpush1.bf16.msra.mxu0 0
        %5316 = vmatprep.subr.bf16.mxu0 0
        %5317 = vmatpush1.bf16.msra.mxu0 0
        %5318 = vmatprep.subr.bf16.mxu0 0
        %5319 = vmatpush1.bf16.msra.mxu0 0
        %5320 = vmatprep.subr.bf16.mxu0 0
        %5321 = vmatpush1.bf16.msra.mxu0 0
        %5322 = vmatprep.subr.bf16.mxu0 0
        %5323 = vmatpush1.bf16.msra.mxu0 0
        %5324 = vmatprep.subr.bf16.mxu0 0
        %5325 = vmatpush1.bf16.msra.mxu0 0
        %5326 = vmatprep.subr.bf16.mxu0 0
        %5327 = vmatpush1.bf16.msra.mxu0 0
        %5328 = vmatprep.mubr.bf16.mxu0 0
        %5329 = vmatmul.mubr.bf16.gmra.mrb[0].mxu0 %v3645
        %v5330 = vpop.f32.mrb[0].mxu0
        %v5331 = vadd.f32 %v5170, %v5330
        %v5332 = vpop.f32.mrb[0].mxu0
        %v5333 = vpop.f32.mrb[0].mxu0
        %v5334 = vadd.f32 %v5173, %v5333
        %v5335 = vpop.f32.mrb[0].mxu0
        %5336 = vmatprep.mubr.bf16.mxu0 0
        %5337 = vmatmul.mubr.bf16.gmra.mrb[0].mxu0 %v3648
        %v5338 = vpop.f32.mrb[0].mxu0
        %v5339 = vadd.f32 %v5178, %v5338
        %v5340 = vpop.f32.mrb[0].mxu0
        %v5341 = vpop.f32.mrb[0].mxu0
        %v5342 = vadd.f32 %v5181, %v5341
        %v5343 = vpop.f32.mrb[0].mxu0
        %5344 = vmatprep.mubr.bf16.mxu0 0
        %5345 = vmatmul.mubr.bf16.gmra.mrb[0].mxu0 %v3651
        %v5346 = vpop.f32.mrb[0].mxu0
        %v5347 = vadd.f32 %v5186, %v5346
        %v5348 = vpop.f32.mrb[0].mxu0
        %v5349 = vpop.f32.mrb[0].mxu0
        %v5350 = vadd.f32 %v5189, %v5349
        %v5351 = vpop.f32.mrb[0].mxu0
        %5352 = vmatprep.mubr.bf16.mxu0 0
        %5353 = vmatmul.mubr.bf16.gmra.mrb[0].mxu0 %v3654
        %v5354 = vpop.f32.mrb[0].mxu0
        %v5355 = vadd.f32 %v5194, %v5354
        %v5356 = vpop.f32.mrb[0].mxu0
        %v5357 = vpop.f32.mrb[0].mxu0
        %v5358 = vadd.f32 %v5197, %v5357
        %v5359 = vpop.f32.mrb[0].mxu0
        %5360 = vmatprep.mubr.bf16.mxu0 0
        %5361 = vmatmul.mubr.bf16.gmra.mrb[0].mxu0 %v3657
        %v5362 = vpop.f32.mrb[0].mxu0
        %v5363 = vadd.f32 %v5202, %v5362
        %v5364 = vpop.f32.mrb[0].mxu0
        %v5365 = vpop.f32.mrb[0].mxu0
        %v5366 = vadd.f32 %v5205, %v5365
        %v5367 = vpop.f32.mrb[0].mxu0
        %5368 = vmatprep.mubr.bf16.mxu0 0
        %5369 = vmatmul.mubr.bf16.gmra.mrb[0].mxu0 %v3660
        %v5370 = vpop.f32.mrb[0].mxu0
        %v5371 = vadd.f32 %v5210, %v5370
        %v5372 = vpop.f32.mrb[0].mxu0
        %v5373 = vpop.f32.mrb[0].mxu0
        %v5374 = vadd.f32 %v5213, %v5373
        %v5375 = vpop.f32.mrb[0].mxu0
        %5376 = vmatprep.mubr.bf16.mxu0 0
        %5377 = vmatmul.mubr.bf16.gmra.mrb[0].mxu0 %v3663
        %v5378 = vpop.f32.mrb[0].mxu0
        %v5379 = vadd.f32 %v5218, %v5378
        %v5380 = vpop.f32.mrb[0].mxu0
        %v5381 = vpop.f32.mrb[0].mxu0
        %v5382 = vadd.f32 %v5221, %v5381
        %v5383 = vpop.f32.mrb[0].mxu0
        %5384 = vmatprep.mubr.bf16.mxu0 0
        %5385 = vmatmul.mubr.bf16.gmra.mrb[0].mxu0 %v3666
        %v5386 = vpop.f32.mrb[0].mxu0
        %v5387 = vadd.f32 %v5226, %v5386
        %v5388 = vpop.f32.mrb[0].mxu0
        %v5389 = vpop.f32.mrb[0].mxu0
        %v5390 = vadd.f32 %v5229, %v5389
        %v5391 = vpop.f32.mrb[0].mxu0
        %5392 = vmatprep.mubr.bf16.mxu0 0
        %5393 = vmatmul.mubr.bf16.gmra.mrb[0].mxu0 %v3669
        %v5394 = vpop.f32.mrb[0].mxu0
        %v5395 = vadd.f32 %v5234, %v5394
        %v5396 = vpop.f32.mrb[0].mxu0
        %v5397 = vpop.f32.mrb[0].mxu0
        %v5398 = vadd.f32 %v5237, %v5397
        %v5399 = vpop.f32.mrb[0].mxu0
        %5400 = vmatprep.mubr.bf16.mxu0 0
        %5401 = vmatmul.mubr.bf16.gmra.mrb[0].mxu0 %v3672
        %v5402 = vpop.f32.mrb[0].mxu0
        %v5403 = vadd.f32 %v5242, %v5402
        %v5404 = vpop.f32.mrb[0].mxu0
        %v5405 = vpop.f32.mrb[0].mxu0
        %v5406 = vadd.f32 %v5245, %v5405
        %v5407 = vpop.f32.mrb[0].mxu0
        %5408 = vmatprep.mubr.bf16.mxu0 0
        %5409 = vmatmul.mubr.bf16.gmra.mrb[0].mxu0 %v3675
        %v5410 = vpop.f32.mrb[0].mxu0
        %v5411 = vadd.f32 %v5250, %v5410
        %v5412 = vpop.f32.mrb[0].mxu0
        %v5413 = vpop.f32.mrb[0].mxu0
        %v5414 = vadd.f32 %v5253, %v5413
        %v5415 = vpop.f32.mrb[0].mxu0
        %5416 = vmatprep.mubr.bf16.mxu0 0
        %5417 = vmatmul.mubr.bf16.gmra.mrb[0].mxu0 %v3678
        %v5418 = vpop.f32.mrb[0].mxu0
        %v5419 = vadd.f32 %v5258, %v5418
        %v5420 = vpop.f32.mrb[0].mxu0
        %v5421 = vpop.f32.mrb[0].mxu0
        %v5422 = vadd.f32 %v5261, %v5421
        %v5423 = vpop.f32.mrb[0].mxu0
        %5424 = vmatprep.mubr.bf16.mxu0 0
        %5425 = vmatmul.mubr.bf16.gmra.mrb[0].mxu0 %v3681
        %v5426 = vpop.f32.mrb[0].mxu0
        %v5427 = vadd.f32 %v5266, %v5426
        %v5428 = vpop.f32.mrb[0].mxu0
        %v5429 = vpop.f32.mrb[0].mxu0
        %v5430 = vadd.f32 %v5269, %v5429
        %v5431 = vpop.f32.mrb[0].mxu0
        %5432 = vmatprep.mubr.bf16.mxu0 0
        %5433 = vmatmul.mubr.bf16.gmra.mrb[0].mxu0 %v3684
        %v5434 = vpop.f32.mrb[0].mxu0
        %v5435 = vadd.f32 %v5274, %v5434
        %v5436 = vpop.f32.mrb[0].mxu0
        %v5437 = vpop.f32.mrb[0].mxu0
        %v5438 = vadd.f32 %v5277, %v5437
        %v5439 = vpop.f32.mrb[0].mxu0
        %5440 = vmatprep.mubr.bf16.mxu0 0
        %5441 = vmatmul.mubr.bf16.gmra.mrb[0].mxu0 %v4615
        %v5442 = vpop.f32.mrb[0].mxu0
        %v5443 = vadd.f32 %v5282, %v5442
        %v5444 = vpop.f32.mrb[0].mxu0
        %v5445 = vpop.f32.mrb[0].mxu0
        %v5446 = vadd.f32 %v5285, %v5445
        %v5447 = vpop.f32.mrb[0].mxu0
        %5448 = vmatprep.mubr.bf16.mxu0 0
        %5449 = vmatmul.mubr.bf16.gmra.mrb[0].mxu0 %v5133
        %v5450 = vpop.f32.mrb[0].mxu0
        %v5451 = vadd.f32 %v5290, %v5450
        %v5452 = vpop.f32.mrb[0].mxu0
        %v5453 = vpop.f32.mrb[0].mxu0
        %v5454 = vadd.f32 %v5293, %v5453
        %v5455 = vpop.f32.mrb[0].mxu0
        %5456 = vdwg.mxu0
        %v5457 = vadd.f32 %v4939, %v5331
        %v5458 = vadd.f32 %v4940, %v5334
        %v5459 = vadd.f32 %v4941, %v5339
        %v5460 = vadd.f32 %v4942, %v5342
        %v5461 = vadd.f32 %v4943, %v5347
        %v5462 = vadd.f32 %v4944, %v5350
        %v5463 = vadd.f32 %v4945, %v5355
        %v5464 = vadd.f32 %v4946, %v5358
        %v5465 = vadd.f32 %v4947, %v5363
        %v5466 = vadd.f32 %v4948, %v5366
        %v5467 = vadd.f32 %v4949, %v5371
        %v5468 = vadd.f32 %v4950, %v5374
        %v5469 = vadd.f32 %v4951, %v5379
        %v5470 = vadd.f32 %v4952, %v5382
        %v5471 = vadd.f32 %v4953, %v5387
        %v5472 = vadd.f32 %v4954, %v5390
        %v5473 = vadd.f32 %v4955, %v5395
        %v5474 = vadd.f32 %v4956, %v5398
        %v5475 = vadd.f32 %v4957, %v5403
        %v5476 = vadd.f32 %v4958, %v5406
        %v5477 = vadd.f32 %v4959, %v5411
        %v5478 = vadd.f32 %v4960, %v5414
        %v5479 = vadd.f32 %v4961, %v5419
        %v5480 = vadd.f32 %v4962, %v5422
        %v5481 = vadd.f32 %v4963, %v5427
        %v5482 = vadd.f32 %v4964, %v5430
        %v5483 = vadd.f32 %v4965, %v5435
        %v5484 = vadd.f32 %v4966, %v5438
        %v5485 = vadd.f32 %v4967, %v5443
        %v5486 = vadd.f32 %v4968, %v5446
        %v5487 = vadd.f32 %v4969, %v5451
        %v5488 = vadd.f32 %v4970, %v5454
        %s5489 = scalar_lea.vmem %s3, 640
        %v5490 = vld [vmem:[%s5489] sm:$0xf]
        %v5491 = vld [vmem:[%s5489 + $0x4] sm:$0xf]
        %v5492 = vld [vmem:[%s5489 + $0x8] sm:$0xf]
        %v5493 = vld [vmem:[%s5489 + $0xc] sm:$0xf]
        %v5494 = vld [vmem:[%s5489 + $0x10] sm:$0xf]
        %v5495 = vld [vmem:[%s5489 + $0x14] sm:$0xf]
        %v5496 = vld [vmem:[%s5489 + $0x18] sm:$0xf]
        %v5497 = vld [vmem:[%s5489 + $0x1c] sm:$0xf]
        %v5498 = vld [vmem:[%s5489 + $0x20] sm:$0xf]
        %v5499 = vld [vmem:[%s5489 + $0x24] sm:$0xf]
        %v5500 = vld [vmem:[%s5489 + $0x28] sm:$0xf]
        %v5501 = vld [vmem:[%s5489 + $0x2c] sm:$0xf]
        %v5502 = vld [vmem:[%s5489 + $0x30] sm:$0xf]
        %v5503 = vld [vmem:[%s5489 + $0x34] sm:$0xf]
        %v5504 = vld [vmem:[%s5489 + $0x38] sm:$0xf]
        %v5505 = vld [vmem:[%s5489 + $0x3c] sm:$0xf]
        %v5506 = vld [vmem:[%s5489 + $0x40] sm:$0xf]
        %v5507 = vld [vmem:[%s5489 + $0x44] sm:$0xf]
        %v5508 = vld [vmem:[%s5489 + $0x48] sm:$0xf]
        %v5509 = vld [vmem:[%s5489 + $0x4c] sm:$0xf]
        %v5510 = vld [vmem:[%s5489 + $0x50] sm:$0xf]
        %v5511 = vld [vmem:[%s5489 + $0x54] sm:$0xf]
        %v5512 = vld [vmem:[%s5489 + $0x58] sm:$0xf]
        %v5513 = vld [vmem:[%s5489 + $0x5c] sm:$0xf]
        %v5514 = vld [vmem:[%s5489 + $0x60] sm:$0xf]
        %v5515 = vld [vmem:[%s5489 + $0x64] sm:$0xf]
        %v5516 = vld [vmem:[%s5489 + $0x68] sm:$0xf]
        %v5517 = vld [vmem:[%s5489 + $0x6c] sm:$0xf]
        %v5518 = vld [vmem:[%s5489 + $0x70] sm:$0xf]
        %v5519 = vld [vmem:[%s5489 + $0x74] sm:$0xf]
        %v5520 = vld [vmem:[%s5489 + $0x78] sm:$0xf]
        %v5521 = vld [vmem:[%s5489 + $0x7c] sm:$0xf]
        %v5522 = vld [vmem:[%s5489 + $0x80] sm:$0xf]
        %v5523 = vld [vmem:[%s5489 + $0x84] sm:$0xf]
        %v5524 = vld [vmem:[%s5489 + $0x88] sm:$0xf]
        %v5525 = vld [vmem:[%s5489 + $0x8c] sm:$0xf]
        %v5526 = vld [vmem:[%s5489 + $0x90] sm:$0xf]
        %v5527 = vld [vmem:[%s5489 + $0x94] sm:$0xf]
        %v5528 = vld [vmem:[%s5489 + $0x98] sm:$0xf]
        %v5529 = vld [vmem:[%s5489 + $0x9c] sm:$0xf]
        %v5570 = vunpack.c.l.b16 %v5490
        %v5571 = vunpack.c.l.b16 %v5491
        %v5572 = vunpack.c.l.b16 %v5492
        %v5573 = vunpack.c.l.b16 %v5493
        %v5574 = vunpack.c.l.b16 %v5494
        %v5575 = vunpack.c.l.b16 %v5495
        %v5576 = vunpack.c.l.b16 %v5496
        %v5577 = vunpack.c.l.b16 %v5497
        %v5578 = vunpack.c.l.b16 %v5498
        %v5579 = vunpack.c.l.b16 %v5499
        %v5580 = vunpack.c.l.b16 %v5500
        %v5581 = vunpack.c.l.b16 %v5501
        %v5582 = vunpack.c.l.b16 %v5502
        %v5583 = vunpack.c.l.b16 %v5503
        %v5584 = vunpack.c.l.b16 %v5504
        %v5585 = vunpack.c.l.b16 %v5505
        %v5586 = vunpack.c.l.b16 %v5506
        %v5587 = vunpack.c.l.b16 %v5507
        %v5588 = vunpack.c.l.b16 %v5508
        %v5589 = vunpack.c.l.b16 %v5509
        %v5590 = vunpack.c.l.b16 %v5510
        %v5591 = vunpack.c.l.b16 %v5511
        %v5592 = vunpack.c.l.b16 %v5512
        %v5593 = vunpack.c.l.b16 %v5513
        %v5594 = vunpack.c.l.b16 %v5514
        %v5595 = vunpack.c.l.b16 %v5515
        %v5596 = vunpack.c.l.b16 %v5516
        %v5597 = vunpack.c.l.b16 %v5517
        %v5598 = vunpack.c.l.b16 %v5518
        %v5599 = vunpack.c.l.b16 %v5519
        %v5600 = vunpack.c.l.b16 %v5520
        %v5601 = vunpack.c.l.b16 %v5521
        %v5602 = vunpack.c.l.b16 %v5522
        %v5603 = vunpack.c.l.b16 %v5523
        %v5604 = vunpack.c.l.b16 %v5524
        %v5605 = vunpack.c.l.b16 %v5525
        %v5606 = vunpack.c.l.b16 %v5526
        %v5607 = vunpack.c.l.b16 %v5527
        %v5608 = vunpack.c.l.b16 %v5528
        %v5609 = vunpack.c.l.b16 %v5529
        %v5610 = vpack.c.b16 %v5571, %v5570
        %v5611 = vpack.c.b16 %v5573, %v5572
        %v5612 = vpack.c.b16 %v5575, %v5574
        %v5613 = vpack.c.b16 %v5577, %v5576
        %v5614 = vpack.c.b16 %v5579, %v5578
        %v5615 = vpack.c.b16 %v5581, %v5580
        %v5616 = vpack.c.b16 %v5583, %v5582
        %v5617 = vpack.c.b16 %v5585, %v5584
        %v5618 = vpack.c.b16 %v5587, %v5586
        %v5619 = vpack.c.b16 %v5589, %v5588
        %v5620 = vpack.c.b16 %v5591, %v5590
        %v5621 = vpack.c.b16 %v5593, %v5592
        %v5622 = vpack.c.b16 %v5595, %v5594
        %v5623 = vpack.c.b16 %v5597, %v5596
        %v5624 = vpack.c.b16 %v5599, %v5598
        %v5625 = vpack.c.b16 %v5601, %v5600
        %v5626 = vpack.c.b16 %v5603, %v5602
        %v5627 = vpack.c.b16 %v5605, %v5604
        %v5628 = vpack.c.b16 %v5607, %v5606
        %v5629 = vpack.c.b16 %v5609, %v5608
        %v5651 = vsel %vm792, %v3296, 0
        %5653 = vmatprep.subr.bf16.mxu0 0
        %5654 = vmatpush1.bf16.msra.mxu0 %v5610
        %5655 = vmatprep.subr.bf16.mxu0 0
        %5656 = vmatpush1.bf16.msra.mxu0 %v5611
        %5657 = vmatprep.subr.bf16.mxu0 0
        %5658 = vmatpush1.bf16.msra.mxu0 %v5612
        %5659 = vmatprep.subr.bf16.mxu0 0
        %5660 = vmatpush1.bf16.msra.mxu0 %v5613
        %5661 = vmatprep.subr.bf16.mxu0 0
        %5662 = vmatpush1.bf16.msra.mxu0 %v5614
        %5663 = vmatprep.subr.bf16.mxu0 0
        %5664 = vmatpush1.bf16.msra.mxu0 %v5615
        %5665 = vmatprep.subr.bf16.mxu0 0
        %5666 = vmatpush1.bf16.msra.mxu0 %v5616
        %5667 = vmatprep.subr.bf16.mxu0 0
        %5668 = vmatpush1.bf16.msra.mxu0 %v5617
        %5669 = vmatprep.subr.bf16.mxu0 0
        %5670 = vmatpush1.bf16.msra.mxu0 %v5618
        %5671 = vmatprep.subr.bf16.mxu0 0
        %5672 = vmatpush1.bf16.msra.mxu0 %v5619
        %5673 = vmatprep.subr.bf16.mxu0 0
        %5674 = vmatpush1.bf16.msra.mxu0 %v5620
        %5675 = vmatprep.subr.bf16.mxu0 0
        %5676 = vmatpush1.bf16.msra.mxu0 %v5621
        %5677 = vmatprep.subr.bf16.mxu0 0
        %5678 = vmatpush1.bf16.msra.mxu0 %v5622
        %5679 = vmatprep.subr.bf16.mxu0 0
        %5680 = vmatpush1.bf16.msra.mxu0 %v5623
        %5681 = vmatprep.subr.bf16.mxu0 0
        %5682 = vmatpush1.bf16.msra.mxu0 %v5624
        %5683 = vmatprep.subr.bf16.mxu0 0
        %5684 = vmatpush1.bf16.msra.mxu0 %v5625
        %5685 = vmatprep.mubr.bf16.mxu0 %v3375
        %5686 = vmatmul.mubr.bf16.gmra.mrb[0].mxu0 %v3310
        %v5687 = vpop.f32.mrb[0].mxu0
        %v5688 = vadd.f32 0.0, %v5687
        %v5689 = vpop.f32.mrb[0].mxu0
        %v5690 = vpop.f32.mrb[0].mxu0
        %v5691 = vadd.f32 0.0, %v5690
        %v5692 = vpop.f32.mrb[0].mxu0
        %5693 = vmatprep.mubr.bf16.mxu0 %v3379
        %5694 = vmatmul.mubr.bf16.gmra.mrb[0].mxu0 %v3313
        %v5695 = vpop.f32.mrb[0].mxu0
        %v5696 = vadd.f32 0.0, %v5695
        %v5697 = vpop.f32.mrb[0].mxu0
        %v5698 = vpop.f32.mrb[0].mxu0
        %v5699 = vadd.f32 0.0, %v5698
        %v5700 = vpop.f32.mrb[0].mxu0
        %5701 = vmatprep.mubr.bf16.mxu0 %v3383
        %5702 = vmatmul.mubr.bf16.gmra.mrb[0].mxu0 %v3316
        %v5703 = vpop.f32.mrb[0].mxu0
        %v5704 = vadd.f32 0.0, %v5703
        %v5705 = vpop.f32.mrb[0].mxu0
        %v5706 = vpop.f32.mrb[0].mxu0
        %v5707 = vadd.f32 0.0, %v5706
        %v5708 = vpop.f32.mrb[0].mxu0
        %5709 = vmatprep.mubr.bf16.mxu0 %v3387
        %5710 = vmatmul.mubr.bf16.gmra.mrb[0].mxu0 %v3319
        %v5711 = vpop.f32.mrb[0].mxu0
        %v5712 = vadd.f32 0.0, %v5711
        %v5713 = vpop.f32.mrb[0].mxu0
        %v5714 = vpop.f32.mrb[0].mxu0
        %v5715 = vadd.f32 0.0, %v5714
        %v5716 = vpop.f32.mrb[0].mxu0
        %5717 = vmatprep.mubr.bf16.mxu0 %v3391
        %5718 = vmatmul.mubr.bf16.gmra.mrb[0].mxu0 %v3322
        %v5719 = vpop.f32.mrb[0].mxu0
        %v5720 = vadd.f32 0.0, %v5719
        %v5721 = vpop.f32.mrb[0].mxu0
        %v5722 = vpop.f32.mrb[0].mxu0
        %v5723 = vadd.f32 0.0, %v5722
        %v5724 = vpop.f32.mrb[0].mxu0
        %5725 = vmatprep.mubr.bf16.mxu0 %v3395
        %5726 = vmatmul.mubr.bf16.gmra.mrb[0].mxu0 %v3325
        %v5727 = vpop.f32.mrb[0].mxu0
        %v5728 = vadd.f32 0.0, %v5727
        %v5729 = vpop.f32.mrb[0].mxu0
        %v5730 = vpop.f32.mrb[0].mxu0
        %v5731 = vadd.f32 0.0, %v5730
        %v5732 = vpop.f32.mrb[0].mxu0
        %5733 = vmatprep.mubr.bf16.mxu0 %v3399
        %5734 = vmatmul.mubr.bf16.gmra.mrb[0].mxu0 %v3328
        %v5735 = vpop.f32.mrb[0].mxu0
        %v5736 = vadd.f32 0.0, %v5735
        %v5737 = vpop.f32.mrb[0].mxu0
        %v5738 = vpop.f32.mrb[0].mxu0
        %v5739 = vadd.f32 0.0, %v5738
        %v5740 = vpop.f32.mrb[0].mxu0
        %5741 = vmatprep.mubr.bf16.mxu0 %v3403
        %5742 = vmatmul.mubr.bf16.gmra.mrb[0].mxu0 %v3331
        %v5743 = vpop.f32.mrb[0].mxu0
        %v5744 = vadd.f32 0.0, %v5743
        %v5745 = vpop.f32.mrb[0].mxu0
        %v5746 = vpop.f32.mrb[0].mxu0
        %v5747 = vadd.f32 0.0, %v5746
        %v5748 = vpop.f32.mrb[0].mxu0
        %5749 = vmatprep.mubr.bf16.mxu0 %v3407
        %5750 = vmatmul.mubr.bf16.gmra.mrb[0].mxu0 %v3334
        %v5751 = vpop.f32.mrb[0].mxu0
        %v5752 = vadd.f32 0.0, %v5751
        %v5753 = vpop.f32.mrb[0].mxu0
        %v5754 = vpop.f32.mrb[0].mxu0
        %v5755 = vadd.f32 0.0, %v5754
        %v5756 = vpop.f32.mrb[0].mxu0
        %5757 = vmatprep.mubr.bf16.mxu0 %v3411
        %5758 = vmatmul.mubr.bf16.gmra.mrb[0].mxu0 %v3337
        %v5759 = vpop.f32.mrb[0].mxu0
        %v5760 = vadd.f32 0.0, %v5759
        %v5761 = vpop.f32.mrb[0].mxu0
        %v5762 = vpop.f32.mrb[0].mxu0
        %v5763 = vadd.f32 0.0, %v5762
        %v5764 = vpop.f32.mrb[0].mxu0
        %5765 = vmatprep.mubr.bf16.mxu0 %v3415
        %5766 = vmatmul.mubr.bf16.gmra.mrb[0].mxu0 %v3340
        %v5767 = vpop.f32.mrb[0].mxu0
        %v5768 = vadd.f32 0.0, %v5767
        %v5769 = vpop.f32.mrb[0].mxu0
        %v5770 = vpop.f32.mrb[0].mxu0
        %v5771 = vadd.f32 0.0, %v5770
        %v5772 = vpop.f32.mrb[0].mxu0
        %5773 = vmatprep.mubr.bf16.mxu0 %v3419
        %5774 = vmatmul.mubr.bf16.gmra.mrb[0].mxu0 %v3343
        %v5775 = vpop.f32.mrb[0].mxu0
        %v5776 = vadd.f32 0.0, %v5775
        %v5777 = vpop.f32.mrb[0].mxu0
        %v5778 = vpop.f32.mrb[0].mxu0
        %v5779 = vadd.f32 0.0, %v5778
        %v5780 = vpop.f32.mrb[0].mxu0
        %5781 = vmatprep.mubr.bf16.mxu0 %v3423
        %5782 = vmatmul.mubr.bf16.gmra.mrb[0].mxu0 %v3346
        %v5783 = vpop.f32.mrb[0].mxu0
        %v5784 = vadd.f32 0.0, %v5783
        %v5785 = vpop.f32.mrb[0].mxu0
        %v5786 = vpop.f32.mrb[0].mxu0
        %v5787 = vadd.f32 0.0, %v5786
        %v5788 = vpop.f32.mrb[0].mxu0
        %5789 = vmatprep.mubr.bf16.mxu0 %v3427
        %5790 = vmatmul.mubr.bf16.gmra.mrb[0].mxu0 %v3349
        %v5791 = vpop.f32.mrb[0].mxu0
        %v5792 = vadd.f32 0.0, %v5791
        %v5793 = vpop.f32.mrb[0].mxu0
        %v5794 = vpop.f32.mrb[0].mxu0
        %v5795 = vadd.f32 0.0, %v5794
        %v5796 = vpop.f32.mrb[0].mxu0
        %5797 = vmatprep.mubr.bf16.mxu0 %v3431
        %5798 = vmatmul.mubr.bf16.gmra.mrb[0].mxu0 %v3352
        %v5799 = vpop.f32.mrb[0].mxu0
        %v5800 = vadd.f32 0.0, %v5799
        %v5801 = vpop.f32.mrb[0].mxu0
        %v5802 = vpop.f32.mrb[0].mxu0
        %v5803 = vadd.f32 0.0, %v5802
        %v5804 = vpop.f32.mrb[0].mxu0
        %5805 = vmatprep.mubr.bf16.mxu0 %v3435
        %5806 = vmatmul.mubr.bf16.gmra.mrb[0].mxu0 %v3355
        %v5807 = vpop.f32.mrb[0].mxu0
        %v5808 = vadd.f32 0.0, %v5807
        %v5809 = vpop.f32.mrb[0].mxu0
        %v5810 = vpop.f32.mrb[0].mxu0
        %v5811 = vadd.f32 0.0, %v5810
        %v5812 = vpop.f32.mrb[0].mxu0
        %5813 = vdwg.mxu0
        %5814 = vmatprep.subr.bf16.mxu0 0
        %5815 = vmatpush1.bf16.msra.mxu0 %v5626
        %5816 = vmatprep.subr.bf16.mxu0 0
        %5817 = vmatpush1.bf16.msra.mxu0 %v5627
        %5818 = vmatprep.subr.bf16.mxu0 0
        %5819 = vmatpush1.bf16.msra.mxu0 %v5628
        %5820 = vmatprep.subr.bf16.mxu0 0
        %5821 = vmatpush1.bf16.msra.mxu0 %v5629
        %5822 = vmatprep.subr.bf16.mxu0 0
        %5823 = vmatpush1.bf16.msra.mxu0 0
        %5824 = vmatprep.subr.bf16.mxu0 0
        %5825 = vmatpush1.bf16.msra.mxu0 0
        %5826 = vmatprep.subr.bf16.mxu0 0
        %5827 = vmatpush1.bf16.msra.mxu0 0
        %5828 = vmatprep.subr.bf16.mxu0 0
        %5829 = vmatpush1.bf16.msra.mxu0 0
        %5830 = vmatprep.subr.bf16.mxu0 0
        %5831 = vmatpush1.bf16.msra.mxu0 0
        %5832 = vmatprep.subr.bf16.mxu0 0
        %5833 = vmatpush1.bf16.msra.mxu0 0
        %5834 = vmatprep.subr.bf16.mxu0 0
        %5835 = vmatpush1.bf16.msra.mxu0 0
        %5836 = vmatprep.subr.bf16.mxu0 0
        %5837 = vmatpush1.bf16.msra.mxu0 0
        %5838 = vmatprep.subr.bf16.mxu0 0
        %5839 = vmatpush1.bf16.msra.mxu0 0
        %5840 = vmatprep.subr.bf16.mxu0 0
        %5841 = vmatpush1.bf16.msra.mxu0 0
        %5842 = vmatprep.subr.bf16.mxu0 0
        %5843 = vmatpush1.bf16.msra.mxu0 0
        %5844 = vmatprep.subr.bf16.mxu0 0
        %5845 = vmatpush1.bf16.msra.mxu0 0
        %5846 = vmatprep.mubr.bf16.mxu0 0
        %5847 = vmatmul.mubr.bf16.gmra.mrb[0].mxu0 %v3648
        %v5848 = vpop.f32.mrb[0].mxu0
        %v5849 = vadd.f32 %v5688, %v5848
        %v5850 = vpop.f32.mrb[0].mxu0
        %v5851 = vpop.f32.mrb[0].mxu0
        %v5852 = vadd.f32 %v5691, %v5851
        %v5853 = vpop.f32.mrb[0].mxu0
        %5854 = vmatprep.mubr.bf16.mxu0 0
        %5855 = vmatmul.mubr.bf16.gmra.mrb[0].mxu0 %v3651
        %v5856 = vpop.f32.mrb[0].mxu0
        %v5857 = vadd.f32 %v5696, %v5856
        %v5858 = vpop.f32.mrb[0].mxu0
        %v5859 = vpop.f32.mrb[0].mxu0
        %v5860 = vadd.f32 %v5699, %v5859
        %v5861 = vpop.f32.mrb[0].mxu0
        %5862 = vmatprep.mubr.bf16.mxu0 0
        %5863 = vmatmul.mubr.bf16.gmra.mrb[0].mxu0 %v3654
        %v5864 = vpop.f32.mrb[0].mxu0
        %v5865 = vadd.f32 %v5704, %v5864
        %v5866 = vpop.f32.mrb[0].mxu0
        %v5867 = vpop.f32.mrb[0].mxu0
        %v5868 = vadd.f32 %v5707, %v5867
        %v5869 = vpop.f32.mrb[0].mxu0
        %5870 = vmatprep.mubr.bf16.mxu0 0
        %5871 = vmatmul.mubr.bf16.gmra.mrb[0].mxu0 %v3657
        %v5872 = vpop.f32.mrb[0].mxu0
        %v5873 = vadd.f32 %v5712, %v5872
        %v5874 = vpop.f32.mrb[0].mxu0
        %v5875 = vpop.f32.mrb[0].mxu0
        %v5876 = vadd.f32 %v5715, %v5875
        %v5877 = vpop.f32.mrb[0].mxu0
        %5878 = vmatprep.mubr.bf16.mxu0 0
        %5879 = vmatmul.mubr.bf16.gmra.mrb[0].mxu0 %v3660
        %v5880 = vpop.f32.mrb[0].mxu0
        %v5881 = vadd.f32 %v5720, %v5880
        %v5882 = vpop.f32.mrb[0].mxu0
        %v5883 = vpop.f32.mrb[0].mxu0
        %v5884 = vadd.f32 %v5723, %v5883
        %v5885 = vpop.f32.mrb[0].mxu0
        %5886 = vmatprep.mubr.bf16.mxu0 0
        %5887 = vmatmul.mubr.bf16.gmra.mrb[0].mxu0 %v3663
        %v5888 = vpop.f32.mrb[0].mxu0
        %v5889 = vadd.f32 %v5728, %v5888
        %v5890 = vpop.f32.mrb[0].mxu0
        %v5891 = vpop.f32.mrb[0].mxu0
        %v5892 = vadd.f32 %v5731, %v5891
        %v5893 = vpop.f32.mrb[0].mxu0
        %5894 = vmatprep.mubr.bf16.mxu0 0
        %5895 = vmatmul.mubr.bf16.gmra.mrb[0].mxu0 %v3666
        %v5896 = vpop.f32.mrb[0].mxu0
        %v5897 = vadd.f32 %v5736, %v5896
        %v5898 = vpop.f32.mrb[0].mxu0
        %v5899 = vpop.f32.mrb[0].mxu0
        %v5900 = vadd.f32 %v5739, %v5899
        %v5901 = vpop.f32.mrb[0].mxu0
        %5902 = vmatprep.mubr.bf16.mxu0 0
        %5903 = vmatmul.mubr.bf16.gmra.mrb[0].mxu0 %v3669
        %v5904 = vpop.f32.mrb[0].mxu0
        %v5905 = vadd.f32 %v5744, %v5904
        %v5906 = vpop.f32.mrb[0].mxu0
        %v5907 = vpop.f32.mrb[0].mxu0
        %v5908 = vadd.f32 %v5747, %v5907
        %v5909 = vpop.f32.mrb[0].mxu0
        %5910 = vmatprep.mubr.bf16.mxu0 0
        %5911 = vmatmul.mubr.bf16.gmra.mrb[0].mxu0 %v3672
        %v5912 = vpop.f32.mrb[0].mxu0
        %v5913 = vadd.f32 %v5752, %v5912
        %v5914 = vpop.f32.mrb[0].mxu0
        %v5915 = vpop.f32.mrb[0].mxu0
        %v5916 = vadd.f32 %v5755, %v5915
        %v5917 = vpop.f32.mrb[0].mxu0
        %5918 = vmatprep.mubr.bf16.mxu0 0
        %5919 = vmatmul.mubr.bf16.gmra.mrb[0].mxu0 %v3675
        %v5920 = vpop.f32.mrb[0].mxu0
        %v5921 = vadd.f32 %v5760, %v5920
        %v5922 = vpop.f32.mrb[0].mxu0
        %v5923 = vpop.f32.mrb[0].mxu0
        %v5924 = vadd.f32 %v5763, %v5923
        %v5925 = vpop.f32.mrb[0].mxu0
        %5926 = vmatprep.mubr.bf16.mxu0 0
        %5927 = vmatmul.mubr.bf16.gmra.mrb[0].mxu0 %v3678
        %v5928 = vpop.f32.mrb[0].mxu0
        %v5929 = vadd.f32 %v5768, %v5928
        %v5930 = vpop.f32.mrb[0].mxu0
        %v5931 = vpop.f32.mrb[0].mxu0
        %v5932 = vadd.f32 %v5771, %v5931
        %v5933 = vpop.f32.mrb[0].mxu0
        %5934 = vmatprep.mubr.bf16.mxu0 0
        %5935 = vmatmul.mubr.bf16.gmra.mrb[0].mxu0 %v3681
        %v5936 = vpop.f32.mrb[0].mxu0
        %v5937 = vadd.f32 %v5776, %v5936
        %v5938 = vpop.f32.mrb[0].mxu0
        %v5939 = vpop.f32.mrb[0].mxu0
        %v5940 = vadd.f32 %v5779, %v5939
        %v5941 = vpop.f32.mrb[0].mxu0
        %5942 = vmatprep.mubr.bf16.mxu0 0
        %5943 = vmatmul.mubr.bf16.gmra.mrb[0].mxu0 %v3684
        %v5944 = vpop.f32.mrb[0].mxu0
        %v5945 = vadd.f32 %v5784, %v5944
        %v5946 = vpop.f32.mrb[0].mxu0
        %v5947 = vpop.f32.mrb[0].mxu0
        %v5948 = vadd.f32 %v5787, %v5947
        %v5949 = vpop.f32.mrb[0].mxu0
        %5950 = vmatprep.mubr.bf16.mxu0 0
        %5951 = vmatmul.mubr.bf16.gmra.mrb[0].mxu0 %v4615
        %v5952 = vpop.f32.mrb[0].mxu0
        %v5953 = vadd.f32 %v5792, %v5952
        %v5954 = vpop.f32.mrb[0].mxu0
        %v5955 = vpop.f32.mrb[0].mxu0
        %v5956 = vadd.f32 %v5795, %v5955
        %v5957 = vpop.f32.mrb[0].mxu0
        %5958 = vmatprep.mubr.bf16.mxu0 0
        %5959 = vmatmul.mubr.bf16.gmra.mrb[0].mxu0 %v5133
        %v5960 = vpop.f32.mrb[0].mxu0
        %v5961 = vadd.f32 %v5800, %v5960
        %v5962 = vpop.f32.mrb[0].mxu0
        %v5963 = vpop.f32.mrb[0].mxu0
        %v5964 = vadd.f32 %v5803, %v5963
        %v5965 = vpop.f32.mrb[0].mxu0
        %5966 = vmatprep.mubr.bf16.mxu0 0
        %5967 = vmatmul.mubr.bf16.gmra.mrb[0].mxu0 %v5651
        %v5968 = vpop.f32.mrb[0].mxu0
        %v5969 = vadd.f32 %v5808, %v5968
        %v5970 = vpop.f32.mrb[0].mxu0
        %v5971 = vpop.f32.mrb[0].mxu0
        %v5972 = vadd.f32 %v5811, %v5971
        %v5973 = vpop.f32.mrb[0].mxu0
        %5974 = vdwg.mxu0
        %v5975 = vadd.f32 %v5457, %v5849
        %v5976 = vadd.f32 %v5458, %v5852
        %v5977 = vadd.f32 %v5459, %v5857
        %v5978 = vadd.f32 %v5460, %v5860
        %v5979 = vadd.f32 %v5461, %v5865
        %v5980 = vadd.f32 %v5462, %v5868
        %v5981 = vadd.f32 %v5463, %v5873
        %v5982 = vadd.f32 %v5464, %v5876
        %v5983 = vadd.f32 %v5465, %v5881
        %v5984 = vadd.f32 %v5466, %v5884
        %v5985 = vadd.f32 %v5467, %v5889
        %v5986 = vadd.f32 %v5468, %v5892
        %v5987 = vadd.f32 %v5469, %v5897
        %v5988 = vadd.f32 %v5470, %v5900
        %v5989 = vadd.f32 %v5471, %v5905
        %v5990 = vadd.f32 %v5472, %v5908
        %v5991 = vadd.f32 %v5473, %v5913
        %v5992 = vadd.f32 %v5474, %v5916
        %v5993 = vadd.f32 %v5475, %v5921
        %v5994 = vadd.f32 %v5476, %v5924
        %v5995 = vadd.f32 %v5477, %v5929
        %v5996 = vadd.f32 %v5478, %v5932
        %v5997 = vadd.f32 %v5479, %v5937
        %v5998 = vadd.f32 %v5480, %v5940
        %v5999 = vadd.f32 %v5481, %v5945
        %v6000 = vadd.f32 %v5482, %v5948
        %v6001 = vadd.f32 %v5483, %v5953
        %v6002 = vadd.f32 %v5484, %v5956
        %v6003 = vadd.f32 %v5485, %v5961
        %v6004 = vadd.f32 %v5486, %v5964
        %v6005 = vadd.f32 %v5487, %v5969
        %v6006 = vadd.f32 %v5488, %v5972
        %v6007 = vld [vmem:[%s4] sm:$0x1]
        %v6009 = vlaneseq
        %v6010 = vshrl.u32 %v6009, 7
        %v6011 = vsub.s32 0, %v6010
        %v6012 = vrot.slane %v6007, %v6011
        %v6014 = vadd.f32 %v5975, %v6012
        %v6015 = vadd.f32 %v5976, %v6012
        %v6016 = vadd.f32 %v5977, %v6012
        %v6017 = vadd.f32 %v5978, %v6012
        %v6018 = vadd.f32 %v5979, %v6012
        %v6019 = vadd.f32 %v5980, %v6012
        %v6020 = vadd.f32 %v5981, %v6012
        %v6021 = vadd.f32 %v5982, %v6012
        %v6022 = vadd.f32 %v5983, %v6012
        %v6023 = vadd.f32 %v5984, %v6012
        %v6024 = vadd.f32 %v5985, %v6012
        %v6025 = vadd.f32 %v5986, %v6012
        %v6026 = vadd.f32 %v5987, %v6012
        %v6027 = vadd.f32 %v5988, %v6012
        %v6028 = vadd.f32 %v5989, %v6012
        %v6029 = vadd.f32 %v5990, %v6012
        %v6030 = vadd.f32 %v5991, %v6012
        %v6031 = vadd.f32 %v5992, %v6012
        %v6032 = vadd.f32 %v5993, %v6012
        %v6033 = vadd.f32 %v5994, %v6012
        %v6034 = vadd.f32 %v5995, %v6012
        %v6035 = vadd.f32 %v5996, %v6012
        %v6036 = vadd.f32 %v5997, %v6012
        %v6037 = vadd.f32 %v5998, %v6012
        %v6038 = vadd.f32 %v5999, %v6012
        %v6039 = vadd.f32 %v6000, %v6012
        %v6040 = vadd.f32 %v6001, %v6012
        %v6041 = vadd.f32 %v6002, %v6012
        %v6042 = vadd.f32 %v6003, %v6012
        %v6043 = vadd.f32 %v6004, %v6012
        %v6044 = vadd.f32 %v6005, %v6012
        %v6045 = vadd.f32 %v6006, %v6012
        %v6046 = vmax.f32 %v6014, 0.0
        %v6047 = vmax.f32 %v6015, 0.0
        %v6048 = vmax.f32 %v6016, 0.0
        %v6049 = vmax.f32 %v6017, 0.0
        %v6050 = vmax.f32 %v6018, 0.0
        %v6051 = vmax.f32 %v6019, 0.0
        %v6052 = vmax.f32 %v6020, 0.0
        %v6053 = vmax.f32 %v6021, 0.0
        %v6054 = vmax.f32 %v6022, 0.0
        %v6055 = vmax.f32 %v6023, 0.0
        %v6056 = vmax.f32 %v6024, 0.0
        %v6057 = vmax.f32 %v6025, 0.0
        %v6058 = vmax.f32 %v6026, 0.0
        %v6059 = vmax.f32 %v6027, 0.0
        %v6060 = vmax.f32 %v6028, 0.0
        %v6061 = vmax.f32 %v6029, 0.0
        %v6062 = vmax.f32 %v6030, 0.0
        %v6063 = vmax.f32 %v6031, 0.0
        %v6064 = vmax.f32 %v6032, 0.0
        %v6065 = vmax.f32 %v6033, 0.0
        %v6066 = vmax.f32 %v6034, 0.0
        %v6067 = vmax.f32 %v6035, 0.0
        %v6068 = vmax.f32 %v6036, 0.0
        %v6069 = vmax.f32 %v6037, 0.0
        %v6070 = vmax.f32 %v6038, 0.0
        %v6071 = vmax.f32 %v6039, 0.0
        %v6072 = vmax.f32 %v6040, 0.0
        %v6073 = vmax.f32 %v6041, 0.0
        %v6074 = vmax.f32 %v6042, 0.0
        %v6075 = vmax.f32 %v6043, 0.0
        %v6076 = vmax.f32 %v6044, 0.0
        %v6077 = vmax.f32 %v6045, 0.0
        %v6110 = vcombine.high %v6046, %v6046
        %v6112 = vunpack.c.l.s4 1983009808
        %v6113 = vunpack.c.0.s8 %v6112
        %v6114 = vlaneseq
        %v6115 = vshrl.u32 %v6114, 7
        %v6116 = vsub.s32 %v6113, %v6115
        %v6117 = vrot.slane %v6046, %v6116
        %v6119 = vunpack.c.l.s4 1983009808
        %v6120 = vunpack.c.0.s8 %v6119
        %v6121 = vlaneseq
        %v6122 = vshrl.u32 %v6121, 7
        %v6123 = vsub.s32 %v6120, %v6122
        %v6124 = vrot.slane %v6110, %v6123
        %v6125 = vcombine.high %v6117, %v6117
        %v6126 = vcombine.high %v6124, %v6124
        %v6127 = vcombine.high %v6047, %v6047
        %v6129 = vunpack.c.l.s4 1983009808
        %v6130 = vunpack.c.0.s8 %v6129
        %v6131 = vlaneseq
        %v6132 = vshrl.u32 %v6131, 7
        %v6133 = vsub.s32 %v6130, %v6132
        %v6134 = vrot.slane %v6047, %v6133
        %v6136 = vunpack.c.l.s4 1983009808
        %v6137 = vunpack.c.0.s8 %v6136
        %v6138 = vlaneseq
        %v6139 = vshrl.u32 %v6138, 7
        %v6140 = vsub.s32 %v6137, %v6139
        %v6141 = vrot.slane %v6127, %v6140
        %v6142 = vcombine.high %v6134, %v6134
        %v6143 = vcombine.high %v6141, %v6141
        %v6144 = vcombine.high %v6048, %v6048
        %v6146 = vunpack.c.l.s4 1983009808
        %v6147 = vunpack.c.0.s8 %v6146
        %v6148 = vlaneseq
        %v6149 = vshrl.u32 %v6148, 7
        %v6150 = vsub.s32 %v6147, %v6149
        %v6151 = vrot.slane %v6048, %v6150
        %v6153 = vunpack.c.l.s4 1983009808
        %v6154 = vunpack.c.0.s8 %v6153
        %v6155 = vlaneseq
        %v6156 = vshrl.u32 %v6155, 7
        %v6157 = vsub.s32 %v6154, %v6156
        %v6158 = vrot.slane %v6144, %v6157
        %v6159 = vcombine.high %v6151, %v6151
        %v6160 = vcombine.high %v6158, %v6158
        %v6161 = vcombine.high %v6049, %v6049
        %v6163 = vunpack.c.l.s4 1983009808
        %v6164 = vunpack.c.0.s8 %v6163
        %v6165 = vlaneseq
        %v6166 = vshrl.u32 %v6165, 7
        %v6167 = vsub.s32 %v6164, %v6166
        %v6168 = vrot.slane %v6049, %v6167
        %v6170 = vunpack.c.l.s4 1983009808
        %v6171 = vunpack.c.0.s8 %v6170
        %v6172 = vlaneseq
        %v6173 = vshrl.u32 %v6172, 7
        %v6174 = vsub.s32 %v6171, %v6173
        %v6175 = vrot.slane %v6161, %v6174
        %v6176 = vcombine.high %v6168, %v6168
        %v6177 = vcombine.high %v6175, %v6175
        %v6178 = vcombine.high %v6050, %v6050
        %v6180 = vunpack.c.l.s4 1983009808
        %v6181 = vunpack.c.0.s8 %v6180
        %v6182 = vlaneseq
        %v6183 = vshrl.u32 %v6182, 7
        %v6184 = vsub.s32 %v6181, %v6183
        %v6185 = vrot.slane %v6050, %v6184
        %v6187 = vunpack.c.l.s4 1983009808
        %v6188 = vunpack.c.0.s8 %v6187
        %v6189 = vlaneseq
        %v6190 = vshrl.u32 %v6189, 7
        %v6191 = vsub.s32 %v6188, %v6190
        %v6192 = vrot.slane %v6178, %v6191
        %v6193 = vcombine.high %v6185, %v6185
        %v6194 = vcombine.high %v6192, %v6192
        %v6195 = vcombine.high %v6051, %v6051
        %v6197 = vunpack.c.l.s4 1983009808
        %v6198 = vunpack.c.0.s8 %v6197
        %v6199 = vlaneseq
        %v6200 = vshrl.u32 %v6199, 7
        %v6201 = vsub.s32 %v6198, %v6200
        %v6202 = vrot.slane %v6051, %v6201
        %v6204 = vunpack.c.l.s4 1983009808
        %v6205 = vunpack.c.0.s8 %v6204
        %v6206 = vlaneseq
        %v6207 = vshrl.u32 %v6206, 7
        %v6208 = vsub.s32 %v6205, %v6207
        %v6209 = vrot.slane %v6195, %v6208
        %v6210 = vcombine.high %v6202, %v6202
        %v6211 = vcombine.high %v6209, %v6209
        %v6212 = vcombine.high %v6052, %v6052
        %v6214 = vunpack.c.l.s4 1983009808
        %v6215 = vunpack.c.0.s8 %v6214
        %v6216 = vlaneseq
        %v6217 = vshrl.u32 %v6216, 7
        %v6218 = vsub.s32 %v6215, %v6217
        %v6219 = vrot.slane %v6052, %v6218
        %v6221 = vunpack.c.l.s4 1983009808
        %v6222 = vunpack.c.0.s8 %v6221
        %v6223 = vlaneseq
        %v6224 = vshrl.u32 %v6223, 7
        %v6225 = vsub.s32 %v6222, %v6224
        %v6226 = vrot.slane %v6212, %v6225
        %v6227 = vcombine.high %v6219, %v6219
        %v6228 = vcombine.high %v6226, %v6226
        %v6229 = vcombine.high %v6053, %v6053
        %v6231 = vunpack.c.l.s4 1983009808
        %v6232 = vunpack.c.0.s8 %v6231
        %v6233 = vlaneseq
        %v6234 = vshrl.u32 %v6233, 7
        %v6235 = vsub.s32 %v6232, %v6234
        %v6236 = vrot.slane %v6053, %v6235
        %v6238 = vunpack.c.l.s4 1983009808
        %v6239 = vunpack.c.0.s8 %v6238
        %v6240 = vlaneseq
        %v6241 = vshrl.u32 %v6240, 7
        %v6242 = vsub.s32 %v6239, %v6241
        %v6243 = vrot.slane %v6229, %v6242
        %v6244 = vcombine.high %v6236, %v6236
        %v6245 = vcombine.high %v6243, %v6243
        %v6246 = vcombine.high %v6054, %v6054
        %v6248 = vunpack.c.l.s4 1983009808
        %v6249 = vunpack.c.0.s8 %v6248
        %v6250 = vlaneseq
        %v6251 = vshrl.u32 %v6250, 7
        %v6252 = vsub.s32 %v6249, %v6251
        %v6253 = vrot.slane %v6054, %v6252
        %v6255 = vunpack.c.l.s4 1983009808
        %v6256 = vunpack.c.0.s8 %v6255
        %v6257 = vlaneseq
        %v6258 = vshrl.u32 %v6257, 7
        %v6259 = vsub.s32 %v6256, %v6258
        %v6260 = vrot.slane %v6246, %v6259
        %v6261 = vcombine.high %v6253, %v6253
        %v6262 = vcombine.high %v6260, %v6260
        %v6263 = vcombine.high %v6055, %v6055
        %v6265 = vunpack.c.l.s4 1983009808
        %v6266 = vunpack.c.0.s8 %v6265
        %v6267 = vlaneseq
        %v6268 = vshrl.u32 %v6267, 7
        %v6269 = vsub.s32 %v6266, %v6268
        %v6270 = vrot.slane %v6055, %v6269
        %v6272 = vunpack.c.l.s4 1983009808
        %v6273 = vunpack.c.0.s8 %v6272
        %v6274 = vlaneseq
        %v6275 = vshrl.u32 %v6274, 7
        %v6276 = vsub.s32 %v6273, %v6275
        %v6277 = vrot.slane %v6263, %v6276
        %v6278 = vcombine.high %v6270, %v6270
        %v6279 = vcombine.high %v6277, %v6277
        %v6280 = vcombine.high %v6056, %v6056
        %v6282 = vunpack.c.l.s4 1983009808
        %v6283 = vunpack.c.0.s8 %v6282
        %v6284 = vlaneseq
        %v6285 = vshrl.u32 %v6284, 7
        %v6286 = vsub.s32 %v6283, %v6285
        %v6287 = vrot.slane %v6056, %v6286
        %v6289 = vunpack.c.l.s4 1983009808
        %v6290 = vunpack.c.0.s8 %v6289
        %v6291 = vlaneseq
        %v6292 = vshrl.u32 %v6291, 7
        %v6293 = vsub.s32 %v6290, %v6292
        %v6294 = vrot.slane %v6280, %v6293
        %v6295 = vcombine.high %v6287, %v6287
        %v6296 = vcombine.high %v6294, %v6294
        %v6297 = vcombine.high %v6057, %v6057
        %v6299 = vunpack.c.l.s4 1983009808
        %v6300 = vunpack.c.0.s8 %v6299
        %v6301 = vlaneseq
        %v6302 = vshrl.u32 %v6301, 7
        %v6303 = vsub.s32 %v6300, %v6302
        %v6304 = vrot.slane %v6057, %v6303
        %v6306 = vunpack.c.l.s4 1983009808
        %v6307 = vunpack.c.0.s8 %v6306
        %v6308 = vlaneseq
        %v6309 = vshrl.u32 %v6308, 7
        %v6310 = vsub.s32 %v6307, %v6309
        %v6311 = vrot.slane %v6297, %v6310
        %v6312 = vcombine.high %v6304, %v6304
        %v6313 = vcombine.high %v6311, %v6311
        %v6314 = vcombine.high %v6058, %v6058
        %v6316 = vunpack.c.l.s4 1983009808
        %v6317 = vunpack.c.0.s8 %v6316
        %v6318 = vlaneseq
        %v6319 = vshrl.u32 %v6318, 7
        %v6320 = vsub.s32 %v6317, %v6319
        %v6321 = vrot.slane %v6058, %v6320
        %v6323 = vunpack.c.l.s4 1983009808
        %v6324 = vunpack.c.0.s8 %v6323
        %v6325 = vlaneseq
        %v6326 = vshrl.u32 %v6325, 7
        %v6327 = vsub.s32 %v6324, %v6326
        %v6328 = vrot.slane %v6314, %v6327
        %v6329 = vcombine.high %v6321, %v6321
        %v6330 = vcombine.high %v6328, %v6328
        %v6331 = vcombine.high %v6059, %v6059
        %v6333 = vunpack.c.l.s4 1983009808
        %v6334 = vunpack.c.0.s8 %v6333
        %v6335 = vlaneseq
        %v6336 = vshrl.u32 %v6335, 7
        %v6337 = vsub.s32 %v6334, %v6336
        %v6338 = vrot.slane %v6059, %v6337
        %v6340 = vunpack.c.l.s4 1983009808
        %v6341 = vunpack.c.0.s8 %v6340
        %v6342 = vlaneseq
        %v6343 = vshrl.u32 %v6342, 7
        %v6344 = vsub.s32 %v6341, %v6343
        %v6345 = vrot.slane %v6331, %v6344
        %v6346 = vcombine.high %v6338, %v6338
        %v6347 = vcombine.high %v6345, %v6345
        %v6348 = vcombine.high %v6060, %v6060
        %v6350 = vunpack.c.l.s4 1983009808
        %v6351 = vunpack.c.0.s8 %v6350
        %v6352 = vlaneseq
        %v6353 = vshrl.u32 %v6352, 7
        %v6354 = vsub.s32 %v6351, %v6353
        %v6355 = vrot.slane %v6060, %v6354
        %v6357 = vunpack.c.l.s4 1983009808
        %v6358 = vunpack.c.0.s8 %v6357
        %v6359 = vlaneseq
        %v6360 = vshrl.u32 %v6359, 7
        %v6361 = vsub.s32 %v6358, %v6360
        %v6362 = vrot.slane %v6348, %v6361
        %v6363 = vcombine.high %v6355, %v6355
        %v6364 = vcombine.high %v6362, %v6362
        %v6365 = vcombine.high %v6061, %v6061
        %v6367 = vunpack.c.l.s4 1983009808
        %v6368 = vunpack.c.0.s8 %v6367
        %v6369 = vlaneseq
        %v6370 = vshrl.u32 %v6369, 7
        %v6371 = vsub.s32 %v6368, %v6370
        %v6372 = vrot.slane %v6061, %v6371
        %v6374 = vunpack.c.l.s4 1983009808
        %v6375 = vunpack.c.0.s8 %v6374
        %v6376 = vlaneseq
        %v6377 = vshrl.u32 %v6376, 7
        %v6378 = vsub.s32 %v6375, %v6377
        %v6379 = vrot.slane %v6365, %v6378
        %v6380 = vcombine.high %v6372, %v6372
        %v6381 = vcombine.high %v6379, %v6379
        %v6382 = vcombine.high %v6062, %v6062
        %v6384 = vunpack.c.l.s4 1983009808
        %v6385 = vunpack.c.0.s8 %v6384
        %v6386 = vlaneseq
        %v6387 = vshrl.u32 %v6386, 7
        %v6388 = vsub.s32 %v6385, %v6387
        %v6389 = vrot.slane %v6062, %v6388
        %v6391 = vunpack.c.l.s4 1983009808
        %v6392 = vunpack.c.0.s8 %v6391
        %v6393 = vlaneseq
        %v6394 = vshrl.u32 %v6393, 7
        %v6395 = vsub.s32 %v6392, %v6394
        %v6396 = vrot.slane %v6382, %v6395
        %v6397 = vcombine.high %v6389, %v6389
        %v6398 = vcombine.high %v6396, %v6396
        %v6399 = vcombine.high %v6063, %v6063
        %v6401 = vunpack.c.l.s4 1983009808
        %v6402 = vunpack.c.0.s8 %v6401
        %v6403 = vlaneseq
        %v6404 = vshrl.u32 %v6403, 7
        %v6405 = vsub.s32 %v6402, %v6404
        %v6406 = vrot.slane %v6063, %v6405
        %v6408 = vunpack.c.l.s4 1983009808
        %v6409 = vunpack.c.0.s8 %v6408
        %v6410 = vlaneseq
        %v6411 = vshrl.u32 %v6410, 7
        %v6412 = vsub.s32 %v6409, %v6411
        %v6413 = vrot.slane %v6399, %v6412
        %v6414 = vcombine.high %v6406, %v6406
        %v6415 = vcombine.high %v6413, %v6413
        %v6416 = vcombine.high %v6064, %v6064
        %v6418 = vunpack.c.l.s4 1983009808
        %v6419 = vunpack.c.0.s8 %v6418
        %v6420 = vlaneseq
        %v6421 = vshrl.u32 %v6420, 7
        %v6422 = vsub.s32 %v6419, %v6421
        %v6423 = vrot.slane %v6064, %v6422
        %v6425 = vunpack.c.l.s4 1983009808
        %v6426 = vunpack.c.0.s8 %v6425
        %v6427 = vlaneseq
        %v6428 = vshrl.u32 %v6427, 7
        %v6429 = vsub.s32 %v6426, %v6428
        %v6430 = vrot.slane %v6416, %v6429
        %v6431 = vcombine.high %v6423, %v6423
        %v6432 = vcombine.high %v6430, %v6430
        %v6433 = vcombine.high %v6065, %v6065
        %v6435 = vunpack.c.l.s4 1983009808
        %v6436 = vunpack.c.0.s8 %v6435
        %v6437 = vlaneseq
        %v6438 = vshrl.u32 %v6437, 7
        %v6439 = vsub.s32 %v6436, %v6438
        %v6440 = vrot.slane %v6065, %v6439
        %v6442 = vunpack.c.l.s4 1983009808
        %v6443 = vunpack.c.0.s8 %v6442
        %v6444 = vlaneseq
        %v6445 = vshrl.u32 %v6444, 7
        %v6446 = vsub.s32 %v6443, %v6445
        %v6447 = vrot.slane %v6433, %v6446
        %v6448 = vcombine.high %v6440, %v6440
        %v6449 = vcombine.high %v6447, %v6447
        %v6450 = vcombine.high %v6066, %v6066
        %v6452 = vunpack.c.l.s4 1983009808
        %v6453 = vunpack.c.0.s8 %v6452
        %v6454 = vlaneseq
        %v6455 = vshrl.u32 %v6454, 7
        %v6456 = vsub.s32 %v6453, %v6455
        %v6457 = vrot.slane %v6066, %v6456
        %v6459 = vunpack.c.l.s4 1983009808
        %v6460 = vunpack.c.0.s8 %v6459
        %v6461 = vlaneseq
        %v6462 = vshrl.u32 %v6461, 7
        %v6463 = vsub.s32 %v6460, %v6462
        %v6464 = vrot.slane %v6450, %v6463
        %v6465 = vcombine.high %v6457, %v6457
        %v6466 = vcombine.high %v6464, %v6464
        %v6467 = vcombine.high %v6067, %v6067
        %v6469 = vunpack.c.l.s4 1983009808
        %v6470 = vunpack.c.0.s8 %v6469
        %v6471 = vlaneseq
        %v6472 = vshrl.u32 %v6471, 7
        %v6473 = vsub.s32 %v6470, %v6472
        %v6474 = vrot.slane %v6067, %v6473
        %v6476 = vunpack.c.l.s4 1983009808
        %v6477 = vunpack.c.0.s8 %v6476
        %v6478 = vlaneseq
        %v6479 = vshrl.u32 %v6478, 7
        %v6480 = vsub.s32 %v6477, %v6479
        %v6481 = vrot.slane %v6467, %v6480
        %v6482 = vcombine.high %v6474, %v6474
        %v6483 = vcombine.high %v6481, %v6481
        %v6484 = vcombine.high %v6068, %v6068
        %v6486 = vunpack.c.l.s4 1983009808
        %v6487 = vunpack.c.0.s8 %v6486
        %v6488 = vlaneseq
        %v6489 = vshrl.u32 %v6488, 7
        %v6490 = vsub.s32 %v6487, %v6489
        %v6491 = vrot.slane %v6068, %v6490
        %v6493 = vunpack.c.l.s4 1983009808
        %v6494 = vunpack.c.0.s8 %v6493
        %v6495 = vlaneseq
        %v6496 = vshrl.u32 %v6495, 7
        %v6497 = vsub.s32 %v6494, %v6496
        %v6498 = vrot.slane %v6484, %v6497
        %v6499 = vcombine.high %v6491, %v6491
        %v6500 = vcombine.high %v6498, %v6498
        %v6501 = vcombine.high %v6069, %v6069
        %v6503 = vunpack.c.l.s4 1983009808
        %v6504 = vunpack.c.0.s8 %v6503
        %v6505 = vlaneseq
        %v6506 = vshrl.u32 %v6505, 7
        %v6507 = vsub.s32 %v6504, %v6506
        %v6508 = vrot.slane %v6069, %v6507
        %v6510 = vunpack.c.l.s4 1983009808
        %v6511 = vunpack.c.0.s8 %v6510
        %v6512 = vlaneseq
        %v6513 = vshrl.u32 %v6512, 7
        %v6514 = vsub.s32 %v6511, %v6513
        %v6515 = vrot.slane %v6501, %v6514
        %v6516 = vcombine.high %v6508, %v6508
        %v6517 = vcombine.high %v6515, %v6515
        %v6518 = vcombine.high %v6070, %v6070
        %v6520 = vunpack.c.l.s4 1983009808
        %v6521 = vunpack.c.0.s8 %v6520
        %v6522 = vlaneseq
        %v6523 = vshrl.u32 %v6522, 7
        %v6524 = vsub.s32 %v6521, %v6523
        %v6525 = vrot.slane %v6070, %v6524
        %v6527 = vunpack.c.l.s4 1983009808
        %v6528 = vunpack.c.0.s8 %v6527
        %v6529 = vlaneseq
        %v6530 = vshrl.u32 %v6529, 7
        %v6531 = vsub.s32 %v6528, %v6530
        %v6532 = vrot.slane %v6518, %v6531
        %v6533 = vcombine.high %v6525, %v6525
        %v6534 = vcombine.high %v6532, %v6532
        %v6535 = vcombine.high %v6071, %v6071
        %v6537 = vunpack.c.l.s4 1983009808
        %v6538 = vunpack.c.0.s8 %v6537
        %v6539 = vlaneseq
        %v6540 = vshrl.u32 %v6539, 7
        %v6541 = vsub.s32 %v6538, %v6540
        %v6542 = vrot.slane %v6071, %v6541
        %v6544 = vunpack.c.l.s4 1983009808
        %v6545 = vunpack.c.0.s8 %v6544
        %v6546 = vlaneseq
        %v6547 = vshrl.u32 %v6546, 7
        %v6548 = vsub.s32 %v6545, %v6547
        %v6549 = vrot.slane %v6535, %v6548
        %v6550 = vcombine.high %v6542, %v6542
        %v6551 = vcombine.high %v6549, %v6549
        %v6552 = vcombine.high %v6072, %v6072
        %v6554 = vunpack.c.l.s4 1983009808
        %v6555 = vunpack.c.0.s8 %v6554
        %v6556 = vlaneseq
        %v6557 = vshrl.u32 %v6556, 7
        %v6558 = vsub.s32 %v6555, %v6557
        %v6559 = vrot.slane %v6072, %v6558
        %v6561 = vunpack.c.l.s4 1983009808
        %v6562 = vunpack.c.0.s8 %v6561
        %v6563 = vlaneseq
        %v6564 = vshrl.u32 %v6563, 7
        %v6565 = vsub.s32 %v6562, %v6564
        %v6566 = vrot.slane %v6552, %v6565
        %v6567 = vcombine.high %v6559, %v6559
        %v6568 = vcombine.high %v6566, %v6566
        %v6569 = vcombine.high %v6073, %v6073
        %v6571 = vunpack.c.l.s4 1983009808
        %v6572 = vunpack.c.0.s8 %v6571
        %v6573 = vlaneseq
        %v6574 = vshrl.u32 %v6573, 7
        %v6575 = vsub.s32 %v6572, %v6574
        %v6576 = vrot.slane %v6073, %v6575
        %v6578 = vunpack.c.l.s4 1983009808
        %v6579 = vunpack.c.0.s8 %v6578
        %v6580 = vlaneseq
        %v6581 = vshrl.u32 %v6580, 7
        %v6582 = vsub.s32 %v6579, %v6581
        %v6583 = vrot.slane %v6569, %v6582
        %v6584 = vcombine.high %v6576, %v6576
        %v6585 = vcombine.high %v6583, %v6583
        %v6586 = vcombine.high %v6074, %v6074
        %v6588 = vunpack.c.l.s4 1983009808
        %v6589 = vunpack.c.0.s8 %v6588
        %v6590 = vlaneseq
        %v6591 = vshrl.u32 %v6590, 7
        %v6592 = vsub.s32 %v6589, %v6591
        %v6593 = vrot.slane %v6074, %v6592
        %v6595 = vunpack.c.l.s4 1983009808
        %v6596 = vunpack.c.0.s8 %v6595
        %v6597 = vlaneseq
        %v6598 = vshrl.u32 %v6597, 7
        %v6599 = vsub.s32 %v6596, %v6598
        %v6600 = vrot.slane %v6586, %v6599
        %v6601 = vcombine.high %v6593, %v6593
        %v6602 = vcombine.high %v6600, %v6600
        %v6603 = vcombine.high %v6075, %v6075
        %v6605 = vunpack.c.l.s4 1983009808
        %v6606 = vunpack.c.0.s8 %v6605
        %v6607 = vlaneseq
        %v6608 = vshrl.u32 %v6607, 7
        %v6609 = vsub.s32 %v6606, %v6608
        %v6610 = vrot.slane %v6075, %v6609
        %v6612 = vunpack.c.l.s4 1983009808
        %v6613 = vunpack.c.0.s8 %v6612
        %v6614 = vlaneseq
        %v6615 = vshrl.u32 %v6614, 7
        %v6616 = vsub.s32 %v6613, %v6615
        %v6617 = vrot.slane %v6603, %v6616
        %v6618 = vcombine.high %v6610, %v6610
        %v6619 = vcombine.high %v6617, %v6617
        %v6620 = vcombine.high %v6076, %v6076
        %v6622 = vunpack.c.l.s4 1983009808
        %v6623 = vunpack.c.0.s8 %v6622
        %v6624 = vlaneseq
        %v6625 = vshrl.u32 %v6624, 7
        %v6626 = vsub.s32 %v6623, %v6625
        %v6627 = vrot.slane %v6076, %v6626
        %v6629 = vunpack.c.l.s4 1983009808
        %v6630 = vunpack.c.0.s8 %v6629
        %v6631 = vlaneseq
        %v6632 = vshrl.u32 %v6631, 7
        %v6633 = vsub.s32 %v6630, %v6632
        %v6634 = vrot.slane %v6620, %v6633
        %v6635 = vcombine.high %v6627, %v6627
        %v6636 = vcombine.high %v6634, %v6634
        %v6637 = vcombine.high %v6077, %v6077
        %v6639 = vunpack.c.l.s4 1983009808
        %v6640 = vunpack.c.0.s8 %v6639
        %v6641 = vlaneseq
        %v6642 = vshrl.u32 %v6641, 7
        %v6643 = vsub.s32 %v6640, %v6642
        %v6644 = vrot.slane %v6077, %v6643
        %v6646 = vunpack.c.l.s4 1983009808
        %v6647 = vunpack.c.0.s8 %v6646
        %v6648 = vlaneseq
        %v6649 = vshrl.u32 %v6648, 7
        %v6650 = vsub.s32 %v6647, %v6649
        %v6651 = vrot.slane %v6637, %v6650
        %v6652 = vcombine.high %v6644, %v6644
        %v6653 = vcombine.high %v6651, %v6651
        %v6782 = vsel %vm281, %v6117, -inf
        %v6783 = vsel %vm281, %v6151, -inf
        %v6784 = vmax.f32 %v6782, %v6783
        %v6785 = vrot.slane %v6784, 4
        %v6786 = vmax.f32 %v6784, %v6785
        %v6787 = vrot.slane %v6786, 2
        %v6788 = vmax.f32 %v6786, %v6787
        %v6789 = vrot.slane %v6788, 1
        %v6790 = vmax.f32 %v6788, %v6789
        %v6791 = vsel %vm281, %v6125, -inf
        %v6792 = vsel %vm281, %v6159, -inf
        %v6793 = vmax.f32 %v6791, %v6792
        %v6794 = vrot.slane %v6793, 4
        %v6795 = vmax.f32 %v6793, %v6794
        %v6796 = vrot.slane %v6795, 2
        %v6797 = vmax.f32 %v6795, %v6796
        %v6798 = vrot.slane %v6797, 1
        %v6799 = vmax.f32 %v6797, %v6798
        %v6800 = vsel %vm281, %v6124, -inf
        %v6801 = vsel %vm281, %v6158, -inf
        %v6802 = vmax.f32 %v6800, %v6801
        %v6803 = vrot.slane %v6802, 4
        %v6804 = vmax.f32 %v6802, %v6803
        %v6805 = vrot.slane %v6804, 2
        %v6806 = vmax.f32 %v6804, %v6805
        %v6807 = vrot.slane %v6806, 1
        %v6808 = vmax.f32 %v6806, %v6807
        %v6809 = vsel %vm281, %v6126, -inf
        %v6810 = vsel %vm281, %v6160, -inf
        %v6811 = vmax.f32 %v6809, %v6810
        %v6812 = vrot.slane %v6811, 4
        %v6813 = vmax.f32 %v6811, %v6812
        %v6814 = vrot.slane %v6813, 2
        %v6815 = vmax.f32 %v6813, %v6814
        %v6816 = vrot.slane %v6815, 1
        %v6817 = vmax.f32 %v6815, %v6816
        %v6818 = vsel %vm281, %v6134, -inf
        %v6819 = vsel %vm281, %v6168, -inf
        %v6820 = vmax.f32 %v6818, %v6819
        %v6821 = vrot.slane %v6820, 4
        %v6822 = vmax.f32 %v6820, %v6821
        %v6823 = vrot.slane %v6822, 2
        %v6824 = vmax.f32 %v6822, %v6823
        %v6825 = vrot.slane %v6824, 1
        %v6826 = vmax.f32 %v6824, %v6825
        %v6827 = vsel %vm281, %v6142, -inf
        %v6828 = vsel %vm281, %v6176, -inf
        %v6829 = vmax.f32 %v6827, %v6828
        %v6830 = vrot.slane %v6829, 4
        %v6831 = vmax.f32 %v6829, %v6830
        %v6832 = vrot.slane %v6831, 2
        %v6833 = vmax.f32 %v6831, %v6832
        %v6834 = vrot.slane %v6833, 1
        %v6835 = vmax.f32 %v6833, %v6834
        %v6836 = vsel %vm281, %v6141, -inf
        %v6837 = vsel %vm281, %v6175, -inf
        %v6838 = vmax.f32 %v6836, %v6837
        %v6839 = vrot.slane %v6838, 4
        %v6840 = vmax.f32 %v6838, %v6839
        %v6841 = vrot.slane %v6840, 2
        %v6842 = vmax.f32 %v6840, %v6841
        %v6843 = vrot.slane %v6842, 1
        %v6844 = vmax.f32 %v6842, %v6843
        %v6845 = vsel %vm281, %v6143, -inf
        %v6846 = vsel %vm281, %v6177, -inf
        %v6847 = vmax.f32 %v6845, %v6846
        %v6848 = vrot.slane %v6847, 4
        %v6849 = vmax.f32 %v6847, %v6848
        %v6850 = vrot.slane %v6849, 2
        %v6851 = vmax.f32 %v6849, %v6850
        %v6852 = vrot.slane %v6851, 1
        %v6853 = vmax.f32 %v6851, %v6852
        %v6854 = vsel %vm281, %v6185, -inf
        %v6855 = vsel %vm281, %v6219, -inf
        %v6856 = vmax.f32 %v6854, %v6855
        %v6857 = vrot.slane %v6856, 4
        %v6858 = vmax.f32 %v6856, %v6857
        %v6859 = vrot.slane %v6858, 2
        %v6860 = vmax.f32 %v6858, %v6859
        %v6861 = vrot.slane %v6860, 1
        %v6862 = vmax.f32 %v6860, %v6861
        %v6863 = vsel %vm281, %v6193, -inf
        %v6864 = vsel %vm281, %v6227, -inf
        %v6865 = vmax.f32 %v6863, %v6864
        %v6866 = vrot.slane %v6865, 4
        %v6867 = vmax.f32 %v6865, %v6866
        %v6868 = vrot.slane %v6867, 2
        %v6869 = vmax.f32 %v6867, %v6868
        %v6870 = vrot.slane %v6869, 1
        %v6871 = vmax.f32 %v6869, %v6870
        %v6872 = vsel %vm281, %v6192, -inf
        %v6873 = vsel %vm281, %v6226, -inf
        %v6874 = vmax.f32 %v6872, %v6873
        %v6875 = vrot.slane %v6874, 4
        %v6876 = vmax.f32 %v6874, %v6875
        %v6877 = vrot.slane %v6876, 2
        %v6878 = vmax.f32 %v6876, %v6877
        %v6879 = vrot.slane %v6878, 1
        %v6880 = vmax.f32 %v6878, %v6879
        %v6881 = vsel %vm281, %v6194, -inf
        %v6882 = vsel %vm281, %v6228, -inf
        %v6883 = vmax.f32 %v6881, %v6882
        %v6884 = vrot.slane %v6883, 4
        %v6885 = vmax.f32 %v6883, %v6884
        %v6886 = vrot.slane %v6885, 2
        %v6887 = vmax.f32 %v6885, %v6886
        %v6888 = vrot.slane %v6887, 1
        %v6889 = vmax.f32 %v6887, %v6888
        %v6890 = vsel %vm281, %v6202, -inf
        %v6891 = vsel %vm281, %v6236, -inf
        %v6892 = vmax.f32 %v6890, %v6891
        %v6893 = vrot.slane %v6892, 4
        %v6894 = vmax.f32 %v6892, %v6893
        %v6895 = vrot.slane %v6894, 2
        %v6896 = vmax.f32 %v6894, %v6895
        %v6897 = vrot.slane %v6896, 1
        %v6898 = vmax.f32 %v6896, %v6897
        %v6899 = vsel %vm281, %v6210, -inf
        %v6900 = vsel %vm281, %v6244, -inf
        %v6901 = vmax.f32 %v6899, %v6900
        %v6902 = vrot.slane %v6901, 4
        %v6903 = vmax.f32 %v6901, %v6902
        %v6904 = vrot.slane %v6903, 2
        %v6905 = vmax.f32 %v6903, %v6904
        %v6906 = vrot.slane %v6905, 1
        %v6907 = vmax.f32 %v6905, %v6906
        %v6908 = vsel %vm281, %v6209, -inf
        %v6909 = vsel %vm281, %v6243, -inf
        %v6910 = vmax.f32 %v6908, %v6909
        %v6911 = vrot.slane %v6910, 4
        %v6912 = vmax.f32 %v6910, %v6911
        %v6913 = vrot.slane %v6912, 2
        %v6914 = vmax.f32 %v6912, %v6913
        %v6915 = vrot.slane %v6914, 1
        %v6916 = vmax.f32 %v6914, %v6915
        %v6917 = vsel %vm281, %v6211, -inf
        %v6918 = vsel %vm281, %v6245, -inf
        %v6919 = vmax.f32 %v6917, %v6918
        %v6920 = vrot.slane %v6919, 4
        %v6921 = vmax.f32 %v6919, %v6920
        %v6922 = vrot.slane %v6921, 2
        %v6923 = vmax.f32 %v6921, %v6922
        %v6924 = vrot.slane %v6923, 1
        %v6925 = vmax.f32 %v6923, %v6924
        %v6926 = vsel %vm281, %v6253, -inf
        %v6927 = vsel %vm281, %v6287, -inf
        %v6928 = vmax.f32 %v6926, %v6927
        %v6929 = vrot.slane %v6928, 4
        %v6930 = vmax.f32 %v6928, %v6929
        %v6931 = vrot.slane %v6930, 2
        %v6932 = vmax.f32 %v6930, %v6931
        %v6933 = vrot.slane %v6932, 1
        %v6934 = vmax.f32 %v6932, %v6933
        %v6935 = vsel %vm281, %v6261, -inf
        %v6936 = vsel %vm281, %v6295, -inf
        %v6937 = vmax.f32 %v6935, %v6936
        %v6938 = vrot.slane %v6937, 4
        %v6939 = vmax.f32 %v6937, %v6938
        %v6940 = vrot.slane %v6939, 2
        %v6941 = vmax.f32 %v6939, %v6940
        %v6942 = vrot.slane %v6941, 1
        %v6943 = vmax.f32 %v6941, %v6942
        %v6944 = vsel %vm281, %v6260, -inf
        %v6945 = vsel %vm281, %v6294, -inf
        %v6946 = vmax.f32 %v6944, %v6945
        %v6947 = vrot.slane %v6946, 4
        %v6948 = vmax.f32 %v6946, %v6947
        %v6949 = vrot.slane %v6948, 2
        %v6950 = vmax.f32 %v6948, %v6949
        %v6951 = vrot.slane %v6950, 1
        %v6952 = vmax.f32 %v6950, %v6951
        %v6953 = vsel %vm281, %v6262, -inf
        %v6954 = vsel %vm281, %v6296, -inf
        %v6955 = vmax.f32 %v6953, %v6954
        %v6956 = vrot.slane %v6955, 4
        %v6957 = vmax.f32 %v6955, %v6956
        %v6958 = vrot.slane %v6957, 2
        %v6959 = vmax.f32 %v6957, %v6958
        %v6960 = vrot.slane %v6959, 1
        %v6961 = vmax.f32 %v6959, %v6960
        %v6962 = vsel %vm281, %v6270, -inf
        %v6963 = vsel %vm281, %v6304, -inf
        %v6964 = vmax.f32 %v6962, %v6963
        %v6965 = vrot.slane %v6964, 4
        %v6966 = vmax.f32 %v6964, %v6965
        %v6967 = vrot.slane %v6966, 2
        %v6968 = vmax.f32 %v6966, %v6967
        %v6969 = vrot.slane %v6968, 1
        %v6970 = vmax.f32 %v6968, %v6969
        %v6971 = vsel %vm281, %v6278, -inf
        %v6972 = vsel %vm281, %v6312, -inf
        %v6973 = vmax.f32 %v6971, %v6972
        %v6974 = vrot.slane %v6973, 4
        %v6975 = vmax.f32 %v6973, %v6974
        %v6976 = vrot.slane %v6975, 2
        %v6977 = vmax.f32 %v6975, %v6976
        %v6978 = vrot.slane %v6977, 1
        %v6979 = vmax.f32 %v6977, %v6978
        %v6980 = vsel %vm281, %v6277, -inf
        %v6981 = vsel %vm281, %v6311, -inf
        %v6982 = vmax.f32 %v6980, %v6981
        %v6983 = vrot.slane %v6982, 4
        %v6984 = vmax.f32 %v6982, %v6983
        %v6985 = vrot.slane %v6984, 2
        %v6986 = vmax.f32 %v6984, %v6985
        %v6987 = vrot.slane %v6986, 1
        %v6988 = vmax.f32 %v6986, %v6987
        %v6989 = vsel %vm281, %v6279, -inf
        %v6990 = vsel %vm281, %v6313, -inf
        %v6991 = vmax.f32 %v6989, %v6990
        %v6992 = vrot.slane %v6991, 4
        %v6993 = vmax.f32 %v6991, %v6992
        %v6994 = vrot.slane %v6993, 2
        %v6995 = vmax.f32 %v6993, %v6994
        %v6996 = vrot.slane %v6995, 1
        %v6997 = vmax.f32 %v6995, %v6996
        %v6998 = vsel %vm281, %v6321, -inf
        %v6999 = vsel %vm281, %v6355, -inf
        %v7000 = vmax.f32 %v6998, %v6999
        %v7001 = vrot.slane %v7000, 4
        %v7002 = vmax.f32 %v7000, %v7001
        %v7003 = vrot.slane %v7002, 2
        %v7004 = vmax.f32 %v7002, %v7003
        %v7005 = vrot.slane %v7004, 1
        %v7006 = vmax.f32 %v7004, %v7005
        %v7007 = vsel %vm281, %v6329, -inf
        %v7008 = vsel %vm281, %v6363, -inf
        %v7009 = vmax.f32 %v7007, %v7008
        %v7010 = vrot.slane %v7009, 4
        %v7011 = vmax.f32 %v7009, %v7010
        %v7012 = vrot.slane %v7011, 2
        %v7013 = vmax.f32 %v7011, %v7012
        %v7014 = vrot.slane %v7013, 1
        %v7015 = vmax.f32 %v7013, %v7014
        %v7016 = vsel %vm281, %v6328, -inf
        %v7017 = vsel %vm281, %v6362, -inf
        %v7018 = vmax.f32 %v7016, %v7017
        %v7019 = vrot.slane %v7018, 4
        %v7020 = vmax.f32 %v7018, %v7019
        %v7021 = vrot.slane %v7020, 2
        %v7022 = vmax.f32 %v7020, %v7021
        %v7023 = vrot.slane %v7022, 1
        %v7024 = vmax.f32 %v7022, %v7023
        %v7025 = vsel %vm281, %v6330, -inf
        %v7026 = vsel %vm281, %v6364, -inf
        %v7027 = vmax.f32 %v7025, %v7026
        %v7028 = vrot.slane %v7027, 4
        %v7029 = vmax.f32 %v7027, %v7028
        %v7030 = vrot.slane %v7029, 2
        %v7031 = vmax.f32 %v7029, %v7030
        %v7032 = vrot.slane %v7031, 1
        %v7033 = vmax.f32 %v7031, %v7032
        %v7034 = vsel %vm281, %v6338, -inf
        %v7035 = vsel %vm281, %v6372, -inf
        %v7036 = vmax.f32 %v7034, %v7035
        %v7037 = vrot.slane %v7036, 4
        %v7038 = vmax.f32 %v7036, %v7037
        %v7039 = vrot.slane %v7038, 2
        %v7040 = vmax.f32 %v7038, %v7039
        %v7041 = vrot.slane %v7040, 1
        %v7042 = vmax.f32 %v7040, %v7041
        %v7043 = vsel %vm281, %v6346, -inf
        %v7044 = vsel %vm281, %v6380, -inf
        %v7045 = vmax.f32 %v7043, %v7044
        %v7046 = vrot.slane %v7045, 4
        %v7047 = vmax.f32 %v7045, %v7046
        %v7048 = vrot.slane %v7047, 2
        %v7049 = vmax.f32 %v7047, %v7048
        %v7050 = vrot.slane %v7049, 1
        %v7051 = vmax.f32 %v7049, %v7050
        %v7052 = vsel %vm281, %v6345, -inf
        %v7053 = vsel %vm281, %v6379, -inf
        %v7054 = vmax.f32 %v7052, %v7053
        %v7055 = vrot.slane %v7054, 4
        %v7056 = vmax.f32 %v7054, %v7055
        %v7057 = vrot.slane %v7056, 2
        %v7058 = vmax.f32 %v7056, %v7057
        %v7059 = vrot.slane %v7058, 1
        %v7060 = vmax.f32 %v7058, %v7059
        %v7061 = vsel %vm281, %v6347, -inf
        %v7062 = vsel %vm281, %v6381, -inf
        %v7063 = vmax.f32 %v7061, %v7062
        %v7064 = vrot.slane %v7063, 4
        %v7065 = vmax.f32 %v7063, %v7064
        %v7066 = vrot.slane %v7065, 2
        %v7067 = vmax.f32 %v7065, %v7066
        %v7068 = vrot.slane %v7067, 1
        %v7069 = vmax.f32 %v7067, %v7068
        %v7070 = vsel %vm281, %v6389, -inf
        %v7071 = vsel %vm281, %v6423, -inf
        %v7072 = vmax.f32 %v7070, %v7071
        %v7073 = vrot.slane %v7072, 4
        %v7074 = vmax.f32 %v7072, %v7073
        %v7075 = vrot.slane %v7074, 2
        %v7076 = vmax.f32 %v7074, %v7075
        %v7077 = vrot.slane %v7076, 1
        %v7078 = vmax.f32 %v7076, %v7077
        %v7079 = vsel %vm281, %v6397, -inf
        %v7080 = vsel %vm281, %v6431, -inf
        %v7081 = vmax.f32 %v7079, %v7080
        %v7082 = vrot.slane %v7081, 4
        %v7083 = vmax.f32 %v7081, %v7082
        %v7084 = vrot.slane %v7083, 2
        %v7085 = vmax.f32 %v7083, %v7084
        %v7086 = vrot.slane %v7085, 1
        %v7087 = vmax.f32 %v7085, %v7086
        %v7088 = vsel %vm281, %v6396, -inf
        %v7089 = vsel %vm281, %v6430, -inf
        %v7090 = vmax.f32 %v7088, %v7089
        %v7091 = vrot.slane %v7090, 4
        %v7092 = vmax.f32 %v7090, %v7091
        %v7093 = vrot.slane %v7092, 2
        %v7094 = vmax.f32 %v7092, %v7093
        %v7095 = vrot.slane %v7094, 1
        %v7096 = vmax.f32 %v7094, %v7095
        %v7097 = vsel %vm281, %v6398, -inf
        %v7098 = vsel %vm281, %v6432, -inf
        %v7099 = vmax.f32 %v7097, %v7098
        %v7100 = vrot.slane %v7099, 4
        %v7101 = vmax.f32 %v7099, %v7100
        %v7102 = vrot.slane %v7101, 2
        %v7103 = vmax.f32 %v7101, %v7102
        %v7104 = vrot.slane %v7103, 1
        %v7105 = vmax.f32 %v7103, %v7104
        %v7106 = vsel %vm281, %v6406, -inf
        %v7107 = vsel %vm281, %v6440, -inf
        %v7108 = vmax.f32 %v7106, %v7107
        %v7109 = vrot.slane %v7108, 4
        %v7110 = vmax.f32 %v7108, %v7109
        %v7111 = vrot.slane %v7110, 2
        %v7112 = vmax.f32 %v7110, %v7111
        %v7113 = vrot.slane %v7112, 1
        %v7114 = vmax.f32 %v7112, %v7113
        %v7115 = vsel %vm281, %v6414, -inf
        %v7116 = vsel %vm281, %v6448, -inf
        %v7117 = vmax.f32 %v7115, %v7116
        %v7118 = vrot.slane %v7117, 4
        %v7119 = vmax.f32 %v7117, %v7118
        %v7120 = vrot.slane %v7119, 2
        %v7121 = vmax.f32 %v7119, %v7120
        %v7122 = vrot.slane %v7121, 1
        %v7123 = vmax.f32 %v7121, %v7122
        %v7124 = vsel %vm281, %v6413, -inf
        %v7125 = vsel %vm281, %v6447, -inf
        %v7126 = vmax.f32 %v7124, %v7125
        %v7127 = vrot.slane %v7126, 4
        %v7128 = vmax.f32 %v7126, %v7127
        %v7129 = vrot.slane %v7128, 2
        %v7130 = vmax.f32 %v7128, %v7129
        %v7131 = vrot.slane %v7130, 1
        %v7132 = vmax.f32 %v7130, %v7131
        %v7133 = vsel %vm281, %v6415, -inf
        %v7134 = vsel %vm281, %v6449, -inf
        %v7135 = vmax.f32 %v7133, %v7134
        %v7136 = vrot.slane %v7135, 4
        %v7137 = vmax.f32 %v7135, %v7136
        %v7138 = vrot.slane %v7137, 2
        %v7139 = vmax.f32 %v7137, %v7138
        %v7140 = vrot.slane %v7139, 1
        %v7141 = vmax.f32 %v7139, %v7140
        %v7142 = vsel %vm281, %v6457, -inf
        %v7143 = vsel %vm281, %v6491, -inf
        %v7144 = vmax.f32 %v7142, %v7143
        %v7145 = vrot.slane %v7144, 4
        %v7146 = vmax.f32 %v7144, %v7145
        %v7147 = vrot.slane %v7146, 2
        %v7148 = vmax.f32 %v7146, %v7147
        %v7149 = vrot.slane %v7148, 1
        %v7150 = vmax.f32 %v7148, %v7149
        %v7151 = vsel %vm281, %v6465, -inf
        %v7152 = vsel %vm281, %v6499, -inf
        %v7153 = vmax.f32 %v7151, %v7152
        %v7154 = vrot.slane %v7153, 4
        %v7155 = vmax.f32 %v7153, %v7154
        %v7156 = vrot.slane %v7155, 2
        %v7157 = vmax.f32 %v7155, %v7156
        %v7158 = vrot.slane %v7157, 1
        %v7159 = vmax.f32 %v7157, %v7158
        %v7160 = vsel %vm281, %v6464, -inf
        %v7161 = vsel %vm281, %v6498, -inf
        %v7162 = vmax.f32 %v7160, %v7161
        %v7163 = vrot.slane %v7162, 4
        %v7164 = vmax.f32 %v7162, %v7163
        %v7165 = vrot.slane %v7164, 2
        %v7166 = vmax.f32 %v7164, %v7165
        %v7167 = vrot.slane %v7166, 1
        %v7168 = vmax.f32 %v7166, %v7167
        %v7169 = vsel %vm281, %v6466, -inf
        %v7170 = vsel %vm281, %v6500, -inf
        %v7171 = vmax.f32 %v7169, %v7170
        %v7172 = vrot.slane %v7171, 4
        %v7173 = vmax.f32 %v7171, %v7172
        %v7174 = vrot.slane %v7173, 2
        %v7175 = vmax.f32 %v7173, %v7174
        %v7176 = vrot.slane %v7175, 1
        %v7177 = vmax.f32 %v7175, %v7176
        %v7178 = vsel %vm281, %v6474, -inf
        %v7179 = vsel %vm281, %v6508, -inf
        %v7180 = vmax.f32 %v7178, %v7179
        %v7181 = vrot.slane %v7180, 4
        %v7182 = vmax.f32 %v7180, %v7181
        %v7183 = vrot.slane %v7182, 2
        %v7184 = vmax.f32 %v7182, %v7183
        %v7185 = vrot.slane %v7184, 1
        %v7186 = vmax.f32 %v7184, %v7185
        %v7187 = vsel %vm281, %v6482, -inf
        %v7188 = vsel %vm281, %v6516, -inf
        %v7189 = vmax.f32 %v7187, %v7188
        %v7190 = vrot.slane %v7189, 4
        %v7191 = vmax.f32 %v7189, %v7190
        %v7192 = vrot.slane %v7191, 2
        %v7193 = vmax.f32 %v7191, %v7192
        %v7194 = vrot.slane %v7193, 1
        %v7195 = vmax.f32 %v7193, %v7194
        %v7196 = vsel %vm281, %v6481, -inf
        %v7197 = vsel %vm281, %v6515, -inf
        %v7198 = vmax.f32 %v7196, %v7197
        %v7199 = vrot.slane %v7198, 4
        %v7200 = vmax.f32 %v7198, %v7199
        %v7201 = vrot.slane %v7200, 2
        %v7202 = vmax.f32 %v7200, %v7201
        %v7203 = vrot.slane %v7202, 1
        %v7204 = vmax.f32 %v7202, %v7203
        %v7205 = vsel %vm281, %v6483, -inf
        %v7206 = vsel %vm281, %v6517, -inf
        %v7207 = vmax.f32 %v7205, %v7206
        %v7208 = vrot.slane %v7207, 4
        %v7209 = vmax.f32 %v7207, %v7208
        %v7210 = vrot.slane %v7209, 2
        %v7211 = vmax.f32 %v7209, %v7210
        %v7212 = vrot.slane %v7211, 1
        %v7213 = vmax.f32 %v7211, %v7212
        %v7214 = vsel %vm281, %v6525, -inf
        %v7215 = vsel %vm281, %v6559, -inf
        %v7216 = vmax.f32 %v7214, %v7215
        %v7217 = vrot.slane %v7216, 4
        %v7218 = vmax.f32 %v7216, %v7217
        %v7219 = vrot.slane %v7218, 2
        %v7220 = vmax.f32 %v7218, %v7219
        %v7221 = vrot.slane %v7220, 1
        %v7222 = vmax.f32 %v7220, %v7221
        %v7223 = vsel %vm281, %v6533, -inf
        %v7224 = vsel %vm281, %v6567, -inf
        %v7225 = vmax.f32 %v7223, %v7224
        %v7226 = vrot.slane %v7225, 4
        %v7227 = vmax.f32 %v7225, %v7226
        %v7228 = vrot.slane %v7227, 2
        %v7229 = vmax.f32 %v7227, %v7228
        %v7230 = vrot.slane %v7229, 1
        %v7231 = vmax.f32 %v7229, %v7230
        %v7232 = vsel %vm281, %v6532, -inf
        %v7233 = vsel %vm281, %v6566, -inf
        %v7234 = vmax.f32 %v7232, %v7233
        %v7235 = vrot.slane %v7234, 4
        %v7236 = vmax.f32 %v7234, %v7235
        %v7237 = vrot.slane %v7236, 2
        %v7238 = vmax.f32 %v7236, %v7237
        %v7239 = vrot.slane %v7238, 1
        %v7240 = vmax.f32 %v7238, %v7239
        %v7241 = vsel %vm281, %v6534, -inf
        %v7242 = vsel %vm281, %v6568, -inf
        %v7243 = vmax.f32 %v7241, %v7242
        %v7244 = vrot.slane %v7243, 4
        %v7245 = vmax.f32 %v7243, %v7244
        %v7246 = vrot.slane %v7245, 2
        %v7247 = vmax.f32 %v7245, %v7246
        %v7248 = vrot.slane %v7247, 1
        %v7249 = vmax.f32 %v7247, %v7248
        %v7250 = vsel %vm281, %v6542, -inf
        %v7251 = vsel %vm281, %v6576, -inf
        %v7252 = vmax.f32 %v7250, %v7251
        %v7253 = vrot.slane %v7252, 4
        %v7254 = vmax.f32 %v7252, %v7253
        %v7255 = vrot.slane %v7254, 2
        %v7256 = vmax.f32 %v7254, %v7255
        %v7257 = vrot.slane %v7256, 1
        %v7258 = vmax.f32 %v7256, %v7257
        %v7259 = vsel %vm281, %v6550, -inf
        %v7260 = vsel %vm281, %v6584, -inf
        %v7261 = vmax.f32 %v7259, %v7260
        %v7262 = vrot.slane %v7261, 4
        %v7263 = vmax.f32 %v7261, %v7262
        %v7264 = vrot.slane %v7263, 2
        %v7265 = vmax.f32 %v7263, %v7264
        %v7266 = vrot.slane %v7265, 1
        %v7267 = vmax.f32 %v7265, %v7266
        %v7268 = vsel %vm281, %v6549, -inf
        %v7269 = vsel %vm281, %v6583, -inf
        %v7270 = vmax.f32 %v7268, %v7269
        %v7271 = vrot.slane %v7270, 4
        %v7272 = vmax.f32 %v7270, %v7271
        %v7273 = vrot.slane %v7272, 2
        %v7274 = vmax.f32 %v7272, %v7273
        %v7275 = vrot.slane %v7274, 1
        %v7276 = vmax.f32 %v7274, %v7275
        %v7277 = vsel %vm281, %v6551, -inf
        %v7278 = vsel %vm281, %v6585, -inf
        %v7279 = vmax.f32 %v7277, %v7278
        %v7280 = vrot.slane %v7279, 4
        %v7281 = vmax.f32 %v7279, %v7280
        %v7282 = vrot.slane %v7281, 2
        %v7283 = vmax.f32 %v7281, %v7282
        %v7284 = vrot.slane %v7283, 1
        %v7285 = vmax.f32 %v7283, %v7284
        %v7286 = vsel %vm281, %v6593, -inf
        %v7287 = vsel %vm281, %v6627, -inf
        %v7288 = vmax.f32 %v7286, %v7287
        %v7289 = vrot.slane %v7288, 4
        %v7290 = vmax.f32 %v7288, %v7289
        %v7291 = vrot.slane %v7290, 2
        %v7292 = vmax.f32 %v7290, %v7291
        %v7293 = vrot.slane %v7292, 1
        %v7294 = vmax.f32 %v7292, %v7293
        %v7295 = vsel %vm281, %v6601, -inf
        %v7296 = vsel %vm281, %v6635, -inf
        %v7297 = vmax.f32 %v7295, %v7296
        %v7298 = vrot.slane %v7297, 4
        %v7299 = vmax.f32 %v7297, %v7298
        %v7300 = vrot.slane %v7299, 2
        %v7301 = vmax.f32 %v7299, %v7300
        %v7302 = vrot.slane %v7301, 1
        %v7303 = vmax.f32 %v7301, %v7302
        %v7304 = vsel %vm281, %v6600, -inf
        %v7305 = vsel %vm281, %v6634, -inf
        %v7306 = vmax.f32 %v7304, %v7305
        %v7307 = vrot.slane %v7306, 4
        %v7308 = vmax.f32 %v7306, %v7307
        %v7309 = vrot.slane %v7308, 2
        %v7310 = vmax.f32 %v7308, %v7309
        %v7311 = vrot.slane %v7310, 1
        %v7312 = vmax.f32 %v7310, %v7311
        %v7313 = vsel %vm281, %v6602, -inf
        %v7314 = vsel %vm281, %v6636, -inf
        %v7315 = vmax.f32 %v7313, %v7314
        %v7316 = vrot.slane %v7315, 4
        %v7317 = vmax.f32 %v7315, %v7316
        %v7318 = vrot.slane %v7317, 2
        %v7319 = vmax.f32 %v7317, %v7318
        %v7320 = vrot.slane %v7319, 1
        %v7321 = vmax.f32 %v7319, %v7320
        %v7322 = vsel %vm281, %v6610, -inf
        %v7323 = vsel %vm281, %v6644, -inf
        %v7324 = vmax.f32 %v7322, %v7323
        %v7325 = vrot.slane %v7324, 4
        %v7326 = vmax.f32 %v7324, %v7325
        %v7327 = vrot.slane %v7326, 2
        %v7328 = vmax.f32 %v7326, %v7327
        %v7329 = vrot.slane %v7328, 1
        %v7330 = vmax.f32 %v7328, %v7329
        %v7331 = vsel %vm281, %v6618, -inf
        %v7332 = vsel %vm281, %v6652, -inf
        %v7333 = vmax.f32 %v7331, %v7332
        %v7334 = vrot.slane %v7333, 4
        %v7335 = vmax.f32 %v7333, %v7334
        %v7336 = vrot.slane %v7335, 2
        %v7337 = vmax.f32 %v7335, %v7336
        %v7338 = vrot.slane %v7337, 1
        %v7339 = vmax.f32 %v7337, %v7338
        %v7340 = vsel %vm281, %v6617, -inf
        %v7341 = vsel %vm281, %v6651, -inf
        %v7342 = vmax.f32 %v7340, %v7341
        %v7343 = vrot.slane %v7342, 4
        %v7344 = vmax.f32 %v7342, %v7343
        %v7345 = vrot.slane %v7344, 2
        %v7346 = vmax.f32 %v7344, %v7345
        %v7347 = vrot.slane %v7346, 1
        %v7348 = vmax.f32 %v7346, %v7347
        %v7349 = vsel %vm281, %v6619, -inf
        %v7350 = vsel %vm281, %v6653, -inf
        %v7351 = vmax.f32 %v7349, %v7350
        %v7352 = vrot.slane %v7351, 4
        %v7353 = vmax.f32 %v7351, %v7352
        %v7354 = vrot.slane %v7353, 2
        %v7355 = vmax.f32 %v7353, %v7354
        %v7356 = vrot.slane %v7355, 1
        %v7357 = vmax.f32 %v7355, %v7356
        %vm7422 = vcmask 1041409
        %v7423 = vsel %vm7422, %v6799, %v6790
        %vm7424 = vcmask 1042434
        %v7425 = vsel %vm7424, %v6808, %v7423
        %vm7426 = vcmask 1043459
        %v7427 = vsel %vm7426, %v6817, %v7425
        %vm7428 = vcmask 1044484
        %v7429 = vsel %vm7428, %v6826, %v7427
        %vm7430 = vcmask 1045509
        %v7431 = vsel %vm7430, %v6835, %v7429
        %vm7432 = vcmask 1046534
        %v7433 = vsel %vm7432, %v6844, %v7431
        %vm7434 = vcmask 1047559
        %v7435 = vsel %vm7434, %v6853, %v7433
        %v7436 = vsel %vm7422, %v6871, %v6862
        %v7437 = vsel %vm7424, %v6880, %v7436
        %v7438 = vsel %vm7426, %v6889, %v7437
        %v7439 = vsel %vm7428, %v6898, %v7438
        %v7440 = vsel %vm7430, %v6907, %v7439
        %v7441 = vsel %vm7432, %v6916, %v7440
        %v7442 = vsel %vm7434, %v6925, %v7441
        %v7443 = vsel %vm7422, %v6943, %v6934
        %v7444 = vsel %vm7424, %v6952, %v7443
        %v7445 = vsel %vm7426, %v6961, %v7444
        %v7446 = vsel %vm7428, %v6970, %v7445
        %v7447 = vsel %vm7430, %v6979, %v7446
        %v7448 = vsel %vm7432, %v6988, %v7447
        %v7449 = vsel %vm7434, %v6997, %v7448
        %v7450 = vsel %vm7422, %v7015, %v7006
        %v7451 = vsel %vm7424, %v7024, %v7450
        %v7452 = vsel %vm7426, %v7033, %v7451
        %v7453 = vsel %vm7428, %v7042, %v7452
        %v7454 = vsel %vm7430, %v7051, %v7453
        %v7455 = vsel %vm7432, %v7060, %v7454
        %v7456 = vsel %vm7434, %v7069, %v7455
        %v7457 = vsel %vm7422, %v7087, %v7078
        %v7458 = vsel %vm7424, %v7096, %v7457
        %v7459 = vsel %vm7426, %v7105, %v7458
        %v7460 = vsel %vm7428, %v7114, %v7459
        %v7461 = vsel %vm7430, %v7123, %v7460
        %v7462 = vsel %vm7432, %v7132, %v7461
        %v7463 = vsel %vm7434, %v7141, %v7462
        %v7464 = vsel %vm7422, %v7159, %v7150
        %v7465 = vsel %vm7424, %v7168, %v7464
        %v7466 = vsel %vm7426, %v7177, %v7465
        %v7467 = vsel %vm7428, %v7186, %v7466
        %v7468 = vsel %vm7430, %v7195, %v7467
        %v7469 = vsel %vm7432, %v7204, %v7468
        %v7470 = vsel %vm7434, %v7213, %v7469
        %v7471 = vsel %vm7422, %v7231, %v7222
        %v7472 = vsel %vm7424, %v7240, %v7471
        %v7473 = vsel %vm7426, %v7249, %v7472
        %v7474 = vsel %vm7428, %v7258, %v7473
        %v7475 = vsel %vm7430, %v7267, %v7474
        %v7476 = vsel %vm7432, %v7276, %v7475
        %v7477 = vsel %vm7434, %v7285, %v7476
        %v7478 = vsel %vm7422, %v7303, %v7294
        %v7479 = vsel %vm7424, %v7312, %v7478
        %v7480 = vsel %vm7426, %v7321, %v7479
        %v7481 = vsel %vm7428, %v7330, %v7480
        %v7482 = vsel %vm7430, %v7339, %v7481
        %v7483 = vsel %vm7432, %v7348, %v7482
        %v7484 = vsel %vm7434, %v7357, %v7483
        %v7493 = vcombine.low %v7435, %v7449
        %v7494 = vcombine.high %v7435, %v7449
        %v7496 = vunpack.c.l.s4 1983009808
        %v7497 = vunpack.c.0.s8 %v7496
        %v7498 = vlaneseq
        %v7499 = vshrl.u32 %v7498, 7
        %v7500 = vsub.s32 %v7497, %v7499
        %v7501 = vrot.slane %v7493, %v7500
        %v7503 = vunpack.c.l.s4 1983009808
        %v7504 = vunpack.c.0.s8 %v7503
        %v7505 = vlaneseq
        %v7506 = vshrl.u32 %v7505, 7
        %v7507 = vsub.s32 %v7504, %v7506
        %v7508 = vrot.slane %v7494, %v7507
        %v7509 = vcombine.low %v7442, %v7456
        %v7510 = vcombine.high %v7442, %v7456
        %v7512 = vunpack.c.l.s4 1983009808
        %v7513 = vunpack.c.0.s8 %v7512
        %v7514 = vlaneseq
        %v7515 = vshrl.u32 %v7514, 7
        %v7516 = vsub.s32 %v7513, %v7515
        %v7517 = vrot.slane %v7509, %v7516
        %v7519 = vunpack.c.l.s4 1983009808
        %v7520 = vunpack.c.0.s8 %v7519
        %v7521 = vlaneseq
        %v7522 = vshrl.u32 %v7521, 7
        %v7523 = vsub.s32 %v7520, %v7522
        %v7524 = vrot.slane %v7510, %v7523
        %v7525 = vcombine.low %v7463, %v7477
        %v7526 = vcombine.high %v7463, %v7477
        %v7528 = vunpack.c.l.s4 1983009808
        %v7529 = vunpack.c.0.s8 %v7528
        %v7530 = vlaneseq
        %v7531 = vshrl.u32 %v7530, 7
        %v7532 = vsub.s32 %v7529, %v7531
        %v7533 = vrot.slane %v7525, %v7532
        %v7535 = vunpack.c.l.s4 1983009808
        %v7536 = vunpack.c.0.s8 %v7535
        %v7537 = vlaneseq
        %v7538 = vshrl.u32 %v7537, 7
        %v7539 = vsub.s32 %v7536, %v7538
        %v7540 = vrot.slane %v7526, %v7539
        %v7541 = vcombine.low %v7470, %v7484
        %v7542 = vcombine.high %v7470, %v7484
        %v7544 = vunpack.c.l.s4 1983009808
        %v7545 = vunpack.c.0.s8 %v7544
        %v7546 = vlaneseq
        %v7547 = vshrl.u32 %v7546, 7
        %v7548 = vsub.s32 %v7545, %v7547
        %v7549 = vrot.slane %v7541, %v7548
        %v7551 = vunpack.c.l.s4 1983009808
        %v7552 = vunpack.c.0.s8 %v7551
        %v7553 = vlaneseq
        %v7554 = vshrl.u32 %v7553, 7
        %v7555 = vsub.s32 %v7552, %v7554
        %v7556 = vrot.slane %v7542, %v7555
        %v7557 = vcombine.low %v7501, %v7517
        %v7558 = vcombine.high %v7501, %v7517
        %v7560 = vunpack.c.l.s4 1934713408
        %v7561 = vunpack.c.0.s8 %v7560
        %v7562 = vlaneseq
        %v7563 = vshrl.u32 %v7562, 7
        %v7564 = vsub.s32 %v7561, %v7563
        %v7565 = vrot.slane %v7557, %v7564
        %v7567 = vunpack.c.l.s4 1934713408
        %v7568 = vunpack.c.0.s8 %v7567
        %v7569 = vlaneseq
        %v7570 = vshrl.u32 %v7569, 7
        %v7571 = vsub.s32 %v7568, %v7570
        %v7572 = vrot.slane %v7558, %v7571
        %v7573 = vcombine.low %v7508, %v7524
        %v7574 = vcombine.high %v7508, %v7524
        %v7576 = vunpack.c.l.s4 1934713408
        %v7577 = vunpack.c.0.s8 %v7576
        %v7578 = vlaneseq
        %v7579 = vshrl.u32 %v7578, 7
        %v7580 = vsub.s32 %v7577, %v7579
        %v7581 = vrot.slane %v7573, %v7580
        %v7583 = vunpack.c.l.s4 1934713408
        %v7584 = vunpack.c.0.s8 %v7583
        %v7585 = vlaneseq
        %v7586 = vshrl.u32 %v7585, 7
        %v7587 = vsub.s32 %v7584, %v7586
        %v7588 = vrot.slane %v7574, %v7587
        %v7589 = vcombine.low %v7533, %v7549
        %v7590 = vcombine.high %v7533, %v7549
        %v7592 = vunpack.c.l.s4 1934713408
        %v7593 = vunpack.c.0.s8 %v7592
        %v7594 = vlaneseq
        %v7595 = vshrl.u32 %v7594, 7
        %v7596 = vsub.s32 %v7593, %v7595
        %v7597 = vrot.slane %v7589, %v7596
        %v7599 = vunpack.c.l.s4 1934713408
        %v7600 = vunpack.c.0.s8 %v7599
        %v7601 = vlaneseq
        %v7602 = vshrl.u32 %v7601, 7
        %v7603 = vsub.s32 %v7600, %v7602
        %v7604 = vrot.slane %v7590, %v7603
        %v7605 = vcombine.low %v7540, %v7556
        %v7606 = vcombine.high %v7540, %v7556
        %v7608 = vunpack.c.l.s4 1934713408
        %v7609 = vunpack.c.0.s8 %v7608
        %v7610 = vlaneseq
        %v7611 = vshrl.u32 %v7610, 7
        %v7612 = vsub.s32 %v7609, %v7611
        %v7613 = vrot.slane %v7605, %v7612
        %v7615 = vunpack.c.l.s4 1934713408
        %v7616 = vunpack.c.0.s8 %v7615
        %v7617 = vlaneseq
        %v7618 = vshrl.u32 %v7617, 7
        %v7619 = vsub.s32 %v7616, %v7618
        %v7620 = vrot.slane %v7606, %v7619
        %v7621 = vcombine.low %v7565, %v7597
        %v7622 = vcombine.high %v7565, %v7597
        %v7623 = vcombine.low %v7572, %v7604
        %v7624 = vcombine.high %v7572, %v7604
        %v7625 = vcombine.low %v7581, %v7613
        %v7626 = vcombine.high %v7581, %v7613
        %v7627 = vcombine.low %v7588, %v7620
        %v7628 = vcombine.high %v7588, %v7620
        %7630 = vrot.lane.b32.xlu0 %v7622, 64
        %v7631 = vpop.permute.xlu0 %7630
        %7634 = vrot.lane.b32.xlu0 %v7624, 64
        %v7635 = vpop.permute.xlu0 %7634
        %7638 = vrot.lane.b32.xlu0 %v7626, 64
        %v7639 = vpop.permute.xlu0 %7638
        %7642 = vrot.lane.b32.xlu0 %v7628, 64
        %v7643 = vpop.permute.xlu0 %7642
        %v7645 = vsel %vm792, %v7621, %v7631
        %v7646 = vsel %vm792, %v7623, %v7635
        %v7647 = vsel %vm792, %v7625, %v7639
        %v7648 = vsel %vm792, %v7627, %v7643
        %7649 = vst [vmem:[%s217] sm:$0xff] %v7645
        %7650 = vst [vmem:[%s217 + $0x8] sm:$0xff] %v7646
        %7651 = vst [vmem:[%s217 + $0x10] sm:$0xff] %v7647
        %7652 = vst [vmem:[%s217 + $0x18] sm:$0xff] %v7648
        %s7653 = sand.u32 %s137, 1
        %s7654 = scalar_lea.sflag [#allocation4], %s7653
        %s7655 = sand.u32 %s137, 1
        %s7656 = smul.addr %s7655, 32
        %s7657 = scalar_lea.vmem [#allocation3], %s7656
        // Predicated region
        $region41: #{tpu_custom_call.1} parent=39 // pred_check
          %p7658 = pneg %p147
        $region42: #{tpu_custom_call.1} parent=39 // pred_check_branch
          %7660 = sbr.rel (%p7658) target = $region44
        $region43: #{tpu_custom_call.1} parent=39 // pred_region
          %s7662 = ssub.s32 512, 512
          %7663 = vsyncadd %s7654, %s7662
          %s7664 = smul.addr %s19, 4
          %s7665 = smul.addr %s7664, 128
          %s7666 = scalar_lea.hbm %s5, %s7665
          %s7668 = sshll.u32 %s7657, 4
          %s7669 = int_to_ptr.vmem [resolvable:$true] %s7668
          %7671 = dma.vmem_to_hbm [thread:$0]  %s7669, 512, %s7666, %s7654
        $region44: #{tpu_custom_call.1} parent=39 // pred_fallthru
          _
      $region40: #{tpu_custom_call.1} parent=5 // pred_fallthru
        _
      %p7672 = scmp.le.s32.totalorder 2, %s14
      // Predicated region
      $region45: #{tpu_custom_call.1} parent=5 // pred_check
        %p7673 = pneg %p7672
      $region46: #{tpu_custom_call.1} parent=5 // pred_check_branch
        %7675 = sbr.rel (%p7673) target = $region48
      $region47: #{tpu_custom_call.1} parent=5 // pred_region
        %s7676 = ssub.s32 %s14, 2
        // Predicated region
        $region49: #{tpu_custom_call.1} parent=47 // pred_check
          %p7677 = pneg %p153
        $region50: #{tpu_custom_call.1} parent=47 // pred_check_branch
          %7679 = sbr.rel (%p7677) target = $region52
        $region51: #{tpu_custom_call.1} parent=47 // pred_region
          %s7680 = sand.u32 %s138, 1
          %s7681 = scalar_lea.sflag [#allocation4], %s7680
          %s7682 = sand.u32 %s138, 1
          %s7683 = smul.addr %s7682, 32
          %s7684 = scalar_lea.vmem [#allocation3], %s7683
          %7685 = dma.done %s7681, 512
        $region52: #{tpu_custom_call.1} parent=47 // pred_fallthru
          _
      $region48: #{tpu_custom_call.1} parent=5 // pred_fallthru
        _
    $region6: #{tpu_custom_call.1} parent=1 // loop_footer
      %s18 = sadd.s32 1, %s14
    $region7: #{tpu_custom_call.1} parent=1 // loop_footer_branch
      %13 = sbr.rel target = $region3
    $region8: #{tpu_custom_call.1} parent=1 // loop_exit
      _
    %7686 = vsyncpa [#allocation4], 1
    %s7687 = scalar_lea.sflag [#allocation4], 1
    %7688 = vsyncpa %s7687, 1

</llo_original>
